<compile_context>
chip_gen: v5e
topology: v5e:2x2
jax: 0.10.0
libtpu: 0.0.40
codegen_flags: <defaults>
</compile_context>

<pallas_src>
import functools
import numpy as np

import jax
import jax.numpy as jnp
from jax.experimental import pallas as pl
from jax.experimental.pallas import tpu as pltpu

EPS = 1e-5


# ----------------------------------------------------------------------------
# Window partition / reverse (pure reshape/transpose glue, XLA)
# ----------------------------------------------------------------------------
def partition_window_jnp(x, window_shape):
    B, Z, H, W, C = x.shape
    wZ, wH, wW = window_shape
    x = x.reshape(B, Z // wZ, wZ, H // wH, wH, W // wW, wW, C)
    windows = x.transpose(0, 1, 3, 5, 2, 4, 6, 7).reshape(-1, wZ, wH, wW, C)
    return windows


def reverse_window_jnp(windows, window_shape, original_shape):
    wZ, wH, wW = window_shape
    Z, H, W = original_shape
    nZ, nH, nW = Z // wZ, H // wH, W // wW
    C = windows.shape[-1]
    x = windows.reshape(-1, nZ, nH, nW, wZ, wH, wW, C)
    x = x.transpose(0, 1, 4, 2, 5, 3, 6, 7).reshape(-1, wZ * nZ, wH * nH, wW * nW, C)
    return x


# ----------------------------------------------------------------------------
# Earth-specific bias position index + shifted-window attention mask (host-side)
# ----------------------------------------------------------------------------
def construct_position_index(wZ, wH, wW):
    coords_zi = np.arange(wZ)
    coords_zj = -np.arange(wZ) * wZ
    coords_hi = np.arange(wH)
    coords_hj = -np.arange(wH) * wH
    coords_w = np.arange(wW)
    coords_1 = np.stack(np.meshgrid(coords_zi, coords_hi, coords_w, indexing="ij"), axis=0)
    coords_2 = np.stack(np.meshgrid(coords_zj, coords_hj, coords_w, indexing="ij"), axis=0)
    coords_1_flat = coords_1.reshape(3, -1)
    coords_2_flat = coords_2.reshape(3, -1)
    coords = coords_1_flat[:, :, None] - coords_2_flat[:, None, :]
    coords = coords.transpose(1, 2, 0).copy()
    coords[:, :, 2] += wW - 1
    coords[:, :, 1] *= 2 * wW - 1
    coords[:, :, 0] *= (2 * wW - 1) * wH ** 2
    position_index = coords.sum(-1).flatten()
    return position_index.astype(np.int32)


def generate_3d_attention_mask(Z, H, W, wZ, wH, wW, shift):
    img_mask = np.zeros((1, Z, H, W, 1), dtype=np.float32)
    sZ, sH, sW = shift
    z_slices = (slice(0, -wZ), slice(-wZ, -sZ), slice(-sZ, None))
    h_slices = (slice(0, -wH), slice(-wH, -sH), slice(-sH, None))
    w_slices = (slice(0, -wW), slice(-wW, -sW), slice(-sW, None))
    cnt = 0
    for zs in z_slices:
        for hs in h_slices:
            for ws in w_slices:
                img_mask[:, zs, hs, ws, :] = cnt
                cnt += 1
    x = img_mask.reshape(1, Z // wZ, wZ, H // wH, wH, W // wW, wW, 1)
    mw = x.transpose(0, 1, 3, 5, 2, 4, 6, 7).reshape(-1, wZ * wH * wW)
    am = mw[:, None, :] - mw[:, :, None]
    am = np.where(am != 0, np.float32(-100.0), np.float32(0.0)).astype(np.float32)
    return am  # (nwin, Lw, Lw)


def _gelu_exact(x):
    return 0.5 * x * (1.0 + jax.lax.erf(x / jnp.sqrt(2.0).astype(x.dtype)))


# ----------------------------------------------------------------------------
# Fused SwinTransformerBlock kernel (one pallas_call per forward)
# ----------------------------------------------------------------------------
def _swin_block_kernel(x_ref, g1_ref, beta1_ref, wqkv_ref, bqkv_ref, bias_ref,
                       wproj_ref, bproj_ref, g2_ref, beta2_ref,
                       w1_ref, b1_ref, w2_ref, b2_ref, o_ref,
                       *, heads, hd, C, Lw, nwin, mm_dtype):
    # x block: (nwin, Lw, C) raw (un-normalized) window tokens; also the shortcut.
    x = x_ref[...].astype(jnp.float32).reshape(nwin * Lw, C)

    # --- norm1 (fused; LayerNorm commutes with the roll/window token permutation) ---
    mu = jnp.mean(x, axis=-1, keepdims=True)
    var = jnp.mean(jnp.square(x - mu), axis=-1, keepdims=True)
    xn = (x - mu) * jax.lax.rsqrt(var + EPS) * g1_ref[...] + beta1_ref[...]

    # --- QKV: one (nwin*Lw, C) x (C, 3C) GEMM; query scale pre-folded into weights ---
    qkv = jnp.dot(xn.astype(mm_dtype), wqkv_ref[...].astype(mm_dtype),
                  preferred_element_type=jnp.float32) + bqkv_ref[...]

    # --- head split: (nwin*Lw, 3C) -> q/k/v of shape (heads*nwin, Lw, hd).
    # Head-major batch order matches the precomputed bias table; these lane slices are
    # the only per-head work left — scores/softmax/AV/projection below are all batched.
    def split(base):
        parts = [qkv[:, base + h * hd: base + (h + 1) * hd].reshape(nwin, Lw, hd)
                 for h in range(heads)]
        return jnp.concatenate(parts, axis=0)

    q = split(0)
    k = split(C)
    v = split(2 * C)

    # --- batched attention over all (head, window) pairs in a single chain ---
    s = jnp.einsum('bld,bmd->blm', q.astype(mm_dtype), k.astype(mm_dtype),
                   preferred_element_type=jnp.float32)       # (heads*nwin, Lw, Lw)
    s = s + bias_ref[...]                                    # earth bias (+ shift mask)
    s = s - jnp.max(s, axis=-1, keepdims=True)
    p = jnp.exp(s)
    l = jnp.sum(p, axis=-1, keepdims=True)
    r = pl.reciprocal(l, approx=True)                        # EUP slot, off the VPU chain
    r = r * (2.0 - l * r)                                    # one Newton step (~f32 accuracy)
    p = p * r

    o = jnp.einsum('blm,bmd->bld', p.astype(mm_dtype), v.astype(mm_dtype),
                   preferred_element_type=jnp.float32)       # (heads*nwin, Lw, hd)

    # --- merge heads (head-major columns, as in torch) + single K=C projection GEMM ---
    o = jnp.concatenate([o[h * nwin:(h + 1) * nwin] for h in range(heads)], axis=-1)
    attn = jnp.dot(o.reshape(nwin * Lw, C).astype(mm_dtype),
                   wproj_ref[...].astype(mm_dtype),
                   preferred_element_type=jnp.float32) + bproj_ref[...]

    # --- first residual: the shortcut in window order is exactly the raw x block ---
    z = x + attn

    # --- norm2 + MLP (exact erf GELU, matching torch nn.GELU) + second residual ---
    mu2 = jnp.mean(z, axis=-1, keepdims=True)
    var2 = jnp.mean(jnp.square(z - mu2), axis=-1, keepdims=True)
    zn = (z - mu2) * jax.lax.rsqrt(var2 + EPS) * g2_ref[...] + beta2_ref[...]
    h1 = jnp.dot(zn.astype(mm_dtype), w1_ref[...].astype(mm_dtype),
                 preferred_element_type=jnp.float32) + b1_ref[...]
    h1 = _gelu_exact(h1)
    y = jnp.dot(h1.astype(mm_dtype), w2_ref[...].astype(mm_dtype),
                preferred_element_type=jnp.float32) + b2_ref[...]

    # TODO(synk): for large C, pack the output lane-dense ((nwin, Lw*C), multiple of 128
    # lanes) to avoid masked vst's; at C=32 the in-kernel relayout costs what it saves.
    o_ref[...] = (z + y).reshape(nwin, Lw, C).astype(o_ref.dtype)


def swin_block_pallas(win, prep, *, heads, nwin, mm_dtype):
    B_, Lw, C = win.shape
    hd = C // heads
    C4 = prep["w1"].shape[1]
    nblocks = B_ // nwin
    kernel = functools.partial(_swin_block_kernel, heads=heads, hd=hd, C=C, Lw=Lw,
                               nwin=nwin, mm_dtype=mm_dtype)
    rep2 = lambda b: (0, 0)
    rep3 = lambda b: (0, 0, 0)
    return pl.pallas_call(
        kernel,
        out_shape=jax.ShapeDtypeStruct((B_, Lw, C), win.dtype),
        grid_spec=pltpu.PrefetchScalarGridSpec(
            num_scalar_prefetch=0,
            grid=(nblocks,),
            in_specs=[
                pl.BlockSpec((nwin, Lw, C), lambda b: (b, 0, 0)),   # x windows (+ shortcut)
                pl.BlockSpec((1, C), rep2),                         # norm1 gamma
                pl.BlockSpec((1, C), rep2),                         # norm1 beta
                pl.BlockSpec((C, 3 * C), rep2),                     # w_qkv (q-scale folded)
                pl.BlockSpec((1, 3 * C), rep2),                     # b_qkv (q-scale folded)
                pl.BlockSpec((heads * nwin, Lw, Lw), rep3),         # earth bias (+ mask)
                pl.BlockSpec((C, C), rep2),                         # w_proj
                pl.BlockSpec((1, C), rep2),                         # b_proj
                pl.BlockSpec((1, C), rep2),                         # norm2 gamma
                pl.BlockSpec((1, C), rep2),                         # norm2 beta
                pl.BlockSpec((C, C4), rep2),                        # mlp w1
                pl.BlockSpec((1, C4), rep2),                        # mlp b1
                pl.BlockSpec((C4, C), rep2),                        # mlp w2
                pl.BlockSpec((1, C), rep2),                         # mlp b2
            ],
            out_specs=pl.BlockSpec((nwin, Lw, C), lambda b: (b, 0, 0)),
        ),
        compiler_params=pltpu.CompilerParams(dimension_semantics=("parallel",)),
    )(win, prep["g1"], prep["beta1"], prep["w_qkv"], prep["b_qkv"], prep["bias"],
      prep["w_proj"], prep["b_proj"], prep["g2"], prep["beta2"],
      prep["w1"], prep["b1"], prep["w2"], prep["b2"])


# ----------------------------------------------------------------------------
# One-time per-layer preparation (hoisted out of the per-call path)
# ----------------------------------------------------------------------------
def prepare_block_params(params, cfg):
    """Precompute the compact earth-bias(+shift-mask) table in the kernel's batch order
    and fold the 1/sqrt(hd) query scale into the QKV weights.  Depends only on
    params/cfg, so it runs once per layer, not per forward call."""
    Z, H, W = cfg["input_shape"]
    wZ, wH, wW = cfg["window_shape"]
    heads = cfg["heads"]
    Lw = wZ * wH * wW
    nZ, nH, nW = Z // wZ, H // wH, W // wW
    window_types = nZ * nH
    nwin = nZ * nH * nW
    C = params["g1"].shape[0]
    hd = C // heads
    scale = float(hd) ** (-0.5)

    # (heads*nwin, Lw, Lw); identical for every batch element (window_types | nwin),
    # so there is no (B_, heads, Lw, Lw) duplication in HBM.
    esb = params["bias_table"][cfg["position_index"]]                      # (Lw*Lw, wt, heads)
    esb = esb.reshape(Lw, Lw, window_types, heads).transpose(2, 3, 0, 1)   # (wt, heads, Lw, Lw)
    bias = esb[jnp.arange(nwin) % window_types]                            # (nwin, heads, Lw, Lw)
    if cfg["mask"] is not None:
        bias = bias + cfg["mask"][:, None, :, :]
    bias = bias.transpose(1, 0, 2, 3).reshape(heads * nwin, Lw, Lw)        # head-major batch

    col_scale = jnp.concatenate([jnp.full((C,), scale, jnp.float32),
                                 jnp.ones((2 * C,), jnp.float32)])
    return {
        "bias": bias,
        "g1": params["g1"].reshape(1, C), "beta1": params["beta1"].reshape(1, C),
        "w_qkv": params["w_qkv"] * col_scale[None, :],
        "b_qkv": (params["b_qkv"] * col_scale).reshape(1, 3 * C),
        "w_proj": params["w_proj"], "b_proj": params["b_proj"].reshape(1, C),
        "g2": params["g2"].reshape(1, C), "beta2": params["beta2"].reshape(1, C),
        "w1": params["w1"], "b1": params["b1"].reshape(1, 4 * C),
        "w2": params["w2"], "b2": params["b2"].reshape(1, C),
    }


# ----------------------------------------------------------------------------
# Full SwinTransformerBlock forward (Pallas-backed, ONE pallas_call)
# ----------------------------------------------------------------------------
def swin_block_forward(x, prep, cfg, *, mm_dtype=jnp.bfloat16):
    B, L, C = x.shape
    Z, H, W = cfg["input_shape"]
    wZ, wH, wW = cfg["window_shape"]
    heads = cfg["heads"]
    roll = cfg["roll"]
    assert L == Z * H * W
    Lw = wZ * wH * wW
    nwin = (Z // wZ) * (H // wH) * (W // wW)

    # norm1 commutes with roll + window partition (pure token permutations), so it is
    # fused into the kernel and we partition the *raw* input; the same windows serve as
    # the shortcut for the first residual inside the kernel.
    xs = x.reshape(B, Z, H, W, C)
    if roll:
        sZ, sH, sW = cfg["shift"]
        xs = jnp.roll(xs, shift=(-sZ, -sH, -sW), axis=(1, 2, 3))
    win = partition_window_jnp(xs, (wZ, wH, wW)).reshape(B * nwin, Lw, C)

    out_win = swin_block_pallas(win, prep, heads=heads, nwin=nwin, mm_dtype=mm_dtype)

    # Residual / norm2 / MLP are token-wise, so the fused kernel output is already the
    # final block output in window order; undo the permutation once.
    y = reverse_window_jnp(out_win, (wZ, wH, wW), (Z, H, W))
    if roll:
        sZ, sH, sW = cfg["shift"]
        y = jnp.roll(y, shift=(sZ, sH, sW), axis=(1, 2, 3))
    return y.reshape(B, L, C)


# ----------------------------------------------------------------------------
# Pure-JAX reference (same math as the PyTorch module) for verification
# ----------------------------------------------------------------------------
def ref_forward(x, params, cfg):
    B, L, C = x.shape
    Z, H, W = cfg["input_shape"]
    wZ, wH, wW = cfg["window_shape"]
    heads = cfg["heads"]
    roll = cfg["roll"]
    Lw = wZ * wH * wW
    nZ, nH, nW = Z // wZ, H // wH, W // wW
    window_types = nZ * nH
    nwin = nZ * nH * nW
    hd = C // heads
    scale = float(hd) ** (-0.5)

    def ln(v, g, b):
        m = v.mean(-1, keepdims=True)
        var = jnp.square(v - m).mean(-1, keepdims=True)
        return (v - m) / jnp.sqrt(var + EPS) * g + b

    shortcut = x
    xn = ln(x, params["g1"], params["beta1"]).reshape(B, Z, H, W, C)
    if roll:
        sZ, sH, sW = cfg["shift"]
        xn = jnp.roll(xn, shift=(-sZ, -sH, -sW), axis=(1, 2, 3))
    win = partition_window_jnp(xn, (wZ, wH, wW)).reshape(-1, Lw, C)
    B_ = win.shape[0]

    qkv = win @ params["w_qkv"] + params["b_qkv"]
    qkv = qkv.reshape(B_, Lw, 3, heads, hd).transpose(2, 0, 3, 1, 4)
    q, k, v = qkv[0] * scale, qkv[1], qkv[2]
    attn = jnp.einsum("bhld,bhmd->bhlm", q, k)

    esb = params["bias_table"][cfg["position_index"]]
    esb = esb.reshape(Lw, Lw, window_types, heads).transpose(2, 3, 0, 1)
    attn = attn + esb[jnp.arange(B_) % window_types]
    if cfg["mask"] is not None:
        attn = attn + cfg["mask"][jnp.arange(B_) % nwin][:, None, :, :]
    attn = jax.nn.softmax(attn, axis=-1)
    y = jnp.einsum("bhlm,bhmd->bhld", attn, v)
    y = y.transpose(0, 2, 1, 3).reshape(B_, Lw, C)
    y = y @ params["w_proj"] + params["b_proj"]

    y = reverse_window_jnp(y, (wZ, wH, wW), (Z, H, W))
    if roll:
        sZ, sH, sW = cfg["shift"]
        y = jnp.roll(y, shift=(sZ, sH, sW), axis=(1, 2, 3))
    y = y.reshape(B, L, C)
    x = shortcut + y
    xn2 = ln(x, params["g2"], params["beta2"])
    h = _gelu_exact(xn2 @ params["w1"] + params["b1"])
    x = x + (h @ params["w2"] + params["b2"])
    return x


# ----------------------------------------------------------------------------
# Main
# ----------------------------------------------------------------------------
if __name__ == "__main__":
    B = 2
    input_shape = (4, 8, 8)      # (Z, H, W)
    window_shape = (2, 4, 4)     # (wZ, wH, wW)
    dim = 32
    heads = 4
    roll = True

    Z, H, W = input_shape
    wZ, wH, wW = window_shape
    L = Z * H * W
    nZ, nH, nW = Z // wZ, H // wH, W // wW
    window_types = nZ * nH
    shift = tuple(i // 2 for i in window_shape)

    key = jax.random.PRNGKey(0)
    ks = jax.random.split(key, 16)
    s = 0.02
    params = {
        "g1": 1.0 + 0.1 * jax.random.normal(ks[0], (dim,), jnp.float32),
        "beta1": 0.1 * jax.random.normal(ks[1], (dim,), jnp.float32),
        "g2": 1.0 + 0.1 * jax.random.normal(ks[2], (dim,), jnp.float32),
        "beta2": 0.1 * jax.random.normal(ks[3], (dim,), jnp.float32),
        "w_qkv": s * jax.random.normal(ks[4], (dim, 3 * dim), jnp.float32) * 10,
        "b_qkv": s * jax.random.normal(ks[5], (3 * dim,), jnp.float32),
        "w_proj": s * jax.random.normal(ks[6], (dim, dim), jnp.float32) * 10,
        "b_proj": s * jax.random.normal(ks[7], (dim,), jnp.float32),
        "w1": s * jax.random.normal(ks[8], (dim, 4 * dim), jnp.float32) * 10,
        "b1": s * jax.random.normal(ks[9], (4 * dim,), jnp.float32),
        "w2": s * jax.random.normal(ks[10], (4 * dim, dim), jnp.float32) * 10,
        "b2": s * jax.random.normal(ks[11], (dim,), jnp.float32),
        # earth-specific bias table: (wZ^2 * wH^2 * (2*wW-1), window_types, heads)
        "bias_table": s * jax.random.normal(
            ks[12], (wZ ** 2 * wH ** 2 * (2 * wW - 1), window_types, heads), jnp.float32),
    }

    cfg = {
        "input_shape": input_shape,
        "window_shape": window_shape,
        "heads": heads,
        "roll": roll,
        "shift": shift,
        "position_index": jnp.asarray(construct_position_index(wZ, wH, wW)),
        "mask": (jnp.asarray(generate_3d_attention_mask(Z, H, W, wZ, wH, wW, shift))
                 if roll else None),
    }

    x = jax.random.normal(ks[13], (B, L, dim), jnp.float32)

    # One-time per-layer preparation (hoisted XLA glue: bias table, q-scale folding).
    prep = prepare_block_params(params, cfg)

    # Primary (perf) path: bf16 MXU operands, f32 accumulation / LN / softmax / GELU.
    fwd_bf16 = jax.jit(lambda xx, pp: swin_block_forward(xx, pp, cfg, mm_dtype=jnp.bfloat16))
    # Debug path: full f32, checked bit-tight against the pure-JAX reference.
    fwd_f32 = jax.jit(lambda xx, pp: swin_block_forward(xx, pp, cfg, mm_dtype=jnp.float32))

    out_bf16 = jax.block_until_ready(fwd_bf16(x, prep))
    out_f32 = jax.block_until_ready(fwd_f32(x, prep))
    ref = jax.block_until_ready(ref_forward(x, params, cfg))

    np.testing.assert_allclose(np.asarray(out_f32), np.asarray(ref), rtol=2e-4, atol=2e-4)

    ref64 = np.asarray(ref, np.float64)
    rel = np.linalg.norm(np.asarray(out_bf16, np.float64) - ref64) / np.linalg.norm(ref64)
    assert rel < 3e-2, f"bf16 MXU path relative error too large: {rel:.3e}"

    print("KERNEL_OK")
</pallas_src>

<mosaic_0001>
module attributes {stable_mosaic.version = 11 : i64} {
  func.func @_swin_block_kernel(%arg0: i32, %arg1: memref<8x32x32xf32, #tpu.memory_space<vmem>>, %arg2: memref<1x32xf32, #tpu.memory_space<vmem>>, %arg3: memref<1x32xf32, #tpu.memory_space<vmem>>, %arg4: memref<32x96xf32, #tpu.memory_space<vmem>>, %arg5: memref<1x96xf32, #tpu.memory_space<vmem>>, %arg6: memref<32x32x32xf32, #tpu.memory_space<vmem>>, %arg7: memref<32x32xf32, #tpu.memory_space<vmem>>, %arg8: memref<1x32xf32, #tpu.memory_space<vmem>>, %arg9: memref<1x32xf32, #tpu.memory_space<vmem>>, %arg10: memref<1x32xf32, #tpu.memory_space<vmem>>, %arg11: memref<32x128xf32, #tpu.memory_space<vmem>>, %arg12: memref<1x128xf32, #tpu.memory_space<vmem>>, %arg13: memref<128x32xf32, #tpu.memory_space<vmem>>, %arg14: memref<1x32xf32, #tpu.memory_space<vmem>>, %arg15: memref<8x32x32xf32, #tpu.memory_space<vmem>>) attributes {dimension_semantics = [#tpu.dimension_semantics<parallel>], iteration_bounds = array<i64: 2>, scalar_prefetch = 0 : i64, scratch_operands = 0 : i64, tpu.core_type = #tpu.core_type<tc>, window_params = [{transform_indices = @transform_0, window_bounds = array<i64: 8, 32, 32>}, {pipeline_mode = #tpu.pipeline_mode<synchronous>, transform_indices = @transform_1, window_bounds = array<i64: 1, 32>}, {pipeline_mode = #tpu.pipeline_mode<synchronous>, transform_indices = @transform_2, window_bounds = array<i64: 1, 32>}, {pipeline_mode = #tpu.pipeline_mode<synchronous>, transform_indices = @transform_3, window_bounds = array<i64: 32, 96>}, {pipeline_mode = #tpu.pipeline_mode<synchronous>, transform_indices = @transform_4, window_bounds = array<i64: 1, 96>}, {pipeline_mode = #tpu.pipeline_mode<synchronous>, transform_indices = @transform_5, window_bounds = array<i64: 32, 32, 32>}, {pipeline_mode = #tpu.pipeline_mode<synchronous>, transform_indices = @transform_6, window_bounds = array<i64: 32, 32>}, {pipeline_mode = #tpu.pipeline_mode<synchronous>, transform_indices = @transform_7, window_bounds = array<i64: 1, 32>}, {pipeline_mode = #tpu.pipeline_mode<synchronous>, transform_indices = @transform_8, window_bounds = array<i64: 1, 32>}, {pipeline_mode = #tpu.pipeline_mode<synchronous>, transform_indices = @transform_9, window_bounds = array<i64: 1, 32>}, {pipeline_mode = #tpu.pipeline_mode<synchronous>, transform_indices = @transform_10, window_bounds = array<i64: 32, 128>}, {pipeline_mode = #tpu.pipeline_mode<synchronous>, transform_indices = @transform_11, window_bounds = array<i64: 1, 128>}, {pipeline_mode = #tpu.pipeline_mode<synchronous>, transform_indices = @transform_12, window_bounds = array<i64: 128, 32>}, {pipeline_mode = #tpu.pipeline_mode<synchronous>, transform_indices = @transform_13, window_bounds = array<i64: 1, 32>}, {transform_indices = @transform_14, window_bounds = array<i64: 8, 32, 32>}]} {
    %c0 = arith.constant 0 : index
    %c0_0 = arith.constant 0 : index
    %c0_1 = arith.constant 0 : index
    %0 = vector.load %arg1[%c0, %c0_0, %c0_1] : memref<8x32x32xf32, #tpu.memory_space<vmem>>, vector<8x32x32xf32>
    %1 = vector.shape_cast %0 : vector<8x32x32xf32> to vector<256x32xf32>
    %cst = arith.constant dense<0.000000e+00> : vector<256xf32>
    %2 = vector.multi_reduction <add>, %1, %cst [1] : vector<256x32xf32> to vector<256xf32>
    %3 = vector.shape_cast %2 : vector<256xf32> to vector<256x1xf32>
    %cst_2 = arith.constant 3.200000e+01 : f32
    %4 = vector.broadcast %cst_2 : f32 to vector<256x1xf32>
    %5 = arith.divf %3, %4 : vector<256x1xf32>
    %6 = vector.broadcast %5 : vector<256x1xf32> to vector<256x32xf32>
    %7 = arith.subf %1, %6 : vector<256x32xf32>
    %8 = arith.mulf %7, %7 : vector<256x32xf32>
    %cst_3 = arith.constant dense<0.000000e+00> : vector<256xf32>
    %9 = vector.multi_reduction <add>, %8, %cst_3 [1] : vector<256x32xf32> to vector<256xf32>
    %10 = vector.shape_cast %9 : vector<256xf32> to vector<256x1xf32>
    %cst_4 = arith.constant 3.200000e+01 : f32
    %11 = vector.broadcast %cst_4 : f32 to vector<256x1xf32>
    %12 = arith.divf %10, %11 : vector<256x1xf32>
    %13 = vector.broadcast %5 : vector<256x1xf32> to vector<256x32xf32>
    %14 = arith.subf %1, %13 : vector<256x32xf32>
    %cst_5 = arith.constant 9.99999974E-6 : f32
    %15 = vector.broadcast %cst_5 : f32 to vector<256x1xf32>
    %16 = arith.addf %12, %15 : vector<256x1xf32>
    %17 = math.rsqrt %16 : vector<256x1xf32>
    %18 = vector.broadcast %17 : vector<256x1xf32> to vector<256x32xf32>
    %19 = arith.mulf %14, %18 : vector<256x32xf32>
    %c0_6 = arith.constant 0 : index
    %c0_7 = arith.constant 0 : index
    %20 = vector.load %arg2[%c0_6, %c0_7] : memref<1x32xf32, #tpu.memory_space<vmem>>, vector<1x32xf32>
    %21 = vector.broadcast %20 : vector<1x32xf32> to vector<256x32xf32>
    %22 = arith.mulf %19, %21 : vector<256x32xf32>
    %c0_8 = arith.constant 0 : index
    %c0_9 = arith.constant 0 : index
    %23 = vector.load %arg3[%c0_8, %c0_9] : memref<1x32xf32, #tpu.memory_space<vmem>>, vector<1x32xf32>
    %24 = vector.broadcast %23 : vector<1x32xf32> to vector<256x32xf32>
    %25 = arith.addf %22, %24 : vector<256x32xf32>
    %26 = arith.truncf %25 : vector<256x32xf32> to vector<256x32xbf16>
    %c0_10 = arith.constant 0 : index
    %c0_11 = arith.constant 0 : index
    %27 = vector.load %arg4[%c0_10, %c0_11] : memref<32x96xf32, #tpu.memory_space<vmem>>, vector<32x96xf32>
    %28 = arith.truncf %27 : vector<32x96xf32> to vector<32x96xbf16>
    %cst_12 = arith.constant dense<0.000000e+00> : vector<256x96xf32>
    %29 = tpu.matmul %26, %28, %cst_12 {dimension_numbers = #tpu.dot_dimension_numbers<[1], [0], [0], [1], [0, 0, 1, 1], [], []>} : vector<256x32xbf16>, vector<32x96xbf16>, vector<256x96xf32> -> vector<256x96xf32>
    %c0_13 = arith.constant 0 : index
    %c0_14 = arith.constant 0 : index
    %30 = vector.load %arg5[%c0_13, %c0_14] : memref<1x96xf32, #tpu.memory_space<vmem>>, vector<1x96xf32>
    %31 = vector.broadcast %30 : vector<1x96xf32> to vector<256x96xf32>
    %32 = arith.addf %29, %31 : vector<256x96xf32>
    %33 = vector.extract_strided_slice %32 {offsets = [0, 0], sizes = [256, 8], strides = [1, 1]} : vector<256x96xf32> to vector<256x8xf32>
    %34 = vector.shape_cast %33 : vector<256x8xf32> to vector<8x32x8xf32>
    %35 = vector.extract_strided_slice %32 {offsets = [0, 8], sizes = [256, 8], strides = [1, 1]} : vector<256x96xf32> to vector<256x8xf32>
    %36 = vector.shape_cast %35 : vector<256x8xf32> to vector<8x32x8xf32>
    %37 = vector.extract_strided_slice %32 {offsets = [0, 16], sizes = [256, 8], strides = [1, 1]} : vector<256x96xf32> to vector<256x8xf32>
    %38 = vector.shape_cast %37 : vector<256x8xf32> to vector<8x32x8xf32>
    %39 = vector.extract_strided_slice %32 {offsets = [0, 24], sizes = [256, 8], strides = [1, 1]} : vector<256x96xf32> to vector<256x8xf32>
    %40 = vector.shape_cast %39 : vector<256x8xf32> to vector<8x32x8xf32>
    %41 = tpu.concatenate %34, %36, %38, %40 in 0 : vector<8x32x8xf32>, vector<8x32x8xf32>, vector<8x32x8xf32>, vector<8x32x8xf32> -> vector<32x32x8xf32>
    %42 = vector.extract_strided_slice %32 {offsets = [0, 32], sizes = [256, 8], strides = [1, 1]} : vector<256x96xf32> to vector<256x8xf32>
    %43 = vector.shape_cast %42 : vector<256x8xf32> to vector<8x32x8xf32>
    %44 = vector.extract_strided_slice %32 {offsets = [0, 40], sizes = [256, 8], strides = [1, 1]} : vector<256x96xf32> to vector<256x8xf32>
    %45 = vector.shape_cast %44 : vector<256x8xf32> to vector<8x32x8xf32>
    %46 = vector.extract_strided_slice %32 {offsets = [0, 48], sizes = [256, 8], strides = [1, 1]} : vector<256x96xf32> to vector<256x8xf32>
    %47 = vector.shape_cast %46 : vector<256x8xf32> to vector<8x32x8xf32>
    %48 = vector.extract_strided_slice %32 {offsets = [0, 56], sizes = [256, 8], strides = [1, 1]} : vector<256x96xf32> to vector<256x8xf32>
    %49 = vector.shape_cast %48 : vector<256x8xf32> to vector<8x32x8xf32>
    %50 = tpu.concatenate %43, %45, %47, %49 in 0 : vector<8x32x8xf32>, vector<8x32x8xf32>, vector<8x32x8xf32>, vector<8x32x8xf32> -> vector<32x32x8xf32>
    %51 = vector.extract_strided_slice %32 {offsets = [0, 64], sizes = [256, 8], strides = [1, 1]} : vector<256x96xf32> to vector<256x8xf32>
    %52 = vector.shape_cast %51 : vector<256x8xf32> to vector<8x32x8xf32>
    %53 = vector.extract_strided_slice %32 {offsets = [0, 72], sizes = [256, 8], strides = [1, 1]} : vector<256x96xf32> to vector<256x8xf32>
    %54 = vector.shape_cast %53 : vector<256x8xf32> to vector<8x32x8xf32>
    %55 = vector.extract_strided_slice %32 {offsets = [0, 80], sizes = [256, 8], strides = [1, 1]} : vector<256x96xf32> to vector<256x8xf32>
    %56 = vector.shape_cast %55 : vector<256x8xf32> to vector<8x32x8xf32>
    %57 = vector.extract_strided_slice %32 {offsets = [0, 88], sizes = [256, 8], strides = [1, 1]} : vector<256x96xf32> to vector<256x8xf32>
    %58 = vector.shape_cast %57 : vector<256x8xf32> to vector<8x32x8xf32>
    %59 = tpu.concatenate %52, %54, %56, %58 in 0 : vector<8x32x8xf32>, vector<8x32x8xf32>, vector<8x32x8xf32>, vector<8x32x8xf32> -> vector<32x32x8xf32>
    %60 = arith.truncf %41 : vector<32x32x8xf32> to vector<32x32x8xbf16>
    %61 = arith.truncf %50 : vector<32x32x8xf32> to vector<32x32x8xbf16>
    "tpu.trace_start"() <{level = 10 : i32, message = "bld,bmd->blm"}> : () -> ()
    %cst_15 = arith.constant dense<0.000000e+00> : vector<32x32x32xf32>
    %62 = tpu.matmul %60, %61, %cst_15 {dimension_numbers = #tpu.dot_dimension_numbers<[2], [2], [1], [1], [0, 0, 0, 1, 1, 1], [0], [0]>} : vector<32x32x8xbf16>, vector<32x32x8xbf16>, vector<32x32x32xf32> -> vector<32x32x32xf32>
    "tpu.trace_stop"() : () -> ()
    %c0_16 = arith.constant 0 : index
    %c0_17 = arith.constant 0 : index
    %c0_18 = arith.constant 0 : index
    %63 = vector.load %arg6[%c0_16, %c0_17, %c0_18] : memref<32x32x32xf32, #tpu.memory_space<vmem>>, vector<32x32x32xf32>
    %64 = arith.addf %62, %63 : vector<32x32x32xf32>
    %cst_19 = arith.constant dense<0xFF800000> : vector<32x32xf32>
    %65 = vector.multi_reduction <maximumf>, %64, %cst_19 [2] : vector<32x32x32xf32> to vector<32x32xf32>
    %66 = vector.shape_cast %65 : vector<32x32xf32> to vector<32x32x1xf32>
    %67 = vector.broadcast %66 : vector<32x32x1xf32> to vector<32x32x32xf32>
    %68 = arith.subf %64, %67 : vector<32x32x32xf32>
    %69 = math.exp %68 : vector<32x32x32xf32>
    %cst_20 = arith.constant dense<0.000000e+00> : vector<32x32xf32>
    %70 = vector.multi_reduction <add>, %69, %cst_20 [2] : vector<32x32x32xf32> to vector<32x32xf32>
    %71 = vector.shape_cast %70 : vector<32x32xf32> to vector<32x32x1xf32>
    %72 = tpu.reciprocal %71 {approx = true} : vector<32x32x1xf32> -> vector<32x32x1xf32>
    %73 = arith.mulf %71, %72 : vector<32x32x1xf32>
    %cst_21 = arith.constant 2.000000e+00 : f32
    %74 = vector.broadcast %cst_21 : f32 to vector<32x32x1xf32>
    %75 = arith.subf %74, %73 : vector<32x32x1xf32>
    %76 = arith.mulf %72, %75 : vector<32x32x1xf32>
    %77 = vector.broadcast %76 : vector<32x32x1xf32> to vector<32x32x32xf32>
    %78 = arith.mulf %69, %77 : vector<32x32x32xf32>
    %79 = arith.truncf %78 : vector<32x32x32xf32> to vector<32x32x32xbf16>
    %80 = arith.truncf %59 : vector<32x32x8xf32> to vector<32x32x8xbf16>
    "tpu.trace_start"() <{level = 10 : i32, message = "blm,bmd->bld"}> : () -> ()
    %cst_22 = arith.constant dense<0.000000e+00> : vector<32x32x8xf32>
    %81 = tpu.matmul %79, %80, %cst_22 {dimension_numbers = #tpu.dot_dimension_numbers<[2], [1], [1], [2], [0, 0, 0, 1, 1, 2], [0], [0]>} : vector<32x32x32xbf16>, vector<32x32x8xbf16>, vector<32x32x8xf32> -> vector<32x32x8xf32>
    "tpu.trace_stop"() : () -> ()
    %82 = vector.extract_strided_slice %81 {offsets = [0, 0, 0], sizes = [8, 32, 8], strides = [1, 1, 1]} : vector<32x32x8xf32> to vector<8x32x8xf32>
    %83 = vector.extract_strided_slice %81 {offsets = [8, 0, 0], sizes = [8, 32, 8], strides = [1, 1, 1]} : vector<32x32x8xf32> to vector<8x32x8xf32>
    %84 = vector.extract_strided_slice %81 {offsets = [16, 0, 0], sizes = [8, 32, 8], strides = [1, 1, 1]} : vector<32x32x8xf32> to vector<8x32x8xf32>
    %85 = vector.extract_strided_slice %81 {offsets = [24, 0, 0], sizes = [8, 32, 8], strides = [1, 1, 1]} : vector<32x32x8xf32> to vector<8x32x8xf32>
    %86 = tpu.concatenate %82, %83, %84, %85 in 2 : vector<8x32x8xf32>, vector<8x32x8xf32>, vector<8x32x8xf32>, vector<8x32x8xf32> -> vector<8x32x32xf32>
    %87 = vector.shape_cast %86 : vector<8x32x32xf32> to vector<256x32xf32>
    %88 = arith.truncf %87 : vector<256x32xf32> to vector<256x32xbf16>
    %c0_23 = arith.constant 0 : index
    %c0_24 = arith.constant 0 : index
    %89 = vector.load %arg7[%c0_23, %c0_24] : memref<32x32xf32, #tpu.memory_space<vmem>>, vector<32x32xf32>
    %90 = arith.truncf %89 : vector<32x32xf32> to vector<32x32xbf16>
    %cst_25 = arith.constant dense<0.000000e+00> : vector<256x32xf32>
    %91 = tpu.matmul %88, %90, %cst_25 {dimension_numbers = #tpu.dot_dimension_numbers<[1], [0], [0], [1], [0, 0, 1, 1], [], []>} : vector<256x32xbf16>, vector<32x32xbf16>, vector<256x32xf32> -> vector<256x32xf32>
    %c0_26 = arith.constant 0 : index
    %c0_27 = arith.constant 0 : index
    %92 = vector.load %arg8[%c0_26, %c0_27] : memref<1x32xf32, #tpu.memory_space<vmem>>, vector<1x32xf32>
    %93 = vector.broadcast %92 : vector<1x32xf32> to vector<256x32xf32>
    %94 = arith.addf %91, %93 : vector<256x32xf32>
    %95 = arith.addf %1, %94 : vector<256x32xf32>
    %cst_28 = arith.constant dense<0.000000e+00> : vector<256xf32>
    %96 = vector.multi_reduction <add>, %95, %cst_28 [1] : vector<256x32xf32> to vector<256xf32>
    %97 = vector.shape_cast %96 : vector<256xf32> to vector<256x1xf32>
    %cst_29 = arith.constant 3.200000e+01 : f32
    %98 = vector.broadcast %cst_29 : f32 to vector<256x1xf32>
    %99 = arith.divf %97, %98 : vector<256x1xf32>
    %100 = vector.broadcast %99 : vector<256x1xf32> to vector<256x32xf32>
    %101 = arith.subf %95, %100 : vector<256x32xf32>
    %102 = arith.mulf %101, %101 : vector<256x32xf32>
    %cst_30 = arith.constant dense<0.000000e+00> : vector<256xf32>
    %103 = vector.multi_reduction <add>, %102, %cst_30 [1] : vector<256x32xf32> to vector<256xf32>
    %104 = vector.shape_cast %103 : vector<256xf32> to vector<256x1xf32>
    %cst_31 = arith.constant 3.200000e+01 : f32
    %105 = vector.broadcast %cst_31 : f32 to vector<256x1xf32>
    %106 = arith.divf %104, %105 : vector<256x1xf32>
    %107 = vector.broadcast %99 : vector<256x1xf32> to vector<256x32xf32>
    %108 = arith.subf %95, %107 : vector<256x32xf32>
    %cst_32 = arith.constant 9.99999974E-6 : f32
    %109 = vector.broadcast %cst_32 : f32 to vector<256x1xf32>
    %110 = arith.addf %106, %109 : vector<256x1xf32>
    %111 = math.rsqrt %110 : vector<256x1xf32>
    %112 = vector.broadcast %111 : vector<256x1xf32> to vector<256x32xf32>
    %113 = arith.mulf %108, %112 : vector<256x32xf32>
    %c0_33 = arith.constant 0 : index
    %c0_34 = arith.constant 0 : index
    %114 = vector.load %arg9[%c0_33, %c0_34] : memref<1x32xf32, #tpu.memory_space<vmem>>, vector<1x32xf32>
    %115 = vector.broadcast %114 : vector<1x32xf32> to vector<256x32xf32>
    %116 = arith.mulf %113, %115 : vector<256x32xf32>
    %c0_35 = arith.constant 0 : index
    %c0_36 = arith.constant 0 : index
    %117 = vector.load %arg10[%c0_35, %c0_36] : memref<1x32xf32, #tpu.memory_space<vmem>>, vector<1x32xf32>
    %118 = vector.broadcast %117 : vector<1x32xf32> to vector<256x32xf32>
    %119 = arith.addf %116, %118 : vector<256x32xf32>
    %120 = arith.truncf %119 : vector<256x32xf32> to vector<256x32xbf16>
    %c0_37 = arith.constant 0 : index
    %c0_38 = arith.constant 0 : index
    %121 = vector.load %arg11[%c0_37, %c0_38] : memref<32x128xf32, #tpu.memory_space<vmem>>, vector<32x128xf32>
    %122 = arith.truncf %121 : vector<32x128xf32> to vector<32x128xbf16>
    %cst_39 = arith.constant dense<0.000000e+00> : vector<256x128xf32>
    %123 = tpu.matmul %120, %122, %cst_39 {dimension_numbers = #tpu.dot_dimension_numbers<[1], [0], [0], [1], [0, 0, 1, 1], [], []>} : vector<256x32xbf16>, vector<32x128xbf16>, vector<256x128xf32> -> vector<256x128xf32>
    %c0_40 = arith.constant 0 : index
    %c0_41 = arith.constant 0 : index
    %124 = vector.load %arg12[%c0_40, %c0_41] : memref<1x128xf32, #tpu.memory_space<vmem>>, vector<1x128xf32>
    %125 = vector.broadcast %124 : vector<1x128xf32> to vector<256x128xf32>
    %126 = arith.addf %123, %125 : vector<256x128xf32>
    %cst_42 = arith.constant 5.000000e-01 : f32
    %127 = vector.broadcast %cst_42 : f32 to vector<256x128xf32>
    %128 = arith.mulf %127, %126 : vector<256x128xf32>
    %cst_43 = arith.constant 2.000000e+00 : f32
    %129 = math.sqrt %cst_43 : f32
    %130 = vector.broadcast %129 : f32 to vector<256x128xf32>
    %131 = arith.divf %126, %130 : vector<256x128xf32>
    %132 = math.erf %131 : vector<256x128xf32>
    %cst_44 = arith.constant 1.000000e+00 : f32
    %133 = vector.broadcast %cst_44 : f32 to vector<256x128xf32>
    %134 = arith.addf %133, %132 : vector<256x128xf32>
    %135 = arith.mulf %128, %134 : vector<256x128xf32>
    %136 = arith.truncf %135 : vector<256x128xf32> to vector<256x128xbf16>
    %c0_45 = arith.constant 0 : index
    %c0_46 = arith.constant 0 : index
    %137 = vector.load %arg13[%c0_45, %c0_46] : memref<128x32xf32, #tpu.memory_space<vmem>>, vector<128x32xf32>
    %138 = arith.truncf %137 : vector<128x32xf32> to vector<128x32xbf16>
    %cst_47 = arith.constant dense<0.000000e+00> : vector<256x32xf32>
    %139 = tpu.matmul %136, %138, %cst_47 {dimension_numbers = #tpu.dot_dimension_numbers<[1], [0], [0], [1], [0, 0, 1, 1], [], []>} : vector<256x128xbf16>, vector<128x32xbf16>, vector<256x32xf32> -> vector<256x32xf32>
    %c0_48 = arith.constant 0 : index
    %c0_49 = arith.constant 0 : index
    %140 = vector.load %arg14[%c0_48, %c0_49] : memref<1x32xf32, #tpu.memory_space<vmem>>, vector<1x32xf32>
    %141 = vector.broadcast %140 : vector<1x32xf32> to vector<256x32xf32>
    %142 = arith.addf %139, %141 : vector<256x32xf32>
    %143 = arith.addf %95, %142 : vector<256x32xf32>
    %144 = vector.shape_cast %143 : vector<256x32xf32> to vector<8x32x32xf32>
    %c0_50 = arith.constant 0 : index
    %c0_51 = arith.constant 0 : index
    %c0_52 = arith.constant 0 : index
    %145 = vector.load %arg15[%c0_50, %c0_51, %c0_52] : memref<8x32x32xf32, #tpu.memory_space<vmem>>, vector<8x32x32xf32>
    tpu.vector_store %arg15[%c0_50, %c0_51, %c0_52], %144 {strides = array<i32>} : memref<8x32x32xf32, #tpu.memory_space<vmem>>, vector<8x32x32xf32>,
    return
  }
  func.func @transform_0(%arg0: i32) -> (i32, i32, i32) {
    %c0_i32 = arith.constant 0 : i32
    %c0_i32_0 = arith.constant 0 : i32
    %c0_i32_1 = arith.constant 0 : i32
    return %arg0, %c0_i32, %c0_i32_0 : i32, i32, i32
  }
  func.func @transform_1(%arg0: i32) -> (i32, i32) {
    %c0_i32 = arith.constant 0 : i32
    %c0_i32_0 = arith.constant 0 : i32
    %c0_i32_1 = arith.constant 0 : i32
    return %c0_i32, %c0_i32_0 : i32, i32
  }
  func.func @transform_2(%arg0: i32) -> (i32, i32) {
    %c0_i32 = arith.constant 0 : i32
    %c0_i32_0 = arith.constant 0 : i32
    %c0_i32_1 = arith.constant 0 : i32
    return %c0_i32, %c0_i32_0 : i32, i32
  }
  func.func @transform_3(%arg0: i32) -> (i32, i32) {
    %c0_i32 = arith.constant 0 : i32
    %c0_i32_0 = arith.constant 0 : i32
    %c0_i32_1 = arith.constant 0 : i32
    return %c0_i32, %c0_i32_0 : i32, i32
  }
  func.func @transform_4(%arg0: i32) -> (i32, i32) {
    %c0_i32 = arith.constant 0 : i32
    %c0_i32_0 = arith.constant 0 : i32
    %c0_i32_1 = arith.constant 0 : i32
    return %c0_i32, %c0_i32_0 : i32, i32
  }
  func.func @transform_5(%arg0: i32) -> (i32, i32, i32) {
    %c0_i32 = arith.constant 0 : i32
    %c0_i32_0 = arith.constant 0 : i32
    %c0_i32_1 = arith.constant 0 : i32
    %c0_i32_2 = arith.constant 0 : i32
    return %c0_i32, %c0_i32_0, %c0_i32_1 : i32, i32, i32
  }
  func.func @transform_6(%arg0: i32) -> (i32, i32) {
    %c0_i32 = arith.constant 0 : i32
    %c0_i32_0 = arith.constant 0 : i32
    %c0_i32_1 = arith.constant 0 : i32
    return %c0_i32, %c0_i32_0 : i32, i32
  }
  func.func @transform_7(%arg0: i32) -> (i32, i32) {
    %c0_i32 = arith.constant 0 : i32
    %c0_i32_0 = arith.constant 0 : i32
    %c0_i32_1 = arith.constant 0 : i32
    return %c0_i32, %c0_i32_0 : i32, i32
  }
  func.func @transform_8(%arg0: i32) -> (i32, i32) {
    %c0_i32 = arith.constant 0 : i32
    %c0_i32_0 = arith.constant 0 : i32
    %c0_i32_1 = arith.constant 0 : i32
    return %c0_i32, %c0_i32_0 : i32, i32
  }
  func.func @transform_9(%arg0: i32) -> (i32, i32) {
    %c0_i32 = arith.constant 0 : i32
    %c0_i32_0 = arith.constant 0 : i32
    %c0_i32_1 = arith.constant 0 : i32
    return %c0_i32, %c0_i32_0 : i32, i32
  }
  func.func @transform_10(%arg0: i32) -> (i32, i32) {
    %c0_i32 = arith.constant 0 : i32
    %c0_i32_0 = arith.constant 0 : i32
    %c0_i32_1 = arith.constant 0 : i32
    return %c0_i32, %c0_i32_0 : i32, i32
  }
  func.func @transform_11(%arg0: i32) -> (i32, i32) {
    %c0_i32 = arith.constant 0 : i32
    %c0_i32_0 = arith.constant 0 : i32
    %c0_i32_1 = arith.constant 0 : i32
    return %c0_i32, %c0_i32_0 : i32, i32
  }
  func.func @transform_12(%arg0: i32) -> (i32, i32) {
    %c0_i32 = arith.constant 0 : i32
    %c0_i32_0 = arith.constant 0 : i32
    %c0_i32_1 = arith.constant 0 : i32
    return %c0_i32, %c0_i32_0 : i32, i32
  }
  func.func @transform_13(%arg0: i32) -> (i32, i32) {
    %c0_i32 = arith.constant 0 : i32
    %c0_i32_0 = arith.constant 0 : i32
    %c0_i32_1 = arith.constant 0 : i32
    return %c0_i32, %c0_i32_0 : i32, i32
  }
  func.func @transform_14(%arg0: i32) -> (i32, i32, i32) {
    %c0_i32 = arith.constant 0 : i32
    %c0_i32_0 = arith.constant 0 : i32
    %c0_i32_1 = arith.constant 0 : i32
    return %arg0, %c0_i32, %c0_i32_0 : i32, i32, i32
  }
}

</mosaic_0001>

<llo_original>
// kernel: _lambda_.1
$region0: #{_lambda_.1}
  #allocation0 [shape = 'u32[]', space=smem, size = 0x4, offset = 0x4, fixed_abs, tag = 'smem constant byte address 0x4 - core index']
  #allocation1 [shape = 'u32[72,128]{1,0:T(1,128)}', space=vmem, size = 0x9000, scoped, tag = 'internal scratch']
  %s0 = inlined_call_operand.vmem [shape: f32[16,32,32], index: 0, kind: input, shape index: {}]
  %s1 = inlined_call_operand.vmem [shape: f32[1,32], index: 1, kind: input, shape index: {}]
  %s2 = inlined_call_operand.vmem [shape: f32[1,32], index: 2, kind: input, shape index: {}]
  %s3 = inlined_call_operand.vmem [shape: f32[32,96], index: 3, kind: input, shape index: {}]
  %s4 = inlined_call_operand.vmem [shape: f32[1,96], index: 4, kind: input, shape index: {}]
  %s5 = inlined_call_operand.vmem [shape: f32[32,32,32], index: 5, kind: input, shape index: {}]
  %s6 = inlined_call_operand.vmem [shape: f32[32,32], index: 6, kind: input, shape index: {}]
  %s7 = inlined_call_operand.vmem [shape: f32[1,32], index: 7, kind: input, shape index: {}]
  %s8 = inlined_call_operand.vmem [shape: f32[1,32], index: 8, kind: input, shape index: {}]
  %s9 = inlined_call_operand.vmem [shape: f32[1,32], index: 9, kind: input, shape index: {}]
  %s10 = inlined_call_operand.vmem [shape: f32[32,128], index: 10, kind: input, shape index: {}]
  %s11 = inlined_call_operand.vmem [shape: f32[1,128], index: 11, kind: input, shape index: {}]
  %s12 = inlined_call_operand.vmem [shape: f32[128,32], index: 12, kind: input, shape index: {}]
  %s13 = inlined_call_operand.vmem [shape: f32[1,32], index: 13, kind: input, shape index: {}]
  %s14 = inlined_call_operand.vmem [shape: f32[16,32,32], index: 14, kind: output, shape index: {}]
  %s15 = sld [smem:[#allocation0]]
  $region89: #{_lambda_.1} parent=0
    _
  %s17 = ssub.s32 1, %s15
  %s18 = scalar_select 0, %s17, %s15
  loop: start=0, step=1, limit=4
  $region2: #{_lambda_.1} parent=0 // loop_pre_header
    _
  $region3: #{_lambda_.1} parent=0 // loop_header
    %s20 = sphi 0, %s24
    %p21 = scmp.ge.s32.totalorder %s20, 4
    %s30 = sphi 0, %s32
    %s33 = sphi 0, %s30
    %s34 = sphi 0, %s33
    %s50 = sphi 0, %s34
    %s54 = sphi 0, %s54
    %s56 = sphi 0, %s54
    %s57 = sphi 0, %s56
    %s71 = sphi 0, %s57
    %s75 = sphi 0, %s75
    %s77 = sphi 0, %s75
    %s78 = sphi 0, %s77
    %s92 = sphi 0, %s78
    %s96 = sphi 0, %s96
    %s98 = sphi 0, %s96
    %s99 = sphi 0, %s98
    %s113 = sphi 0, %s99
    %s117 = sphi 0, %s117
    %s119 = sphi 0, %s117
    %s120 = sphi 0, %s119
    %s134 = sphi 0, %s120
    %s138 = sphi 0, %s138
    %s140 = sphi 0, %s138
    %s141 = sphi 0, %s140
    %s155 = sphi 0, %s141
    %s159 = sphi 0, %s159
    %s161 = sphi 0, %s159
    %s162 = sphi 0, %s161
    %s176 = sphi 0, %s162
    %s180 = sphi 0, %s180
    %s182 = sphi 0, %s180
    %s183 = sphi 0, %s182
    %s197 = sphi 0, %s183
    %s201 = sphi 0, %s201
    %s203 = sphi 0, %s201
    %s204 = sphi 0, %s203
    %s218 = sphi 0, %s204
    %s222 = sphi 0, %s222
    %s224 = sphi 0, %s222
    %s225 = sphi 0, %s224
    %s239 = sphi 0, %s225
    %s243 = sphi 0, %s243
    %s245 = sphi 0, %s243
    %s246 = sphi 0, %s245
    %s260 = sphi 0, %s246
    %s264 = sphi 0, %s264
    %s266 = sphi 0, %s264
    %s267 = sphi 0, %s266
    %s281 = sphi 0, %s267
    %s285 = sphi 0, %s285
    %s287 = sphi 0, %s285
    %s288 = sphi 0, %s287
    %s302 = sphi 0, %s288
    %s306 = sphi 0, %s306
    %s308 = sphi 0, %s306
    %s309 = sphi 0, %s308
    %s323 = sphi 0, %s309
    %s329 = sphi 0, %s331
    %s332 = sphi 0, %s329
    %s333 = sphi 0, %s332
    %s349 = sphi 0, %s333
  $region4: #{_lambda_.1} parent=0 // loop_header_branch
    %23 = sbr.rel (%p21) target = $region8
  $region5: #{_lambda_.1} parent=0 // loop_body
    %s25 = ssub.s32 %s20, 1
    %s26 = ssub.s32 %s20, 2
    %s27 = sadd.s32 %s20, 1
    %s28 = ssub.s32 %s20, %s27
    %p29 = scmp.eq.s32.totalorder %s28, 0
    %s31 = sadd.s32 %s30, 1
    %s32 = scalar_select %p29, %s30, %s31
    %p35 = pneg %p29
    %p36 = scmp.eq.s32.totalorder %s20, 1
    %p37 = por %p35, %p36
    %p38 = scmp.ne.s32.totalorder %s30, %s33
    %p39 = scmp.eq.s32.totalorder %s20, 0
    %p40 = por %p38, %p39
    %p41 = scmp.ne.s32.totalorder %s30, %s33
    %p42 = scmp.eq.s32.totalorder %s25, 1
    %p43 = por %p41, %p42
    %p44 = scmp.ne.s32.totalorder %s33, %s34
    %p45 = scmp.eq.s32.totalorder %s25, 0
    %p46 = por %p44, %p45
    %p47 = scmp.ne.s32.totalorder %s33, %s34
    %p48 = scmp.eq.s32.totalorder %s26, 1
    %p49 = por %p47, %p48
    %p51 = scmp.ne.s32.totalorder %s34, %s50
    %p52 = scmp.eq.s32.totalorder %s26, 0
    %p53 = por %p51, %p52
    %s55 = sadd.s32 %s54, 1
    %p58 = scmp.eq.s32.totalorder %s20, 1
    %p59 = scmp.ne.s32.totalorder %s54, %s56
    %p60 = scmp.eq.s32.totalorder %s20, 0
    %p61 = por %p59, %p60
    %p62 = scmp.ne.s32.totalorder %s54, %s56
    %p63 = scmp.eq.s32.totalorder %s25, 1
    %p64 = por %p62, %p63
    %p65 = scmp.ne.s32.totalorder %s56, %s57
    %p66 = scmp.eq.s32.totalorder %s25, 0
    %p67 = por %p65, %p66
    %p68 = scmp.ne.s32.totalorder %s56, %s57
    %p69 = scmp.eq.s32.totalorder %s26, 1
    %p70 = por %p68, %p69
    %p72 = scmp.ne.s32.totalorder %s57, %s71
    %p73 = scmp.eq.s32.totalorder %s26, 0
    %p74 = por %p72, %p73
    %s76 = sadd.s32 %s75, 1
    %p79 = scmp.eq.s32.totalorder %s20, 1
    %p80 = scmp.ne.s32.totalorder %s75, %s77
    %p81 = scmp.eq.s32.totalorder %s20, 0
    %p82 = por %p80, %p81
    %p83 = scmp.ne.s32.totalorder %s75, %s77
    %p84 = scmp.eq.s32.totalorder %s25, 1
    %p85 = por %p83, %p84
    %p86 = scmp.ne.s32.totalorder %s77, %s78
    %p87 = scmp.eq.s32.totalorder %s25, 0
    %p88 = por %p86, %p87
    %p89 = scmp.ne.s32.totalorder %s77, %s78
    %p90 = scmp.eq.s32.totalorder %s26, 1
    %p91 = por %p89, %p90
    %p93 = scmp.ne.s32.totalorder %s78, %s92
    %p94 = scmp.eq.s32.totalorder %s26, 0
    %p95 = por %p93, %p94
    %s97 = sadd.s32 %s96, 1
    %p100 = scmp.eq.s32.totalorder %s20, 1
    %p101 = scmp.ne.s32.totalorder %s96, %s98
    %p102 = scmp.eq.s32.totalorder %s20, 0
    %p103 = por %p101, %p102
    %p104 = scmp.ne.s32.totalorder %s96, %s98
    %p105 = scmp.eq.s32.totalorder %s25, 1
    %p106 = por %p104, %p105
    %p107 = scmp.ne.s32.totalorder %s98, %s99
    %p108 = scmp.eq.s32.totalorder %s25, 0
    %p109 = por %p107, %p108
    %p110 = scmp.ne.s32.totalorder %s98, %s99
    %p111 = scmp.eq.s32.totalorder %s26, 1
    %p112 = por %p110, %p111
    %p114 = scmp.ne.s32.totalorder %s99, %s113
    %p115 = scmp.eq.s32.totalorder %s26, 0
    %p116 = por %p114, %p115
    %s118 = sadd.s32 %s117, 1
    %p121 = scmp.eq.s32.totalorder %s20, 1
    %p122 = scmp.ne.s32.totalorder %s117, %s119
    %p123 = scmp.eq.s32.totalorder %s20, 0
    %p124 = por %p122, %p123
    %p125 = scmp.ne.s32.totalorder %s117, %s119
    %p126 = scmp.eq.s32.totalorder %s25, 1
    %p127 = por %p125, %p126
    %p128 = scmp.ne.s32.totalorder %s119, %s120
    %p129 = scmp.eq.s32.totalorder %s25, 0
    %p130 = por %p128, %p129
    %p131 = scmp.ne.s32.totalorder %s119, %s120
    %p132 = scmp.eq.s32.totalorder %s26, 1
    %p133 = por %p131, %p132
    %p135 = scmp.ne.s32.totalorder %s120, %s134
    %p136 = scmp.eq.s32.totalorder %s26, 0
    %p137 = por %p135, %p136
    %s139 = sadd.s32 %s138, 1
    %p142 = scmp.eq.s32.totalorder %s20, 1
    %p143 = scmp.ne.s32.totalorder %s138, %s140
    %p144 = scmp.eq.s32.totalorder %s20, 0
    %p145 = por %p143, %p144
    %p146 = scmp.ne.s32.totalorder %s138, %s140
    %p147 = scmp.eq.s32.totalorder %s25, 1
    %p148 = por %p146, %p147
    %p149 = scmp.ne.s32.totalorder %s140, %s141
    %p150 = scmp.eq.s32.totalorder %s25, 0
    %p151 = por %p149, %p150
    %p152 = scmp.ne.s32.totalorder %s140, %s141
    %p153 = scmp.eq.s32.totalorder %s26, 1
    %p154 = por %p152, %p153
    %p156 = scmp.ne.s32.totalorder %s141, %s155
    %p157 = scmp.eq.s32.totalorder %s26, 0
    %p158 = por %p156, %p157
    %s160 = sadd.s32 %s159, 1
    %p163 = scmp.eq.s32.totalorder %s20, 1
    %p164 = scmp.ne.s32.totalorder %s159, %s161
    %p165 = scmp.eq.s32.totalorder %s20, 0
    %p166 = por %p164, %p165
    %p167 = scmp.ne.s32.totalorder %s159, %s161
    %p168 = scmp.eq.s32.totalorder %s25, 1
    %p169 = por %p167, %p168
    %p170 = scmp.ne.s32.totalorder %s161, %s162
    %p171 = scmp.eq.s32.totalorder %s25, 0
    %p172 = por %p170, %p171
    %p173 = scmp.ne.s32.totalorder %s161, %s162
    %p174 = scmp.eq.s32.totalorder %s26, 1
    %p175 = por %p173, %p174
    %p177 = scmp.ne.s32.totalorder %s162, %s176
    %p178 = scmp.eq.s32.totalorder %s26, 0
    %p179 = por %p177, %p178
    %s181 = sadd.s32 %s180, 1
    %p184 = scmp.eq.s32.totalorder %s20, 1
    %p185 = scmp.ne.s32.totalorder %s180, %s182
    %p186 = scmp.eq.s32.totalorder %s20, 0
    %p187 = por %p185, %p186
    %p188 = scmp.ne.s32.totalorder %s180, %s182
    %p189 = scmp.eq.s32.totalorder %s25, 1
    %p190 = por %p188, %p189
    %p191 = scmp.ne.s32.totalorder %s182, %s183
    %p192 = scmp.eq.s32.totalorder %s25, 0
    %p193 = por %p191, %p192
    %p194 = scmp.ne.s32.totalorder %s182, %s183
    %p195 = scmp.eq.s32.totalorder %s26, 1
    %p196 = por %p194, %p195
    %p198 = scmp.ne.s32.totalorder %s183, %s197
    %p199 = scmp.eq.s32.totalorder %s26, 0
    %p200 = por %p198, %p199
    %s202 = sadd.s32 %s201, 1
    %p205 = scmp.eq.s32.totalorder %s20, 1
    %p206 = scmp.ne.s32.totalorder %s201, %s203
    %p207 = scmp.eq.s32.totalorder %s20, 0
    %p208 = por %p206, %p207
    %p209 = scmp.ne.s32.totalorder %s201, %s203
    %p210 = scmp.eq.s32.totalorder %s25, 1
    %p211 = por %p209, %p210
    %p212 = scmp.ne.s32.totalorder %s203, %s204
    %p213 = scmp.eq.s32.totalorder %s25, 0
    %p214 = por %p212, %p213
    %p215 = scmp.ne.s32.totalorder %s203, %s204
    %p216 = scmp.eq.s32.totalorder %s26, 1
    %p217 = por %p215, %p216
    %p219 = scmp.ne.s32.totalorder %s204, %s218
    %p220 = scmp.eq.s32.totalorder %s26, 0
    %p221 = por %p219, %p220
    %s223 = sadd.s32 %s222, 1
    %p226 = scmp.eq.s32.totalorder %s20, 1
    %p227 = scmp.ne.s32.totalorder %s222, %s224
    %p228 = scmp.eq.s32.totalorder %s20, 0
    %p229 = por %p227, %p228
    %p230 = scmp.ne.s32.totalorder %s222, %s224
    %p231 = scmp.eq.s32.totalorder %s25, 1
    %p232 = por %p230, %p231
    %p233 = scmp.ne.s32.totalorder %s224, %s225
    %p234 = scmp.eq.s32.totalorder %s25, 0
    %p235 = por %p233, %p234
    %p236 = scmp.ne.s32.totalorder %s224, %s225
    %p237 = scmp.eq.s32.totalorder %s26, 1
    %p238 = por %p236, %p237
    %p240 = scmp.ne.s32.totalorder %s225, %s239
    %p241 = scmp.eq.s32.totalorder %s26, 0
    %p242 = por %p240, %p241
    %s244 = sadd.s32 %s243, 1
    %p247 = scmp.eq.s32.totalorder %s20, 1
    %p248 = scmp.ne.s32.totalorder %s243, %s245
    %p249 = scmp.eq.s32.totalorder %s20, 0
    %p250 = por %p248, %p249
    %p251 = scmp.ne.s32.totalorder %s243, %s245
    %p252 = scmp.eq.s32.totalorder %s25, 1
    %p253 = por %p251, %p252
    %p254 = scmp.ne.s32.totalorder %s245, %s246
    %p255 = scmp.eq.s32.totalorder %s25, 0
    %p256 = por %p254, %p255
    %p257 = scmp.ne.s32.totalorder %s245, %s246
    %p258 = scmp.eq.s32.totalorder %s26, 1
    %p259 = por %p257, %p258
    %p261 = scmp.ne.s32.totalorder %s246, %s260
    %p262 = scmp.eq.s32.totalorder %s26, 0
    %p263 = por %p261, %p262
    %s265 = sadd.s32 %s264, 1
    %p268 = scmp.eq.s32.totalorder %s20, 1
    %p269 = scmp.ne.s32.totalorder %s264, %s266
    %p270 = scmp.eq.s32.totalorder %s20, 0
    %p271 = por %p269, %p270
    %p272 = scmp.ne.s32.totalorder %s264, %s266
    %p273 = scmp.eq.s32.totalorder %s25, 1
    %p274 = por %p272, %p273
    %p275 = scmp.ne.s32.totalorder %s266, %s267
    %p276 = scmp.eq.s32.totalorder %s25, 0
    %p277 = por %p275, %p276
    %p278 = scmp.ne.s32.totalorder %s266, %s267
    %p279 = scmp.eq.s32.totalorder %s26, 1
    %p280 = por %p278, %p279
    %p282 = scmp.ne.s32.totalorder %s267, %s281
    %p283 = scmp.eq.s32.totalorder %s26, 0
    %p284 = por %p282, %p283
    %s286 = sadd.s32 %s285, 1
    %p289 = scmp.eq.s32.totalorder %s20, 1
    %p290 = scmp.ne.s32.totalorder %s285, %s287
    %p291 = scmp.eq.s32.totalorder %s20, 0
    %p292 = por %p290, %p291
    %p293 = scmp.ne.s32.totalorder %s285, %s287
    %p294 = scmp.eq.s32.totalorder %s25, 1
    %p295 = por %p293, %p294
    %p296 = scmp.ne.s32.totalorder %s287, %s288
    %p297 = scmp.eq.s32.totalorder %s25, 0
    %p298 = por %p296, %p297
    %p299 = scmp.ne.s32.totalorder %s287, %s288
    %p300 = scmp.eq.s32.totalorder %s26, 1
    %p301 = por %p299, %p300
    %p303 = scmp.ne.s32.totalorder %s288, %s302
    %p304 = scmp.eq.s32.totalorder %s26, 0
    %p305 = por %p303, %p304
    %s307 = sadd.s32 %s306, 1
    %p310 = scmp.eq.s32.totalorder %s20, 1
    %p311 = scmp.ne.s32.totalorder %s306, %s308
    %p312 = scmp.eq.s32.totalorder %s20, 0
    %p313 = por %p311, %p312
    %p314 = scmp.ne.s32.totalorder %s306, %s308
    %p315 = scmp.eq.s32.totalorder %s25, 1
    %p316 = por %p314, %p315
    %p317 = scmp.ne.s32.totalorder %s308, %s309
    %p318 = scmp.eq.s32.totalorder %s25, 0
    %p319 = por %p317, %p318
    %p320 = scmp.ne.s32.totalorder %s308, %s309
    %p321 = scmp.eq.s32.totalorder %s26, 1
    %p322 = por %p320, %p321
    %p324 = scmp.ne.s32.totalorder %s309, %s323
    %p325 = scmp.eq.s32.totalorder %s26, 0
    %p326 = por %p324, %p325
    %s327 = ssub.s32 %s20, %s27
    %p328 = scmp.eq.s32.totalorder %s327, 0
    %s330 = sadd.s32 %s329, 1
    %s331 = scalar_select %p328, %s329, %s330
    %p334 = pneg %p328
    %p335 = scmp.eq.s32.totalorder %s20, 1
    %p336 = por %p334, %p335
    %p337 = scmp.ne.s32.totalorder %s329, %s332
    %p338 = scmp.eq.s32.totalorder %s20, 0
    %p339 = por %p337, %p338
    %p340 = scmp.ne.s32.totalorder %s329, %s332
    %p341 = scmp.eq.s32.totalorder %s25, 1
    %p342 = por %p340, %p341
    %p343 = scmp.ne.s32.totalorder %s332, %s333
    %p344 = scmp.eq.s32.totalorder %s25, 0
    %p345 = por %p343, %p344
    %p346 = scmp.ne.s32.totalorder %s332, %s333
    %p347 = scmp.eq.s32.totalorder %s26, 1
    %p348 = por %p346, %p347
    %p350 = scmp.ne.s32.totalorder %s333, %s349
    %p351 = scmp.eq.s32.totalorder %s26, 0
    %p352 = por %p350, %p351
    %p353 = scmp.le.s32.totalorder 1, %s20
    %p354 = scmp.lt.s32.totalorder %s20, 3
    %p355 = pnand %p353, %p354
    %p356 = pneg %p355
    // Predicated region
    $region9: #{_lambda_.1} parent=5 // pred_check
      _
    $region10: #{_lambda_.1} parent=5 // pred_check_branch
      %358 = sbr.rel (%p355) target = $region12
    $region11: #{_lambda_.1} parent=5 // pred_region
      %s359 = ssub.s32 %s20, 1
      // Predicated region
      $region13: #{_lambda_.1} parent=11 // pred_check
        %p360 = pneg %p67
      $region14: #{_lambda_.1} parent=11 // pred_check_branch
        %362 = sbr.rel (%p360) target = $region16
      $region15: #{_lambda_.1} parent=11 // pred_region
        _
      $region16: #{_lambda_.1} parent=11 // pred_fallthru
        _
      // Predicated region
      $region17: #{_lambda_.1} parent=11 // pred_check
        %p363 = pneg %p88
      $region18: #{_lambda_.1} parent=11 // pred_check_branch
        %365 = sbr.rel (%p363) target = $region20
      $region19: #{_lambda_.1} parent=11 // pred_region
        _
      $region20: #{_lambda_.1} parent=11 // pred_fallthru
        _
      // Predicated region
      $region21: #{_lambda_.1} parent=11 // pred_check
        %p366 = pneg %p109
      $region22: #{_lambda_.1} parent=11 // pred_check_branch
        %368 = sbr.rel (%p366) target = $region24
      $region23: #{_lambda_.1} parent=11 // pred_region
        _
      $region24: #{_lambda_.1} parent=11 // pred_fallthru
        _
      // Predicated region
      $region25: #{_lambda_.1} parent=11 // pred_check
        %p369 = pneg %p130
      $region26: #{_lambda_.1} parent=11 // pred_check_branch
        %371 = sbr.rel (%p369) target = $region28
      $region27: #{_lambda_.1} parent=11 // pred_region
        _
      $region28: #{_lambda_.1} parent=11 // pred_fallthru
        _
      // Predicated region
      $region29: #{_lambda_.1} parent=11 // pred_check
        %p372 = pneg %p151
      $region30: #{_lambda_.1} parent=11 // pred_check_branch
        %374 = sbr.rel (%p372) target = $region32
      $region31: #{_lambda_.1} parent=11 // pred_region
        _
      $region32: #{_lambda_.1} parent=11 // pred_fallthru
        _
      // Predicated region
      $region33: #{_lambda_.1} parent=11 // pred_check
        %p375 = pneg %p172
      $region34: #{_lambda_.1} parent=11 // pred_check_branch
        %377 = sbr.rel (%p375) target = $region36
      $region35: #{_lambda_.1} parent=11 // pred_region
        _
      $region36: #{_lambda_.1} parent=11 // pred_fallthru
        _
      // Predicated region
      $region37: #{_lambda_.1} parent=11 // pred_check
        %p378 = pneg %p193
      $region38: #{_lambda_.1} parent=11 // pred_check_branch
        %380 = sbr.rel (%p378) target = $region40
      $region39: #{_lambda_.1} parent=11 // pred_region
        _
      $region40: #{_lambda_.1} parent=11 // pred_fallthru
        _
      // Predicated region
      $region41: #{_lambda_.1} parent=11 // pred_check
        %p381 = pneg %p214
      $region42: #{_lambda_.1} parent=11 // pred_check_branch
        %383 = sbr.rel (%p381) target = $region44
      $region43: #{_lambda_.1} parent=11 // pred_region
        _
      $region44: #{_lambda_.1} parent=11 // pred_fallthru
        _
      // Predicated region
      $region45: #{_lambda_.1} parent=11 // pred_check
        %p384 = pneg %p235
      $region46: #{_lambda_.1} parent=11 // pred_check_branch
        %386 = sbr.rel (%p384) target = $region48
      $region47: #{_lambda_.1} parent=11 // pred_region
        _
      $region48: #{_lambda_.1} parent=11 // pred_fallthru
        _
      // Predicated region
      $region49: #{_lambda_.1} parent=11 // pred_check
        %p387 = pneg %p256
      $region50: #{_lambda_.1} parent=11 // pred_check_branch
        %389 = sbr.rel (%p387) target = $region52
      $region51: #{_lambda_.1} parent=11 // pred_region
        _
      $region52: #{_lambda_.1} parent=11 // pred_fallthru
        _
      // Predicated region
      $region53: #{_lambda_.1} parent=11 // pred_check
        %p390 = pneg %p277
      $region54: #{_lambda_.1} parent=11 // pred_check_branch
        %392 = sbr.rel (%p390) target = $region56
      $region55: #{_lambda_.1} parent=11 // pred_region
        _
      $region56: #{_lambda_.1} parent=11 // pred_fallthru
        _
      // Predicated region
      $region57: #{_lambda_.1} parent=11 // pred_check
        %p393 = pneg %p298
      $region58: #{_lambda_.1} parent=11 // pred_check_branch
        %395 = sbr.rel (%p393) target = $region60
      $region59: #{_lambda_.1} parent=11 // pred_region
        _
      $region60: #{_lambda_.1} parent=11 // pred_fallthru
        _
      // Predicated region
      $region61: #{_lambda_.1} parent=11 // pred_check
        %p396 = pneg %p319
      $region62: #{_lambda_.1} parent=11 // pred_check_branch
        %398 = sbr.rel (%p396) target = $region64
      $region63: #{_lambda_.1} parent=11 // pred_region
        _
      $region64: #{_lambda_.1} parent=11 // pred_fallthru
        _
    $region12: #{_lambda_.1} parent=5 // pred_fallthru
      _
    %p399 = scmp.lt.s32.totalorder %s20, 2
    // Predicated region
    $region65: #{_lambda_.1} parent=5 // pred_check
      %p400 = pneg %p399
    $region66: #{_lambda_.1} parent=5 // pred_check_branch
      %402 = sbr.rel (%p400) target = $region68
    $region67: #{_lambda_.1} parent=5 // pred_region
      // Predicated region
      $region69: #{_lambda_.1} parent=67 // pred_check
        %p403 = pneg %p40
      $region70: #{_lambda_.1} parent=67 // pred_check_branch
        %405 = sbr.rel (%p403) target = $region72
      $region71: #{_lambda_.1} parent=67 // pred_region
        %s406 = smul.u32 8, %s20
        %p407 = scmp.lt.s32.totalorder %s406, 15
        %s408 = scalar_select %p407, %s406, 15
        %s409 = smul.addr %s408, 4
        %s410 = smul.addr %s409, 8
        %s411 = scalar_lea.vmem %s0, %s410
        %s412 = smul.u32 8, %s20
      $region72: #{_lambda_.1} parent=67 // pred_fallthru
        _
    $region68: #{_lambda_.1} parent=5 // pred_fallthru
      _
    %p413 = scmp.le.s32.totalorder 1, %s20
    %p414 = scmp.lt.s32.totalorder %s20, 3
    %p415 = pnand %p413, %p414
    %p416 = pneg %p415
    // Predicated region
    $region73: #{_lambda_.1} parent=5 // pred_check
      _
    $region74: #{_lambda_.1} parent=5 // pred_check_branch
      %418 = sbr.rel (%p415) target = $region76
    $region75: #{_lambda_.1} parent=5 // pred_region
      %s419 = ssub.s32 %s20, 1
      %s420 = smul.u32 8, %s25
      %p421 = scmp.lt.s32.totalorder %s420, 15
      %s422 = scalar_select %p421, %s420, 15
      %s423 = smul.addr %s422, 4
      %s424 = smul.addr %s423, 8
      %s425 = scalar_lea.vmem %s0, %s424
      %p426 = pneg %p46
      %p427 = pneg %p43
      %p428 = pneg %p67
      %p429 = pneg %p64
      %p430 = pneg %p88
      %p431 = pneg %p85
      %p432 = pneg %p109
      %p433 = pneg %p106
      %p434 = pneg %p130
      %p435 = pneg %p127
      %p436 = pneg %p151
      %p437 = pneg %p148
      %p438 = pneg %p172
      %p439 = pneg %p169
      %p440 = pneg %p193
      %p441 = pneg %p190
      %p442 = pneg %p214
      %p443 = pneg %p211
      %p444 = pneg %p235
      %p445 = pneg %p232
      %p446 = pneg %p256
      %p447 = pneg %p253
      %p448 = pneg %p277
      %p449 = pneg %p274
      %p450 = pneg %p298
      %p451 = pneg %p295
      %p452 = pneg %p319
      %p453 = pneg %p316
      %p454 = pneg %p345
      %p455 = pneg %p342
      %s456 = smul.u32 8, %s25
      %p457 = scmp.lt.s32.totalorder %s456, 15
      %s458 = scalar_select %p457, %s456, 15
      %s459 = smul.addr %s458, 4
      %s460 = smul.addr %s459, 8
      %s461 = scalar_lea.vmem %s14, %s460
      %s462 = smul.u32 8, %s25
      %p463 = scmp.lt.s32.totalorder %s462, 15
      %s464 = scalar_select %p463, %s462, 15
      %s465 = smul.addr %s464, 4
      %s466 = smul.addr %s465, 8
      %s467 = scalar_lea.vmem %s0, %s466
      %s468 = smul.u32 8, %s25
      %s469 = smul.u32 8, %s25
      %p470 = scmp.lt.s32.totalorder %s469, 15
      %s471 = scalar_select %p470, %s469, 15
      %s472 = smul.addr %s471, 4
      %s473 = smul.addr %s472, 8
      %s474 = scalar_lea.vmem %s14, %s473
      %s475 = smul.u32 8, %s25
      %v477 = vld [vmem:[%s467] sm:$0xff]
      %v478 = vld [vmem:[%s467 + $0x8] sm:$0xff]
      %v479 = vld [vmem:[%s467 + $0x10] sm:$0xff]
      %v480 = vld [vmem:[%s467 + $0x18] sm:$0xff]
      %v481 = vld [vmem:[%s467 + $0x20] sm:$0xff]
      %v482 = vld [vmem:[%s467 + $0x28] sm:$0xff]
      %v483 = vld [vmem:[%s467 + $0x30] sm:$0xff]
      %v484 = vld [vmem:[%s467 + $0x38] sm:$0xff]
      %v485 = vld [vmem:[%s467 + $0x40] sm:$0xff]
      %v486 = vld [vmem:[%s467 + $0x48] sm:$0xff]
      %v487 = vld [vmem:[%s467 + $0x50] sm:$0xff]
      %v488 = vld [vmem:[%s467 + $0x58] sm:$0xff]
      %v489 = vld [vmem:[%s467 + $0x60] sm:$0xff]
      %v490 = vld [vmem:[%s467 + $0x68] sm:$0xff]
      %v491 = vld [vmem:[%s467 + $0x70] sm:$0xff]
      %v492 = vld [vmem:[%s467 + $0x78] sm:$0xff]
      %v493 = vld [vmem:[%s467 + $0x80] sm:$0xff]
      %v494 = vld [vmem:[%s467 + $0x88] sm:$0xff]
      %v495 = vld [vmem:[%s467 + $0x90] sm:$0xff]
      %v496 = vld [vmem:[%s467 + $0x98] sm:$0xff]
      %v497 = vld [vmem:[%s467 + $0xa0] sm:$0xff]
      %v498 = vld [vmem:[%s467 + $0xa8] sm:$0xff]
      %v499 = vld [vmem:[%s467 + $0xb0] sm:$0xff]
      %v500 = vld [vmem:[%s467 + $0xb8] sm:$0xff]
      %v501 = vld [vmem:[%s467 + $0xc0] sm:$0xff]
      %v502 = vld [vmem:[%s467 + $0xc8] sm:$0xff]
      %v503 = vld [vmem:[%s467 + $0xd0] sm:$0xff]
      %v504 = vld [vmem:[%s467 + $0xd8] sm:$0xff]
      %v505 = vld [vmem:[%s467 + $0xe0] sm:$0xff]
      %v506 = vld [vmem:[%s467 + $0xe8] sm:$0xff]
      %v507 = vld [vmem:[%s467 + $0xf0] sm:$0xff]
      %v508 = vld [vmem:[%s467 + $0xf8] sm:$0xff]
      %vm509 = vcmask 261120
      %v510 = vsel %vm509, %v477, 0.0
      %511 = vadd.xlane.f32.xlu0 %v510
      %v512 = vpop.xlane.xlu0 %511
      %v513 = vsel %vm509, %v478, 0.0
      %514 = vadd.xlane.f32.xlu0 %v513
      %v515 = vpop.xlane.xlu0 %514
      %v516 = vsel %vm509, %v479, 0.0
      %517 = vadd.xlane.f32.xlu0 %v516
      %v518 = vpop.xlane.xlu0 %517
      %v519 = vsel %vm509, %v480, 0.0
      %520 = vadd.xlane.f32.xlu0 %v519
      %v521 = vpop.xlane.xlu0 %520
      %v522 = vsel %vm509, %v481, 0.0
      %523 = vadd.xlane.f32.xlu0 %v522
      %v524 = vpop.xlane.xlu0 %523
      %v525 = vsel %vm509, %v482, 0.0
      %526 = vadd.xlane.f32.xlu0 %v525
      %v527 = vpop.xlane.xlu0 %526
      %v528 = vsel %vm509, %v483, 0.0
      %529 = vadd.xlane.f32.xlu0 %v528
      %v530 = vpop.xlane.xlu0 %529
      %v531 = vsel %vm509, %v484, 0.0
      %532 = vadd.xlane.f32.xlu0 %v531
      %v533 = vpop.xlane.xlu0 %532
      %v534 = vsel %vm509, %v485, 0.0
      %535 = vadd.xlane.f32.xlu0 %v534
      %v536 = vpop.xlane.xlu0 %535
      %v537 = vsel %vm509, %v486, 0.0
      %538 = vadd.xlane.f32.xlu0 %v537
      %v539 = vpop.xlane.xlu0 %538
      %v540 = vsel %vm509, %v487, 0.0
      %541 = vadd.xlane.f32.xlu0 %v540
      %v542 = vpop.xlane.xlu0 %541
      %v543 = vsel %vm509, %v488, 0.0
      %544 = vadd.xlane.f32.xlu0 %v543
      %v545 = vpop.xlane.xlu0 %544
      %v546 = vsel %vm509, %v489, 0.0
      %547 = vadd.xlane.f32.xlu0 %v546
      %v548 = vpop.xlane.xlu0 %547
      %v549 = vsel %vm509, %v490, 0.0
      %550 = vadd.xlane.f32.xlu0 %v549
      %v551 = vpop.xlane.xlu0 %550
      %v552 = vsel %vm509, %v491, 0.0
      %553 = vadd.xlane.f32.xlu0 %v552
      %v554 = vpop.xlane.xlu0 %553
      %v555 = vsel %vm509, %v492, 0.0
      %556 = vadd.xlane.f32.xlu0 %v555
      %v557 = vpop.xlane.xlu0 %556
      %v558 = vsel %vm509, %v493, 0.0
      %559 = vadd.xlane.f32.xlu0 %v558
      %v560 = vpop.xlane.xlu0 %559
      %v561 = vsel %vm509, %v494, 0.0
      %562 = vadd.xlane.f32.xlu0 %v561
      %v563 = vpop.xlane.xlu0 %562
      %v564 = vsel %vm509, %v495, 0.0
      %565 = vadd.xlane.f32.xlu0 %v564
      %v566 = vpop.xlane.xlu0 %565
      %v567 = vsel %vm509, %v496, 0.0
      %568 = vadd.xlane.f32.xlu0 %v567
      %v569 = vpop.xlane.xlu0 %568
      %v570 = vsel %vm509, %v497, 0.0
      %571 = vadd.xlane.f32.xlu0 %v570
      %v572 = vpop.xlane.xlu0 %571
      %v573 = vsel %vm509, %v498, 0.0
      %574 = vadd.xlane.f32.xlu0 %v573
      %v575 = vpop.xlane.xlu0 %574
      %v576 = vsel %vm509, %v499, 0.0
      %577 = vadd.xlane.f32.xlu0 %v576
      %v578 = vpop.xlane.xlu0 %577
      %v579 = vsel %vm509, %v500, 0.0
      %580 = vadd.xlane.f32.xlu0 %v579
      %v581 = vpop.xlane.xlu0 %580
      %v582 = vsel %vm509, %v501, 0.0
      %583 = vadd.xlane.f32.xlu0 %v582
      %v584 = vpop.xlane.xlu0 %583
      %v585 = vsel %vm509, %v502, 0.0
      %586 = vadd.xlane.f32.xlu0 %v585
      %v587 = vpop.xlane.xlu0 %586
      %v588 = vsel %vm509, %v503, 0.0
      %589 = vadd.xlane.f32.xlu0 %v588
      %v590 = vpop.xlane.xlu0 %589
      %v591 = vsel %vm509, %v504, 0.0
      %592 = vadd.xlane.f32.xlu0 %v591
      %v593 = vpop.xlane.xlu0 %592
      %v594 = vsel %vm509, %v505, 0.0
      %595 = vadd.xlane.f32.xlu0 %v594
      %v596 = vpop.xlane.xlu0 %595
      %v597 = vsel %vm509, %v506, 0.0
      %598 = vadd.xlane.f32.xlu0 %v597
      %v599 = vpop.xlane.xlu0 %598
      %v600 = vsel %vm509, %v507, 0.0
      %601 = vadd.xlane.f32.xlu0 %v600
      %v602 = vpop.xlane.xlu0 %601
      %v603 = vsel %vm509, %v508, 0.0
      %604 = vadd.xlane.f32.xlu0 %v603
      %v605 = vpop.xlane.xlu0 %604
      %v606 = vrcp.pop 32.0
      %v607 = vmul.f32 32.0, %v606
      %v608 = vsub.f32 1.0, %v607
      %v609 = vmul.f32 %v606, %v608
      %v610 = vadd.f32 %v606, %v609
      %vm611 = vweird.f32 %v606
      %v612 = vsel %vm611, %v606, %v610
      %v613 = vmul.f32 %v512, %v612
      %v614 = vmul.f32 %v515, %v612
      %v615 = vmul.f32 %v518, %v612
      %v616 = vmul.f32 %v521, %v612
      %v617 = vmul.f32 %v524, %v612
      %v618 = vmul.f32 %v527, %v612
      %v619 = vmul.f32 %v530, %v612
      %v620 = vmul.f32 %v533, %v612
      %v621 = vmul.f32 %v536, %v612
      %v622 = vmul.f32 %v539, %v612
      %v623 = vmul.f32 %v542, %v612
      %v624 = vmul.f32 %v545, %v612
      %v625 = vmul.f32 %v548, %v612
      %v626 = vmul.f32 %v551, %v612
      %v627 = vmul.f32 %v554, %v612
      %v628 = vmul.f32 %v557, %v612
      %v629 = vmul.f32 %v560, %v612
      %v630 = vmul.f32 %v563, %v612
      %v631 = vmul.f32 %v566, %v612
      %v632 = vmul.f32 %v569, %v612
      %v633 = vmul.f32 %v572, %v612
      %v634 = vmul.f32 %v575, %v612
      %v635 = vmul.f32 %v578, %v612
      %v636 = vmul.f32 %v581, %v612
      %v637 = vmul.f32 %v584, %v612
      %v638 = vmul.f32 %v587, %v612
      %v639 = vmul.f32 %v590, %v612
      %v640 = vmul.f32 %v593, %v612
      %v641 = vmul.f32 %v596, %v612
      %v642 = vmul.f32 %v599, %v612
      %v643 = vmul.f32 %v602, %v612
      %v644 = vmul.f32 %v605, %v612
      %v645 = vsub.f32 %v477, %v613
      %v646 = vsub.f32 %v478, %v614
      %v647 = vsub.f32 %v479, %v615
      %v648 = vsub.f32 %v480, %v616
      %v649 = vsub.f32 %v481, %v617
      %v650 = vsub.f32 %v482, %v618
      %v651 = vsub.f32 %v483, %v619
      %v652 = vsub.f32 %v484, %v620
      %v653 = vsub.f32 %v485, %v621
      %v654 = vsub.f32 %v486, %v622
      %v655 = vsub.f32 %v487, %v623
      %v656 = vsub.f32 %v488, %v624
      %v657 = vsub.f32 %v489, %v625
      %v658 = vsub.f32 %v490, %v626
      %v659 = vsub.f32 %v491, %v627
      %v660 = vsub.f32 %v492, %v628
      %v661 = vsub.f32 %v493, %v629
      %v662 = vsub.f32 %v494, %v630
      %v663 = vsub.f32 %v495, %v631
      %v664 = vsub.f32 %v496, %v632
      %v665 = vsub.f32 %v497, %v633
      %v666 = vsub.f32 %v498, %v634
      %v667 = vsub.f32 %v499, %v635
      %v668 = vsub.f32 %v500, %v636
      %v669 = vsub.f32 %v501, %v637
      %v670 = vsub.f32 %v502, %v638
      %v671 = vsub.f32 %v503, %v639
      %v672 = vsub.f32 %v504, %v640
      %v673 = vsub.f32 %v505, %v641
      %v674 = vsub.f32 %v506, %v642
      %v675 = vsub.f32 %v507, %v643
      %v676 = vsub.f32 %v508, %v644
      %v677 = vmul.f32 %v645, %v645
      %v678 = vmul.f32 %v646, %v646
      %v679 = vmul.f32 %v647, %v647
      %v680 = vmul.f32 %v648, %v648
      %v681 = vmul.f32 %v649, %v649
      %v682 = vmul.f32 %v650, %v650
      %v683 = vmul.f32 %v651, %v651
      %v684 = vmul.f32 %v652, %v652
      %v685 = vmul.f32 %v653, %v653
      %v686 = vmul.f32 %v654, %v654
      %v687 = vmul.f32 %v655, %v655
      %v688 = vmul.f32 %v656, %v656
      %v689 = vmul.f32 %v657, %v657
      %v690 = vmul.f32 %v658, %v658
      %v691 = vmul.f32 %v659, %v659
      %v692 = vmul.f32 %v660, %v660
      %v693 = vmul.f32 %v661, %v661
      %v694 = vmul.f32 %v662, %v662
      %v695 = vmul.f32 %v663, %v663
      %v696 = vmul.f32 %v664, %v664
      %v697 = vmul.f32 %v665, %v665
      %v698 = vmul.f32 %v666, %v666
      %v699 = vmul.f32 %v667, %v667
      %v700 = vmul.f32 %v668, %v668
      %v701 = vmul.f32 %v669, %v669
      %v702 = vmul.f32 %v670, %v670
      %v703 = vmul.f32 %v671, %v671
      %v704 = vmul.f32 %v672, %v672
      %v705 = vmul.f32 %v673, %v673
      %v706 = vmul.f32 %v674, %v674
      %v707 = vmul.f32 %v675, %v675
      %v708 = vmul.f32 %v676, %v676
      %v709 = vsel %vm509, %v677, 0.0
      %710 = vadd.xlane.f32.xlu0 %v709
      %v711 = vpop.xlane.xlu0 %710
      %v712 = vsel %vm509, %v678, 0.0
      %713 = vadd.xlane.f32.xlu0 %v712
      %v714 = vpop.xlane.xlu0 %713
      %v715 = vsel %vm509, %v679, 0.0
      %716 = vadd.xlane.f32.xlu0 %v715
      %v717 = vpop.xlane.xlu0 %716
      %v718 = vsel %vm509, %v680, 0.0
      %719 = vadd.xlane.f32.xlu0 %v718
      %v720 = vpop.xlane.xlu0 %719
      %v721 = vsel %vm509, %v681, 0.0
      %722 = vadd.xlane.f32.xlu0 %v721
      %v723 = vpop.xlane.xlu0 %722
      %v724 = vsel %vm509, %v682, 0.0
      %725 = vadd.xlane.f32.xlu0 %v724
      %v726 = vpop.xlane.xlu0 %725
      %v727 = vsel %vm509, %v683, 0.0
      %728 = vadd.xlane.f32.xlu0 %v727
      %v729 = vpop.xlane.xlu0 %728
      %v730 = vsel %vm509, %v684, 0.0
      %731 = vadd.xlane.f32.xlu0 %v730
      %v732 = vpop.xlane.xlu0 %731
      %v733 = vsel %vm509, %v685, 0.0
      %734 = vadd.xlane.f32.xlu0 %v733
      %v735 = vpop.xlane.xlu0 %734
      %v736 = vsel %vm509, %v686, 0.0
      %737 = vadd.xlane.f32.xlu0 %v736
      %v738 = vpop.xlane.xlu0 %737
      %v739 = vsel %vm509, %v687, 0.0
      %740 = vadd.xlane.f32.xlu0 %v739
      %v741 = vpop.xlane.xlu0 %740
      %v742 = vsel %vm509, %v688, 0.0
      %743 = vadd.xlane.f32.xlu0 %v742
      %v744 = vpop.xlane.xlu0 %743
      %v745 = vsel %vm509, %v689, 0.0
      %746 = vadd.xlane.f32.xlu0 %v745
      %v747 = vpop.xlane.xlu0 %746
      %v748 = vsel %vm509, %v690, 0.0
      %749 = vadd.xlane.f32.xlu0 %v748
      %v750 = vpop.xlane.xlu0 %749
      %v751 = vsel %vm509, %v691, 0.0
      %752 = vadd.xlane.f32.xlu0 %v751
      %v753 = vpop.xlane.xlu0 %752
      %v754 = vsel %vm509, %v692, 0.0
      %755 = vadd.xlane.f32.xlu0 %v754
      %v756 = vpop.xlane.xlu0 %755
      %v757 = vsel %vm509, %v693, 0.0
      %758 = vadd.xlane.f32.xlu0 %v757
      %v759 = vpop.xlane.xlu0 %758
      %v760 = vsel %vm509, %v694, 0.0
      %761 = vadd.xlane.f32.xlu0 %v760
      %v762 = vpop.xlane.xlu0 %761
      %v763 = vsel %vm509, %v695, 0.0
      %764 = vadd.xlane.f32.xlu0 %v763
      %v765 = vpop.xlane.xlu0 %764
      %v766 = vsel %vm509, %v696, 0.0
      %767 = vadd.xlane.f32.xlu0 %v766
      %v768 = vpop.xlane.xlu0 %767
      %v769 = vsel %vm509, %v697, 0.0
      %770 = vadd.xlane.f32.xlu0 %v769
      %v771 = vpop.xlane.xlu0 %770
      %v772 = vsel %vm509, %v698, 0.0
      %773 = vadd.xlane.f32.xlu0 %v772
      %v774 = vpop.xlane.xlu0 %773
      %v775 = vsel %vm509, %v699, 0.0
      %776 = vadd.xlane.f32.xlu0 %v775
      %v777 = vpop.xlane.xlu0 %776
      %v778 = vsel %vm509, %v700, 0.0
      %779 = vadd.xlane.f32.xlu0 %v778
      %v780 = vpop.xlane.xlu0 %779
      %v781 = vsel %vm509, %v701, 0.0
      %782 = vadd.xlane.f32.xlu0 %v781
      %v783 = vpop.xlane.xlu0 %782
      %v784 = vsel %vm509, %v702, 0.0
      %785 = vadd.xlane.f32.xlu0 %v784
      %v786 = vpop.xlane.xlu0 %785
      %v787 = vsel %vm509, %v703, 0.0
      %788 = vadd.xlane.f32.xlu0 %v787
      %v789 = vpop.xlane.xlu0 %788
      %v790 = vsel %vm509, %v704, 0.0
      %791 = vadd.xlane.f32.xlu0 %v790
      %v792 = vpop.xlane.xlu0 %791
      %v793 = vsel %vm509, %v705, 0.0
      %794 = vadd.xlane.f32.xlu0 %v793
      %v795 = vpop.xlane.xlu0 %794
      %v796 = vsel %vm509, %v706, 0.0
      %797 = vadd.xlane.f32.xlu0 %v796
      %v798 = vpop.xlane.xlu0 %797
      %v799 = vsel %vm509, %v707, 0.0
      %800 = vadd.xlane.f32.xlu0 %v799
      %v801 = vpop.xlane.xlu0 %800
      %v802 = vsel %vm509, %v708, 0.0
      %803 = vadd.xlane.f32.xlu0 %v802
      %v804 = vpop.xlane.xlu0 %803
      %v805 = vmul.f32 %v711, %v612
      %v806 = vmul.f32 %v714, %v612
      %v807 = vmul.f32 %v717, %v612
      %v808 = vmul.f32 %v720, %v612
      %v809 = vmul.f32 %v723, %v612
      %v810 = vmul.f32 %v726, %v612
      %v811 = vmul.f32 %v729, %v612
      %v812 = vmul.f32 %v732, %v612
      %v813 = vmul.f32 %v735, %v612
      %v814 = vmul.f32 %v738, %v612
      %v815 = vmul.f32 %v741, %v612
      %v816 = vmul.f32 %v744, %v612
      %v817 = vmul.f32 %v747, %v612
      %v818 = vmul.f32 %v750, %v612
      %v819 = vmul.f32 %v753, %v612
      %v820 = vmul.f32 %v756, %v612
      %v821 = vmul.f32 %v759, %v612
      %v822 = vmul.f32 %v762, %v612
      %v823 = vmul.f32 %v765, %v612
      %v824 = vmul.f32 %v768, %v612
      %v825 = vmul.f32 %v771, %v612
      %v826 = vmul.f32 %v774, %v612
      %v827 = vmul.f32 %v777, %v612
      %v828 = vmul.f32 %v780, %v612
      %v829 = vmul.f32 %v783, %v612
      %v830 = vmul.f32 %v786, %v612
      %v831 = vmul.f32 %v789, %v612
      %v832 = vmul.f32 %v792, %v612
      %v833 = vmul.f32 %v795, %v612
      %v834 = vmul.f32 %v798, %v612
      %v835 = vmul.f32 %v801, %v612
      %v836 = vmul.f32 %v804, %v612
      %v837 = vadd.f32 %v805, 1e-05
      %v838 = vadd.f32 %v806, 1e-05
      %v839 = vadd.f32 %v807, 1e-05
      %v840 = vadd.f32 %v808, 1e-05
      %v841 = vadd.f32 %v809, 1e-05
      %v842 = vadd.f32 %v810, 1e-05
      %v843 = vadd.f32 %v811, 1e-05
      %v844 = vadd.f32 %v812, 1e-05
      %v845 = vadd.f32 %v813, 1e-05
      %v846 = vadd.f32 %v814, 1e-05
      %v847 = vadd.f32 %v815, 1e-05
      %v848 = vadd.f32 %v816, 1e-05
      %v849 = vadd.f32 %v817, 1e-05
      %v850 = vadd.f32 %v818, 1e-05
      %v851 = vadd.f32 %v819, 1e-05
      %v852 = vadd.f32 %v820, 1e-05
      %v853 = vadd.f32 %v821, 1e-05
      %v854 = vadd.f32 %v822, 1e-05
      %v855 = vadd.f32 %v823, 1e-05
      %v856 = vadd.f32 %v824, 1e-05
      %v857 = vadd.f32 %v825, 1e-05
      %v858 = vadd.f32 %v826, 1e-05
      %v859 = vadd.f32 %v827, 1e-05
      %v860 = vadd.f32 %v828, 1e-05
      %v861 = vadd.f32 %v829, 1e-05
      %v862 = vadd.f32 %v830, 1e-05
      %v863 = vadd.f32 %v831, 1e-05
      %v864 = vadd.f32 %v832, 1e-05
      %v865 = vadd.f32 %v833, 1e-05
      %v866 = vadd.f32 %v834, 1e-05
      %v867 = vadd.f32 %v835, 1e-05
      %v868 = vadd.f32 %v836, 1e-05
      %v869 = vrsqrt.pop %v837
      %v870 = vmul.f32 %v869, %v837
      %v871 = vmul.f32 %v870, %v869
      %v872 = vmul.f32 0.5, %v871
      %v873 = vsub.f32 1.5, %v872
      %v874 = vmul.f32 %v869, %v873
      %vm875 = vweird.f32 %v837
      %vm876 = vweird.f32 %v869
      %vm877 = vmor %vm875, %vm876
      %v878 = vsel %vm877, %v869, %v874
      %v879 = vrsqrt.pop %v838
      %v880 = vmul.f32 %v879, %v838
      %v881 = vmul.f32 %v880, %v879
      %v882 = vmul.f32 0.5, %v881
      %v883 = vsub.f32 1.5, %v882
      %v884 = vmul.f32 %v879, %v883
      %vm885 = vweird.f32 %v838
      %vm886 = vweird.f32 %v879
      %vm887 = vmor %vm885, %vm886
      %v888 = vsel %vm887, %v879, %v884
      %v889 = vrsqrt.pop %v839
      %v890 = vmul.f32 %v889, %v839
      %v891 = vmul.f32 %v890, %v889
      %v892 = vmul.f32 0.5, %v891
      %v893 = vsub.f32 1.5, %v892
      %v894 = vmul.f32 %v889, %v893
      %vm895 = vweird.f32 %v839
      %vm896 = vweird.f32 %v889
      %vm897 = vmor %vm895, %vm896
      %v898 = vsel %vm897, %v889, %v894
      %v899 = vrsqrt.pop %v840
      %v900 = vmul.f32 %v899, %v840
      %v901 = vmul.f32 %v900, %v899
      %v902 = vmul.f32 0.5, %v901
      %v903 = vsub.f32 1.5, %v902
      %v904 = vmul.f32 %v899, %v903
      %vm905 = vweird.f32 %v840
      %vm906 = vweird.f32 %v899
      %vm907 = vmor %vm905, %vm906
      %v908 = vsel %vm907, %v899, %v904
      %v909 = vrsqrt.pop %v841
      %v910 = vmul.f32 %v909, %v841
      %v911 = vmul.f32 %v910, %v909
      %v912 = vmul.f32 0.5, %v911
      %v913 = vsub.f32 1.5, %v912
      %v914 = vmul.f32 %v909, %v913
      %vm915 = vweird.f32 %v841
      %vm916 = vweird.f32 %v909
      %vm917 = vmor %vm915, %vm916
      %v918 = vsel %vm917, %v909, %v914
      %v919 = vrsqrt.pop %v842
      %v920 = vmul.f32 %v919, %v842
      %v921 = vmul.f32 %v920, %v919
      %v922 = vmul.f32 0.5, %v921
      %v923 = vsub.f32 1.5, %v922
      %v924 = vmul.f32 %v919, %v923
      %vm925 = vweird.f32 %v842
      %vm926 = vweird.f32 %v919
      %vm927 = vmor %vm925, %vm926
      %v928 = vsel %vm927, %v919, %v924
      %v929 = vrsqrt.pop %v843
      %v930 = vmul.f32 %v929, %v843
      %v931 = vmul.f32 %v930, %v929
      %v932 = vmul.f32 0.5, %v931
      %v933 = vsub.f32 1.5, %v932
      %v934 = vmul.f32 %v929, %v933
      %vm935 = vweird.f32 %v843
      %vm936 = vweird.f32 %v929
      %vm937 = vmor %vm935, %vm936
      %v938 = vsel %vm937, %v929, %v934
      %v939 = vrsqrt.pop %v844
      %v940 = vmul.f32 %v939, %v844
      %v941 = vmul.f32 %v940, %v939
      %v942 = vmul.f32 0.5, %v941
      %v943 = vsub.f32 1.5, %v942
      %v944 = vmul.f32 %v939, %v943
      %vm945 = vweird.f32 %v844
      %vm946 = vweird.f32 %v939
      %vm947 = vmor %vm945, %vm946
      %v948 = vsel %vm947, %v939, %v944
      %v949 = vrsqrt.pop %v845
      %v950 = vmul.f32 %v949, %v845
      %v951 = vmul.f32 %v950, %v949
      %v952 = vmul.f32 0.5, %v951
      %v953 = vsub.f32 1.5, %v952
      %v954 = vmul.f32 %v949, %v953
      %vm955 = vweird.f32 %v845
      %vm956 = vweird.f32 %v949
      %vm957 = vmor %vm955, %vm956
      %v958 = vsel %vm957, %v949, %v954
      %v959 = vrsqrt.pop %v846
      %v960 = vmul.f32 %v959, %v846
      %v961 = vmul.f32 %v960, %v959
      %v962 = vmul.f32 0.5, %v961
      %v963 = vsub.f32 1.5, %v962
      %v964 = vmul.f32 %v959, %v963
      %vm965 = vweird.f32 %v846
      %vm966 = vweird.f32 %v959
      %vm967 = vmor %vm965, %vm966
      %v968 = vsel %vm967, %v959, %v964
      %v969 = vrsqrt.pop %v847
      %v970 = vmul.f32 %v969, %v847
      %v971 = vmul.f32 %v970, %v969
      %v972 = vmul.f32 0.5, %v971
      %v973 = vsub.f32 1.5, %v972
      %v974 = vmul.f32 %v969, %v973
      %vm975 = vweird.f32 %v847
      %vm976 = vweird.f32 %v969
      %vm977 = vmor %vm975, %vm976
      %v978 = vsel %vm977, %v969, %v974
      %v979 = vrsqrt.pop %v848
      %v980 = vmul.f32 %v979, %v848
      %v981 = vmul.f32 %v980, %v979
      %v982 = vmul.f32 0.5, %v981
      %v983 = vsub.f32 1.5, %v982
      %v984 = vmul.f32 %v979, %v983
      %vm985 = vweird.f32 %v848
      %vm986 = vweird.f32 %v979
      %vm987 = vmor %vm985, %vm986
      %v988 = vsel %vm987, %v979, %v984
      %v989 = vrsqrt.pop %v849
      %v990 = vmul.f32 %v989, %v849
      %v991 = vmul.f32 %v990, %v989
      %v992 = vmul.f32 0.5, %v991
      %v993 = vsub.f32 1.5, %v992
      %v994 = vmul.f32 %v989, %v993
      %vm995 = vweird.f32 %v849
      %vm996 = vweird.f32 %v989
      %vm997 = vmor %vm995, %vm996
      %v998 = vsel %vm997, %v989, %v994
      %v999 = vrsqrt.pop %v850
      %v1000 = vmul.f32 %v999, %v850
      %v1001 = vmul.f32 %v1000, %v999
      %v1002 = vmul.f32 0.5, %v1001
      %v1003 = vsub.f32 1.5, %v1002
      %v1004 = vmul.f32 %v999, %v1003
      %vm1005 = vweird.f32 %v850
      %vm1006 = vweird.f32 %v999
      %vm1007 = vmor %vm1005, %vm1006
      %v1008 = vsel %vm1007, %v999, %v1004
      %v1009 = vrsqrt.pop %v851
      %v1010 = vmul.f32 %v1009, %v851
      %v1011 = vmul.f32 %v1010, %v1009
      %v1012 = vmul.f32 0.5, %v1011
      %v1013 = vsub.f32 1.5, %v1012
      %v1014 = vmul.f32 %v1009, %v1013
      %vm1015 = vweird.f32 %v851
      %vm1016 = vweird.f32 %v1009
      %vm1017 = vmor %vm1015, %vm1016
      %v1018 = vsel %vm1017, %v1009, %v1014
      %v1019 = vrsqrt.pop %v852
      %v1020 = vmul.f32 %v1019, %v852
      %v1021 = vmul.f32 %v1020, %v1019
      %v1022 = vmul.f32 0.5, %v1021
      %v1023 = vsub.f32 1.5, %v1022
      %v1024 = vmul.f32 %v1019, %v1023
      %vm1025 = vweird.f32 %v852
      %vm1026 = vweird.f32 %v1019
      %vm1027 = vmor %vm1025, %vm1026
      %v1028 = vsel %vm1027, %v1019, %v1024
      %v1029 = vrsqrt.pop %v853
      %v1030 = vmul.f32 %v1029, %v853
      %v1031 = vmul.f32 %v1030, %v1029
      %v1032 = vmul.f32 0.5, %v1031
      %v1033 = vsub.f32 1.5, %v1032
      %v1034 = vmul.f32 %v1029, %v1033
      %vm1035 = vweird.f32 %v853
      %vm1036 = vweird.f32 %v1029
      %vm1037 = vmor %vm1035, %vm1036
      %v1038 = vsel %vm1037, %v1029, %v1034
      %v1039 = vrsqrt.pop %v854
      %v1040 = vmul.f32 %v1039, %v854
      %v1041 = vmul.f32 %v1040, %v1039
      %v1042 = vmul.f32 0.5, %v1041
      %v1043 = vsub.f32 1.5, %v1042
      %v1044 = vmul.f32 %v1039, %v1043
      %vm1045 = vweird.f32 %v854
      %vm1046 = vweird.f32 %v1039
      %vm1047 = vmor %vm1045, %vm1046
      %v1048 = vsel %vm1047, %v1039, %v1044
      %v1049 = vrsqrt.pop %v855
      %v1050 = vmul.f32 %v1049, %v855
      %v1051 = vmul.f32 %v1050, %v1049
      %v1052 = vmul.f32 0.5, %v1051
      %v1053 = vsub.f32 1.5, %v1052
      %v1054 = vmul.f32 %v1049, %v1053
      %vm1055 = vweird.f32 %v855
      %vm1056 = vweird.f32 %v1049
      %vm1057 = vmor %vm1055, %vm1056
      %v1058 = vsel %vm1057, %v1049, %v1054
      %v1059 = vrsqrt.pop %v856
      %v1060 = vmul.f32 %v1059, %v856
      %v1061 = vmul.f32 %v1060, %v1059
      %v1062 = vmul.f32 0.5, %v1061
      %v1063 = vsub.f32 1.5, %v1062
      %v1064 = vmul.f32 %v1059, %v1063
      %vm1065 = vweird.f32 %v856
      %vm1066 = vweird.f32 %v1059
      %vm1067 = vmor %vm1065, %vm1066
      %v1068 = vsel %vm1067, %v1059, %v1064
      %v1069 = vrsqrt.pop %v857
      %v1070 = vmul.f32 %v1069, %v857
      %v1071 = vmul.f32 %v1070, %v1069
      %v1072 = vmul.f32 0.5, %v1071
      %v1073 = vsub.f32 1.5, %v1072
      %v1074 = vmul.f32 %v1069, %v1073
      %vm1075 = vweird.f32 %v857
      %vm1076 = vweird.f32 %v1069
      %vm1077 = vmor %vm1075, %vm1076
      %v1078 = vsel %vm1077, %v1069, %v1074
      %v1079 = vrsqrt.pop %v858
      %v1080 = vmul.f32 %v1079, %v858
      %v1081 = vmul.f32 %v1080, %v1079
      %v1082 = vmul.f32 0.5, %v1081
      %v1083 = vsub.f32 1.5, %v1082
      %v1084 = vmul.f32 %v1079, %v1083
      %vm1085 = vweird.f32 %v858
      %vm1086 = vweird.f32 %v1079
      %vm1087 = vmor %vm1085, %vm1086
      %v1088 = vsel %vm1087, %v1079, %v1084
      %v1089 = vrsqrt.pop %v859
      %v1090 = vmul.f32 %v1089, %v859
      %v1091 = vmul.f32 %v1090, %v1089
      %v1092 = vmul.f32 0.5, %v1091
      %v1093 = vsub.f32 1.5, %v1092
      %v1094 = vmul.f32 %v1089, %v1093
      %vm1095 = vweird.f32 %v859
      %vm1096 = vweird.f32 %v1089
      %vm1097 = vmor %vm1095, %vm1096
      %v1098 = vsel %vm1097, %v1089, %v1094
      %v1099 = vrsqrt.pop %v860
      %v1100 = vmul.f32 %v1099, %v860
      %v1101 = vmul.f32 %v1100, %v1099
      %v1102 = vmul.f32 0.5, %v1101
      %v1103 = vsub.f32 1.5, %v1102
      %v1104 = vmul.f32 %v1099, %v1103
      %vm1105 = vweird.f32 %v860
      %vm1106 = vweird.f32 %v1099
      %vm1107 = vmor %vm1105, %vm1106
      %v1108 = vsel %vm1107, %v1099, %v1104
      %v1109 = vrsqrt.pop %v861
      %v1110 = vmul.f32 %v1109, %v861
      %v1111 = vmul.f32 %v1110, %v1109
      %v1112 = vmul.f32 0.5, %v1111
      %v1113 = vsub.f32 1.5, %v1112
      %v1114 = vmul.f32 %v1109, %v1113
      %vm1115 = vweird.f32 %v861
      %vm1116 = vweird.f32 %v1109
      %vm1117 = vmor %vm1115, %vm1116
      %v1118 = vsel %vm1117, %v1109, %v1114
      %v1119 = vrsqrt.pop %v862
      %v1120 = vmul.f32 %v1119, %v862
      %v1121 = vmul.f32 %v1120, %v1119
      %v1122 = vmul.f32 0.5, %v1121
      %v1123 = vsub.f32 1.5, %v1122
      %v1124 = vmul.f32 %v1119, %v1123
      %vm1125 = vweird.f32 %v862
      %vm1126 = vweird.f32 %v1119
      %vm1127 = vmor %vm1125, %vm1126
      %v1128 = vsel %vm1127, %v1119, %v1124
      %v1129 = vrsqrt.pop %v863
      %v1130 = vmul.f32 %v1129, %v863
      %v1131 = vmul.f32 %v1130, %v1129
      %v1132 = vmul.f32 0.5, %v1131
      %v1133 = vsub.f32 1.5, %v1132
      %v1134 = vmul.f32 %v1129, %v1133
      %vm1135 = vweird.f32 %v863
      %vm1136 = vweird.f32 %v1129
      %vm1137 = vmor %vm1135, %vm1136
      %v1138 = vsel %vm1137, %v1129, %v1134
      %v1139 = vrsqrt.pop %v864
      %v1140 = vmul.f32 %v1139, %v864
      %v1141 = vmul.f32 %v1140, %v1139
      %v1142 = vmul.f32 0.5, %v1141
      %v1143 = vsub.f32 1.5, %v1142
      %v1144 = vmul.f32 %v1139, %v1143
      %vm1145 = vweird.f32 %v864
      %vm1146 = vweird.f32 %v1139
      %vm1147 = vmor %vm1145, %vm1146
      %v1148 = vsel %vm1147, %v1139, %v1144
      %v1149 = vrsqrt.pop %v865
      %v1150 = vmul.f32 %v1149, %v865
      %v1151 = vmul.f32 %v1150, %v1149
      %v1152 = vmul.f32 0.5, %v1151
      %v1153 = vsub.f32 1.5, %v1152
      %v1154 = vmul.f32 %v1149, %v1153
      %vm1155 = vweird.f32 %v865
      %vm1156 = vweird.f32 %v1149
      %vm1157 = vmor %vm1155, %vm1156
      %v1158 = vsel %vm1157, %v1149, %v1154
      %v1159 = vrsqrt.pop %v866
      %v1160 = vmul.f32 %v1159, %v866
      %v1161 = vmul.f32 %v1160, %v1159
      %v1162 = vmul.f32 0.5, %v1161
      %v1163 = vsub.f32 1.5, %v1162
      %v1164 = vmul.f32 %v1159, %v1163
      %vm1165 = vweird.f32 %v866
      %vm1166 = vweird.f32 %v1159
      %vm1167 = vmor %vm1165, %vm1166
      %v1168 = vsel %vm1167, %v1159, %v1164
      %v1169 = vrsqrt.pop %v867
      %v1170 = vmul.f32 %v1169, %v867
      %v1171 = vmul.f32 %v1170, %v1169
      %v1172 = vmul.f32 0.5, %v1171
      %v1173 = vsub.f32 1.5, %v1172
      %v1174 = vmul.f32 %v1169, %v1173
      %vm1175 = vweird.f32 %v867
      %vm1176 = vweird.f32 %v1169
      %vm1177 = vmor %vm1175, %vm1176
      %v1178 = vsel %vm1177, %v1169, %v1174
      %v1179 = vrsqrt.pop %v868
      %v1180 = vmul.f32 %v1179, %v868
      %v1181 = vmul.f32 %v1180, %v1179
      %v1182 = vmul.f32 0.5, %v1181
      %v1183 = vsub.f32 1.5, %v1182
      %v1184 = vmul.f32 %v1179, %v1183
      %vm1185 = vweird.f32 %v868
      %vm1186 = vweird.f32 %v1179
      %vm1187 = vmor %vm1185, %vm1186
      %v1188 = vsel %vm1187, %v1179, %v1184
      %v1189 = vmul.f32 %v645, %v878
      %v1190 = vmul.f32 %v646, %v888
      %v1191 = vmul.f32 %v647, %v898
      %v1192 = vmul.f32 %v648, %v908
      %v1193 = vmul.f32 %v649, %v918
      %v1194 = vmul.f32 %v650, %v928
      %v1195 = vmul.f32 %v651, %v938
      %v1196 = vmul.f32 %v652, %v948
      %v1197 = vmul.f32 %v653, %v958
      %v1198 = vmul.f32 %v654, %v968
      %v1199 = vmul.f32 %v655, %v978
      %v1200 = vmul.f32 %v656, %v988
      %v1201 = vmul.f32 %v657, %v998
      %v1202 = vmul.f32 %v658, %v1008
      %v1203 = vmul.f32 %v659, %v1018
      %v1204 = vmul.f32 %v660, %v1028
      %v1205 = vmul.f32 %v661, %v1038
      %v1206 = vmul.f32 %v662, %v1048
      %v1207 = vmul.f32 %v663, %v1058
      %v1208 = vmul.f32 %v664, %v1068
      %v1209 = vmul.f32 %v665, %v1078
      %v1210 = vmul.f32 %v666, %v1088
      %v1211 = vmul.f32 %v667, %v1098
      %v1212 = vmul.f32 %v668, %v1108
      %v1213 = vmul.f32 %v669, %v1118
      %v1214 = vmul.f32 %v670, %v1128
      %v1215 = vmul.f32 %v671, %v1138
      %v1216 = vmul.f32 %v672, %v1148
      %v1217 = vmul.f32 %v673, %v1158
      %v1218 = vmul.f32 %v674, %v1168
      %v1219 = vmul.f32 %v675, %v1178
      %v1220 = vmul.f32 %v676, %v1188
      %v1221 = vld [vmem:[%s1] sm:$0x1]
      %v1223 = vperm.slane %v1221, 0
      %v1225 = vmul.f32 %v1189, %v1223
      %v1226 = vmul.f32 %v1190, %v1223
      %v1227 = vmul.f32 %v1191, %v1223
      %v1228 = vmul.f32 %v1192, %v1223
      %v1229 = vmul.f32 %v1193, %v1223
      %v1230 = vmul.f32 %v1194, %v1223
      %v1231 = vmul.f32 %v1195, %v1223
      %v1232 = vmul.f32 %v1196, %v1223
      %v1233 = vmul.f32 %v1197, %v1223
      %v1234 = vmul.f32 %v1198, %v1223
      %v1235 = vmul.f32 %v1199, %v1223
      %v1236 = vmul.f32 %v1200, %v1223
      %v1237 = vmul.f32 %v1201, %v1223
      %v1238 = vmul.f32 %v1202, %v1223
      %v1239 = vmul.f32 %v1203, %v1223
      %v1240 = vmul.f32 %v1204, %v1223
      %v1241 = vmul.f32 %v1205, %v1223
      %v1242 = vmul.f32 %v1206, %v1223
      %v1243 = vmul.f32 %v1207, %v1223
      %v1244 = vmul.f32 %v1208, %v1223
      %v1245 = vmul.f32 %v1209, %v1223
      %v1246 = vmul.f32 %v1210, %v1223
      %v1247 = vmul.f32 %v1211, %v1223
      %v1248 = vmul.f32 %v1212, %v1223
      %v1249 = vmul.f32 %v1213, %v1223
      %v1250 = vmul.f32 %v1214, %v1223
      %v1251 = vmul.f32 %v1215, %v1223
      %v1252 = vmul.f32 %v1216, %v1223
      %v1253 = vmul.f32 %v1217, %v1223
      %v1254 = vmul.f32 %v1218, %v1223
      %v1255 = vmul.f32 %v1219, %v1223
      %v1256 = vmul.f32 %v1220, %v1223
      %v1257 = vld [vmem:[%s2] sm:$0x1]
      %v1259 = vperm.slane %v1257, 0
      %v1261 = vadd.f32 %v1225, %v1259
      %v1262 = vadd.f32 %v1226, %v1259
      %v1263 = vadd.f32 %v1227, %v1259
      %v1264 = vadd.f32 %v1228, %v1259
      %v1265 = vadd.f32 %v1229, %v1259
      %v1266 = vadd.f32 %v1230, %v1259
      %v1267 = vadd.f32 %v1231, %v1259
      %v1268 = vadd.f32 %v1232, %v1259
      %v1269 = vadd.f32 %v1233, %v1259
      %v1270 = vadd.f32 %v1234, %v1259
      %v1271 = vadd.f32 %v1235, %v1259
      %v1272 = vadd.f32 %v1236, %v1259
      %v1273 = vadd.f32 %v1237, %v1259
      %v1274 = vadd.f32 %v1238, %v1259
      %v1275 = vadd.f32 %v1239, %v1259
      %v1276 = vadd.f32 %v1240, %v1259
      %v1277 = vadd.f32 %v1241, %v1259
      %v1278 = vadd.f32 %v1242, %v1259
      %v1279 = vadd.f32 %v1243, %v1259
      %v1280 = vadd.f32 %v1244, %v1259
      %v1281 = vadd.f32 %v1245, %v1259
      %v1282 = vadd.f32 %v1246, %v1259
      %v1283 = vadd.f32 %v1247, %v1259
      %v1284 = vadd.f32 %v1248, %v1259
      %v1285 = vadd.f32 %v1249, %v1259
      %v1286 = vadd.f32 %v1250, %v1259
      %v1287 = vadd.f32 %v1251, %v1259
      %v1288 = vadd.f32 %v1252, %v1259
      %v1289 = vadd.f32 %v1253, %v1259
      %v1290 = vadd.f32 %v1254, %v1259
      %v1291 = vadd.f32 %v1255, %v1259
      %v1292 = vadd.f32 %v1256, %v1259
      %v1293 = vpack.c.bf16 %v1262, %v1261
      %v1294 = vpack.c.bf16 %v1264, %v1263
      %v1295 = vpack.c.bf16 %v1266, %v1265
      %v1296 = vpack.c.bf16 %v1268, %v1267
      %v1297 = vpack.c.bf16 %v1270, %v1269
      %v1298 = vpack.c.bf16 %v1272, %v1271
      %v1299 = vpack.c.bf16 %v1274, %v1273
      %v1300 = vpack.c.bf16 %v1276, %v1275
      %v1301 = vpack.c.bf16 %v1278, %v1277
      %v1302 = vpack.c.bf16 %v1280, %v1279
      %v1303 = vpack.c.bf16 %v1282, %v1281
      %v1304 = vpack.c.bf16 %v1284, %v1283
      %v1305 = vpack.c.bf16 %v1286, %v1285
      %v1306 = vpack.c.bf16 %v1288, %v1287
      %v1307 = vpack.c.bf16 %v1290, %v1289
      %v1308 = vpack.c.bf16 %v1292, %v1291
      %v1309 = vld [vmem:[%s3] sm:$0xff]
      %v1310 = vld [vmem:[%s3 + $0x8] sm:$0xff]
      %v1311 = vld [vmem:[%s3 + $0x10] sm:$0xff]
      %v1312 = vld [vmem:[%s3 + $0x18] sm:$0xff]
      %v1313 = vpack.c.bf16 %v1310, %v1309
      %v1314 = vpack.c.bf16 %v1312, %v1311
      %v1315 = vld [vmem:[%s4] sm:$0x1]
      %v1317 = vperm.slane %v1315, 0
      %v1320 = vsel %vm509, %v1293, 0
      %v1323 = vsel %vm509, %v1294, 0
      %v1326 = vsel %vm509, %v1295, 0
      %v1329 = vsel %vm509, %v1296, 0
      %v1332 = vsel %vm509, %v1297, 0
      %v1335 = vsel %vm509, %v1298, 0
      %v1338 = vsel %vm509, %v1299, 0
      %v1341 = vsel %vm509, %v1300, 0
      %v1344 = vsel %vm509, %v1301, 0
      %v1347 = vsel %vm509, %v1302, 0
      %v1350 = vsel %vm509, %v1303, 0
      %v1353 = vsel %vm509, %v1304, 0
      %v1356 = vsel %vm509, %v1305, 0
      %v1359 = vsel %vm509, %v1306, 0
      %v1362 = vsel %vm509, %v1307, 0
      %v1365 = vsel %vm509, %v1308, 0
      %1367 = vmatpush.bf16.msra.mxu0 0
      %1368 = vmatpush.bf16.msra.mxu0 0
      %1369 = vmatpush.bf16.msra.mxu0 0
      %1370 = vmatpush.bf16.msra.mxu0 0
      %1371 = vmatpush.bf16.msra.mxu0 0
      %1372 = vmatpush.bf16.msra.mxu0 0
      %1373 = vmatpush.bf16.msra.mxu0 %v1314
      %1374 = vmatpush.bf16.msra.mxu0 %v1313
      %1375 = vmatmul.bf16.gmra.mxu0 %v1320
      %v1376 = vpop.f32.mrf.mxu0
      %v1377 = vadd.f32 %v1317, %v1376
      %v1378 = vpop.f32.mrf.mxu0
      %v1379 = vadd.f32 %v1317, %v1378
      %1380 = vmatmul.bf16.gmra.mxu0 %v1323
      %v1381 = vpop.f32.mrf.mxu0
      %v1382 = vadd.f32 %v1317, %v1381
      %v1383 = vpop.f32.mrf.mxu0
      %v1384 = vadd.f32 %v1317, %v1383
      %1385 = vmatmul.bf16.gmra.mxu0 %v1326
      %v1386 = vpop.f32.mrf.mxu0
      %v1387 = vadd.f32 %v1317, %v1386
      %v1388 = vpop.f32.mrf.mxu0
      %v1389 = vadd.f32 %v1317, %v1388
      %1390 = vmatmul.bf16.gmra.mxu0 %v1329
      %v1391 = vpop.f32.mrf.mxu0
      %v1392 = vadd.f32 %v1317, %v1391
      %v1393 = vpop.f32.mrf.mxu0
      %v1394 = vadd.f32 %v1317, %v1393
      %1395 = vmatmul.bf16.gmra.mxu0 %v1332
      %v1396 = vpop.f32.mrf.mxu0
      %v1397 = vadd.f32 %v1317, %v1396
      %v1398 = vpop.f32.mrf.mxu0
      %v1399 = vadd.f32 %v1317, %v1398
      %1400 = vmatmul.bf16.gmra.mxu0 %v1335
      %v1401 = vpop.f32.mrf.mxu0
      %v1402 = vadd.f32 %v1317, %v1401
      %v1403 = vpop.f32.mrf.mxu0
      %v1404 = vadd.f32 %v1317, %v1403
      %1405 = vmatmul.bf16.gmra.mxu0 %v1338
      %v1406 = vpop.f32.mrf.mxu0
      %v1407 = vadd.f32 %v1317, %v1406
      %v1408 = vpop.f32.mrf.mxu0
      %v1409 = vadd.f32 %v1317, %v1408
      %1410 = vmatmul.bf16.gmra.mxu0 %v1341
      %v1411 = vpop.f32.mrf.mxu0
      %v1412 = vadd.f32 %v1317, %v1411
      %v1413 = vpop.f32.mrf.mxu0
      %v1414 = vadd.f32 %v1317, %v1413
      %1415 = vmatmul.bf16.gmra.mxu0 %v1344
      %v1416 = vpop.f32.mrf.mxu0
      %v1417 = vadd.f32 %v1317, %v1416
      %v1418 = vpop.f32.mrf.mxu0
      %v1419 = vadd.f32 %v1317, %v1418
      %1420 = vmatmul.bf16.gmra.mxu0 %v1347
      %v1421 = vpop.f32.mrf.mxu0
      %v1422 = vadd.f32 %v1317, %v1421
      %v1423 = vpop.f32.mrf.mxu0
      %v1424 = vadd.f32 %v1317, %v1423
      %1425 = vmatmul.bf16.gmra.mxu0 %v1350
      %v1426 = vpop.f32.mrf.mxu0
      %v1427 = vadd.f32 %v1317, %v1426
      %v1428 = vpop.f32.mrf.mxu0
      %v1429 = vadd.f32 %v1317, %v1428
      %1430 = vmatmul.bf16.gmra.mxu0 %v1353
      %v1431 = vpop.f32.mrf.mxu0
      %v1432 = vadd.f32 %v1317, %v1431
      %v1433 = vpop.f32.mrf.mxu0
      %v1434 = vadd.f32 %v1317, %v1433
      %1435 = vmatmul.bf16.gmra.mxu0 %v1356
      %v1436 = vpop.f32.mrf.mxu0
      %v1437 = vadd.f32 %v1317, %v1436
      %v1438 = vpop.f32.mrf.mxu0
      %v1439 = vadd.f32 %v1317, %v1438
      %1440 = vmatmul.bf16.gmra.mxu0 %v1359
      %v1441 = vpop.f32.mrf.mxu0
      %v1442 = vadd.f32 %v1317, %v1441
      %v1443 = vpop.f32.mrf.mxu0
      %v1444 = vadd.f32 %v1317, %v1443
      %1445 = vmatmul.bf16.gmra.mxu0 %v1362
      %v1446 = vpop.f32.mrf.mxu0
      %v1447 = vadd.f32 %v1317, %v1446
      %v1448 = vpop.f32.mrf.mxu0
      %v1449 = vadd.f32 %v1317, %v1448
      %1450 = vmatmul.bf16.gmra.mxu0 %v1365
      %v1451 = vpop.f32.mrf.mxu0
      %v1452 = vadd.f32 %v1317, %v1451
      %v1453 = vpop.f32.mrf.mxu0
      %v1454 = vadd.f32 %v1317, %v1453
      %1455 = vdwg.mxu0
      %1488 = vrot.lane.b32.xlu0 %v1377, 120
      %v1489 = vpop.permute.xlu0 %1488
      %1490 = vrot.lane.b32.xlu0 %v1379, 120
      %v1491 = vpop.permute.xlu0 %1490
      %1492 = vrot.lane.b32.xlu0 %v1382, 120
      %v1493 = vpop.permute.xlu0 %1492
      %1494 = vrot.lane.b32.xlu0 %v1384, 120
      %v1495 = vpop.permute.xlu0 %1494
      %1496 = vrot.lane.b32.xlu0 %v1387, 120
      %v1497 = vpop.permute.xlu0 %1496
      %1498 = vrot.lane.b32.xlu0 %v1389, 120
      %v1499 = vpop.permute.xlu0 %1498
      %1500 = vrot.lane.b32.xlu0 %v1392, 120
      %v1501 = vpop.permute.xlu0 %1500
      %1502 = vrot.lane.b32.xlu0 %v1394, 120
      %v1503 = vpop.permute.xlu0 %1502
      %1504 = vrot.lane.b32.xlu0 %v1397, 120
      %v1505 = vpop.permute.xlu0 %1504
      %1506 = vrot.lane.b32.xlu0 %v1399, 120
      %v1507 = vpop.permute.xlu0 %1506
      %1508 = vrot.lane.b32.xlu0 %v1402, 120
      %v1509 = vpop.permute.xlu0 %1508
      %1510 = vrot.lane.b32.xlu0 %v1404, 120
      %v1511 = vpop.permute.xlu0 %1510
      %1512 = vrot.lane.b32.xlu0 %v1407, 120
      %v1513 = vpop.permute.xlu0 %1512
      %1514 = vrot.lane.b32.xlu0 %v1409, 120
      %v1515 = vpop.permute.xlu0 %1514
      %1516 = vrot.lane.b32.xlu0 %v1412, 120
      %v1517 = vpop.permute.xlu0 %1516
      %1518 = vrot.lane.b32.xlu0 %v1414, 120
      %v1519 = vpop.permute.xlu0 %1518
      %1520 = vrot.lane.b32.xlu0 %v1417, 120
      %v1521 = vpop.permute.xlu0 %1520
      %1522 = vrot.lane.b32.xlu0 %v1419, 120
      %v1523 = vpop.permute.xlu0 %1522
      %1524 = vrot.lane.b32.xlu0 %v1422, 120
      %v1525 = vpop.permute.xlu0 %1524
      %1526 = vrot.lane.b32.xlu0 %v1424, 120
      %v1527 = vpop.permute.xlu0 %1526
      %1528 = vrot.lane.b32.xlu0 %v1427, 120
      %v1529 = vpop.permute.xlu0 %1528
      %1530 = vrot.lane.b32.xlu0 %v1429, 120
      %v1531 = vpop.permute.xlu0 %1530
      %1532 = vrot.lane.b32.xlu0 %v1432, 120
      %v1533 = vpop.permute.xlu0 %1532
      %1534 = vrot.lane.b32.xlu0 %v1434, 120
      %v1535 = vpop.permute.xlu0 %1534
      %1536 = vrot.lane.b32.xlu0 %v1437, 120
      %v1537 = vpop.permute.xlu0 %1536
      %1538 = vrot.lane.b32.xlu0 %v1439, 120
      %v1539 = vpop.permute.xlu0 %1538
      %1540 = vrot.lane.b32.xlu0 %v1442, 120
      %v1541 = vpop.permute.xlu0 %1540
      %1542 = vrot.lane.b32.xlu0 %v1444, 120
      %v1543 = vpop.permute.xlu0 %1542
      %1544 = vrot.lane.b32.xlu0 %v1447, 120
      %v1545 = vpop.permute.xlu0 %1544
      %1546 = vrot.lane.b32.xlu0 %v1449, 120
      %v1547 = vpop.permute.xlu0 %1546
      %1548 = vrot.lane.b32.xlu0 %v1452, 120
      %v1549 = vpop.permute.xlu0 %1548
      %1550 = vrot.lane.b32.xlu0 %v1454, 120
      %v1551 = vpop.permute.xlu0 %1550
      %1584 = vrot.lane.b32.xlu0 %v1377, 112
      %v1585 = vpop.permute.xlu0 %1584
      %1586 = vrot.lane.b32.xlu0 %v1379, 112
      %v1587 = vpop.permute.xlu0 %1586
      %1588 = vrot.lane.b32.xlu0 %v1382, 112
      %v1589 = vpop.permute.xlu0 %1588
      %1590 = vrot.lane.b32.xlu0 %v1384, 112
      %v1591 = vpop.permute.xlu0 %1590
      %1592 = vrot.lane.b32.xlu0 %v1387, 112
      %v1593 = vpop.permute.xlu0 %1592
      %1594 = vrot.lane.b32.xlu0 %v1389, 112
      %v1595 = vpop.permute.xlu0 %1594
      %1596 = vrot.lane.b32.xlu0 %v1392, 112
      %v1597 = vpop.permute.xlu0 %1596
      %1598 = vrot.lane.b32.xlu0 %v1394, 112
      %v1599 = vpop.permute.xlu0 %1598
      %1600 = vrot.lane.b32.xlu0 %v1397, 112
      %v1601 = vpop.permute.xlu0 %1600
      %1602 = vrot.lane.b32.xlu0 %v1399, 112
      %v1603 = vpop.permute.xlu0 %1602
      %1604 = vrot.lane.b32.xlu0 %v1402, 112
      %v1605 = vpop.permute.xlu0 %1604
      %1606 = vrot.lane.b32.xlu0 %v1404, 112
      %v1607 = vpop.permute.xlu0 %1606
      %1608 = vrot.lane.b32.xlu0 %v1407, 112
      %v1609 = vpop.permute.xlu0 %1608
      %1610 = vrot.lane.b32.xlu0 %v1409, 112
      %v1611 = vpop.permute.xlu0 %1610
      %1612 = vrot.lane.b32.xlu0 %v1412, 112
      %v1613 = vpop.permute.xlu0 %1612
      %1614 = vrot.lane.b32.xlu0 %v1414, 112
      %v1615 = vpop.permute.xlu0 %1614
      %1616 = vrot.lane.b32.xlu0 %v1417, 112
      %v1617 = vpop.permute.xlu0 %1616
      %1618 = vrot.lane.b32.xlu0 %v1419, 112
      %v1619 = vpop.permute.xlu0 %1618
      %1620 = vrot.lane.b32.xlu0 %v1422, 112
      %v1621 = vpop.permute.xlu0 %1620
      %1622 = vrot.lane.b32.xlu0 %v1424, 112
      %v1623 = vpop.permute.xlu0 %1622
      %1624 = vrot.lane.b32.xlu0 %v1427, 112
      %v1625 = vpop.permute.xlu0 %1624
      %1626 = vrot.lane.b32.xlu0 %v1429, 112
      %v1627 = vpop.permute.xlu0 %1626
      %1628 = vrot.lane.b32.xlu0 %v1432, 112
      %v1629 = vpop.permute.xlu0 %1628
      %1630 = vrot.lane.b32.xlu0 %v1434, 112
      %v1631 = vpop.permute.xlu0 %1630
      %1632 = vrot.lane.b32.xlu0 %v1437, 112
      %v1633 = vpop.permute.xlu0 %1632
      %1634 = vrot.lane.b32.xlu0 %v1439, 112
      %v1635 = vpop.permute.xlu0 %1634
      %1636 = vrot.lane.b32.xlu0 %v1442, 112
      %v1637 = vpop.permute.xlu0 %1636
      %1638 = vrot.lane.b32.xlu0 %v1444, 112
      %v1639 = vpop.permute.xlu0 %1638
      %1640 = vrot.lane.b32.xlu0 %v1447, 112
      %v1641 = vpop.permute.xlu0 %1640
      %1642 = vrot.lane.b32.xlu0 %v1449, 112
      %v1643 = vpop.permute.xlu0 %1642
      %1644 = vrot.lane.b32.xlu0 %v1452, 112
      %v1645 = vpop.permute.xlu0 %1644
      %1646 = vrot.lane.b32.xlu0 %v1454, 112
      %v1647 = vpop.permute.xlu0 %1646
      %1680 = vrot.lane.b32.xlu0 %v1377, 104
      %v1681 = vpop.permute.xlu0 %1680
      %1682 = vrot.lane.b32.xlu0 %v1379, 104
      %v1683 = vpop.permute.xlu0 %1682
      %1684 = vrot.lane.b32.xlu0 %v1382, 104
      %v1685 = vpop.permute.xlu0 %1684
      %1686 = vrot.lane.b32.xlu0 %v1384, 104
      %v1687 = vpop.permute.xlu0 %1686
      %1688 = vrot.lane.b32.xlu0 %v1387, 104
      %v1689 = vpop.permute.xlu0 %1688
      %1690 = vrot.lane.b32.xlu0 %v1389, 104
      %v1691 = vpop.permute.xlu0 %1690
      %1692 = vrot.lane.b32.xlu0 %v1392, 104
      %v1693 = vpop.permute.xlu0 %1692
      %1694 = vrot.lane.b32.xlu0 %v1394, 104
      %v1695 = vpop.permute.xlu0 %1694
      %1696 = vrot.lane.b32.xlu0 %v1397, 104
      %v1697 = vpop.permute.xlu0 %1696
      %1698 = vrot.lane.b32.xlu0 %v1399, 104
      %v1699 = vpop.permute.xlu0 %1698
      %1700 = vrot.lane.b32.xlu0 %v1402, 104
      %v1701 = vpop.permute.xlu0 %1700
      %1702 = vrot.lane.b32.xlu0 %v1404, 104
      %v1703 = vpop.permute.xlu0 %1702
      %1704 = vrot.lane.b32.xlu0 %v1407, 104
      %v1705 = vpop.permute.xlu0 %1704
      %1706 = vrot.lane.b32.xlu0 %v1409, 104
      %v1707 = vpop.permute.xlu0 %1706
      %1708 = vrot.lane.b32.xlu0 %v1412, 104
      %v1709 = vpop.permute.xlu0 %1708
      %1710 = vrot.lane.b32.xlu0 %v1414, 104
      %v1711 = vpop.permute.xlu0 %1710
      %1712 = vrot.lane.b32.xlu0 %v1417, 104
      %v1713 = vpop.permute.xlu0 %1712
      %1714 = vrot.lane.b32.xlu0 %v1419, 104
      %v1715 = vpop.permute.xlu0 %1714
      %1716 = vrot.lane.b32.xlu0 %v1422, 104
      %v1717 = vpop.permute.xlu0 %1716
      %1718 = vrot.lane.b32.xlu0 %v1424, 104
      %v1719 = vpop.permute.xlu0 %1718
      %1720 = vrot.lane.b32.xlu0 %v1427, 104
      %v1721 = vpop.permute.xlu0 %1720
      %1722 = vrot.lane.b32.xlu0 %v1429, 104
      %v1723 = vpop.permute.xlu0 %1722
      %1724 = vrot.lane.b32.xlu0 %v1432, 104
      %v1725 = vpop.permute.xlu0 %1724
      %1726 = vrot.lane.b32.xlu0 %v1434, 104
      %v1727 = vpop.permute.xlu0 %1726
      %1728 = vrot.lane.b32.xlu0 %v1437, 104
      %v1729 = vpop.permute.xlu0 %1728
      %1730 = vrot.lane.b32.xlu0 %v1439, 104
      %v1731 = vpop.permute.xlu0 %1730
      %1732 = vrot.lane.b32.xlu0 %v1442, 104
      %v1733 = vpop.permute.xlu0 %1732
      %1734 = vrot.lane.b32.xlu0 %v1444, 104
      %v1735 = vpop.permute.xlu0 %1734
      %1736 = vrot.lane.b32.xlu0 %v1447, 104
      %v1737 = vpop.permute.xlu0 %1736
      %1738 = vrot.lane.b32.xlu0 %v1449, 104
      %v1739 = vpop.permute.xlu0 %1738
      %1740 = vrot.lane.b32.xlu0 %v1452, 104
      %v1741 = vpop.permute.xlu0 %1740
      %1742 = vrot.lane.b32.xlu0 %v1454, 104
      %v1743 = vpop.permute.xlu0 %1742
      %v1776 = vpack.c.bf16 %v1377, %v1377
      %v1777 = vpack.c.bf16 %v1379, %v1379
      %v1778 = vpack.c.bf16 %v1382, %v1382
      %v1779 = vpack.c.bf16 %v1384, %v1384
      %v1780 = vpack.c.bf16 %v1387, %v1387
      %v1781 = vpack.c.bf16 %v1389, %v1389
      %v1782 = vpack.c.bf16 %v1392, %v1392
      %v1783 = vpack.c.bf16 %v1394, %v1394
      %v1784 = vpack.c.bf16 %v1397, %v1397
      %v1785 = vpack.c.bf16 %v1399, %v1399
      %v1786 = vpack.c.bf16 %v1402, %v1402
      %v1787 = vpack.c.bf16 %v1404, %v1404
      %v1788 = vpack.c.bf16 %v1407, %v1407
      %v1789 = vpack.c.bf16 %v1409, %v1409
      %v1790 = vpack.c.bf16 %v1412, %v1412
      %v1791 = vpack.c.bf16 %v1414, %v1414
      %v1792 = vpack.c.bf16 %v1417, %v1417
      %v1793 = vpack.c.bf16 %v1419, %v1419
      %v1794 = vpack.c.bf16 %v1422, %v1422
      %v1795 = vpack.c.bf16 %v1424, %v1424
      %v1796 = vpack.c.bf16 %v1427, %v1427
      %v1797 = vpack.c.bf16 %v1429, %v1429
      %v1798 = vpack.c.bf16 %v1432, %v1432
      %v1799 = vpack.c.bf16 %v1434, %v1434
      %v1800 = vpack.c.bf16 %v1437, %v1437
      %v1801 = vpack.c.bf16 %v1439, %v1439
      %v1802 = vpack.c.bf16 %v1442, %v1442
      %v1803 = vpack.c.bf16 %v1444, %v1444
      %v1804 = vpack.c.bf16 %v1447, %v1447
      %v1805 = vpack.c.bf16 %v1449, %v1449
      %v1806 = vpack.c.bf16 %v1452, %v1452
      %v1807 = vpack.c.bf16 %v1454, %v1454
      %v1808 = vpack.c.bf16 %v1489, %v1489
      %v1809 = vpack.c.bf16 %v1491, %v1491
      %v1810 = vpack.c.bf16 %v1493, %v1493
      %v1811 = vpack.c.bf16 %v1495, %v1495
      %v1812 = vpack.c.bf16 %v1497, %v1497
      %v1813 = vpack.c.bf16 %v1499, %v1499
      %v1814 = vpack.c.bf16 %v1501, %v1501
      %v1815 = vpack.c.bf16 %v1503, %v1503
      %v1816 = vpack.c.bf16 %v1505, %v1505
      %v1817 = vpack.c.bf16 %v1507, %v1507
      %v1818 = vpack.c.bf16 %v1509, %v1509
      %v1819 = vpack.c.bf16 %v1511, %v1511
      %v1820 = vpack.c.bf16 %v1513, %v1513
      %v1821 = vpack.c.bf16 %v1515, %v1515
      %v1822 = vpack.c.bf16 %v1517, %v1517
      %v1823 = vpack.c.bf16 %v1519, %v1519
      %v1824 = vpack.c.bf16 %v1521, %v1521
      %v1825 = vpack.c.bf16 %v1523, %v1523
      %v1826 = vpack.c.bf16 %v1525, %v1525
      %v1827 = vpack.c.bf16 %v1527, %v1527
      %v1828 = vpack.c.bf16 %v1529, %v1529
      %v1829 = vpack.c.bf16 %v1531, %v1531
      %v1830 = vpack.c.bf16 %v1533, %v1533
      %v1831 = vpack.c.bf16 %v1535, %v1535
      %v1832 = vpack.c.bf16 %v1537, %v1537
      %v1833 = vpack.c.bf16 %v1539, %v1539
      %v1834 = vpack.c.bf16 %v1541, %v1541
      %v1835 = vpack.c.bf16 %v1543, %v1543
      %v1836 = vpack.c.bf16 %v1545, %v1545
      %v1837 = vpack.c.bf16 %v1547, %v1547
      %v1838 = vpack.c.bf16 %v1549, %v1549
      %v1839 = vpack.c.bf16 %v1551, %v1551
      %v1840 = vpack.c.bf16 %v1585, %v1585
      %v1841 = vpack.c.bf16 %v1587, %v1587
      %v1842 = vpack.c.bf16 %v1589, %v1589
      %v1843 = vpack.c.bf16 %v1591, %v1591
      %v1844 = vpack.c.bf16 %v1593, %v1593
      %v1845 = vpack.c.bf16 %v1595, %v1595
      %v1846 = vpack.c.bf16 %v1597, %v1597
      %v1847 = vpack.c.bf16 %v1599, %v1599
      %v1848 = vpack.c.bf16 %v1601, %v1601
      %v1849 = vpack.c.bf16 %v1603, %v1603
      %v1850 = vpack.c.bf16 %v1605, %v1605
      %v1851 = vpack.c.bf16 %v1607, %v1607
      %v1852 = vpack.c.bf16 %v1609, %v1609
      %v1853 = vpack.c.bf16 %v1611, %v1611
      %v1854 = vpack.c.bf16 %v1613, %v1613
      %v1855 = vpack.c.bf16 %v1615, %v1615
      %v1856 = vpack.c.bf16 %v1617, %v1617
      %v1857 = vpack.c.bf16 %v1619, %v1619
      %v1858 = vpack.c.bf16 %v1621, %v1621
      %v1859 = vpack.c.bf16 %v1623, %v1623
      %v1860 = vpack.c.bf16 %v1625, %v1625
      %v1861 = vpack.c.bf16 %v1627, %v1627
      %v1862 = vpack.c.bf16 %v1629, %v1629
      %v1863 = vpack.c.bf16 %v1631, %v1631
      %v1864 = vpack.c.bf16 %v1633, %v1633
      %v1865 = vpack.c.bf16 %v1635, %v1635
      %v1866 = vpack.c.bf16 %v1637, %v1637
      %v1867 = vpack.c.bf16 %v1639, %v1639
      %v1868 = vpack.c.bf16 %v1641, %v1641
      %v1869 = vpack.c.bf16 %v1643, %v1643
      %v1870 = vpack.c.bf16 %v1645, %v1645
      %v1871 = vpack.c.bf16 %v1647, %v1647
      %v1872 = vpack.c.bf16 %v1681, %v1681
      %v1873 = vpack.c.bf16 %v1683, %v1683
      %v1874 = vpack.c.bf16 %v1685, %v1685
      %v1875 = vpack.c.bf16 %v1687, %v1687
      %v1876 = vpack.c.bf16 %v1689, %v1689
      %v1877 = vpack.c.bf16 %v1691, %v1691
      %v1878 = vpack.c.bf16 %v1693, %v1693
      %v1879 = vpack.c.bf16 %v1695, %v1695
      %v1880 = vpack.c.bf16 %v1697, %v1697
      %v1881 = vpack.c.bf16 %v1699, %v1699
      %v1882 = vpack.c.bf16 %v1701, %v1701
      %v1883 = vpack.c.bf16 %v1703, %v1703
      %v1884 = vpack.c.bf16 %v1705, %v1705
      %v1885 = vpack.c.bf16 %v1707, %v1707
      %v1886 = vpack.c.bf16 %v1709, %v1709
      %v1887 = vpack.c.bf16 %v1711, %v1711
      %v1888 = vpack.c.bf16 %v1713, %v1713
      %v1889 = vpack.c.bf16 %v1715, %v1715
      %v1890 = vpack.c.bf16 %v1717, %v1717
      %v1891 = vpack.c.bf16 %v1719, %v1719
      %v1892 = vpack.c.bf16 %v1721, %v1721
      %v1893 = vpack.c.bf16 %v1723, %v1723
      %v1894 = vpack.c.bf16 %v1725, %v1725
      %v1895 = vpack.c.bf16 %v1727, %v1727
      %v1896 = vpack.c.bf16 %v1729, %v1729
      %v1897 = vpack.c.bf16 %v1731, %v1731
      %v1898 = vpack.c.bf16 %v1733, %v1733
      %v1899 = vpack.c.bf16 %v1735, %v1735
      %v1900 = vpack.c.bf16 %v1737, %v1737
      %v1901 = vpack.c.bf16 %v1739, %v1739
      %v1902 = vpack.c.bf16 %v1741, %v1741
      %v1903 = vpack.c.bf16 %v1743, %v1743
      %v1904 = vld [vmem:[%s5] sm:$0xff]
      %v1905 = vld [vmem:[%s5 + $0x8] sm:$0xff]
      %v1906 = vld [vmem:[%s5 + $0x10] sm:$0xff]
      %v1907 = vld [vmem:[%s5 + $0x18] sm:$0xff]
      %v1908 = vld [vmem:[%s5 + $0x20] sm:$0xff]
      %v1909 = vld [vmem:[%s5 + $0x28] sm:$0xff]
      %v1910 = vld [vmem:[%s5 + $0x30] sm:$0xff]
      %v1911 = vld [vmem:[%s5 + $0x38] sm:$0xff]
      %v1912 = vld [vmem:[%s5 + $0x40] sm:$0xff]
      %v1913 = vld [vmem:[%s5 + $0x48] sm:$0xff]
      %v1914 = vld [vmem:[%s5 + $0x50] sm:$0xff]
      %v1915 = vld [vmem:[%s5 + $0x58] sm:$0xff]
      %v1916 = vld [vmem:[%s5 + $0x60] sm:$0xff]
      %v1917 = vld [vmem:[%s5 + $0x68] sm:$0xff]
      %v1918 = vld [vmem:[%s5 + $0x70] sm:$0xff]
      %v1919 = vld [vmem:[%s5 + $0x78] sm:$0xff]
      %v1920 = vld [vmem:[%s5 + $0x80] sm:$0xff]
      %v1921 = vld [vmem:[%s5 + $0x88] sm:$0xff]
      %v1922 = vld [vmem:[%s5 + $0x90] sm:$0xff]
      %v1923 = vld [vmem:[%s5 + $0x98] sm:$0xff]
      %v1924 = vld [vmem:[%s5 + $0xa0] sm:$0xff]
      %v1925 = vld [vmem:[%s5 + $0xa8] sm:$0xff]
      %v1926 = vld [vmem:[%s5 + $0xb0] sm:$0xff]
      %v1927 = vld [vmem:[%s5 + $0xb8] sm:$0xff]
      %v1928 = vld [vmem:[%s5 + $0xc0] sm:$0xff]
      %v1929 = vld [vmem:[%s5 + $0xc8] sm:$0xff]
      %v1930 = vld [vmem:[%s5 + $0xd0] sm:$0xff]
      %v1931 = vld [vmem:[%s5 + $0xd8] sm:$0xff]
      %v1932 = vld [vmem:[%s5 + $0xe0] sm:$0xff]
      %v1933 = vld [vmem:[%s5 + $0xe8] sm:$0xff]
      %v1934 = vld [vmem:[%s5 + $0xf0] sm:$0xff]
      %v1935 = vld [vmem:[%s5 + $0xf8] sm:$0xff]
      %v1936 = vld [vmem:[%s5 + $0x100] sm:$0xff]
      %v1937 = vld [vmem:[%s5 + $0x108] sm:$0xff]
      %v1938 = vld [vmem:[%s5 + $0x110] sm:$0xff]
      %v1939 = vld [vmem:[%s5 + $0x118] sm:$0xff]
      %v1940 = vld [vmem:[%s5 + $0x120] sm:$0xff]
      %v1941 = vld [vmem:[%s5 + $0x128] sm:$0xff]
      %v1942 = vld [vmem:[%s5 + $0x130] sm:$0xff]
      %v1943 = vld [vmem:[%s5 + $0x138] sm:$0xff]
      %v1944 = vld [vmem:[%s5 + $0x140] sm:$0xff]
      %v1945 = vld [vmem:[%s5 + $0x148] sm:$0xff]
      %v1946 = vld [vmem:[%s5 + $0x150] sm:$0xff]
      %v1947 = vld [vmem:[%s5 + $0x158] sm:$0xff]
      %v1948 = vld [vmem:[%s5 + $0x160] sm:$0xff]
      %v1949 = vld [vmem:[%s5 + $0x168] sm:$0xff]
      %v1950 = vld [vmem:[%s5 + $0x170] sm:$0xff]
      %v1951 = vld [vmem:[%s5 + $0x178] sm:$0xff]
      %v1952 = vld [vmem:[%s5 + $0x180] sm:$0xff]
      %v1953 = vld [vmem:[%s5 + $0x188] sm:$0xff]
      %v1954 = vld [vmem:[%s5 + $0x190] sm:$0xff]
      %v1955 = vld [vmem:[%s5 + $0x198] sm:$0xff]
      %v1956 = vld [vmem:[%s5 + $0x1a0] sm:$0xff]
      %v1957 = vld [vmem:[%s5 + $0x1a8] sm:$0xff]
      %v1958 = vld [vmem:[%s5 + $0x1b0] sm:$0xff]
      %v1959 = vld [vmem:[%s5 + $0x1b8] sm:$0xff]
      %v1960 = vld [vmem:[%s5 + $0x1c0] sm:$0xff]
      %v1961 = vld [vmem:[%s5 + $0x1c8] sm:$0xff]
      %v1962 = vld [vmem:[%s5 + $0x1d0] sm:$0xff]
      %v1963 = vld [vmem:[%s5 + $0x1d8] sm:$0xff]
      %v1964 = vld [vmem:[%s5 + $0x1e0] sm:$0xff]
      %v1965 = vld [vmem:[%s5 + $0x1e8] sm:$0xff]
      %v1966 = vld [vmem:[%s5 + $0x1f0] sm:$0xff]
      %v1967 = vld [vmem:[%s5 + $0x1f8] sm:$0xff]
      %v1968 = vld [vmem:[%s5 + $0x200] sm:$0xff]
      %v1969 = vld [vmem:[%s5 + $0x208] sm:$0xff]
      %v1970 = vld [vmem:[%s5 + $0x210] sm:$0xff]
      %v1971 = vld [vmem:[%s5 + $0x218] sm:$0xff]
      %v1972 = vld [vmem:[%s5 + $0x220] sm:$0xff]
      %v1973 = vld [vmem:[%s5 + $0x228] sm:$0xff]
      %v1974 = vld [vmem:[%s5 + $0x230] sm:$0xff]
      %v1975 = vld [vmem:[%s5 + $0x238] sm:$0xff]
      %v1976 = vld [vmem:[%s5 + $0x240] sm:$0xff]
      %v1977 = vld [vmem:[%s5 + $0x248] sm:$0xff]
      %v1978 = vld [vmem:[%s5 + $0x250] sm:$0xff]
      %v1979 = vld [vmem:[%s5 + $0x258] sm:$0xff]
      %v1980 = vld [vmem:[%s5 + $0x260] sm:$0xff]
      %v1981 = vld [vmem:[%s5 + $0x268] sm:$0xff]
      %v1982 = vld [vmem:[%s5 + $0x270] sm:$0xff]
      %v1983 = vld [vmem:[%s5 + $0x278] sm:$0xff]
      %v1984 = vld [vmem:[%s5 + $0x280] sm:$0xff]
      %v1985 = vld [vmem:[%s5 + $0x288] sm:$0xff]
      %v1986 = vld [vmem:[%s5 + $0x290] sm:$0xff]
      %v1987 = vld [vmem:[%s5 + $0x298] sm:$0xff]
      %v1988 = vld [vmem:[%s5 + $0x2a0] sm:$0xff]
      %v1989 = vld [vmem:[%s5 + $0x2a8] sm:$0xff]
      %v1990 = vld [vmem:[%s5 + $0x2b0] sm:$0xff]
      %v1991 = vld [vmem:[%s5 + $0x2b8] sm:$0xff]
      %v1992 = vld [vmem:[%s5 + $0x2c0] sm:$0xff]
      %v1993 = vld [vmem:[%s5 + $0x2c8] sm:$0xff]
      %v1994 = vld [vmem:[%s5 + $0x2d0] sm:$0xff]
      %v1995 = vld [vmem:[%s5 + $0x2d8] sm:$0xff]
      %v1996 = vld [vmem:[%s5 + $0x2e0] sm:$0xff]
      %v1997 = vld [vmem:[%s5 + $0x2e8] sm:$0xff]
      %v1998 = vld [vmem:[%s5 + $0x2f0] sm:$0xff]
      %v1999 = vld [vmem:[%s5 + $0x2f8] sm:$0xff]
      %v2000 = vld [vmem:[%s5 + $0x300] sm:$0xff]
      %v2001 = vld [vmem:[%s5 + $0x308] sm:$0xff]
      %v2002 = vld [vmem:[%s5 + $0x310] sm:$0xff]
      %v2003 = vld [vmem:[%s5 + $0x318] sm:$0xff]
      %v2004 = vld [vmem:[%s5 + $0x320] sm:$0xff]
      %v2005 = vld [vmem:[%s5 + $0x328] sm:$0xff]
      %v2006 = vld [vmem:[%s5 + $0x330] sm:$0xff]
      %v2007 = vld [vmem:[%s5 + $0x338] sm:$0xff]
      %v2008 = vld [vmem:[%s5 + $0x340] sm:$0xff]
      %v2009 = vld [vmem:[%s5 + $0x348] sm:$0xff]
      %v2010 = vld [vmem:[%s5 + $0x350] sm:$0xff]
      %v2011 = vld [vmem:[%s5 + $0x358] sm:$0xff]
      %v2012 = vld [vmem:[%s5 + $0x360] sm:$0xff]
      %v2013 = vld [vmem:[%s5 + $0x368] sm:$0xff]
      %v2014 = vld [vmem:[%s5 + $0x370] sm:$0xff]
      %v2015 = vld [vmem:[%s5 + $0x378] sm:$0xff]
      %v2016 = vld [vmem:[%s5 + $0x380] sm:$0xff]
      %v2017 = vld [vmem:[%s5 + $0x388] sm:$0xff]
      %v2018 = vld [vmem:[%s5 + $0x390] sm:$0xff]
      %v2019 = vld [vmem:[%s5 + $0x398] sm:$0xff]
      %v2020 = vld [vmem:[%s5 + $0x3a0] sm:$0xff]
      %v2021 = vld [vmem:[%s5 + $0x3a8] sm:$0xff]
      %v2022 = vld [vmem:[%s5 + $0x3b0] sm:$0xff]
      %v2023 = vld [vmem:[%s5 + $0x3b8] sm:$0xff]
      %v2024 = vld [vmem:[%s5 + $0x3c0] sm:$0xff]
      %v2025 = vld [vmem:[%s5 + $0x3c8] sm:$0xff]
      %v2026 = vld [vmem:[%s5 + $0x3d0] sm:$0xff]
      %v2027 = vld [vmem:[%s5 + $0x3d8] sm:$0xff]
      %v2028 = vld [vmem:[%s5 + $0x3e0] sm:$0xff]
      %v2029 = vld [vmem:[%s5 + $0x3e8] sm:$0xff]
      %v2030 = vld [vmem:[%s5 + $0x3f0] sm:$0xff]
      %v2031 = vld [vmem:[%s5 + $0x3f8] sm:$0xff]
      %v2036 = vunpack.c.l.b16 %v1776
      %v2037 = vunpack.c.l.b16 %v1777
      %v2038 = vunpack.c.l.b16 %v1778
      %v2039 = vunpack.c.l.b16 %v1779
      %v2040 = vpack.c.b16 %v2037, %v2036
      %v2041 = vpack.c.b16 %v2039, %v2038
      %2042 = vrot.lane.b32.xlu0 %v2040, 96
      %v2043 = vpop.permute.xlu0 %2042
      %2044 = vrot.lane.b32.xlu0 %v2041, 96
      %v2045 = vpop.permute.xlu0 %2044
      %vm2046 = vcmask 64512
      %v2048 = vsel %vm2046, %v2040, 0
      %v2051 = vsel %vm2046, %v2041, 0
      %v2054 = vsel %vm2046, %v2043, 0
      %v2057 = vsel %vm2046, %v2045, 0
      %2059 = vmatpush.bf16.xpose.msra.mxu0 0
      %2060 = vmatpush.bf16.xpose.msra.mxu0 0
      %2061 = vmatpush.bf16.xpose.msra.mxu0 0
      %2062 = vmatpush.bf16.xpose.msra.mxu0 0
      %2063 = vmatpush.bf16.xpose.msra.mxu0 0
      %2064 = vmatpush.bf16.xpose.msra.mxu0 0
      %2065 = vmatpush.bf16.xpose.msra.mxu0 %v2057
      %2066 = vmatpush.bf16.xpose.msra.mxu0 %v2054
      %2067 = vmatmul.bf16.gmra.mxu0 %v2048
      %v2068 = vpop.f32.mrf.mxu0
      %v2069 = vadd.f32 %v1904, %v2068
      %v2070 = vpop.f32.mrf.mxu0
      %v2071 = vadd.f32 %v1905, %v2070
      %2072 = vmatmul.bf16.gmra.mxu0 %v2051
      %v2073 = vpop.f32.mrf.mxu0
      %v2074 = vadd.f32 %v1906, %v2073
      %v2075 = vpop.f32.mrf.mxu0
      %v2076 = vadd.f32 %v1907, %v2075
      %2077 = vdwg.mxu0
      %v2082 = vunpack.c.l.b16 %v1780
      %v2083 = vunpack.c.l.b16 %v1781
      %v2084 = vunpack.c.l.b16 %v1782
      %v2085 = vunpack.c.l.b16 %v1783
      %v2086 = vpack.c.b16 %v2083, %v2082
      %v2087 = vpack.c.b16 %v2085, %v2084
      %2088 = vrot.lane.b32.xlu0 %v2086, 96
      %v2089 = vpop.permute.xlu0 %2088
      %2090 = vrot.lane.b32.xlu0 %v2087, 96
      %v2091 = vpop.permute.xlu0 %2090
      %v2093 = vsel %vm2046, %v2086, 0
      %v2096 = vsel %vm2046, %v2087, 0
      %v2099 = vsel %vm2046, %v2089, 0
      %v2102 = vsel %vm2046, %v2091, 0
      %2104 = vmatpush.bf16.xpose.msra.mxu0 0
      %2105 = vmatpush.bf16.xpose.msra.mxu0 0
      %2106 = vmatpush.bf16.xpose.msra.mxu0 0
      %2107 = vmatpush.bf16.xpose.msra.mxu0 0
      %2108 = vmatpush.bf16.xpose.msra.mxu0 0
      %2109 = vmatpush.bf16.xpose.msra.mxu0 0
      %2110 = vmatpush.bf16.xpose.msra.mxu0 %v2102
      %2111 = vmatpush.bf16.xpose.msra.mxu0 %v2099
      %2112 = vmatmul.bf16.gmra.mxu0 %v2093
      %v2113 = vpop.f32.mrf.mxu0
      %v2114 = vadd.f32 %v1908, %v2113
      %v2115 = vpop.f32.mrf.mxu0
      %v2116 = vadd.f32 %v1909, %v2115
      %2117 = vmatmul.bf16.gmra.mxu0 %v2096
      %v2118 = vpop.f32.mrf.mxu0
      %v2119 = vadd.f32 %v1910, %v2118
      %v2120 = vpop.f32.mrf.mxu0
      %v2121 = vadd.f32 %v1911, %v2120
      %2122 = vdwg.mxu0
      %v2127 = vunpack.c.l.b16 %v1784
      %v2128 = vunpack.c.l.b16 %v1785
      %v2129 = vunpack.c.l.b16 %v1786
      %v2130 = vunpack.c.l.b16 %v1787
      %v2131 = vpack.c.b16 %v2128, %v2127
      %v2132 = vpack.c.b16 %v2130, %v2129
      %2133 = vrot.lane.b32.xlu0 %v2131, 96
      %v2134 = vpop.permute.xlu0 %2133
      %2135 = vrot.lane.b32.xlu0 %v2132, 96
      %v2136 = vpop.permute.xlu0 %2135
      %v2138 = vsel %vm2046, %v2131, 0
      %v2141 = vsel %vm2046, %v2132, 0
      %v2144 = vsel %vm2046, %v2134, 0
      %v2147 = vsel %vm2046, %v2136, 0
      %2149 = vmatpush.bf16.xpose.msra.mxu0 0
      %2150 = vmatpush.bf16.xpose.msra.mxu0 0
      %2151 = vmatpush.bf16.xpose.msra.mxu0 0
      %2152 = vmatpush.bf16.xpose.msra.mxu0 0
      %2153 = vmatpush.bf16.xpose.msra.mxu0 0
      %2154 = vmatpush.bf16.xpose.msra.mxu0 0
      %2155 = vmatpush.bf16.xpose.msra.mxu0 %v2147
      %2156 = vmatpush.bf16.xpose.msra.mxu0 %v2144
      %2157 = vmatmul.bf16.gmra.mxu0 %v2138
      %v2158 = vpop.f32.mrf.mxu0
      %v2159 = vadd.f32 %v1912, %v2158
      %v2160 = vpop.f32.mrf.mxu0
      %v2161 = vadd.f32 %v1913, %v2160
      %2162 = vmatmul.bf16.gmra.mxu0 %v2141
      %v2163 = vpop.f32.mrf.mxu0
      %v2164 = vadd.f32 %v1914, %v2163
      %v2165 = vpop.f32.mrf.mxu0
      %v2166 = vadd.f32 %v1915, %v2165
      %2167 = vdwg.mxu0
      %v2172 = vunpack.c.l.b16 %v1788
      %v2173 = vunpack.c.l.b16 %v1789
      %v2174 = vunpack.c.l.b16 %v1790
      %v2175 = vunpack.c.l.b16 %v1791
      %v2176 = vpack.c.b16 %v2173, %v2172
      %v2177 = vpack.c.b16 %v2175, %v2174
      %2178 = vrot.lane.b32.xlu0 %v2176, 96
      %v2179 = vpop.permute.xlu0 %2178
      %2180 = vrot.lane.b32.xlu0 %v2177, 96
      %v2181 = vpop.permute.xlu0 %2180
      %v2183 = vsel %vm2046, %v2176, 0
      %v2186 = vsel %vm2046, %v2177, 0
      %v2189 = vsel %vm2046, %v2179, 0
      %v2192 = vsel %vm2046, %v2181, 0
      %2194 = vmatpush.bf16.xpose.msra.mxu0 0
      %2195 = vmatpush.bf16.xpose.msra.mxu0 0
      %2196 = vmatpush.bf16.xpose.msra.mxu0 0
      %2197 = vmatpush.bf16.xpose.msra.mxu0 0
      %2198 = vmatpush.bf16.xpose.msra.mxu0 0
      %2199 = vmatpush.bf16.xpose.msra.mxu0 0
      %2200 = vmatpush.bf16.xpose.msra.mxu0 %v2192
      %2201 = vmatpush.bf16.xpose.msra.mxu0 %v2189
      %2202 = vmatmul.bf16.gmra.mxu0 %v2183
      %v2203 = vpop.f32.mrf.mxu0
      %v2204 = vadd.f32 %v1916, %v2203
      %v2205 = vpop.f32.mrf.mxu0
      %v2206 = vadd.f32 %v1917, %v2205
      %2207 = vmatmul.bf16.gmra.mxu0 %v2186
      %v2208 = vpop.f32.mrf.mxu0
      %v2209 = vadd.f32 %v1918, %v2208
      %v2210 = vpop.f32.mrf.mxu0
      %v2211 = vadd.f32 %v1919, %v2210
      %2212 = vdwg.mxu0
      %v2217 = vunpack.c.l.b16 %v1792
      %v2218 = vunpack.c.l.b16 %v1793
      %v2219 = vunpack.c.l.b16 %v1794
      %v2220 = vunpack.c.l.b16 %v1795
      %v2221 = vpack.c.b16 %v2218, %v2217
      %v2222 = vpack.c.b16 %v2220, %v2219
      %2223 = vrot.lane.b32.xlu0 %v2221, 96
      %v2224 = vpop.permute.xlu0 %2223
      %2225 = vrot.lane.b32.xlu0 %v2222, 96
      %v2226 = vpop.permute.xlu0 %2225
      %v2228 = vsel %vm2046, %v2221, 0
      %v2231 = vsel %vm2046, %v2222, 0
      %v2234 = vsel %vm2046, %v2224, 0
      %v2237 = vsel %vm2046, %v2226, 0
      %2239 = vmatpush.bf16.xpose.msra.mxu0 0
      %2240 = vmatpush.bf16.xpose.msra.mxu0 0
      %2241 = vmatpush.bf16.xpose.msra.mxu0 0
      %2242 = vmatpush.bf16.xpose.msra.mxu0 0
      %2243 = vmatpush.bf16.xpose.msra.mxu0 0
      %2244 = vmatpush.bf16.xpose.msra.mxu0 0
      %2245 = vmatpush.bf16.xpose.msra.mxu0 %v2237
      %2246 = vmatpush.bf16.xpose.msra.mxu0 %v2234
      %2247 = vmatmul.bf16.gmra.mxu0 %v2228
      %v2248 = vpop.f32.mrf.mxu0
      %v2249 = vadd.f32 %v1920, %v2248
      %v2250 = vpop.f32.mrf.mxu0
      %v2251 = vadd.f32 %v1921, %v2250
      %2252 = vmatmul.bf16.gmra.mxu0 %v2231
      %v2253 = vpop.f32.mrf.mxu0
      %v2254 = vadd.f32 %v1922, %v2253
      %v2255 = vpop.f32.mrf.mxu0
      %v2256 = vadd.f32 %v1923, %v2255
      %2257 = vdwg.mxu0
      %v2262 = vunpack.c.l.b16 %v1796
      %v2263 = vunpack.c.l.b16 %v1797
      %v2264 = vunpack.c.l.b16 %v1798
      %v2265 = vunpack.c.l.b16 %v1799
      %v2266 = vpack.c.b16 %v2263, %v2262
      %v2267 = vpack.c.b16 %v2265, %v2264
      %2268 = vrot.lane.b32.xlu0 %v2266, 96
      %v2269 = vpop.permute.xlu0 %2268
      %2270 = vrot.lane.b32.xlu0 %v2267, 96
      %v2271 = vpop.permute.xlu0 %2270
      %v2273 = vsel %vm2046, %v2266, 0
      %v2276 = vsel %vm2046, %v2267, 0
      %v2279 = vsel %vm2046, %v2269, 0
      %v2282 = vsel %vm2046, %v2271, 0
      %2284 = vmatpush.bf16.xpose.msra.mxu0 0
      %2285 = vmatpush.bf16.xpose.msra.mxu0 0
      %2286 = vmatpush.bf16.xpose.msra.mxu0 0
      %2287 = vmatpush.bf16.xpose.msra.mxu0 0
      %2288 = vmatpush.bf16.xpose.msra.mxu0 0
      %2289 = vmatpush.bf16.xpose.msra.mxu0 0
      %2290 = vmatpush.bf16.xpose.msra.mxu0 %v2282
      %2291 = vmatpush.bf16.xpose.msra.mxu0 %v2279
      %2292 = vmatmul.bf16.gmra.mxu0 %v2273
      %v2293 = vpop.f32.mrf.mxu0
      %v2294 = vadd.f32 %v1924, %v2293
      %v2295 = vpop.f32.mrf.mxu0
      %v2296 = vadd.f32 %v1925, %v2295
      %2297 = vmatmul.bf16.gmra.mxu0 %v2276
      %v2298 = vpop.f32.mrf.mxu0
      %v2299 = vadd.f32 %v1926, %v2298
      %v2300 = vpop.f32.mrf.mxu0
      %v2301 = vadd.f32 %v1927, %v2300
      %2302 = vdwg.mxu0
      %v2307 = vunpack.c.l.b16 %v1800
      %v2308 = vunpack.c.l.b16 %v1801
      %v2309 = vunpack.c.l.b16 %v1802
      %v2310 = vunpack.c.l.b16 %v1803
      %v2311 = vpack.c.b16 %v2308, %v2307
      %v2312 = vpack.c.b16 %v2310, %v2309
      %2313 = vrot.lane.b32.xlu0 %v2311, 96
      %v2314 = vpop.permute.xlu0 %2313
      %2315 = vrot.lane.b32.xlu0 %v2312, 96
      %v2316 = vpop.permute.xlu0 %2315
      %v2318 = vsel %vm2046, %v2311, 0
      %v2321 = vsel %vm2046, %v2312, 0
      %v2324 = vsel %vm2046, %v2314, 0
      %v2327 = vsel %vm2046, %v2316, 0
      %2329 = vmatpush.bf16.xpose.msra.mxu0 0
      %2330 = vmatpush.bf16.xpose.msra.mxu0 0
      %2331 = vmatpush.bf16.xpose.msra.mxu0 0
      %2332 = vmatpush.bf16.xpose.msra.mxu0 0
      %2333 = vmatpush.bf16.xpose.msra.mxu0 0
      %2334 = vmatpush.bf16.xpose.msra.mxu0 0
      %2335 = vmatpush.bf16.xpose.msra.mxu0 %v2327
      %2336 = vmatpush.bf16.xpose.msra.mxu0 %v2324
      %2337 = vmatmul.bf16.gmra.mxu0 %v2318
      %v2338 = vpop.f32.mrf.mxu0
      %v2339 = vadd.f32 %v1928, %v2338
      %v2340 = vpop.f32.mrf.mxu0
      %v2341 = vadd.f32 %v1929, %v2340
      %2342 = vmatmul.bf16.gmra.mxu0 %v2321
      %v2343 = vpop.f32.mrf.mxu0
      %v2344 = vadd.f32 %v1930, %v2343
      %v2345 = vpop.f32.mrf.mxu0
      %v2346 = vadd.f32 %v1931, %v2345
      %2347 = vdwg.mxu0
      %v2352 = vunpack.c.l.b16 %v1804
      %v2353 = vunpack.c.l.b16 %v1805
      %v2354 = vunpack.c.l.b16 %v1806
      %v2355 = vunpack.c.l.b16 %v1807
      %v2356 = vpack.c.b16 %v2353, %v2352
      %v2357 = vpack.c.b16 %v2355, %v2354
      %2358 = vrot.lane.b32.xlu0 %v2356, 96
      %v2359 = vpop.permute.xlu0 %2358
      %2360 = vrot.lane.b32.xlu0 %v2357, 96
      %v2361 = vpop.permute.xlu0 %2360
      %v2363 = vsel %vm2046, %v2356, 0
      %v2366 = vsel %vm2046, %v2357, 0
      %v2369 = vsel %vm2046, %v2359, 0
      %v2372 = vsel %vm2046, %v2361, 0
      %2374 = vmatpush.bf16.xpose.msra.mxu0 0
      %2375 = vmatpush.bf16.xpose.msra.mxu0 0
      %2376 = vmatpush.bf16.xpose.msra.mxu0 0
      %2377 = vmatpush.bf16.xpose.msra.mxu0 0
      %2378 = vmatpush.bf16.xpose.msra.mxu0 0
      %2379 = vmatpush.bf16.xpose.msra.mxu0 0
      %2380 = vmatpush.bf16.xpose.msra.mxu0 %v2372
      %2381 = vmatpush.bf16.xpose.msra.mxu0 %v2369
      %2382 = vmatmul.bf16.gmra.mxu0 %v2363
      %v2383 = vpop.f32.mrf.mxu0
      %v2384 = vadd.f32 %v1932, %v2383
      %v2385 = vpop.f32.mrf.mxu0
      %v2386 = vadd.f32 %v1933, %v2385
      %2387 = vmatmul.bf16.gmra.mxu0 %v2366
      %v2388 = vpop.f32.mrf.mxu0
      %v2389 = vadd.f32 %v1934, %v2388
      %v2390 = vpop.f32.mrf.mxu0
      %v2391 = vadd.f32 %v1935, %v2390
      %2392 = vdwg.mxu0
      %v2397 = vunpack.c.l.b16 %v1808
      %v2398 = vunpack.c.l.b16 %v1809
      %v2399 = vunpack.c.l.b16 %v1810
      %v2400 = vunpack.c.l.b16 %v1811
      %v2401 = vpack.c.b16 %v2398, %v2397
      %v2402 = vpack.c.b16 %v2400, %v2399
      %2403 = vrot.lane.b32.xlu0 %v2401, 96
      %v2404 = vpop.permute.xlu0 %2403
      %2405 = vrot.lane.b32.xlu0 %v2402, 96
      %v2406 = vpop.permute.xlu0 %2405
      %v2408 = vsel %vm2046, %v2401, 0
      %v2411 = vsel %vm2046, %v2402, 0
      %v2414 = vsel %vm2046, %v2404, 0
      %v2417 = vsel %vm2046, %v2406, 0
      %2419 = vmatpush.bf16.xpose.msra.mxu0 0
      %2420 = vmatpush.bf16.xpose.msra.mxu0 0
      %2421 = vmatpush.bf16.xpose.msra.mxu0 0
      %2422 = vmatpush.bf16.xpose.msra.mxu0 0
      %2423 = vmatpush.bf16.xpose.msra.mxu0 0
      %2424 = vmatpush.bf16.xpose.msra.mxu0 0
      %2425 = vmatpush.bf16.xpose.msra.mxu0 %v2417
      %2426 = vmatpush.bf16.xpose.msra.mxu0 %v2414
      %2427 = vmatmul.bf16.gmra.mxu0 %v2408
      %v2428 = vpop.f32.mrf.mxu0
      %v2429 = vadd.f32 %v1936, %v2428
      %v2430 = vpop.f32.mrf.mxu0
      %v2431 = vadd.f32 %v1937, %v2430
      %2432 = vmatmul.bf16.gmra.mxu0 %v2411
      %v2433 = vpop.f32.mrf.mxu0
      %v2434 = vadd.f32 %v1938, %v2433
      %v2435 = vpop.f32.mrf.mxu0
      %v2436 = vadd.f32 %v1939, %v2435
      %2437 = vdwg.mxu0
      %v2442 = vunpack.c.l.b16 %v1812
      %v2443 = vunpack.c.l.b16 %v1813
      %v2444 = vunpack.c.l.b16 %v1814
      %v2445 = vunpack.c.l.b16 %v1815
      %v2446 = vpack.c.b16 %v2443, %v2442
      %v2447 = vpack.c.b16 %v2445, %v2444
      %2448 = vrot.lane.b32.xlu0 %v2446, 96
      %v2449 = vpop.permute.xlu0 %2448
      %2450 = vrot.lane.b32.xlu0 %v2447, 96
      %v2451 = vpop.permute.xlu0 %2450
      %v2453 = vsel %vm2046, %v2446, 0
      %v2456 = vsel %vm2046, %v2447, 0
      %v2459 = vsel %vm2046, %v2449, 0
      %v2462 = vsel %vm2046, %v2451, 0
      %2464 = vmatpush.bf16.xpose.msra.mxu0 0
      %2465 = vmatpush.bf16.xpose.msra.mxu0 0
      %2466 = vmatpush.bf16.xpose.msra.mxu0 0
      %2467 = vmatpush.bf16.xpose.msra.mxu0 0
      %2468 = vmatpush.bf16.xpose.msra.mxu0 0
      %2469 = vmatpush.bf16.xpose.msra.mxu0 0
      %2470 = vmatpush.bf16.xpose.msra.mxu0 %v2462
      %2471 = vmatpush.bf16.xpose.msra.mxu0 %v2459
      %2472 = vmatmul.bf16.gmra.mxu0 %v2453
      %v2473 = vpop.f32.mrf.mxu0
      %v2474 = vadd.f32 %v1940, %v2473
      %v2475 = vpop.f32.mrf.mxu0
      %v2476 = vadd.f32 %v1941, %v2475
      %2477 = vmatmul.bf16.gmra.mxu0 %v2456
      %v2478 = vpop.f32.mrf.mxu0
      %v2479 = vadd.f32 %v1942, %v2478
      %v2480 = vpop.f32.mrf.mxu0
      %v2481 = vadd.f32 %v1943, %v2480
      %2482 = vdwg.mxu0
      %v2487 = vunpack.c.l.b16 %v1816
      %v2488 = vunpack.c.l.b16 %v1817
      %v2489 = vunpack.c.l.b16 %v1818
      %v2490 = vunpack.c.l.b16 %v1819
      %v2491 = vpack.c.b16 %v2488, %v2487
      %v2492 = vpack.c.b16 %v2490, %v2489
      %2493 = vrot.lane.b32.xlu0 %v2491, 96
      %v2494 = vpop.permute.xlu0 %2493
      %2495 = vrot.lane.b32.xlu0 %v2492, 96
      %v2496 = vpop.permute.xlu0 %2495
      %v2498 = vsel %vm2046, %v2491, 0
      %v2501 = vsel %vm2046, %v2492, 0
      %v2504 = vsel %vm2046, %v2494, 0
      %v2507 = vsel %vm2046, %v2496, 0
      %2509 = vmatpush.bf16.xpose.msra.mxu0 0
      %2510 = vmatpush.bf16.xpose.msra.mxu0 0
      %2511 = vmatpush.bf16.xpose.msra.mxu0 0
      %2512 = vmatpush.bf16.xpose.msra.mxu0 0
      %2513 = vmatpush.bf16.xpose.msra.mxu0 0
      %2514 = vmatpush.bf16.xpose.msra.mxu0 0
      %2515 = vmatpush.bf16.xpose.msra.mxu0 %v2507
      %2516 = vmatpush.bf16.xpose.msra.mxu0 %v2504
      %2517 = vmatmul.bf16.gmra.mxu0 %v2498
      %v2518 = vpop.f32.mrf.mxu0
      %v2519 = vadd.f32 %v1944, %v2518
      %v2520 = vpop.f32.mrf.mxu0
      %v2521 = vadd.f32 %v1945, %v2520
      %2522 = vmatmul.bf16.gmra.mxu0 %v2501
      %v2523 = vpop.f32.mrf.mxu0
      %v2524 = vadd.f32 %v1946, %v2523
      %v2525 = vpop.f32.mrf.mxu0
      %v2526 = vadd.f32 %v1947, %v2525
      %2527 = vdwg.mxu0
      %v2532 = vunpack.c.l.b16 %v1820
      %v2533 = vunpack.c.l.b16 %v1821
      %v2534 = vunpack.c.l.b16 %v1822
      %v2535 = vunpack.c.l.b16 %v1823
      %v2536 = vpack.c.b16 %v2533, %v2532
      %v2537 = vpack.c.b16 %v2535, %v2534
      %2538 = vrot.lane.b32.xlu0 %v2536, 96
      %v2539 = vpop.permute.xlu0 %2538
      %2540 = vrot.lane.b32.xlu0 %v2537, 96
      %v2541 = vpop.permute.xlu0 %2540
      %v2543 = vsel %vm2046, %v2536, 0
      %v2546 = vsel %vm2046, %v2537, 0
      %v2549 = vsel %vm2046, %v2539, 0
      %v2552 = vsel %vm2046, %v2541, 0
      %2554 = vmatpush.bf16.xpose.msra.mxu0 0
      %2555 = vmatpush.bf16.xpose.msra.mxu0 0
      %2556 = vmatpush.bf16.xpose.msra.mxu0 0
      %2557 = vmatpush.bf16.xpose.msra.mxu0 0
      %2558 = vmatpush.bf16.xpose.msra.mxu0 0
      %2559 = vmatpush.bf16.xpose.msra.mxu0 0
      %2560 = vmatpush.bf16.xpose.msra.mxu0 %v2552
      %2561 = vmatpush.bf16.xpose.msra.mxu0 %v2549
      %2562 = vmatmul.bf16.gmra.mxu0 %v2543
      %v2563 = vpop.f32.mrf.mxu0
      %v2564 = vadd.f32 %v1948, %v2563
      %v2565 = vpop.f32.mrf.mxu0
      %v2566 = vadd.f32 %v1949, %v2565
      %2567 = vmatmul.bf16.gmra.mxu0 %v2546
      %v2568 = vpop.f32.mrf.mxu0
      %v2569 = vadd.f32 %v1950, %v2568
      %v2570 = vpop.f32.mrf.mxu0
      %v2571 = vadd.f32 %v1951, %v2570
      %2572 = vdwg.mxu0
      %v2577 = vunpack.c.l.b16 %v1824
      %v2578 = vunpack.c.l.b16 %v1825
      %v2579 = vunpack.c.l.b16 %v1826
      %v2580 = vunpack.c.l.b16 %v1827
      %v2581 = vpack.c.b16 %v2578, %v2577
      %v2582 = vpack.c.b16 %v2580, %v2579
      %2583 = vrot.lane.b32.xlu0 %v2581, 96
      %v2584 = vpop.permute.xlu0 %2583
      %2585 = vrot.lane.b32.xlu0 %v2582, 96
      %v2586 = vpop.permute.xlu0 %2585
      %v2588 = vsel %vm2046, %v2581, 0
      %v2591 = vsel %vm2046, %v2582, 0
      %v2594 = vsel %vm2046, %v2584, 0
      %v2597 = vsel %vm2046, %v2586, 0
      %2599 = vmatpush.bf16.xpose.msra.mxu0 0
      %2600 = vmatpush.bf16.xpose.msra.mxu0 0
      %2601 = vmatpush.bf16.xpose.msra.mxu0 0
      %2602 = vmatpush.bf16.xpose.msra.mxu0 0
      %2603 = vmatpush.bf16.xpose.msra.mxu0 0
      %2604 = vmatpush.bf16.xpose.msra.mxu0 0
      %2605 = vmatpush.bf16.xpose.msra.mxu0 %v2597
      %2606 = vmatpush.bf16.xpose.msra.mxu0 %v2594
      %2607 = vmatmul.bf16.gmra.mxu0 %v2588
      %v2608 = vpop.f32.mrf.mxu0
      %v2609 = vadd.f32 %v1952, %v2608
      %v2610 = vpop.f32.mrf.mxu0
      %v2611 = vadd.f32 %v1953, %v2610
      %2612 = vmatmul.bf16.gmra.mxu0 %v2591
      %v2613 = vpop.f32.mrf.mxu0
      %v2614 = vadd.f32 %v1954, %v2613
      %v2615 = vpop.f32.mrf.mxu0
      %v2616 = vadd.f32 %v1955, %v2615
      %2617 = vdwg.mxu0
      %v2622 = vunpack.c.l.b16 %v1828
      %v2623 = vunpack.c.l.b16 %v1829
      %v2624 = vunpack.c.l.b16 %v1830
      %v2625 = vunpack.c.l.b16 %v1831
      %v2626 = vpack.c.b16 %v2623, %v2622
      %v2627 = vpack.c.b16 %v2625, %v2624
      %2628 = vrot.lane.b32.xlu0 %v2626, 96
      %v2629 = vpop.permute.xlu0 %2628
      %2630 = vrot.lane.b32.xlu0 %v2627, 96
      %v2631 = vpop.permute.xlu0 %2630
      %v2633 = vsel %vm2046, %v2626, 0
      %v2636 = vsel %vm2046, %v2627, 0
      %v2639 = vsel %vm2046, %v2629, 0
      %v2642 = vsel %vm2046, %v2631, 0
      %2644 = vmatpush.bf16.xpose.msra.mxu0 0
      %2645 = vmatpush.bf16.xpose.msra.mxu0 0
      %2646 = vmatpush.bf16.xpose.msra.mxu0 0
      %2647 = vmatpush.bf16.xpose.msra.mxu0 0
      %2648 = vmatpush.bf16.xpose.msra.mxu0 0
      %2649 = vmatpush.bf16.xpose.msra.mxu0 0
      %2650 = vmatpush.bf16.xpose.msra.mxu0 %v2642
      %2651 = vmatpush.bf16.xpose.msra.mxu0 %v2639
      %2652 = vmatmul.bf16.gmra.mxu0 %v2633
      %v2653 = vpop.f32.mrf.mxu0
      %v2654 = vadd.f32 %v1956, %v2653
      %v2655 = vpop.f32.mrf.mxu0
      %v2656 = vadd.f32 %v1957, %v2655
      %2657 = vmatmul.bf16.gmra.mxu0 %v2636
      %v2658 = vpop.f32.mrf.mxu0
      %v2659 = vadd.f32 %v1958, %v2658
      %v2660 = vpop.f32.mrf.mxu0
      %v2661 = vadd.f32 %v1959, %v2660
      %2662 = vdwg.mxu0
      %v2667 = vunpack.c.l.b16 %v1832
      %v2668 = vunpack.c.l.b16 %v1833
      %v2669 = vunpack.c.l.b16 %v1834
      %v2670 = vunpack.c.l.b16 %v1835
      %v2671 = vpack.c.b16 %v2668, %v2667
      %v2672 = vpack.c.b16 %v2670, %v2669
      %2673 = vrot.lane.b32.xlu0 %v2671, 96
      %v2674 = vpop.permute.xlu0 %2673
      %2675 = vrot.lane.b32.xlu0 %v2672, 96
      %v2676 = vpop.permute.xlu0 %2675
      %v2678 = vsel %vm2046, %v2671, 0
      %v2681 = vsel %vm2046, %v2672, 0
      %v2684 = vsel %vm2046, %v2674, 0
      %v2687 = vsel %vm2046, %v2676, 0
      %2689 = vmatpush.bf16.xpose.msra.mxu0 0
      %2690 = vmatpush.bf16.xpose.msra.mxu0 0
      %2691 = vmatpush.bf16.xpose.msra.mxu0 0
      %2692 = vmatpush.bf16.xpose.msra.mxu0 0
      %2693 = vmatpush.bf16.xpose.msra.mxu0 0
      %2694 = vmatpush.bf16.xpose.msra.mxu0 0
      %2695 = vmatpush.bf16.xpose.msra.mxu0 %v2687
      %2696 = vmatpush.bf16.xpose.msra.mxu0 %v2684
      %2697 = vmatmul.bf16.gmra.mxu0 %v2678
      %v2698 = vpop.f32.mrf.mxu0
      %v2699 = vadd.f32 %v1960, %v2698
      %v2700 = vpop.f32.mrf.mxu0
      %v2701 = vadd.f32 %v1961, %v2700
      %2702 = vmatmul.bf16.gmra.mxu0 %v2681
      %v2703 = vpop.f32.mrf.mxu0
      %v2704 = vadd.f32 %v1962, %v2703
      %v2705 = vpop.f32.mrf.mxu0
      %v2706 = vadd.f32 %v1963, %v2705
      %2707 = vdwg.mxu0
      %v2712 = vunpack.c.l.b16 %v1836
      %v2713 = vunpack.c.l.b16 %v1837
      %v2714 = vunpack.c.l.b16 %v1838
      %v2715 = vunpack.c.l.b16 %v1839
      %v2716 = vpack.c.b16 %v2713, %v2712
      %v2717 = vpack.c.b16 %v2715, %v2714
      %2718 = vrot.lane.b32.xlu0 %v2716, 96
      %v2719 = vpop.permute.xlu0 %2718
      %2720 = vrot.lane.b32.xlu0 %v2717, 96
      %v2721 = vpop.permute.xlu0 %2720
      %v2723 = vsel %vm2046, %v2716, 0
      %v2726 = vsel %vm2046, %v2717, 0
      %v2729 = vsel %vm2046, %v2719, 0
      %v2732 = vsel %vm2046, %v2721, 0
      %2734 = vmatpush.bf16.xpose.msra.mxu0 0
      %2735 = vmatpush.bf16.xpose.msra.mxu0 0
      %2736 = vmatpush.bf16.xpose.msra.mxu0 0
      %2737 = vmatpush.bf16.xpose.msra.mxu0 0
      %2738 = vmatpush.bf16.xpose.msra.mxu0 0
      %2739 = vmatpush.bf16.xpose.msra.mxu0 0
      %2740 = vmatpush.bf16.xpose.msra.mxu0 %v2732
      %2741 = vmatpush.bf16.xpose.msra.mxu0 %v2729
      %2742 = vmatmul.bf16.gmra.mxu0 %v2723
      %v2743 = vpop.f32.mrf.mxu0
      %v2744 = vadd.f32 %v1964, %v2743
      %v2745 = vpop.f32.mrf.mxu0
      %v2746 = vadd.f32 %v1965, %v2745
      %2747 = vmatmul.bf16.gmra.mxu0 %v2726
      %v2748 = vpop.f32.mrf.mxu0
      %v2749 = vadd.f32 %v1966, %v2748
      %v2750 = vpop.f32.mrf.mxu0
      %v2751 = vadd.f32 %v1967, %v2750
      %2752 = vdwg.mxu0
      %v2757 = vunpack.c.l.b16 %v1840
      %v2758 = vunpack.c.l.b16 %v1841
      %v2759 = vunpack.c.l.b16 %v1842
      %v2760 = vunpack.c.l.b16 %v1843
      %v2761 = vpack.c.b16 %v2758, %v2757
      %v2762 = vpack.c.b16 %v2760, %v2759
      %2763 = vrot.lane.b32.xlu0 %v2761, 96
      %v2764 = vpop.permute.xlu0 %2763
      %2765 = vrot.lane.b32.xlu0 %v2762, 96
      %v2766 = vpop.permute.xlu0 %2765
      %v2768 = vsel %vm2046, %v2761, 0
      %v2771 = vsel %vm2046, %v2762, 0
      %v2774 = vsel %vm2046, %v2764, 0
      %v2777 = vsel %vm2046, %v2766, 0
      %2779 = vmatpush.bf16.xpose.msra.mxu0 0
      %2780 = vmatpush.bf16.xpose.msra.mxu0 0
      %2781 = vmatpush.bf16.xpose.msra.mxu0 0
      %2782 = vmatpush.bf16.xpose.msra.mxu0 0
      %2783 = vmatpush.bf16.xpose.msra.mxu0 0
      %2784 = vmatpush.bf16.xpose.msra.mxu0 0
      %2785 = vmatpush.bf16.xpose.msra.mxu0 %v2777
      %2786 = vmatpush.bf16.xpose.msra.mxu0 %v2774
      %2787 = vmatmul.bf16.gmra.mxu0 %v2768
      %v2788 = vpop.f32.mrf.mxu0
      %v2789 = vadd.f32 %v1968, %v2788
      %v2790 = vpop.f32.mrf.mxu0
      %v2791 = vadd.f32 %v1969, %v2790
      %2792 = vmatmul.bf16.gmra.mxu0 %v2771
      %v2793 = vpop.f32.mrf.mxu0
      %v2794 = vadd.f32 %v1970, %v2793
      %v2795 = vpop.f32.mrf.mxu0
      %v2796 = vadd.f32 %v1971, %v2795
      %2797 = vdwg.mxu0
      %v2802 = vunpack.c.l.b16 %v1844
      %v2803 = vunpack.c.l.b16 %v1845
      %v2804 = vunpack.c.l.b16 %v1846
      %v2805 = vunpack.c.l.b16 %v1847
      %v2806 = vpack.c.b16 %v2803, %v2802
      %v2807 = vpack.c.b16 %v2805, %v2804
      %2808 = vrot.lane.b32.xlu0 %v2806, 96
      %v2809 = vpop.permute.xlu0 %2808
      %2810 = vrot.lane.b32.xlu0 %v2807, 96
      %v2811 = vpop.permute.xlu0 %2810
      %v2813 = vsel %vm2046, %v2806, 0
      %v2816 = vsel %vm2046, %v2807, 0
      %v2819 = vsel %vm2046, %v2809, 0
      %v2822 = vsel %vm2046, %v2811, 0
      %2824 = vmatpush.bf16.xpose.msra.mxu0 0
      %2825 = vmatpush.bf16.xpose.msra.mxu0 0
      %2826 = vmatpush.bf16.xpose.msra.mxu0 0
      %2827 = vmatpush.bf16.xpose.msra.mxu0 0
      %2828 = vmatpush.bf16.xpose.msra.mxu0 0
      %2829 = vmatpush.bf16.xpose.msra.mxu0 0
      %2830 = vmatpush.bf16.xpose.msra.mxu0 %v2822
      %2831 = vmatpush.bf16.xpose.msra.mxu0 %v2819
      %2832 = vmatmul.bf16.gmra.mxu0 %v2813
      %v2833 = vpop.f32.mrf.mxu0
      %v2834 = vadd.f32 %v1972, %v2833
      %v2835 = vpop.f32.mrf.mxu0
      %v2836 = vadd.f32 %v1973, %v2835
      %2837 = vmatmul.bf16.gmra.mxu0 %v2816
      %v2838 = vpop.f32.mrf.mxu0
      %v2839 = vadd.f32 %v1974, %v2838
      %v2840 = vpop.f32.mrf.mxu0
      %v2841 = vadd.f32 %v1975, %v2840
      %2842 = vdwg.mxu0
      %v2847 = vunpack.c.l.b16 %v1848
      %v2848 = vunpack.c.l.b16 %v1849
      %v2849 = vunpack.c.l.b16 %v1850
      %v2850 = vunpack.c.l.b16 %v1851
      %v2851 = vpack.c.b16 %v2848, %v2847
      %v2852 = vpack.c.b16 %v2850, %v2849
      %2853 = vrot.lane.b32.xlu0 %v2851, 96
      %v2854 = vpop.permute.xlu0 %2853
      %2855 = vrot.lane.b32.xlu0 %v2852, 96
      %v2856 = vpop.permute.xlu0 %2855
      %v2858 = vsel %vm2046, %v2851, 0
      %v2861 = vsel %vm2046, %v2852, 0
      %v2864 = vsel %vm2046, %v2854, 0
      %v2867 = vsel %vm2046, %v2856, 0
      %2869 = vmatpush.bf16.xpose.msra.mxu0 0
      %2870 = vmatpush.bf16.xpose.msra.mxu0 0
      %2871 = vmatpush.bf16.xpose.msra.mxu0 0
      %2872 = vmatpush.bf16.xpose.msra.mxu0 0
      %2873 = vmatpush.bf16.xpose.msra.mxu0 0
      %2874 = vmatpush.bf16.xpose.msra.mxu0 0
      %2875 = vmatpush.bf16.xpose.msra.mxu0 %v2867
      %2876 = vmatpush.bf16.xpose.msra.mxu0 %v2864
      %2877 = vmatmul.bf16.gmra.mxu0 %v2858
      %v2878 = vpop.f32.mrf.mxu0
      %v2879 = vadd.f32 %v1976, %v2878
      %v2880 = vpop.f32.mrf.mxu0
      %v2881 = vadd.f32 %v1977, %v2880
      %2882 = vmatmul.bf16.gmra.mxu0 %v2861
      %v2883 = vpop.f32.mrf.mxu0
      %v2884 = vadd.f32 %v1978, %v2883
      %v2885 = vpop.f32.mrf.mxu0
      %v2886 = vadd.f32 %v1979, %v2885
      %2887 = vdwg.mxu0
      %v2892 = vunpack.c.l.b16 %v1852
      %v2893 = vunpack.c.l.b16 %v1853
      %v2894 = vunpack.c.l.b16 %v1854
      %v2895 = vunpack.c.l.b16 %v1855
      %v2896 = vpack.c.b16 %v2893, %v2892
      %v2897 = vpack.c.b16 %v2895, %v2894
      %2898 = vrot.lane.b32.xlu0 %v2896, 96
      %v2899 = vpop.permute.xlu0 %2898
      %2900 = vrot.lane.b32.xlu0 %v2897, 96
      %v2901 = vpop.permute.xlu0 %2900
      %v2903 = vsel %vm2046, %v2896, 0
      %v2906 = vsel %vm2046, %v2897, 0
      %v2909 = vsel %vm2046, %v2899, 0
      %v2912 = vsel %vm2046, %v2901, 0
      %2914 = vmatpush.bf16.xpose.msra.mxu0 0
      %2915 = vmatpush.bf16.xpose.msra.mxu0 0
      %2916 = vmatpush.bf16.xpose.msra.mxu0 0
      %2917 = vmatpush.bf16.xpose.msra.mxu0 0
      %2918 = vmatpush.bf16.xpose.msra.mxu0 0
      %2919 = vmatpush.bf16.xpose.msra.mxu0 0
      %2920 = vmatpush.bf16.xpose.msra.mxu0 %v2912
      %2921 = vmatpush.bf16.xpose.msra.mxu0 %v2909
      %2922 = vmatmul.bf16.gmra.mxu0 %v2903
      %v2923 = vpop.f32.mrf.mxu0
      %v2924 = vadd.f32 %v1980, %v2923
      %v2925 = vpop.f32.mrf.mxu0
      %v2926 = vadd.f32 %v1981, %v2925
      %2927 = vmatmul.bf16.gmra.mxu0 %v2906
      %v2928 = vpop.f32.mrf.mxu0
      %v2929 = vadd.f32 %v1982, %v2928
      %v2930 = vpop.f32.mrf.mxu0
      %v2931 = vadd.f32 %v1983, %v2930
      %2932 = vdwg.mxu0
      %v2937 = vunpack.c.l.b16 %v1856
      %v2938 = vunpack.c.l.b16 %v1857
      %v2939 = vunpack.c.l.b16 %v1858
      %v2940 = vunpack.c.l.b16 %v1859
      %v2941 = vpack.c.b16 %v2938, %v2937
      %v2942 = vpack.c.b16 %v2940, %v2939
      %2943 = vrot.lane.b32.xlu0 %v2941, 96
      %v2944 = vpop.permute.xlu0 %2943
      %2945 = vrot.lane.b32.xlu0 %v2942, 96
      %v2946 = vpop.permute.xlu0 %2945
      %v2948 = vsel %vm2046, %v2941, 0
      %v2951 = vsel %vm2046, %v2942, 0
      %v2954 = vsel %vm2046, %v2944, 0
      %v2957 = vsel %vm2046, %v2946, 0
      %2959 = vmatpush.bf16.xpose.msra.mxu0 0
      %2960 = vmatpush.bf16.xpose.msra.mxu0 0
      %2961 = vmatpush.bf16.xpose.msra.mxu0 0
      %2962 = vmatpush.bf16.xpose.msra.mxu0 0
      %2963 = vmatpush.bf16.xpose.msra.mxu0 0
      %2964 = vmatpush.bf16.xpose.msra.mxu0 0
      %2965 = vmatpush.bf16.xpose.msra.mxu0 %v2957
      %2966 = vmatpush.bf16.xpose.msra.mxu0 %v2954
      %2967 = vmatmul.bf16.gmra.mxu0 %v2948
      %v2968 = vpop.f32.mrf.mxu0
      %v2969 = vadd.f32 %v1984, %v2968
      %v2970 = vpop.f32.mrf.mxu0
      %v2971 = vadd.f32 %v1985, %v2970
      %2972 = vmatmul.bf16.gmra.mxu0 %v2951
      %v2973 = vpop.f32.mrf.mxu0
      %v2974 = vadd.f32 %v1986, %v2973
      %v2975 = vpop.f32.mrf.mxu0
      %v2976 = vadd.f32 %v1987, %v2975
      %2977 = vdwg.mxu0
      %v2982 = vunpack.c.l.b16 %v1860
      %v2983 = vunpack.c.l.b16 %v1861
      %v2984 = vunpack.c.l.b16 %v1862
      %v2985 = vunpack.c.l.b16 %v1863
      %v2986 = vpack.c.b16 %v2983, %v2982
      %v2987 = vpack.c.b16 %v2985, %v2984
      %2988 = vrot.lane.b32.xlu0 %v2986, 96
      %v2989 = vpop.permute.xlu0 %2988
      %2990 = vrot.lane.b32.xlu0 %v2987, 96
      %v2991 = vpop.permute.xlu0 %2990
      %v2993 = vsel %vm2046, %v2986, 0
      %v2996 = vsel %vm2046, %v2987, 0
      %v2999 = vsel %vm2046, %v2989, 0
      %v3002 = vsel %vm2046, %v2991, 0
      %3004 = vmatpush.bf16.xpose.msra.mxu0 0
      %3005 = vmatpush.bf16.xpose.msra.mxu0 0
      %3006 = vmatpush.bf16.xpose.msra.mxu0 0
      %3007 = vmatpush.bf16.xpose.msra.mxu0 0
      %3008 = vmatpush.bf16.xpose.msra.mxu0 0
      %3009 = vmatpush.bf16.xpose.msra.mxu0 0
      %3010 = vmatpush.bf16.xpose.msra.mxu0 %v3002
      %3011 = vmatpush.bf16.xpose.msra.mxu0 %v2999
      %3012 = vmatmul.bf16.gmra.mxu0 %v2993
      %v3013 = vpop.f32.mrf.mxu0
      %v3014 = vadd.f32 %v1988, %v3013
      %v3015 = vpop.f32.mrf.mxu0
      %v3016 = vadd.f32 %v1989, %v3015
      %3017 = vmatmul.bf16.gmra.mxu0 %v2996
      %v3018 = vpop.f32.mrf.mxu0
      %v3019 = vadd.f32 %v1990, %v3018
      %v3020 = vpop.f32.mrf.mxu0
      %v3021 = vadd.f32 %v1991, %v3020
      %3022 = vdwg.mxu0
      %v3027 = vunpack.c.l.b16 %v1864
      %v3028 = vunpack.c.l.b16 %v1865
      %v3029 = vunpack.c.l.b16 %v1866
      %v3030 = vunpack.c.l.b16 %v1867
      %v3031 = vpack.c.b16 %v3028, %v3027
      %v3032 = vpack.c.b16 %v3030, %v3029
      %3033 = vrot.lane.b32.xlu0 %v3031, 96
      %v3034 = vpop.permute.xlu0 %3033
      %3035 = vrot.lane.b32.xlu0 %v3032, 96
      %v3036 = vpop.permute.xlu0 %3035
      %v3038 = vsel %vm2046, %v3031, 0
      %v3041 = vsel %vm2046, %v3032, 0
      %v3044 = vsel %vm2046, %v3034, 0
      %v3047 = vsel %vm2046, %v3036, 0
      %3049 = vmatpush.bf16.xpose.msra.mxu0 0
      %3050 = vmatpush.bf16.xpose.msra.mxu0 0
      %3051 = vmatpush.bf16.xpose.msra.mxu0 0
      %3052 = vmatpush.bf16.xpose.msra.mxu0 0
      %3053 = vmatpush.bf16.xpose.msra.mxu0 0
      %3054 = vmatpush.bf16.xpose.msra.mxu0 0
      %3055 = vmatpush.bf16.xpose.msra.mxu0 %v3047
      %3056 = vmatpush.bf16.xpose.msra.mxu0 %v3044
      %3057 = vmatmul.bf16.gmra.mxu0 %v3038
      %v3058 = vpop.f32.mrf.mxu0
      %v3059 = vadd.f32 %v1992, %v3058
      %v3060 = vpop.f32.mrf.mxu0
      %v3061 = vadd.f32 %v1993, %v3060
      %3062 = vmatmul.bf16.gmra.mxu0 %v3041
      %v3063 = vpop.f32.mrf.mxu0
      %v3064 = vadd.f32 %v1994, %v3063
      %v3065 = vpop.f32.mrf.mxu0
      %v3066 = vadd.f32 %v1995, %v3065
      %3067 = vdwg.mxu0
      %v3072 = vunpack.c.l.b16 %v1868
      %v3073 = vunpack.c.l.b16 %v1869
      %v3074 = vunpack.c.l.b16 %v1870
      %v3075 = vunpack.c.l.b16 %v1871
      %v3076 = vpack.c.b16 %v3073, %v3072
      %v3077 = vpack.c.b16 %v3075, %v3074
      %3078 = vrot.lane.b32.xlu0 %v3076, 96
      %v3079 = vpop.permute.xlu0 %3078
      %3080 = vrot.lane.b32.xlu0 %v3077, 96
      %v3081 = vpop.permute.xlu0 %3080
      %v3083 = vsel %vm2046, %v3076, 0
      %v3086 = vsel %vm2046, %v3077, 0
      %v3089 = vsel %vm2046, %v3079, 0
      %v3092 = vsel %vm2046, %v3081, 0
      %3094 = vmatpush.bf16.xpose.msra.mxu0 0
      %3095 = vmatpush.bf16.xpose.msra.mxu0 0
      %3096 = vmatpush.bf16.xpose.msra.mxu0 0
      %3097 = vmatpush.bf16.xpose.msra.mxu0 0
      %3098 = vmatpush.bf16.xpose.msra.mxu0 0
      %3099 = vmatpush.bf16.xpose.msra.mxu0 0
      %3100 = vmatpush.bf16.xpose.msra.mxu0 %v3092
      %3101 = vmatpush.bf16.xpose.msra.mxu0 %v3089
      %3102 = vmatmul.bf16.gmra.mxu0 %v3083
      %v3103 = vpop.f32.mrf.mxu0
      %v3104 = vadd.f32 %v1996, %v3103
      %v3105 = vpop.f32.mrf.mxu0
      %v3106 = vadd.f32 %v1997, %v3105
      %3107 = vmatmul.bf16.gmra.mxu0 %v3086
      %v3108 = vpop.f32.mrf.mxu0
      %v3109 = vadd.f32 %v1998, %v3108
      %v3110 = vpop.f32.mrf.mxu0
      %v3111 = vadd.f32 %v1999, %v3110
      %3112 = vdwg.mxu0
      %v3117 = vunpack.c.l.b16 %v1872
      %v3118 = vunpack.c.l.b16 %v1873
      %v3119 = vunpack.c.l.b16 %v1874
      %v3120 = vunpack.c.l.b16 %v1875
      %v3121 = vpack.c.b16 %v3118, %v3117
      %v3122 = vpack.c.b16 %v3120, %v3119
      %3123 = vrot.lane.b32.xlu0 %v3121, 96
      %v3124 = vpop.permute.xlu0 %3123
      %3125 = vrot.lane.b32.xlu0 %v3122, 96
      %v3126 = vpop.permute.xlu0 %3125
      %v3128 = vsel %vm2046, %v3121, 0
      %v3131 = vsel %vm2046, %v3122, 0
      %v3134 = vsel %vm2046, %v3124, 0
      %v3137 = vsel %vm2046, %v3126, 0
      %3139 = vmatpush.bf16.xpose.msra.mxu0 0
      %3140 = vmatpush.bf16.xpose.msra.mxu0 0
      %3141 = vmatpush.bf16.xpose.msra.mxu0 0
      %3142 = vmatpush.bf16.xpose.msra.mxu0 0
      %3143 = vmatpush.bf16.xpose.msra.mxu0 0
      %3144 = vmatpush.bf16.xpose.msra.mxu0 0
      %3145 = vmatpush.bf16.xpose.msra.mxu0 %v3137
      %3146 = vmatpush.bf16.xpose.msra.mxu0 %v3134
      %3147 = vmatmul.bf16.gmra.mxu0 %v3128
      %v3148 = vpop.f32.mrf.mxu0
      %v3149 = vadd.f32 %v2000, %v3148
      %v3150 = vpop.f32.mrf.mxu0
      %v3151 = vadd.f32 %v2001, %v3150
      %3152 = vmatmul.bf16.gmra.mxu0 %v3131
      %v3153 = vpop.f32.mrf.mxu0
      %v3154 = vadd.f32 %v2002, %v3153
      %v3155 = vpop.f32.mrf.mxu0
      %v3156 = vadd.f32 %v2003, %v3155
      %3157 = vdwg.mxu0
      %v3162 = vunpack.c.l.b16 %v1876
      %v3163 = vunpack.c.l.b16 %v1877
      %v3164 = vunpack.c.l.b16 %v1878
      %v3165 = vunpack.c.l.b16 %v1879
      %v3166 = vpack.c.b16 %v3163, %v3162
      %v3167 = vpack.c.b16 %v3165, %v3164
      %3168 = vrot.lane.b32.xlu0 %v3166, 96
      %v3169 = vpop.permute.xlu0 %3168
      %3170 = vrot.lane.b32.xlu0 %v3167, 96
      %v3171 = vpop.permute.xlu0 %3170
      %v3173 = vsel %vm2046, %v3166, 0
      %v3176 = vsel %vm2046, %v3167, 0
      %v3179 = vsel %vm2046, %v3169, 0
      %v3182 = vsel %vm2046, %v3171, 0
      %3184 = vmatpush.bf16.xpose.msra.mxu0 0
      %3185 = vmatpush.bf16.xpose.msra.mxu0 0
      %3186 = vmatpush.bf16.xpose.msra.mxu0 0
      %3187 = vmatpush.bf16.xpose.msra.mxu0 0
      %3188 = vmatpush.bf16.xpose.msra.mxu0 0
      %3189 = vmatpush.bf16.xpose.msra.mxu0 0
      %3190 = vmatpush.bf16.xpose.msra.mxu0 %v3182
      %3191 = vmatpush.bf16.xpose.msra.mxu0 %v3179
      %3192 = vmatmul.bf16.gmra.mxu0 %v3173
      %v3193 = vpop.f32.mrf.mxu0
      %v3194 = vadd.f32 %v2004, %v3193
      %v3195 = vpop.f32.mrf.mxu0
      %v3196 = vadd.f32 %v2005, %v3195
      %3197 = vmatmul.bf16.gmra.mxu0 %v3176
      %v3198 = vpop.f32.mrf.mxu0
      %v3199 = vadd.f32 %v2006, %v3198
      %v3200 = vpop.f32.mrf.mxu0
      %v3201 = vadd.f32 %v2007, %v3200
      %3202 = vdwg.mxu0
      %v3207 = vunpack.c.l.b16 %v1880
      %v3208 = vunpack.c.l.b16 %v1881
      %v3209 = vunpack.c.l.b16 %v1882
      %v3210 = vunpack.c.l.b16 %v1883
      %v3211 = vpack.c.b16 %v3208, %v3207
      %v3212 = vpack.c.b16 %v3210, %v3209
      %3213 = vrot.lane.b32.xlu0 %v3211, 96
      %v3214 = vpop.permute.xlu0 %3213
      %3215 = vrot.lane.b32.xlu0 %v3212, 96
      %v3216 = vpop.permute.xlu0 %3215
      %v3218 = vsel %vm2046, %v3211, 0
      %v3221 = vsel %vm2046, %v3212, 0
      %v3224 = vsel %vm2046, %v3214, 0
      %v3227 = vsel %vm2046, %v3216, 0
      %3229 = vmatpush.bf16.xpose.msra.mxu0 0
      %3230 = vmatpush.bf16.xpose.msra.mxu0 0
      %3231 = vmatpush.bf16.xpose.msra.mxu0 0
      %3232 = vmatpush.bf16.xpose.msra.mxu0 0
      %3233 = vmatpush.bf16.xpose.msra.mxu0 0
      %3234 = vmatpush.bf16.xpose.msra.mxu0 0
      %3235 = vmatpush.bf16.xpose.msra.mxu0 %v3227
      %3236 = vmatpush.bf16.xpose.msra.mxu0 %v3224
      %3237 = vmatmul.bf16.gmra.mxu0 %v3218
      %v3238 = vpop.f32.mrf.mxu0
      %v3239 = vadd.f32 %v2008, %v3238
      %v3240 = vpop.f32.mrf.mxu0
      %v3241 = vadd.f32 %v2009, %v3240
      %3242 = vmatmul.bf16.gmra.mxu0 %v3221
      %v3243 = vpop.f32.mrf.mxu0
      %v3244 = vadd.f32 %v2010, %v3243
      %v3245 = vpop.f32.mrf.mxu0
      %v3246 = vadd.f32 %v2011, %v3245
      %3247 = vdwg.mxu0
      %v3252 = vunpack.c.l.b16 %v1884
      %v3253 = vunpack.c.l.b16 %v1885
      %v3254 = vunpack.c.l.b16 %v1886
      %v3255 = vunpack.c.l.b16 %v1887
      %v3256 = vpack.c.b16 %v3253, %v3252
      %v3257 = vpack.c.b16 %v3255, %v3254
      %3258 = vrot.lane.b32.xlu0 %v3256, 96
      %v3259 = vpop.permute.xlu0 %3258
      %3260 = vrot.lane.b32.xlu0 %v3257, 96
      %v3261 = vpop.permute.xlu0 %3260
      %v3263 = vsel %vm2046, %v3256, 0
      %v3266 = vsel %vm2046, %v3257, 0
      %v3269 = vsel %vm2046, %v3259, 0
      %v3272 = vsel %vm2046, %v3261, 0
      %3274 = vmatpush.bf16.xpose.msra.mxu0 0
      %3275 = vmatpush.bf16.xpose.msra.mxu0 0
      %3276 = vmatpush.bf16.xpose.msra.mxu0 0
      %3277 = vmatpush.bf16.xpose.msra.mxu0 0
      %3278 = vmatpush.bf16.xpose.msra.mxu0 0
      %3279 = vmatpush.bf16.xpose.msra.mxu0 0
      %3280 = vmatpush.bf16.xpose.msra.mxu0 %v3272
      %3281 = vmatpush.bf16.xpose.msra.mxu0 %v3269
      %3282 = vmatmul.bf16.gmra.mxu0 %v3263
      %v3283 = vpop.f32.mrf.mxu0
      %v3284 = vadd.f32 %v2012, %v3283
      %v3285 = vpop.f32.mrf.mxu0
      %v3286 = vadd.f32 %v2013, %v3285
      %3287 = vmatmul.bf16.gmra.mxu0 %v3266
      %v3288 = vpop.f32.mrf.mxu0
      %v3289 = vadd.f32 %v2014, %v3288
      %v3290 = vpop.f32.mrf.mxu0
      %v3291 = vadd.f32 %v2015, %v3290
      %3292 = vdwg.mxu0
      %v3297 = vunpack.c.l.b16 %v1888
      %v3298 = vunpack.c.l.b16 %v1889
      %v3299 = vunpack.c.l.b16 %v1890
      %v3300 = vunpack.c.l.b16 %v1891
      %v3301 = vpack.c.b16 %v3298, %v3297
      %v3302 = vpack.c.b16 %v3300, %v3299
      %3303 = vrot.lane.b32.xlu0 %v3301, 96
      %v3304 = vpop.permute.xlu0 %3303
      %3305 = vrot.lane.b32.xlu0 %v3302, 96
      %v3306 = vpop.permute.xlu0 %3305
      %v3308 = vsel %vm2046, %v3301, 0
      %v3311 = vsel %vm2046, %v3302, 0
      %v3314 = vsel %vm2046, %v3304, 0
      %v3317 = vsel %vm2046, %v3306, 0
      %3319 = vmatpush.bf16.xpose.msra.mxu0 0
      %3320 = vmatpush.bf16.xpose.msra.mxu0 0
      %3321 = vmatpush.bf16.xpose.msra.mxu0 0
      %3322 = vmatpush.bf16.xpose.msra.mxu0 0
      %3323 = vmatpush.bf16.xpose.msra.mxu0 0
      %3324 = vmatpush.bf16.xpose.msra.mxu0 0
      %3325 = vmatpush.bf16.xpose.msra.mxu0 %v3317
      %3326 = vmatpush.bf16.xpose.msra.mxu0 %v3314
      %3327 = vmatmul.bf16.gmra.mxu0 %v3308
      %v3328 = vpop.f32.mrf.mxu0
      %v3329 = vadd.f32 %v2016, %v3328
      %v3330 = vpop.f32.mrf.mxu0
      %v3331 = vadd.f32 %v2017, %v3330
      %3332 = vmatmul.bf16.gmra.mxu0 %v3311
      %v3333 = vpop.f32.mrf.mxu0
      %v3334 = vadd.f32 %v2018, %v3333
      %v3335 = vpop.f32.mrf.mxu0
      %v3336 = vadd.f32 %v2019, %v3335
      %3337 = vdwg.mxu0
      %v3342 = vunpack.c.l.b16 %v1892
      %v3343 = vunpack.c.l.b16 %v1893
      %v3344 = vunpack.c.l.b16 %v1894
      %v3345 = vunpack.c.l.b16 %v1895
      %v3346 = vpack.c.b16 %v3343, %v3342
      %v3347 = vpack.c.b16 %v3345, %v3344
      %3348 = vrot.lane.b32.xlu0 %v3346, 96
      %v3349 = vpop.permute.xlu0 %3348
      %3350 = vrot.lane.b32.xlu0 %v3347, 96
      %v3351 = vpop.permute.xlu0 %3350
      %v3353 = vsel %vm2046, %v3346, 0
      %v3356 = vsel %vm2046, %v3347, 0
      %v3359 = vsel %vm2046, %v3349, 0
      %v3362 = vsel %vm2046, %v3351, 0
      %3364 = vmatpush.bf16.xpose.msra.mxu0 0
      %3365 = vmatpush.bf16.xpose.msra.mxu0 0
      %3366 = vmatpush.bf16.xpose.msra.mxu0 0
      %3367 = vmatpush.bf16.xpose.msra.mxu0 0
      %3368 = vmatpush.bf16.xpose.msra.mxu0 0
      %3369 = vmatpush.bf16.xpose.msra.mxu0 0
      %3370 = vmatpush.bf16.xpose.msra.mxu0 %v3362
      %3371 = vmatpush.bf16.xpose.msra.mxu0 %v3359
      %3372 = vmatmul.bf16.gmra.mxu0 %v3353
      %v3373 = vpop.f32.mrf.mxu0
      %v3374 = vadd.f32 %v2020, %v3373
      %v3375 = vpop.f32.mrf.mxu0
      %v3376 = vadd.f32 %v2021, %v3375
      %3377 = vmatmul.bf16.gmra.mxu0 %v3356
      %v3378 = vpop.f32.mrf.mxu0
      %v3379 = vadd.f32 %v2022, %v3378
      %v3380 = vpop.f32.mrf.mxu0
      %v3381 = vadd.f32 %v2023, %v3380
      %3382 = vdwg.mxu0
      %v3387 = vunpack.c.l.b16 %v1896
      %v3388 = vunpack.c.l.b16 %v1897
      %v3389 = vunpack.c.l.b16 %v1898
      %v3390 = vunpack.c.l.b16 %v1899
      %v3391 = vpack.c.b16 %v3388, %v3387
      %v3392 = vpack.c.b16 %v3390, %v3389
      %3393 = vrot.lane.b32.xlu0 %v3391, 96
      %v3394 = vpop.permute.xlu0 %3393
      %3395 = vrot.lane.b32.xlu0 %v3392, 96
      %v3396 = vpop.permute.xlu0 %3395
      %v3398 = vsel %vm2046, %v3391, 0
      %v3401 = vsel %vm2046, %v3392, 0
      %v3404 = vsel %vm2046, %v3394, 0
      %v3407 = vsel %vm2046, %v3396, 0
      %3409 = vmatpush.bf16.xpose.msra.mxu0 0
      %3410 = vmatpush.bf16.xpose.msra.mxu0 0
      %3411 = vmatpush.bf16.xpose.msra.mxu0 0
      %3412 = vmatpush.bf16.xpose.msra.mxu0 0
      %3413 = vmatpush.bf16.xpose.msra.mxu0 0
      %3414 = vmatpush.bf16.xpose.msra.mxu0 0
      %3415 = vmatpush.bf16.xpose.msra.mxu0 %v3407
      %3416 = vmatpush.bf16.xpose.msra.mxu0 %v3404
      %3417 = vmatmul.bf16.gmra.mxu0 %v3398
      %v3418 = vpop.f32.mrf.mxu0
      %v3419 = vadd.f32 %v2024, %v3418
      %v3420 = vpop.f32.mrf.mxu0
      %v3421 = vadd.f32 %v2025, %v3420
      %3422 = vmatmul.bf16.gmra.mxu0 %v3401
      %v3423 = vpop.f32.mrf.mxu0
      %v3424 = vadd.f32 %v2026, %v3423
      %v3425 = vpop.f32.mrf.mxu0
      %v3426 = vadd.f32 %v2027, %v3425
      %3427 = vdwg.mxu0
      %v3432 = vunpack.c.l.b16 %v1900
      %v3433 = vunpack.c.l.b16 %v1901
      %v3434 = vunpack.c.l.b16 %v1902
      %v3435 = vunpack.c.l.b16 %v1903
      %v3436 = vpack.c.b16 %v3433, %v3432
      %v3437 = vpack.c.b16 %v3435, %v3434
      %3438 = vrot.lane.b32.xlu0 %v3436, 96
      %v3439 = vpop.permute.xlu0 %3438
      %3440 = vrot.lane.b32.xlu0 %v3437, 96
      %v3441 = vpop.permute.xlu0 %3440
      %v3443 = vsel %vm2046, %v3436, 0
      %v3446 = vsel %vm2046, %v3437, 0
      %v3449 = vsel %vm2046, %v3439, 0
      %v3452 = vsel %vm2046, %v3441, 0
      %3454 = vmatpush.bf16.xpose.msra.mxu0 0
      %3455 = vmatpush.bf16.xpose.msra.mxu0 0
      %3456 = vmatpush.bf16.xpose.msra.mxu0 0
      %3457 = vmatpush.bf16.xpose.msra.mxu0 0
      %3458 = vmatpush.bf16.xpose.msra.mxu0 0
      %3459 = vmatpush.bf16.xpose.msra.mxu0 0
      %3460 = vmatpush.bf16.xpose.msra.mxu0 %v3452
      %3461 = vmatpush.bf16.xpose.msra.mxu0 %v3449
      %3462 = vmatmul.bf16.gmra.mxu0 %v3443
      %v3463 = vpop.f32.mrf.mxu0
      %v3464 = vadd.f32 %v2028, %v3463
      %v3465 = vpop.f32.mrf.mxu0
      %v3466 = vadd.f32 %v2029, %v3465
      %3467 = vmatmul.bf16.gmra.mxu0 %v3446
      %v3468 = vpop.f32.mrf.mxu0
      %v3469 = vadd.f32 %v2030, %v3468
      %v3470 = vpop.f32.mrf.mxu0
      %v3471 = vadd.f32 %v2031, %v3470
      %3472 = vdwg.mxu0
      %v3473 = vsel %vm509, %v2069, -inf
      %3474 = vmax.xlane.f32.xlu0 %v3473
      %v3475 = vpop.xlane.xlu0 %3474
      %v3476 = vsel %vm509, %v2071, -inf
      %3477 = vmax.xlane.f32.xlu0 %v3476
      %v3478 = vpop.xlane.xlu0 %3477
      %v3479 = vsel %vm509, %v2074, -inf
      %3480 = vmax.xlane.f32.xlu0 %v3479
      %v3481 = vpop.xlane.xlu0 %3480
      %v3482 = vsel %vm509, %v2076, -inf
      %3483 = vmax.xlane.f32.xlu0 %v3482
      %v3484 = vpop.xlane.xlu0 %3483
      %v3485 = vsel %vm509, %v2114, -inf
      %3486 = vmax.xlane.f32.xlu0 %v3485
      %v3487 = vpop.xlane.xlu0 %3486
      %v3488 = vsel %vm509, %v2116, -inf
      %3489 = vmax.xlane.f32.xlu0 %v3488
      %v3490 = vpop.xlane.xlu0 %3489
      %v3491 = vsel %vm509, %v2119, -inf
      %3492 = vmax.xlane.f32.xlu0 %v3491
      %v3493 = vpop.xlane.xlu0 %3492
      %v3494 = vsel %vm509, %v2121, -inf
      %3495 = vmax.xlane.f32.xlu0 %v3494
      %v3496 = vpop.xlane.xlu0 %3495
      %v3497 = vsel %vm509, %v2159, -inf
      %3498 = vmax.xlane.f32.xlu0 %v3497
      %v3499 = vpop.xlane.xlu0 %3498
      %v3500 = vsel %vm509, %v2161, -inf
      %3501 = vmax.xlane.f32.xlu0 %v3500
      %v3502 = vpop.xlane.xlu0 %3501
      %v3503 = vsel %vm509, %v2164, -inf
      %3504 = vmax.xlane.f32.xlu0 %v3503
      %v3505 = vpop.xlane.xlu0 %3504
      %v3506 = vsel %vm509, %v2166, -inf
      %3507 = vmax.xlane.f32.xlu0 %v3506
      %v3508 = vpop.xlane.xlu0 %3507
      %v3509 = vsel %vm509, %v2204, -inf
      %3510 = vmax.xlane.f32.xlu0 %v3509
      %v3511 = vpop.xlane.xlu0 %3510
      %v3512 = vsel %vm509, %v2206, -inf
      %3513 = vmax.xlane.f32.xlu0 %v3512
      %v3514 = vpop.xlane.xlu0 %3513
      %v3515 = vsel %vm509, %v2209, -inf
      %3516 = vmax.xlane.f32.xlu0 %v3515
      %v3517 = vpop.xlane.xlu0 %3516
      %v3518 = vsel %vm509, %v2211, -inf
      %3519 = vmax.xlane.f32.xlu0 %v3518
      %v3520 = vpop.xlane.xlu0 %3519
      %v3521 = vsel %vm509, %v2249, -inf
      %3522 = vmax.xlane.f32.xlu0 %v3521
      %v3523 = vpop.xlane.xlu0 %3522
      %v3524 = vsel %vm509, %v2251, -inf
      %3525 = vmax.xlane.f32.xlu0 %v3524
      %v3526 = vpop.xlane.xlu0 %3525
      %v3527 = vsel %vm509, %v2254, -inf
      %3528 = vmax.xlane.f32.xlu0 %v3527
      %v3529 = vpop.xlane.xlu0 %3528
      %v3530 = vsel %vm509, %v2256, -inf
      %3531 = vmax.xlane.f32.xlu0 %v3530
      %v3532 = vpop.xlane.xlu0 %3531
      %v3533 = vsel %vm509, %v2294, -inf
      %3534 = vmax.xlane.f32.xlu0 %v3533
      %v3535 = vpop.xlane.xlu0 %3534
      %v3536 = vsel %vm509, %v2296, -inf
      %3537 = vmax.xlane.f32.xlu0 %v3536
      %v3538 = vpop.xlane.xlu0 %3537
      %v3539 = vsel %vm509, %v2299, -inf
      %3540 = vmax.xlane.f32.xlu0 %v3539
      %v3541 = vpop.xlane.xlu0 %3540
      %v3542 = vsel %vm509, %v2301, -inf
      %3543 = vmax.xlane.f32.xlu0 %v3542
      %v3544 = vpop.xlane.xlu0 %3543
      %v3545 = vsel %vm509, %v2339, -inf
      %3546 = vmax.xlane.f32.xlu0 %v3545
      %v3547 = vpop.xlane.xlu0 %3546
      %v3548 = vsel %vm509, %v2341, -inf
      %3549 = vmax.xlane.f32.xlu0 %v3548
      %v3550 = vpop.xlane.xlu0 %3549
      %v3551 = vsel %vm509, %v2344, -inf
      %3552 = vmax.xlane.f32.xlu0 %v3551
      %v3553 = vpop.xlane.xlu0 %3552
      %v3554 = vsel %vm509, %v2346, -inf
      %3555 = vmax.xlane.f32.xlu0 %v3554
      %v3556 = vpop.xlane.xlu0 %3555
      %v3557 = vsel %vm509, %v2384, -inf
      %3558 = vmax.xlane.f32.xlu0 %v3557
      %v3559 = vpop.xlane.xlu0 %3558
      %v3560 = vsel %vm509, %v2386, -inf
      %3561 = vmax.xlane.f32.xlu0 %v3560
      %v3562 = vpop.xlane.xlu0 %3561
      %v3563 = vsel %vm509, %v2389, -inf
      %3564 = vmax.xlane.f32.xlu0 %v3563
      %v3565 = vpop.xlane.xlu0 %3564
      %v3566 = vsel %vm509, %v2391, -inf
      %3567 = vmax.xlane.f32.xlu0 %v3566
      %v3568 = vpop.xlane.xlu0 %3567
      %v3569 = vsel %vm509, %v2429, -inf
      %3570 = vmax.xlane.f32.xlu0 %v3569
      %v3571 = vpop.xlane.xlu0 %3570
      %v3572 = vsel %vm509, %v2431, -inf
      %3573 = vmax.xlane.f32.xlu0 %v3572
      %v3574 = vpop.xlane.xlu0 %3573
      %v3575 = vsel %vm509, %v2434, -inf
      %3576 = vmax.xlane.f32.xlu0 %v3575
      %v3577 = vpop.xlane.xlu0 %3576
      %v3578 = vsel %vm509, %v2436, -inf
      %3579 = vmax.xlane.f32.xlu0 %v3578
      %v3580 = vpop.xlane.xlu0 %3579
      %v3581 = vsel %vm509, %v2474, -inf
      %3582 = vmax.xlane.f32.xlu0 %v3581
      %v3583 = vpop.xlane.xlu0 %3582
      %v3584 = vsel %vm509, %v2476, -inf
      %3585 = vmax.xlane.f32.xlu0 %v3584
      %v3586 = vpop.xlane.xlu0 %3585
      %v3587 = vsel %vm509, %v2479, -inf
      %3588 = vmax.xlane.f32.xlu0 %v3587
      %v3589 = vpop.xlane.xlu0 %3588
      %v3590 = vsel %vm509, %v2481, -inf
      %3591 = vmax.xlane.f32.xlu0 %v3590
      %v3592 = vpop.xlane.xlu0 %3591
      %v3593 = vsel %vm509, %v2519, -inf
      %3594 = vmax.xlane.f32.xlu0 %v3593
      %v3595 = vpop.xlane.xlu0 %3594
      %v3596 = vsel %vm509, %v2521, -inf
      %3597 = vmax.xlane.f32.xlu0 %v3596
      %v3598 = vpop.xlane.xlu0 %3597
      %v3599 = vsel %vm509, %v2524, -inf
      %3600 = vmax.xlane.f32.xlu0 %v3599
      %v3601 = vpop.xlane.xlu0 %3600
      %v3602 = vsel %vm509, %v2526, -inf
      %3603 = vmax.xlane.f32.xlu0 %v3602
      %v3604 = vpop.xlane.xlu0 %3603
      %v3605 = vsel %vm509, %v2564, -inf
      %3606 = vmax.xlane.f32.xlu0 %v3605
      %v3607 = vpop.xlane.xlu0 %3606
      %v3608 = vsel %vm509, %v2566, -inf
      %3609 = vmax.xlane.f32.xlu0 %v3608
      %v3610 = vpop.xlane.xlu0 %3609
      %v3611 = vsel %vm509, %v2569, -inf
      %3612 = vmax.xlane.f32.xlu0 %v3611
      %v3613 = vpop.xlane.xlu0 %3612
      %v3614 = vsel %vm509, %v2571, -inf
      %3615 = vmax.xlane.f32.xlu0 %v3614
      %v3616 = vpop.xlane.xlu0 %3615
      %v3617 = vsel %vm509, %v2609, -inf
      %3618 = vmax.xlane.f32.xlu0 %v3617
      %v3619 = vpop.xlane.xlu0 %3618
      %v3620 = vsel %vm509, %v2611, -inf
      %3621 = vmax.xlane.f32.xlu0 %v3620
      %v3622 = vpop.xlane.xlu0 %3621
      %v3623 = vsel %vm509, %v2614, -inf
      %3624 = vmax.xlane.f32.xlu0 %v3623
      %v3625 = vpop.xlane.xlu0 %3624
      %v3626 = vsel %vm509, %v2616, -inf
      %3627 = vmax.xlane.f32.xlu0 %v3626
      %v3628 = vpop.xlane.xlu0 %3627
      %v3629 = vsel %vm509, %v2654, -inf
      %3630 = vmax.xlane.f32.xlu0 %v3629
      %v3631 = vpop.xlane.xlu0 %3630
      %v3632 = vsel %vm509, %v2656, -inf
      %3633 = vmax.xlane.f32.xlu0 %v3632
      %v3634 = vpop.xlane.xlu0 %3633
      %v3635 = vsel %vm509, %v2659, -inf
      %3636 = vmax.xlane.f32.xlu0 %v3635
      %v3637 = vpop.xlane.xlu0 %3636
      %v3638 = vsel %vm509, %v2661, -inf
      %3639 = vmax.xlane.f32.xlu0 %v3638
      %v3640 = vpop.xlane.xlu0 %3639
      %v3641 = vsel %vm509, %v2699, -inf
      %3642 = vmax.xlane.f32.xlu0 %v3641
      %v3643 = vpop.xlane.xlu0 %3642
      %v3644 = vsel %vm509, %v2701, -inf
      %3645 = vmax.xlane.f32.xlu0 %v3644
      %v3646 = vpop.xlane.xlu0 %3645
      %v3647 = vsel %vm509, %v2704, -inf
      %3648 = vmax.xlane.f32.xlu0 %v3647
      %v3649 = vpop.xlane.xlu0 %3648
      %v3650 = vsel %vm509, %v2706, -inf
      %3651 = vmax.xlane.f32.xlu0 %v3650
      %v3652 = vpop.xlane.xlu0 %3651
      %v3653 = vsel %vm509, %v2744, -inf
      %3654 = vmax.xlane.f32.xlu0 %v3653
      %v3655 = vpop.xlane.xlu0 %3654
      %v3656 = vsel %vm509, %v2746, -inf
      %3657 = vmax.xlane.f32.xlu0 %v3656
      %v3658 = vpop.xlane.xlu0 %3657
      %v3659 = vsel %vm509, %v2749, -inf
      %3660 = vmax.xlane.f32.xlu0 %v3659
      %v3661 = vpop.xlane.xlu0 %3660
      %v3662 = vsel %vm509, %v2751, -inf
      %3663 = vmax.xlane.f32.xlu0 %v3662
      %v3664 = vpop.xlane.xlu0 %3663
      %v3665 = vsel %vm509, %v2789, -inf
      %3666 = vmax.xlane.f32.xlu0 %v3665
      %v3667 = vpop.xlane.xlu0 %3666
      %v3668 = vsel %vm509, %v2791, -inf
      %3669 = vmax.xlane.f32.xlu0 %v3668
      %v3670 = vpop.xlane.xlu0 %3669
      %v3671 = vsel %vm509, %v2794, -inf
      %3672 = vmax.xlane.f32.xlu0 %v3671
      %v3673 = vpop.xlane.xlu0 %3672
      %v3674 = vsel %vm509, %v2796, -inf
      %3675 = vmax.xlane.f32.xlu0 %v3674
      %v3676 = vpop.xlane.xlu0 %3675
      %v3677 = vsel %vm509, %v2834, -inf
      %3678 = vmax.xlane.f32.xlu0 %v3677
      %v3679 = vpop.xlane.xlu0 %3678
      %v3680 = vsel %vm509, %v2836, -inf
      %3681 = vmax.xlane.f32.xlu0 %v3680
      %v3682 = vpop.xlane.xlu0 %3681
      %v3683 = vsel %vm509, %v2839, -inf
      %3684 = vmax.xlane.f32.xlu0 %v3683
      %v3685 = vpop.xlane.xlu0 %3684
      %v3686 = vsel %vm509, %v2841, -inf
      %3687 = vmax.xlane.f32.xlu0 %v3686
      %v3688 = vpop.xlane.xlu0 %3687
      %v3689 = vsel %vm509, %v2879, -inf
      %3690 = vmax.xlane.f32.xlu0 %v3689
      %v3691 = vpop.xlane.xlu0 %3690
      %v3692 = vsel %vm509, %v2881, -inf
      %3693 = vmax.xlane.f32.xlu0 %v3692
      %v3694 = vpop.xlane.xlu0 %3693
      %v3695 = vsel %vm509, %v2884, -inf
      %3696 = vmax.xlane.f32.xlu0 %v3695
      %v3697 = vpop.xlane.xlu0 %3696
      %v3698 = vsel %vm509, %v2886, -inf
      %3699 = vmax.xlane.f32.xlu0 %v3698
      %v3700 = vpop.xlane.xlu0 %3699
      %v3701 = vsel %vm509, %v2924, -inf
      %3702 = vmax.xlane.f32.xlu0 %v3701
      %v3703 = vpop.xlane.xlu0 %3702
      %v3704 = vsel %vm509, %v2926, -inf
      %3705 = vmax.xlane.f32.xlu0 %v3704
      %v3706 = vpop.xlane.xlu0 %3705
      %v3707 = vsel %vm509, %v2929, -inf
      %3708 = vmax.xlane.f32.xlu0 %v3707
      %v3709 = vpop.xlane.xlu0 %3708
      %v3710 = vsel %vm509, %v2931, -inf
      %3711 = vmax.xlane.f32.xlu0 %v3710
      %v3712 = vpop.xlane.xlu0 %3711
      %v3713 = vsel %vm509, %v2969, -inf
      %3714 = vmax.xlane.f32.xlu0 %v3713
      %v3715 = vpop.xlane.xlu0 %3714
      %v3716 = vsel %vm509, %v2971, -inf
      %3717 = vmax.xlane.f32.xlu0 %v3716
      %v3718 = vpop.xlane.xlu0 %3717
      %v3719 = vsel %vm509, %v2974, -inf
      %3720 = vmax.xlane.f32.xlu0 %v3719
      %v3721 = vpop.xlane.xlu0 %3720
      %v3722 = vsel %vm509, %v2976, -inf
      %3723 = vmax.xlane.f32.xlu0 %v3722
      %v3724 = vpop.xlane.xlu0 %3723
      %v3725 = vsel %vm509, %v3014, -inf
      %3726 = vmax.xlane.f32.xlu0 %v3725
      %v3727 = vpop.xlane.xlu0 %3726
      %v3728 = vsel %vm509, %v3016, -inf
      %3729 = vmax.xlane.f32.xlu0 %v3728
      %v3730 = vpop.xlane.xlu0 %3729
      %v3731 = vsel %vm509, %v3019, -inf
      %3732 = vmax.xlane.f32.xlu0 %v3731
      %v3733 = vpop.xlane.xlu0 %3732
      %v3734 = vsel %vm509, %v3021, -inf
      %3735 = vmax.xlane.f32.xlu0 %v3734
      %v3736 = vpop.xlane.xlu0 %3735
      %v3737 = vsel %vm509, %v3059, -inf
      %3738 = vmax.xlane.f32.xlu0 %v3737
      %v3739 = vpop.xlane.xlu0 %3738
      %v3740 = vsel %vm509, %v3061, -inf
      %3741 = vmax.xlane.f32.xlu0 %v3740
      %v3742 = vpop.xlane.xlu0 %3741
      %v3743 = vsel %vm509, %v3064, -inf
      %3744 = vmax.xlane.f32.xlu0 %v3743
      %v3745 = vpop.xlane.xlu0 %3744
      %v3746 = vsel %vm509, %v3066, -inf
      %3747 = vmax.xlane.f32.xlu0 %v3746
      %v3748 = vpop.xlane.xlu0 %3747
      %v3749 = vsel %vm509, %v3104, -inf
      %3750 = vmax.xlane.f32.xlu0 %v3749
      %v3751 = vpop.xlane.xlu0 %3750
      %v3752 = vsel %vm509, %v3106, -inf
      %3753 = vmax.xlane.f32.xlu0 %v3752
      %v3754 = vpop.xlane.xlu0 %3753
      %v3755 = vsel %vm509, %v3109, -inf
      %3756 = vmax.xlane.f32.xlu0 %v3755
      %v3757 = vpop.xlane.xlu0 %3756
      %v3758 = vsel %vm509, %v3111, -inf
      %3759 = vmax.xlane.f32.xlu0 %v3758
      %v3760 = vpop.xlane.xlu0 %3759
      %v3761 = vsel %vm509, %v3149, -inf
      %3762 = vmax.xlane.f32.xlu0 %v3761
      %v3763 = vpop.xlane.xlu0 %3762
      %v3764 = vsel %vm509, %v3151, -inf
      %3765 = vmax.xlane.f32.xlu0 %v3764
      %v3766 = vpop.xlane.xlu0 %3765
      %v3767 = vsel %vm509, %v3154, -inf
      %3768 = vmax.xlane.f32.xlu0 %v3767
      %v3769 = vpop.xlane.xlu0 %3768
      %v3770 = vsel %vm509, %v3156, -inf
      %3771 = vmax.xlane.f32.xlu0 %v3770
      %v3772 = vpop.xlane.xlu0 %3771
      %v3773 = vsel %vm509, %v3194, -inf
      %3774 = vmax.xlane.f32.xlu0 %v3773
      %v3775 = vpop.xlane.xlu0 %3774
      %v3776 = vsel %vm509, %v3196, -inf
      %3777 = vmax.xlane.f32.xlu0 %v3776
      %v3778 = vpop.xlane.xlu0 %3777
      %v3779 = vsel %vm509, %v3199, -inf
      %3780 = vmax.xlane.f32.xlu0 %v3779
      %v3781 = vpop.xlane.xlu0 %3780
      %v3782 = vsel %vm509, %v3201, -inf
      %3783 = vmax.xlane.f32.xlu0 %v3782
      %v3784 = vpop.xlane.xlu0 %3783
      %v3785 = vsel %vm509, %v3239, -inf
      %3786 = vmax.xlane.f32.xlu0 %v3785
      %v3787 = vpop.xlane.xlu0 %3786
      %v3788 = vsel %vm509, %v3241, -inf
      %3789 = vmax.xlane.f32.xlu0 %v3788
      %v3790 = vpop.xlane.xlu0 %3789
      %v3791 = vsel %vm509, %v3244, -inf
      %3792 = vmax.xlane.f32.xlu0 %v3791
      %v3793 = vpop.xlane.xlu0 %3792
      %v3794 = vsel %vm509, %v3246, -inf
      %3795 = vmax.xlane.f32.xlu0 %v3794
      %v3796 = vpop.xlane.xlu0 %3795
      %v3797 = vsel %vm509, %v3284, -inf
      %3798 = vmax.xlane.f32.xlu0 %v3797
      %v3799 = vpop.xlane.xlu0 %3798
      %v3800 = vsel %vm509, %v3286, -inf
      %3801 = vmax.xlane.f32.xlu0 %v3800
      %v3802 = vpop.xlane.xlu0 %3801
      %v3803 = vsel %vm509, %v3289, -inf
      %3804 = vmax.xlane.f32.xlu0 %v3803
      %v3805 = vpop.xlane.xlu0 %3804
      %v3806 = vsel %vm509, %v3291, -inf
      %3807 = vmax.xlane.f32.xlu0 %v3806
      %v3808 = vpop.xlane.xlu0 %3807
      %v3809 = vsel %vm509, %v3329, -inf
      %3810 = vmax.xlane.f32.xlu0 %v3809
      %v3811 = vpop.xlane.xlu0 %3810
      %v3812 = vsel %vm509, %v3331, -inf
      %3813 = vmax.xlane.f32.xlu0 %v3812
      %v3814 = vpop.xlane.xlu0 %3813
      %v3815 = vsel %vm509, %v3334, -inf
      %3816 = vmax.xlane.f32.xlu0 %v3815
      %v3817 = vpop.xlane.xlu0 %3816
      %v3818 = vsel %vm509, %v3336, -inf
      %3819 = vmax.xlane.f32.xlu0 %v3818
      %v3820 = vpop.xlane.xlu0 %3819
      %v3821 = vsel %vm509, %v3374, -inf
      %3822 = vmax.xlane.f32.xlu0 %v3821
      %v3823 = vpop.xlane.xlu0 %3822
      %v3824 = vsel %vm509, %v3376, -inf
      %3825 = vmax.xlane.f32.xlu0 %v3824
      %v3826 = vpop.xlane.xlu0 %3825
      %v3827 = vsel %vm509, %v3379, -inf
      %3828 = vmax.xlane.f32.xlu0 %v3827
      %v3829 = vpop.xlane.xlu0 %3828
      %v3830 = vsel %vm509, %v3381, -inf
      %3831 = vmax.xlane.f32.xlu0 %v3830
      %v3832 = vpop.xlane.xlu0 %3831
      %v3833 = vsel %vm509, %v3419, -inf
      %3834 = vmax.xlane.f32.xlu0 %v3833
      %v3835 = vpop.xlane.xlu0 %3834
      %v3836 = vsel %vm509, %v3421, -inf
      %3837 = vmax.xlane.f32.xlu0 %v3836
      %v3838 = vpop.xlane.xlu0 %3837
      %v3839 = vsel %vm509, %v3424, -inf
      %3840 = vmax.xlane.f32.xlu0 %v3839
      %v3841 = vpop.xlane.xlu0 %3840
      %v3842 = vsel %vm509, %v3426, -inf
      %3843 = vmax.xlane.f32.xlu0 %v3842
      %v3844 = vpop.xlane.xlu0 %3843
      %v3845 = vsel %vm509, %v3464, -inf
      %3846 = vmax.xlane.f32.xlu0 %v3845
      %v3847 = vpop.xlane.xlu0 %3846
      %v3848 = vsel %vm509, %v3466, -inf
      %3849 = vmax.xlane.f32.xlu0 %v3848
      %v3850 = vpop.xlane.xlu0 %3849
      %v3851 = vsel %vm509, %v3469, -inf
      %3852 = vmax.xlane.f32.xlu0 %v3851
      %v3853 = vpop.xlane.xlu0 %3852
      %v3854 = vsel %vm509, %v3471, -inf
      %3855 = vmax.xlane.f32.xlu0 %v3854
      %v3856 = vpop.xlane.xlu0 %3855
      %v3857 = vsub.f32 %v2069, %v3475
      %v3858 = vsub.f32 %v2071, %v3478
      %v3859 = vsub.f32 %v2074, %v3481
      %v3860 = vsub.f32 %v2076, %v3484
      %v3861 = vsub.f32 %v2114, %v3487
      %v3862 = vsub.f32 %v2116, %v3490
      %v3863 = vsub.f32 %v2119, %v3493
      %v3864 = vsub.f32 %v2121, %v3496
      %v3865 = vsub.f32 %v2159, %v3499
      %v3866 = vsub.f32 %v2161, %v3502
      %v3867 = vsub.f32 %v2164, %v3505
      %v3868 = vsub.f32 %v2166, %v3508
      %v3869 = vsub.f32 %v2204, %v3511
      %v3870 = vsub.f32 %v2206, %v3514
      %v3871 = vsub.f32 %v2209, %v3517
      %v3872 = vsub.f32 %v2211, %v3520
      %v3873 = vsub.f32 %v2249, %v3523
      %v3874 = vsub.f32 %v2251, %v3526
      %v3875 = vsub.f32 %v2254, %v3529
      %v3876 = vsub.f32 %v2256, %v3532
      %v3877 = vsub.f32 %v2294, %v3535
      %v3878 = vsub.f32 %v2296, %v3538
      %v3879 = vsub.f32 %v2299, %v3541
      %v3880 = vsub.f32 %v2301, %v3544
      %v3881 = vsub.f32 %v2339, %v3547
      %v3882 = vsub.f32 %v2341, %v3550
      %v3883 = vsub.f32 %v2344, %v3553
      %v3884 = vsub.f32 %v2346, %v3556
      %v3885 = vsub.f32 %v2384, %v3559
      %v3886 = vsub.f32 %v2386, %v3562
      %v3887 = vsub.f32 %v2389, %v3565
      %v3888 = vsub.f32 %v2391, %v3568
      %v3889 = vsub.f32 %v2429, %v3571
      %v3890 = vsub.f32 %v2431, %v3574
      %v3891 = vsub.f32 %v2434, %v3577
      %v3892 = vsub.f32 %v2436, %v3580
      %v3893 = vsub.f32 %v2474, %v3583
      %v3894 = vsub.f32 %v2476, %v3586
      %v3895 = vsub.f32 %v2479, %v3589
      %v3896 = vsub.f32 %v2481, %v3592
      %v3897 = vsub.f32 %v2519, %v3595
      %v3898 = vsub.f32 %v2521, %v3598
      %v3899 = vsub.f32 %v2524, %v3601
      %v3900 = vsub.f32 %v2526, %v3604
      %v3901 = vsub.f32 %v2564, %v3607
      %v3902 = vsub.f32 %v2566, %v3610
      %v3903 = vsub.f32 %v2569, %v3613
      %v3904 = vsub.f32 %v2571, %v3616
      %v3905 = vsub.f32 %v2609, %v3619
      %v3906 = vsub.f32 %v2611, %v3622
      %v3907 = vsub.f32 %v2614, %v3625
      %v3908 = vsub.f32 %v2616, %v3628
      %v3909 = vsub.f32 %v2654, %v3631
      %v3910 = vsub.f32 %v2656, %v3634
      %v3911 = vsub.f32 %v2659, %v3637
      %v3912 = vsub.f32 %v2661, %v3640
      %v3913 = vsub.f32 %v2699, %v3643
      %v3914 = vsub.f32 %v2701, %v3646
      %v3915 = vsub.f32 %v2704, %v3649
      %v3916 = vsub.f32 %v2706, %v3652
      %v3917 = vsub.f32 %v2744, %v3655
      %v3918 = vsub.f32 %v2746, %v3658
      %v3919 = vsub.f32 %v2749, %v3661
      %v3920 = vsub.f32 %v2751, %v3664
      %v3921 = vsub.f32 %v2789, %v3667
      %v3922 = vsub.f32 %v2791, %v3670
      %v3923 = vsub.f32 %v2794, %v3673
      %v3924 = vsub.f32 %v2796, %v3676
      %v3925 = vsub.f32 %v2834, %v3679
      %v3926 = vsub.f32 %v2836, %v3682
      %v3927 = vsub.f32 %v2839, %v3685
      %v3928 = vsub.f32 %v2841, %v3688
      %v3929 = vsub.f32 %v2879, %v3691
      %v3930 = vsub.f32 %v2881, %v3694
      %v3931 = vsub.f32 %v2884, %v3697
      %v3932 = vsub.f32 %v2886, %v3700
      %v3933 = vsub.f32 %v2924, %v3703
      %v3934 = vsub.f32 %v2926, %v3706
      %v3935 = vsub.f32 %v2929, %v3709
      %v3936 = vsub.f32 %v2931, %v3712
      %v3937 = vsub.f32 %v2969, %v3715
      %v3938 = vsub.f32 %v2971, %v3718
      %v3939 = vsub.f32 %v2974, %v3721
      %v3940 = vsub.f32 %v2976, %v3724
      %v3941 = vsub.f32 %v3014, %v3727
      %v3942 = vsub.f32 %v3016, %v3730
      %v3943 = vsub.f32 %v3019, %v3733
      %v3944 = vsub.f32 %v3021, %v3736
      %v3945 = vsub.f32 %v3059, %v3739
      %v3946 = vsub.f32 %v3061, %v3742
      %v3947 = vsub.f32 %v3064, %v3745
      %v3948 = vsub.f32 %v3066, %v3748
      %v3949 = vsub.f32 %v3104, %v3751
      %v3950 = vsub.f32 %v3106, %v3754
      %v3951 = vsub.f32 %v3109, %v3757
      %v3952 = vsub.f32 %v3111, %v3760
      %v3953 = vsub.f32 %v3149, %v3763
      %v3954 = vsub.f32 %v3151, %v3766
      %v3955 = vsub.f32 %v3154, %v3769
      %v3956 = vsub.f32 %v3156, %v3772
      %v3957 = vsub.f32 %v3194, %v3775
      %v3958 = vsub.f32 %v3196, %v3778
      %v3959 = vsub.f32 %v3199, %v3781
      %v3960 = vsub.f32 %v3201, %v3784
      %v3961 = vsub.f32 %v3239, %v3787
      %v3962 = vsub.f32 %v3241, %v3790
      %v3963 = vsub.f32 %v3244, %v3793
      %v3964 = vsub.f32 %v3246, %v3796
      %v3965 = vsub.f32 %v3284, %v3799
      %v3966 = vsub.f32 %v3286, %v3802
      %v3967 = vsub.f32 %v3289, %v3805
      %v3968 = vsub.f32 %v3291, %v3808
      %v3969 = vsub.f32 %v3329, %v3811
      %v3970 = vsub.f32 %v3331, %v3814
      %v3971 = vsub.f32 %v3334, %v3817
      %v3972 = vsub.f32 %v3336, %v3820
      %v3973 = vsub.f32 %v3374, %v3823
      %v3974 = vsub.f32 %v3376, %v3826
      %v3975 = vsub.f32 %v3379, %v3829
      %v3976 = vsub.f32 %v3381, %v3832
      %v3977 = vsub.f32 %v3419, %v3835
      %v3978 = vsub.f32 %v3421, %v3838
      %v3979 = vsub.f32 %v3424, %v3841
      %v3980 = vsub.f32 %v3426, %v3844
      %v3981 = vsub.f32 %v3464, %v3847
      %v3982 = vsub.f32 %v3466, %v3850
      %v3983 = vsub.f32 %v3469, %v3853
      %v3984 = vsub.f32 %v3471, %v3856
      %v3985 = vmul.f32 %v3857, 1.442695
      %v3986 = vpow.pop %v3985
      %v3987 = vmul.f32 %v3858, 1.442695
      %v3988 = vpow.pop %v3987
      %v3989 = vmul.f32 %v3859, 1.442695
      %v3990 = vpow.pop %v3989
      %v3991 = vmul.f32 %v3860, 1.442695
      %v3992 = vpow.pop %v3991
      %v3993 = vmul.f32 %v3861, 1.442695
      %v3994 = vpow.pop %v3993
      %v3995 = vmul.f32 %v3862, 1.442695
      %v3996 = vpow.pop %v3995
      %v3997 = vmul.f32 %v3863, 1.442695
      %v3998 = vpow.pop %v3997
      %v3999 = vmul.f32 %v3864, 1.442695
      %v4000 = vpow.pop %v3999
      %v4001 = vmul.f32 %v3865, 1.442695
      %v4002 = vpow.pop %v4001
      %v4003 = vmul.f32 %v3866, 1.442695
      %v4004 = vpow.pop %v4003
      %v4005 = vmul.f32 %v3867, 1.442695
      %v4006 = vpow.pop %v4005
      %v4007 = vmul.f32 %v3868, 1.442695
      %v4008 = vpow.pop %v4007
      %v4009 = vmul.f32 %v3869, 1.442695
      %v4010 = vpow.pop %v4009
      %v4011 = vmul.f32 %v3870, 1.442695
      %v4012 = vpow.pop %v4011
      %v4013 = vmul.f32 %v3871, 1.442695
      %v4014 = vpow.pop %v4013
      %v4015 = vmul.f32 %v3872, 1.442695
      %v4016 = vpow.pop %v4015
      %v4017 = vmul.f32 %v3873, 1.442695
      %v4018 = vpow.pop %v4017
      %v4019 = vmul.f32 %v3874, 1.442695
      %v4020 = vpow.pop %v4019
      %v4021 = vmul.f32 %v3875, 1.442695
      %v4022 = vpow.pop %v4021
      %v4023 = vmul.f32 %v3876, 1.442695
      %v4024 = vpow.pop %v4023
      %v4025 = vmul.f32 %v3877, 1.442695
      %v4026 = vpow.pop %v4025
      %v4027 = vmul.f32 %v3878, 1.442695
      %v4028 = vpow.pop %v4027
      %v4029 = vmul.f32 %v3879, 1.442695
      %v4030 = vpow.pop %v4029
      %v4031 = vmul.f32 %v3880, 1.442695
      %v4032 = vpow.pop %v4031
      %v4033 = vmul.f32 %v3881, 1.442695
      %v4034 = vpow.pop %v4033
      %v4035 = vmul.f32 %v3882, 1.442695
      %v4036 = vpow.pop %v4035
      %v4037 = vmul.f32 %v3883, 1.442695
      %v4038 = vpow.pop %v4037
      %v4039 = vmul.f32 %v3884, 1.442695
      %v4040 = vpow.pop %v4039
      %v4041 = vmul.f32 %v3885, 1.442695
      %v4042 = vpow.pop %v4041
      %v4043 = vmul.f32 %v3886, 1.442695
      %v4044 = vpow.pop %v4043
      %v4045 = vmul.f32 %v3887, 1.442695
      %v4046 = vpow.pop %v4045
      %v4047 = vmul.f32 %v3888, 1.442695
      %v4048 = vpow.pop %v4047
      %v4049 = vmul.f32 %v3889, 1.442695
      %v4050 = vpow.pop %v4049
      %v4051 = vmul.f32 %v3890, 1.442695
      %v4052 = vpow.pop %v4051
      %v4053 = vmul.f32 %v3891, 1.442695
      %v4054 = vpow.pop %v4053
      %v4055 = vmul.f32 %v3892, 1.442695
      %v4056 = vpow.pop %v4055
      %v4057 = vmul.f32 %v3893, 1.442695
      %v4058 = vpow.pop %v4057
      %v4059 = vmul.f32 %v3894, 1.442695
      %v4060 = vpow.pop %v4059
      %v4061 = vmul.f32 %v3895, 1.442695
      %v4062 = vpow.pop %v4061
      %v4063 = vmul.f32 %v3896, 1.442695
      %v4064 = vpow.pop %v4063
      %v4065 = vmul.f32 %v3897, 1.442695
      %v4066 = vpow.pop %v4065
      %v4067 = vmul.f32 %v3898, 1.442695
      %v4068 = vpow.pop %v4067
      %v4069 = vmul.f32 %v3899, 1.442695
      %v4070 = vpow.pop %v4069
      %v4071 = vmul.f32 %v3900, 1.442695
      %v4072 = vpow.pop %v4071
      %v4073 = vmul.f32 %v3901, 1.442695
      %v4074 = vpow.pop %v4073
      %v4075 = vmul.f32 %v3902, 1.442695
      %v4076 = vpow.pop %v4075
      %v4077 = vmul.f32 %v3903, 1.442695
      %v4078 = vpow.pop %v4077
      %v4079 = vmul.f32 %v3904, 1.442695
      %v4080 = vpow.pop %v4079
      %v4081 = vmul.f32 %v3905, 1.442695
      %v4082 = vpow.pop %v4081
      %v4083 = vmul.f32 %v3906, 1.442695
      %v4084 = vpow.pop %v4083
      %v4085 = vmul.f32 %v3907, 1.442695
      %v4086 = vpow.pop %v4085
      %v4087 = vmul.f32 %v3908, 1.442695
      %v4088 = vpow.pop %v4087
      %v4089 = vmul.f32 %v3909, 1.442695
      %v4090 = vpow.pop %v4089
      %v4091 = vmul.f32 %v3910, 1.442695
      %v4092 = vpow.pop %v4091
      %v4093 = vmul.f32 %v3911, 1.442695
      %v4094 = vpow.pop %v4093
      %v4095 = vmul.f32 %v3912, 1.442695
      %v4096 = vpow.pop %v4095
      %v4097 = vmul.f32 %v3913, 1.442695
      %v4098 = vpow.pop %v4097
      %v4099 = vmul.f32 %v3914, 1.442695
      %v4100 = vpow.pop %v4099
      %v4101 = vmul.f32 %v3915, 1.442695
      %v4102 = vpow.pop %v4101
      %v4103 = vmul.f32 %v3916, 1.442695
      %v4104 = vpow.pop %v4103
      %v4105 = vmul.f32 %v3917, 1.442695
      %v4106 = vpow.pop %v4105
      %v4107 = vmul.f32 %v3918, 1.442695
      %v4108 = vpow.pop %v4107
      %v4109 = vmul.f32 %v3919, 1.442695
      %v4110 = vpow.pop %v4109
      %v4111 = vmul.f32 %v3920, 1.442695
      %v4112 = vpow.pop %v4111
      %v4113 = vmul.f32 %v3921, 1.442695
      %v4114 = vpow.pop %v4113
      %v4115 = vmul.f32 %v3922, 1.442695
      %v4116 = vpow.pop %v4115
      %v4117 = vmul.f32 %v3923, 1.442695
      %v4118 = vpow.pop %v4117
      %v4119 = vmul.f32 %v3924, 1.442695
      %v4120 = vpow.pop %v4119
      %v4121 = vmul.f32 %v3925, 1.442695
      %v4122 = vpow.pop %v4121
      %v4123 = vmul.f32 %v3926, 1.442695
      %v4124 = vpow.pop %v4123
      %v4125 = vmul.f32 %v3927, 1.442695
      %v4126 = vpow.pop %v4125
      %v4127 = vmul.f32 %v3928, 1.442695
      %v4128 = vpow.pop %v4127
      %v4129 = vmul.f32 %v3929, 1.442695
      %v4130 = vpow.pop %v4129
      %v4131 = vmul.f32 %v3930, 1.442695
      %v4132 = vpow.pop %v4131
      %v4133 = vmul.f32 %v3931, 1.442695
      %v4134 = vpow.pop %v4133
      %v4135 = vmul.f32 %v3932, 1.442695
      %v4136 = vpow.pop %v4135
      %v4137 = vmul.f32 %v3933, 1.442695
      %v4138 = vpow.pop %v4137
      %v4139 = vmul.f32 %v3934, 1.442695
      %v4140 = vpow.pop %v4139
      %v4141 = vmul.f32 %v3935, 1.442695
      %v4142 = vpow.pop %v4141
      %v4143 = vmul.f32 %v3936, 1.442695
      %v4144 = vpow.pop %v4143
      %v4145 = vmul.f32 %v3937, 1.442695
      %v4146 = vpow.pop %v4145
      %v4147 = vmul.f32 %v3938, 1.442695
      %v4148 = vpow.pop %v4147
      %v4149 = vmul.f32 %v3939, 1.442695
      %v4150 = vpow.pop %v4149
      %v4151 = vmul.f32 %v3940, 1.442695
      %v4152 = vpow.pop %v4151
      %v4153 = vmul.f32 %v3941, 1.442695
      %v4154 = vpow.pop %v4153
      %v4155 = vmul.f32 %v3942, 1.442695
      %v4156 = vpow.pop %v4155
      %v4157 = vmul.f32 %v3943, 1.442695
      %v4158 = vpow.pop %v4157
      %v4159 = vmul.f32 %v3944, 1.442695
      %v4160 = vpow.pop %v4159
      %v4161 = vmul.f32 %v3945, 1.442695
      %v4162 = vpow.pop %v4161
      %v4163 = vmul.f32 %v3946, 1.442695
      %v4164 = vpow.pop %v4163
      %v4165 = vmul.f32 %v3947, 1.442695
      %v4166 = vpow.pop %v4165
      %v4167 = vmul.f32 %v3948, 1.442695
      %v4168 = vpow.pop %v4167
      %v4169 = vmul.f32 %v3949, 1.442695
      %v4170 = vpow.pop %v4169
      %v4171 = vmul.f32 %v3950, 1.442695
      %v4172 = vpow.pop %v4171
      %v4173 = vmul.f32 %v3951, 1.442695
      %v4174 = vpow.pop %v4173
      %v4175 = vmul.f32 %v3952, 1.442695
      %v4176 = vpow.pop %v4175
      %v4177 = vmul.f32 %v3953, 1.442695
      %v4178 = vpow.pop %v4177
      %v4179 = vmul.f32 %v3954, 1.442695
      %v4180 = vpow.pop %v4179
      %v4181 = vmul.f32 %v3955, 1.442695
      %v4182 = vpow.pop %v4181
      %v4183 = vmul.f32 %v3956, 1.442695
      %v4184 = vpow.pop %v4183
      %v4185 = vmul.f32 %v3957, 1.442695
      %v4186 = vpow.pop %v4185
      %v4187 = vmul.f32 %v3958, 1.442695
      %v4188 = vpow.pop %v4187
      %v4189 = vmul.f32 %v3959, 1.442695
      %v4190 = vpow.pop %v4189
      %v4191 = vmul.f32 %v3960, 1.442695
      %v4192 = vpow.pop %v4191
      %v4193 = vmul.f32 %v3961, 1.442695
      %v4194 = vpow.pop %v4193
      %v4195 = vmul.f32 %v3962, 1.442695
      %v4196 = vpow.pop %v4195
      %v4197 = vmul.f32 %v3963, 1.442695
      %v4198 = vpow.pop %v4197
      %v4199 = vmul.f32 %v3964, 1.442695
      %v4200 = vpow.pop %v4199
      %v4201 = vmul.f32 %v3965, 1.442695
      %v4202 = vpow.pop %v4201
      %v4203 = vmul.f32 %v3966, 1.442695
      %v4204 = vpow.pop %v4203
      %v4205 = vmul.f32 %v3967, 1.442695
      %v4206 = vpow.pop %v4205
      %v4207 = vmul.f32 %v3968, 1.442695
      %v4208 = vpow.pop %v4207
      %v4209 = vmul.f32 %v3969, 1.442695
      %v4210 = vpow.pop %v4209
      %v4211 = vmul.f32 %v3970, 1.442695
      %v4212 = vpow.pop %v4211
      %v4213 = vmul.f32 %v3971, 1.442695
      %v4214 = vpow.pop %v4213
      %v4215 = vmul.f32 %v3972, 1.442695
      %v4216 = vpow.pop %v4215
      %v4217 = vmul.f32 %v3973, 1.442695
      %v4218 = vpow.pop %v4217
      %v4219 = vmul.f32 %v3974, 1.442695
      %v4220 = vpow.pop %v4219
      %v4221 = vmul.f32 %v3975, 1.442695
      %v4222 = vpow.pop %v4221
      %v4223 = vmul.f32 %v3976, 1.442695
      %v4224 = vpow.pop %v4223
      %v4225 = vmul.f32 %v3977, 1.442695
      %v4226 = vpow.pop %v4225
      %v4227 = vmul.f32 %v3978, 1.442695
      %v4228 = vpow.pop %v4227
      %v4229 = vmul.f32 %v3979, 1.442695
      %v4230 = vpow.pop %v4229
      %v4231 = vmul.f32 %v3980, 1.442695
      %v4232 = vpow.pop %v4231
      %v4233 = vmul.f32 %v3981, 1.442695
      %v4234 = vpow.pop %v4233
      %v4235 = vmul.f32 %v3982, 1.442695
      %v4236 = vpow.pop %v4235
      %v4237 = vmul.f32 %v3983, 1.442695
      %v4238 = vpow.pop %v4237
      %v4239 = vmul.f32 %v3984, 1.442695
      %v4240 = vpow.pop %v4239
      %v4241 = vsel %vm509, %v3986, 0.0
      %4242 = vadd.xlane.f32.xlu0 %v4241
      %v4243 = vpop.xlane.xlu0 %4242
      %v4244 = vsel %vm509, %v3988, 0.0
      %4245 = vadd.xlane.f32.xlu0 %v4244
      %v4246 = vpop.xlane.xlu0 %4245
      %v4247 = vsel %vm509, %v3990, 0.0
      %4248 = vadd.xlane.f32.xlu0 %v4247
      %v4249 = vpop.xlane.xlu0 %4248
      %v4250 = vsel %vm509, %v3992, 0.0
      %4251 = vadd.xlane.f32.xlu0 %v4250
      %v4252 = vpop.xlane.xlu0 %4251
      %v4253 = vsel %vm509, %v3994, 0.0
      %4254 = vadd.xlane.f32.xlu0 %v4253
      %v4255 = vpop.xlane.xlu0 %4254
      %v4256 = vsel %vm509, %v3996, 0.0
      %4257 = vadd.xlane.f32.xlu0 %v4256
      %v4258 = vpop.xlane.xlu0 %4257
      %v4259 = vsel %vm509, %v3998, 0.0
      %4260 = vadd.xlane.f32.xlu0 %v4259
      %v4261 = vpop.xlane.xlu0 %4260
      %v4262 = vsel %vm509, %v4000, 0.0
      %4263 = vadd.xlane.f32.xlu0 %v4262
      %v4264 = vpop.xlane.xlu0 %4263
      %v4265 = vsel %vm509, %v4002, 0.0
      %4266 = vadd.xlane.f32.xlu0 %v4265
      %v4267 = vpop.xlane.xlu0 %4266
      %v4268 = vsel %vm509, %v4004, 0.0
      %4269 = vadd.xlane.f32.xlu0 %v4268
      %v4270 = vpop.xlane.xlu0 %4269
      %v4271 = vsel %vm509, %v4006, 0.0
      %4272 = vadd.xlane.f32.xlu0 %v4271
      %v4273 = vpop.xlane.xlu0 %4272
      %v4274 = vsel %vm509, %v4008, 0.0
      %4275 = vadd.xlane.f32.xlu0 %v4274
      %v4276 = vpop.xlane.xlu0 %4275
      %v4277 = vsel %vm509, %v4010, 0.0
      %4278 = vadd.xlane.f32.xlu0 %v4277
      %v4279 = vpop.xlane.xlu0 %4278
      %v4280 = vsel %vm509, %v4012, 0.0
      %4281 = vadd.xlane.f32.xlu0 %v4280
      %v4282 = vpop.xlane.xlu0 %4281
      %v4283 = vsel %vm509, %v4014, 0.0
      %4284 = vadd.xlane.f32.xlu0 %v4283
      %v4285 = vpop.xlane.xlu0 %4284
      %v4286 = vsel %vm509, %v4016, 0.0
      %4287 = vadd.xlane.f32.xlu0 %v4286
      %v4288 = vpop.xlane.xlu0 %4287
      %v4289 = vsel %vm509, %v4018, 0.0
      %4290 = vadd.xlane.f32.xlu0 %v4289
      %v4291 = vpop.xlane.xlu0 %4290
      %v4292 = vsel %vm509, %v4020, 0.0
      %4293 = vadd.xlane.f32.xlu0 %v4292
      %v4294 = vpop.xlane.xlu0 %4293
      %v4295 = vsel %vm509, %v4022, 0.0
      %4296 = vadd.xlane.f32.xlu0 %v4295
      %v4297 = vpop.xlane.xlu0 %4296
      %v4298 = vsel %vm509, %v4024, 0.0
      %4299 = vadd.xlane.f32.xlu0 %v4298
      %v4300 = vpop.xlane.xlu0 %4299
      %v4301 = vsel %vm509, %v4026, 0.0
      %4302 = vadd.xlane.f32.xlu0 %v4301
      %v4303 = vpop.xlane.xlu0 %4302
      %v4304 = vsel %vm509, %v4028, 0.0
      %4305 = vadd.xlane.f32.xlu0 %v4304
      %v4306 = vpop.xlane.xlu0 %4305
      %v4307 = vsel %vm509, %v4030, 0.0
      %4308 = vadd.xlane.f32.xlu0 %v4307
      %v4309 = vpop.xlane.xlu0 %4308
      %v4310 = vsel %vm509, %v4032, 0.0
      %4311 = vadd.xlane.f32.xlu0 %v4310
      %v4312 = vpop.xlane.xlu0 %4311
      %v4313 = vsel %vm509, %v4034, 0.0
      %4314 = vadd.xlane.f32.xlu0 %v4313
      %v4315 = vpop.xlane.xlu0 %4314
      %v4316 = vsel %vm509, %v4036, 0.0
      %4317 = vadd.xlane.f32.xlu0 %v4316
      %v4318 = vpop.xlane.xlu0 %4317
      %v4319 = vsel %vm509, %v4038, 0.0
      %4320 = vadd.xlane.f32.xlu0 %v4319
      %v4321 = vpop.xlane.xlu0 %4320
      %v4322 = vsel %vm509, %v4040, 0.0
      %4323 = vadd.xlane.f32.xlu0 %v4322
      %v4324 = vpop.xlane.xlu0 %4323
      %v4325 = vsel %vm509, %v4042, 0.0
      %4326 = vadd.xlane.f32.xlu0 %v4325
      %v4327 = vpop.xlane.xlu0 %4326
      %v4328 = vsel %vm509, %v4044, 0.0
      %4329 = vadd.xlane.f32.xlu0 %v4328
      %v4330 = vpop.xlane.xlu0 %4329
      %v4331 = vsel %vm509, %v4046, 0.0
      %4332 = vadd.xlane.f32.xlu0 %v4331
      %v4333 = vpop.xlane.xlu0 %4332
      %v4334 = vsel %vm509, %v4048, 0.0
      %4335 = vadd.xlane.f32.xlu0 %v4334
      %v4336 = vpop.xlane.xlu0 %4335
      %v4337 = vsel %vm509, %v4050, 0.0
      %4338 = vadd.xlane.f32.xlu0 %v4337
      %v4339 = vpop.xlane.xlu0 %4338
      %v4340 = vsel %vm509, %v4052, 0.0
      %4341 = vadd.xlane.f32.xlu0 %v4340
      %v4342 = vpop.xlane.xlu0 %4341
      %v4343 = vsel %vm509, %v4054, 0.0
      %4344 = vadd.xlane.f32.xlu0 %v4343
      %v4345 = vpop.xlane.xlu0 %4344
      %v4346 = vsel %vm509, %v4056, 0.0
      %4347 = vadd.xlane.f32.xlu0 %v4346
      %v4348 = vpop.xlane.xlu0 %4347
      %v4349 = vsel %vm509, %v4058, 0.0
      %4350 = vadd.xlane.f32.xlu0 %v4349
      %v4351 = vpop.xlane.xlu0 %4350
      %v4352 = vsel %vm509, %v4060, 0.0
      %4353 = vadd.xlane.f32.xlu0 %v4352
      %v4354 = vpop.xlane.xlu0 %4353
      %v4355 = vsel %vm509, %v4062, 0.0
      %4356 = vadd.xlane.f32.xlu0 %v4355
      %v4357 = vpop.xlane.xlu0 %4356
      %v4358 = vsel %vm509, %v4064, 0.0
      %4359 = vadd.xlane.f32.xlu0 %v4358
      %v4360 = vpop.xlane.xlu0 %4359
      %v4361 = vsel %vm509, %v4066, 0.0
      %4362 = vadd.xlane.f32.xlu0 %v4361
      %v4363 = vpop.xlane.xlu0 %4362
      %v4364 = vsel %vm509, %v4068, 0.0
      %4365 = vadd.xlane.f32.xlu0 %v4364
      %v4366 = vpop.xlane.xlu0 %4365
      %v4367 = vsel %vm509, %v4070, 0.0
      %4368 = vadd.xlane.f32.xlu0 %v4367
      %v4369 = vpop.xlane.xlu0 %4368
      %v4370 = vsel %vm509, %v4072, 0.0
      %4371 = vadd.xlane.f32.xlu0 %v4370
      %v4372 = vpop.xlane.xlu0 %4371
      %v4373 = vsel %vm509, %v4074, 0.0
      %4374 = vadd.xlane.f32.xlu0 %v4373
      %v4375 = vpop.xlane.xlu0 %4374
      %v4376 = vsel %vm509, %v4076, 0.0
      %4377 = vadd.xlane.f32.xlu0 %v4376
      %v4378 = vpop.xlane.xlu0 %4377
      %v4379 = vsel %vm509, %v4078, 0.0
      %4380 = vadd.xlane.f32.xlu0 %v4379
      %v4381 = vpop.xlane.xlu0 %4380
      %v4382 = vsel %vm509, %v4080, 0.0
      %4383 = vadd.xlane.f32.xlu0 %v4382
      %v4384 = vpop.xlane.xlu0 %4383
      %v4385 = vsel %vm509, %v4082, 0.0
      %4386 = vadd.xlane.f32.xlu0 %v4385
      %v4387 = vpop.xlane.xlu0 %4386
      %v4388 = vsel %vm509, %v4084, 0.0
      %4389 = vadd.xlane.f32.xlu0 %v4388
      %v4390 = vpop.xlane.xlu0 %4389
      %v4391 = vsel %vm509, %v4086, 0.0
      %4392 = vadd.xlane.f32.xlu0 %v4391
      %v4393 = vpop.xlane.xlu0 %4392
      %v4394 = vsel %vm509, %v4088, 0.0
      %4395 = vadd.xlane.f32.xlu0 %v4394
      %v4396 = vpop.xlane.xlu0 %4395
      %v4397 = vsel %vm509, %v4090, 0.0
      %4398 = vadd.xlane.f32.xlu0 %v4397
      %v4399 = vpop.xlane.xlu0 %4398
      %v4400 = vsel %vm509, %v4092, 0.0
      %4401 = vadd.xlane.f32.xlu0 %v4400
      %v4402 = vpop.xlane.xlu0 %4401
      %v4403 = vsel %vm509, %v4094, 0.0
      %4404 = vadd.xlane.f32.xlu0 %v4403
      %v4405 = vpop.xlane.xlu0 %4404
      %v4406 = vsel %vm509, %v4096, 0.0
      %4407 = vadd.xlane.f32.xlu0 %v4406
      %v4408 = vpop.xlane.xlu0 %4407
      %v4409 = vsel %vm509, %v4098, 0.0
      %4410 = vadd.xlane.f32.xlu0 %v4409
      %v4411 = vpop.xlane.xlu0 %4410
      %v4412 = vsel %vm509, %v4100, 0.0
      %4413 = vadd.xlane.f32.xlu0 %v4412
      %v4414 = vpop.xlane.xlu0 %4413
      %v4415 = vsel %vm509, %v4102, 0.0
      %4416 = vadd.xlane.f32.xlu0 %v4415
      %v4417 = vpop.xlane.xlu0 %4416
      %v4418 = vsel %vm509, %v4104, 0.0
      %4419 = vadd.xlane.f32.xlu0 %v4418
      %v4420 = vpop.xlane.xlu0 %4419
      %v4421 = vsel %vm509, %v4106, 0.0
      %4422 = vadd.xlane.f32.xlu0 %v4421
      %v4423 = vpop.xlane.xlu0 %4422
      %v4424 = vsel %vm509, %v4108, 0.0
      %4425 = vadd.xlane.f32.xlu0 %v4424
      %v4426 = vpop.xlane.xlu0 %4425
      %v4427 = vsel %vm509, %v4110, 0.0
      %4428 = vadd.xlane.f32.xlu0 %v4427
      %v4429 = vpop.xlane.xlu0 %4428
      %v4430 = vsel %vm509, %v4112, 0.0
      %4431 = vadd.xlane.f32.xlu0 %v4430
      %v4432 = vpop.xlane.xlu0 %4431
      %v4433 = vsel %vm509, %v4114, 0.0
      %4434 = vadd.xlane.f32.xlu0 %v4433
      %v4435 = vpop.xlane.xlu0 %4434
      %v4436 = vsel %vm509, %v4116, 0.0
      %4437 = vadd.xlane.f32.xlu0 %v4436
      %v4438 = vpop.xlane.xlu0 %4437
      %v4439 = vsel %vm509, %v4118, 0.0
      %4440 = vadd.xlane.f32.xlu0 %v4439
      %v4441 = vpop.xlane.xlu0 %4440
      %v4442 = vsel %vm509, %v4120, 0.0
      %4443 = vadd.xlane.f32.xlu0 %v4442
      %v4444 = vpop.xlane.xlu0 %4443
      %v4445 = vsel %vm509, %v4122, 0.0
      %4446 = vadd.xlane.f32.xlu0 %v4445
      %v4447 = vpop.xlane.xlu0 %4446
      %v4448 = vsel %vm509, %v4124, 0.0
      %4449 = vadd.xlane.f32.xlu0 %v4448
      %v4450 = vpop.xlane.xlu0 %4449
      %v4451 = vsel %vm509, %v4126, 0.0
      %4452 = vadd.xlane.f32.xlu0 %v4451
      %v4453 = vpop.xlane.xlu0 %4452
      %v4454 = vsel %vm509, %v4128, 0.0
      %4455 = vadd.xlane.f32.xlu0 %v4454
      %v4456 = vpop.xlane.xlu0 %4455
      %v4457 = vsel %vm509, %v4130, 0.0
      %4458 = vadd.xlane.f32.xlu0 %v4457
      %v4459 = vpop.xlane.xlu0 %4458
      %v4460 = vsel %vm509, %v4132, 0.0
      %4461 = vadd.xlane.f32.xlu0 %v4460
      %v4462 = vpop.xlane.xlu0 %4461
      %v4463 = vsel %vm509, %v4134, 0.0
      %4464 = vadd.xlane.f32.xlu0 %v4463
      %v4465 = vpop.xlane.xlu0 %4464
      %v4466 = vsel %vm509, %v4136, 0.0
      %4467 = vadd.xlane.f32.xlu0 %v4466
      %v4468 = vpop.xlane.xlu0 %4467
      %v4469 = vsel %vm509, %v4138, 0.0
      %4470 = vadd.xlane.f32.xlu0 %v4469
      %v4471 = vpop.xlane.xlu0 %4470
      %v4472 = vsel %vm509, %v4140, 0.0
      %4473 = vadd.xlane.f32.xlu0 %v4472
      %v4474 = vpop.xlane.xlu0 %4473
      %v4475 = vsel %vm509, %v4142, 0.0
      %4476 = vadd.xlane.f32.xlu0 %v4475
      %v4477 = vpop.xlane.xlu0 %4476
      %v4478 = vsel %vm509, %v4144, 0.0
      %4479 = vadd.xlane.f32.xlu0 %v4478
      %v4480 = vpop.xlane.xlu0 %4479
      %v4481 = vsel %vm509, %v4146, 0.0
      %4482 = vadd.xlane.f32.xlu0 %v4481
      %v4483 = vpop.xlane.xlu0 %4482
      %v4484 = vsel %vm509, %v4148, 0.0
      %4485 = vadd.xlane.f32.xlu0 %v4484
      %v4486 = vpop.xlane.xlu0 %4485
      %v4487 = vsel %vm509, %v4150, 0.0
      %4488 = vadd.xlane.f32.xlu0 %v4487
      %v4489 = vpop.xlane.xlu0 %4488
      %v4490 = vsel %vm509, %v4152, 0.0
      %4491 = vadd.xlane.f32.xlu0 %v4490
      %v4492 = vpop.xlane.xlu0 %4491
      %v4493 = vsel %vm509, %v4154, 0.0
      %4494 = vadd.xlane.f32.xlu0 %v4493
      %v4495 = vpop.xlane.xlu0 %4494
      %v4496 = vsel %vm509, %v4156, 0.0
      %4497 = vadd.xlane.f32.xlu0 %v4496
      %v4498 = vpop.xlane.xlu0 %4497
      %v4499 = vsel %vm509, %v4158, 0.0
      %4500 = vadd.xlane.f32.xlu0 %v4499
      %v4501 = vpop.xlane.xlu0 %4500
      %v4502 = vsel %vm509, %v4160, 0.0
      %4503 = vadd.xlane.f32.xlu0 %v4502
      %v4504 = vpop.xlane.xlu0 %4503
      %v4505 = vsel %vm509, %v4162, 0.0
      %4506 = vadd.xlane.f32.xlu0 %v4505
      %v4507 = vpop.xlane.xlu0 %4506
      %v4508 = vsel %vm509, %v4164, 0.0
      %4509 = vadd.xlane.f32.xlu0 %v4508
      %v4510 = vpop.xlane.xlu0 %4509
      %v4511 = vsel %vm509, %v4166, 0.0
      %4512 = vadd.xlane.f32.xlu0 %v4511
      %v4513 = vpop.xlane.xlu0 %4512
      %v4514 = vsel %vm509, %v4168, 0.0
      %4515 = vadd.xlane.f32.xlu0 %v4514
      %v4516 = vpop.xlane.xlu0 %4515
      %v4517 = vsel %vm509, %v4170, 0.0
      %4518 = vadd.xlane.f32.xlu0 %v4517
      %v4519 = vpop.xlane.xlu0 %4518
      %v4520 = vsel %vm509, %v4172, 0.0
      %4521 = vadd.xlane.f32.xlu0 %v4520
      %v4522 = vpop.xlane.xlu0 %4521
      %v4523 = vsel %vm509, %v4174, 0.0
      %4524 = vadd.xlane.f32.xlu0 %v4523
      %v4525 = vpop.xlane.xlu0 %4524
      %v4526 = vsel %vm509, %v4176, 0.0
      %4527 = vadd.xlane.f32.xlu0 %v4526
      %v4528 = vpop.xlane.xlu0 %4527
      %v4529 = vsel %vm509, %v4178, 0.0
      %4530 = vadd.xlane.f32.xlu0 %v4529
      %v4531 = vpop.xlane.xlu0 %4530
      %v4532 = vsel %vm509, %v4180, 0.0
      %4533 = vadd.xlane.f32.xlu0 %v4532
      %v4534 = vpop.xlane.xlu0 %4533
      %v4535 = vsel %vm509, %v4182, 0.0
      %4536 = vadd.xlane.f32.xlu0 %v4535
      %v4537 = vpop.xlane.xlu0 %4536
      %v4538 = vsel %vm509, %v4184, 0.0
      %4539 = vadd.xlane.f32.xlu0 %v4538
      %v4540 = vpop.xlane.xlu0 %4539
      %v4541 = vsel %vm509, %v4186, 0.0
      %4542 = vadd.xlane.f32.xlu0 %v4541
      %v4543 = vpop.xlane.xlu0 %4542
      %v4544 = vsel %vm509, %v4188, 0.0
      %4545 = vadd.xlane.f32.xlu0 %v4544
      %v4546 = vpop.xlane.xlu0 %4545
      %v4547 = vsel %vm509, %v4190, 0.0
      %4548 = vadd.xlane.f32.xlu0 %v4547
      %v4549 = vpop.xlane.xlu0 %4548
      %v4550 = vsel %vm509, %v4192, 0.0
      %4551 = vadd.xlane.f32.xlu0 %v4550
      %v4552 = vpop.xlane.xlu0 %4551
      %v4553 = vsel %vm509, %v4194, 0.0
      %4554 = vadd.xlane.f32.xlu0 %v4553
      %v4555 = vpop.xlane.xlu0 %4554
      %v4556 = vsel %vm509, %v4196, 0.0
      %4557 = vadd.xlane.f32.xlu0 %v4556
      %v4558 = vpop.xlane.xlu0 %4557
      %v4559 = vsel %vm509, %v4198, 0.0
      %4560 = vadd.xlane.f32.xlu0 %v4559
      %v4561 = vpop.xlane.xlu0 %4560
      %v4562 = vsel %vm509, %v4200, 0.0
      %4563 = vadd.xlane.f32.xlu0 %v4562
      %v4564 = vpop.xlane.xlu0 %4563
      %v4565 = vsel %vm509, %v4202, 0.0
      %4566 = vadd.xlane.f32.xlu0 %v4565
      %v4567 = vpop.xlane.xlu0 %4566
      %v4568 = vsel %vm509, %v4204, 0.0
      %4569 = vadd.xlane.f32.xlu0 %v4568
      %v4570 = vpop.xlane.xlu0 %4569
      %v4571 = vsel %vm509, %v4206, 0.0
      %4572 = vadd.xlane.f32.xlu0 %v4571
      %v4573 = vpop.xlane.xlu0 %4572
      %v4574 = vsel %vm509, %v4208, 0.0
      %4575 = vadd.xlane.f32.xlu0 %v4574
      %v4576 = vpop.xlane.xlu0 %4575
      %v4577 = vsel %vm509, %v4210, 0.0
      %4578 = vadd.xlane.f32.xlu0 %v4577
      %v4579 = vpop.xlane.xlu0 %4578
      %v4580 = vsel %vm509, %v4212, 0.0
      %4581 = vadd.xlane.f32.xlu0 %v4580
      %v4582 = vpop.xlane.xlu0 %4581
      %v4583 = vsel %vm509, %v4214, 0.0
      %4584 = vadd.xlane.f32.xlu0 %v4583
      %v4585 = vpop.xlane.xlu0 %4584
      %v4586 = vsel %vm509, %v4216, 0.0
      %4587 = vadd.xlane.f32.xlu0 %v4586
      %v4588 = vpop.xlane.xlu0 %4587
      %v4589 = vsel %vm509, %v4218, 0.0
      %4590 = vadd.xlane.f32.xlu0 %v4589
      %v4591 = vpop.xlane.xlu0 %4590
      %v4592 = vsel %vm509, %v4220, 0.0
      %4593 = vadd.xlane.f32.xlu0 %v4592
      %v4594 = vpop.xlane.xlu0 %4593
      %v4595 = vsel %vm509, %v4222, 0.0
      %4596 = vadd.xlane.f32.xlu0 %v4595
      %v4597 = vpop.xlane.xlu0 %4596
      %v4598 = vsel %vm509, %v4224, 0.0
      %4599 = vadd.xlane.f32.xlu0 %v4598
      %v4600 = vpop.xlane.xlu0 %4599
      %v4601 = vsel %vm509, %v4226, 0.0
      %4602 = vadd.xlane.f32.xlu0 %v4601
      %v4603 = vpop.xlane.xlu0 %4602
      %v4604 = vsel %vm509, %v4228, 0.0
      %4605 = vadd.xlane.f32.xlu0 %v4604
      %v4606 = vpop.xlane.xlu0 %4605
      %v4607 = vsel %vm509, %v4230, 0.0
      %4608 = vadd.xlane.f32.xlu0 %v4607
      %v4609 = vpop.xlane.xlu0 %4608
      %v4610 = vsel %vm509, %v4232, 0.0
      %4611 = vadd.xlane.f32.xlu0 %v4610
      %v4612 = vpop.xlane.xlu0 %4611
      %v4613 = vsel %vm509, %v4234, 0.0
      %4614 = vadd.xlane.f32.xlu0 %v4613
      %v4615 = vpop.xlane.xlu0 %4614
      %v4616 = vsel %vm509, %v4236, 0.0
      %4617 = vadd.xlane.f32.xlu0 %v4616
      %v4618 = vpop.xlane.xlu0 %4617
      %v4619 = vsel %vm509, %v4238, 0.0
      %4620 = vadd.xlane.f32.xlu0 %v4619
      %v4621 = vpop.xlane.xlu0 %4620
      %v4622 = vsel %vm509, %v4240, 0.0
      %4623 = vadd.xlane.f32.xlu0 %v4622
      %v4624 = vpop.xlane.xlu0 %4623
      %v4625 = vrcp.pop %v4243
      %v4626 = vrcp.pop %v4246
      %v4627 = vrcp.pop %v4249
      %v4628 = vrcp.pop %v4252
      %v4629 = vrcp.pop %v4255
      %v4630 = vrcp.pop %v4258
      %v4631 = vrcp.pop %v4261
      %v4632 = vrcp.pop %v4264
      %v4633 = vrcp.pop %v4267
      %v4634 = vrcp.pop %v4270
      %v4635 = vrcp.pop %v4273
      %v4636 = vrcp.pop %v4276
      %v4637 = vrcp.pop %v4279
      %v4638 = vrcp.pop %v4282
      %v4639 = vrcp.pop %v4285
      %v4640 = vrcp.pop %v4288
      %v4641 = vrcp.pop %v4291
      %v4642 = vrcp.pop %v4294
      %v4643 = vrcp.pop %v4297
      %v4644 = vrcp.pop %v4300
      %v4645 = vrcp.pop %v4303
      %v4646 = vrcp.pop %v4306
      %v4647 = vrcp.pop %v4309
      %v4648 = vrcp.pop %v4312
      %v4649 = vrcp.pop %v4315
      %v4650 = vrcp.pop %v4318
      %v4651 = vrcp.pop %v4321
      %v4652 = vrcp.pop %v4324
      %v4653 = vrcp.pop %v4327
      %v4654 = vrcp.pop %v4330
      %v4655 = vrcp.pop %v4333
      %v4656 = vrcp.pop %v4336
      %v4657 = vrcp.pop %v4339
      %v4658 = vrcp.pop %v4342
      %v4659 = vrcp.pop %v4345
      %v4660 = vrcp.pop %v4348
      %v4661 = vrcp.pop %v4351
      %v4662 = vrcp.pop %v4354
      %v4663 = vrcp.pop %v4357
      %v4664 = vrcp.pop %v4360
      %v4665 = vrcp.pop %v4363
      %v4666 = vrcp.pop %v4366
      %v4667 = vrcp.pop %v4369
      %v4668 = vrcp.pop %v4372
      %v4669 = vrcp.pop %v4375
      %v4670 = vrcp.pop %v4378
      %v4671 = vrcp.pop %v4381
      %v4672 = vrcp.pop %v4384
      %v4673 = vrcp.pop %v4387
      %v4674 = vrcp.pop %v4390
      %v4675 = vrcp.pop %v4393
      %v4676 = vrcp.pop %v4396
      %v4677 = vrcp.pop %v4399
      %v4678 = vrcp.pop %v4402
      %v4679 = vrcp.pop %v4405
      %v4680 = vrcp.pop %v4408
      %v4681 = vrcp.pop %v4411
      %v4682 = vrcp.pop %v4414
      %v4683 = vrcp.pop %v4417
      %v4684 = vrcp.pop %v4420
      %v4685 = vrcp.pop %v4423
      %v4686 = vrcp.pop %v4426
      %v4687 = vrcp.pop %v4429
      %v4688 = vrcp.pop %v4432
      %v4689 = vrcp.pop %v4435
      %v4690 = vrcp.pop %v4438
      %v4691 = vrcp.pop %v4441
      %v4692 = vrcp.pop %v4444
      %v4693 = vrcp.pop %v4447
      %v4694 = vrcp.pop %v4450
      %v4695 = vrcp.pop %v4453
      %v4696 = vrcp.pop %v4456
      %v4697 = vrcp.pop %v4459
      %v4698 = vrcp.pop %v4462
      %v4699 = vrcp.pop %v4465
      %v4700 = vrcp.pop %v4468
      %v4701 = vrcp.pop %v4471
      %v4702 = vrcp.pop %v4474
      %v4703 = vrcp.pop %v4477
      %v4704 = vrcp.pop %v4480
      %v4705 = vrcp.pop %v4483
      %v4706 = vrcp.pop %v4486
      %v4707 = vrcp.pop %v4489
      %v4708 = vrcp.pop %v4492
      %v4709 = vrcp.pop %v4495
      %v4710 = vrcp.pop %v4498
      %v4711 = vrcp.pop %v4501
      %v4712 = vrcp.pop %v4504
      %v4713 = vrcp.pop %v4507
      %v4714 = vrcp.pop %v4510
      %v4715 = vrcp.pop %v4513
      %v4716 = vrcp.pop %v4516
      %v4717 = vrcp.pop %v4519
      %v4718 = vrcp.pop %v4522
      %v4719 = vrcp.pop %v4525
      %v4720 = vrcp.pop %v4528
      %v4721 = vrcp.pop %v4531
      %v4722 = vrcp.pop %v4534
      %v4723 = vrcp.pop %v4537
      %v4724 = vrcp.pop %v4540
      %v4725 = vrcp.pop %v4543
      %v4726 = vrcp.pop %v4546
      %v4727 = vrcp.pop %v4549
      %v4728 = vrcp.pop %v4552
      %v4729 = vrcp.pop %v4555
      %v4730 = vrcp.pop %v4558
      %v4731 = vrcp.pop %v4561
      %v4732 = vrcp.pop %v4564
      %v4733 = vrcp.pop %v4567
      %v4734 = vrcp.pop %v4570
      %v4735 = vrcp.pop %v4573
      %v4736 = vrcp.pop %v4576
      %v4737 = vrcp.pop %v4579
      %v4738 = vrcp.pop %v4582
      %v4739 = vrcp.pop %v4585
      %v4740 = vrcp.pop %v4588
      %v4741 = vrcp.pop %v4591
      %v4742 = vrcp.pop %v4594
      %v4743 = vrcp.pop %v4597
      %v4744 = vrcp.pop %v4600
      %v4745 = vrcp.pop %v4603
      %v4746 = vrcp.pop %v4606
      %v4747 = vrcp.pop %v4609
      %v4748 = vrcp.pop %v4612
      %v4749 = vrcp.pop %v4615
      %v4750 = vrcp.pop %v4618
      %v4751 = vrcp.pop %v4621
      %v4752 = vrcp.pop %v4624
      %v4753 = vmul.f32 %v4243, %v4625
      %v4754 = vmul.f32 %v4246, %v4626
      %v4755 = vmul.f32 %v4249, %v4627
      %v4756 = vmul.f32 %v4252, %v4628
      %v4757 = vmul.f32 %v4255, %v4629
      %v4758 = vmul.f32 %v4258, %v4630
      %v4759 = vmul.f32 %v4261, %v4631
      %v4760 = vmul.f32 %v4264, %v4632
      %v4761 = vmul.f32 %v4267, %v4633
      %v4762 = vmul.f32 %v4270, %v4634
      %v4763 = vmul.f32 %v4273, %v4635
      %v4764 = vmul.f32 %v4276, %v4636
      %v4765 = vmul.f32 %v4279, %v4637
      %v4766 = vmul.f32 %v4282, %v4638
      %v4767 = vmul.f32 %v4285, %v4639
      %v4768 = vmul.f32 %v4288, %v4640
      %v4769 = vmul.f32 %v4291, %v4641
      %v4770 = vmul.f32 %v4294, %v4642
      %v4771 = vmul.f32 %v4297, %v4643
      %v4772 = vmul.f32 %v4300, %v4644
      %v4773 = vmul.f32 %v4303, %v4645
      %v4774 = vmul.f32 %v4306, %v4646
      %v4775 = vmul.f32 %v4309, %v4647
      %v4776 = vmul.f32 %v4312, %v4648
      %v4777 = vmul.f32 %v4315, %v4649
      %v4778 = vmul.f32 %v4318, %v4650
      %v4779 = vmul.f32 %v4321, %v4651
      %v4780 = vmul.f32 %v4324, %v4652
      %v4781 = vmul.f32 %v4327, %v4653
      %v4782 = vmul.f32 %v4330, %v4654
      %v4783 = vmul.f32 %v4333, %v4655
      %v4784 = vmul.f32 %v4336, %v4656
      %v4785 = vmul.f32 %v4339, %v4657
      %v4786 = vmul.f32 %v4342, %v4658
      %v4787 = vmul.f32 %v4345, %v4659
      %v4788 = vmul.f32 %v4348, %v4660
      %v4789 = vmul.f32 %v4351, %v4661
      %v4790 = vmul.f32 %v4354, %v4662
      %v4791 = vmul.f32 %v4357, %v4663
      %v4792 = vmul.f32 %v4360, %v4664
      %v4793 = vmul.f32 %v4363, %v4665
      %v4794 = vmul.f32 %v4366, %v4666
      %v4795 = vmul.f32 %v4369, %v4667
      %v4796 = vmul.f32 %v4372, %v4668
      %v4797 = vmul.f32 %v4375, %v4669
      %v4798 = vmul.f32 %v4378, %v4670
      %v4799 = vmul.f32 %v4381, %v4671
      %v4800 = vmul.f32 %v4384, %v4672
      %v4801 = vmul.f32 %v4387, %v4673
      %v4802 = vmul.f32 %v4390, %v4674
      %v4803 = vmul.f32 %v4393, %v4675
      %v4804 = vmul.f32 %v4396, %v4676
      %v4805 = vmul.f32 %v4399, %v4677
      %v4806 = vmul.f32 %v4402, %v4678
      %v4807 = vmul.f32 %v4405, %v4679
      %v4808 = vmul.f32 %v4408, %v4680
      %v4809 = vmul.f32 %v4411, %v4681
      %v4810 = vmul.f32 %v4414, %v4682
      %v4811 = vmul.f32 %v4417, %v4683
      %v4812 = vmul.f32 %v4420, %v4684
      %v4813 = vmul.f32 %v4423, %v4685
      %v4814 = vmul.f32 %v4426, %v4686
      %v4815 = vmul.f32 %v4429, %v4687
      %v4816 = vmul.f32 %v4432, %v4688
      %v4817 = vmul.f32 %v4435, %v4689
      %v4818 = vmul.f32 %v4438, %v4690
      %v4819 = vmul.f32 %v4441, %v4691
      %v4820 = vmul.f32 %v4444, %v4692
      %v4821 = vmul.f32 %v4447, %v4693
      %v4822 = vmul.f32 %v4450, %v4694
      %v4823 = vmul.f32 %v4453, %v4695
      %v4824 = vmul.f32 %v4456, %v4696
      %v4825 = vmul.f32 %v4459, %v4697
      %v4826 = vmul.f32 %v4462, %v4698
      %v4827 = vmul.f32 %v4465, %v4699
      %v4828 = vmul.f32 %v4468, %v4700
      %v4829 = vmul.f32 %v4471, %v4701
      %v4830 = vmul.f32 %v4474, %v4702
      %v4831 = vmul.f32 %v4477, %v4703
      %v4832 = vmul.f32 %v4480, %v4704
      %v4833 = vmul.f32 %v4483, %v4705
      %v4834 = vmul.f32 %v4486, %v4706
      %v4835 = vmul.f32 %v4489, %v4707
      %v4836 = vmul.f32 %v4492, %v4708
      %v4837 = vmul.f32 %v4495, %v4709
      %v4838 = vmul.f32 %v4498, %v4710
      %v4839 = vmul.f32 %v4501, %v4711
      %v4840 = vmul.f32 %v4504, %v4712
      %v4841 = vmul.f32 %v4507, %v4713
      %v4842 = vmul.f32 %v4510, %v4714
      %v4843 = vmul.f32 %v4513, %v4715
      %v4844 = vmul.f32 %v4516, %v4716
      %v4845 = vmul.f32 %v4519, %v4717
      %v4846 = vmul.f32 %v4522, %v4718
      %v4847 = vmul.f32 %v4525, %v4719
      %v4848 = vmul.f32 %v4528, %v4720
      %v4849 = vmul.f32 %v4531, %v4721
      %v4850 = vmul.f32 %v4534, %v4722
      %v4851 = vmul.f32 %v4537, %v4723
      %v4852 = vmul.f32 %v4540, %v4724
      %v4853 = vmul.f32 %v4543, %v4725
      %v4854 = vmul.f32 %v4546, %v4726
      %v4855 = vmul.f32 %v4549, %v4727
      %v4856 = vmul.f32 %v4552, %v4728
      %v4857 = vmul.f32 %v4555, %v4729
      %v4858 = vmul.f32 %v4558, %v4730
      %v4859 = vmul.f32 %v4561, %v4731
      %v4860 = vmul.f32 %v4564, %v4732
      %v4861 = vmul.f32 %v4567, %v4733
      %v4862 = vmul.f32 %v4570, %v4734
      %v4863 = vmul.f32 %v4573, %v4735
      %v4864 = vmul.f32 %v4576, %v4736
      %v4865 = vmul.f32 %v4579, %v4737
      %v4866 = vmul.f32 %v4582, %v4738
      %v4867 = vmul.f32 %v4585, %v4739
      %v4868 = vmul.f32 %v4588, %v4740
      %v4869 = vmul.f32 %v4591, %v4741
      %v4870 = vmul.f32 %v4594, %v4742
      %v4871 = vmul.f32 %v4597, %v4743
      %v4872 = vmul.f32 %v4600, %v4744
      %v4873 = vmul.f32 %v4603, %v4745
      %v4874 = vmul.f32 %v4606, %v4746
      %v4875 = vmul.f32 %v4609, %v4747
      %v4876 = vmul.f32 %v4612, %v4748
      %v4877 = vmul.f32 %v4615, %v4749
      %v4878 = vmul.f32 %v4618, %v4750
      %v4879 = vmul.f32 %v4621, %v4751
      %v4880 = vmul.f32 %v4624, %v4752
      %v4881 = vsub.f32 2.0, %v4753
      %v4882 = vsub.f32 2.0, %v4754
      %v4883 = vsub.f32 2.0, %v4755
      %v4884 = vsub.f32 2.0, %v4756
      %v4885 = vsub.f32 2.0, %v4757
      %v4886 = vsub.f32 2.0, %v4758
      %v4887 = vsub.f32 2.0, %v4759
      %v4888 = vsub.f32 2.0, %v4760
      %v4889 = vsub.f32 2.0, %v4761
      %v4890 = vsub.f32 2.0, %v4762
      %v4891 = vsub.f32 2.0, %v4763
      %v4892 = vsub.f32 2.0, %v4764
      %v4893 = vsub.f32 2.0, %v4765
      %v4894 = vsub.f32 2.0, %v4766
      %v4895 = vsub.f32 2.0, %v4767
      %v4896 = vsub.f32 2.0, %v4768
      %v4897 = vsub.f32 2.0, %v4769
      %v4898 = vsub.f32 2.0, %v4770
      %v4899 = vsub.f32 2.0, %v4771
      %v4900 = vsub.f32 2.0, %v4772
      %v4901 = vsub.f32 2.0, %v4773
      %v4902 = vsub.f32 2.0, %v4774
      %v4903 = vsub.f32 2.0, %v4775
      %v4904 = vsub.f32 2.0, %v4776
      %v4905 = vsub.f32 2.0, %v4777
      %v4906 = vsub.f32 2.0, %v4778
      %v4907 = vsub.f32 2.0, %v4779
      %v4908 = vsub.f32 2.0, %v4780
      %v4909 = vsub.f32 2.0, %v4781
      %v4910 = vsub.f32 2.0, %v4782
      %v4911 = vsub.f32 2.0, %v4783
      %v4912 = vsub.f32 2.0, %v4784
      %v4913 = vsub.f32 2.0, %v4785
      %v4914 = vsub.f32 2.0, %v4786
      %v4915 = vsub.f32 2.0, %v4787
      %v4916 = vsub.f32 2.0, %v4788
      %v4917 = vsub.f32 2.0, %v4789
      %v4918 = vsub.f32 2.0, %v4790
      %v4919 = vsub.f32 2.0, %v4791
      %v4920 = vsub.f32 2.0, %v4792
      %v4921 = vsub.f32 2.0, %v4793
      %v4922 = vsub.f32 2.0, %v4794
      %v4923 = vsub.f32 2.0, %v4795
      %v4924 = vsub.f32 2.0, %v4796
      %v4925 = vsub.f32 2.0, %v4797
      %v4926 = vsub.f32 2.0, %v4798
      %v4927 = vsub.f32 2.0, %v4799
      %v4928 = vsub.f32 2.0, %v4800
      %v4929 = vsub.f32 2.0, %v4801
      %v4930 = vsub.f32 2.0, %v4802
      %v4931 = vsub.f32 2.0, %v4803
      %v4932 = vsub.f32 2.0, %v4804
      %v4933 = vsub.f32 2.0, %v4805
      %v4934 = vsub.f32 2.0, %v4806
      %v4935 = vsub.f32 2.0, %v4807
      %v4936 = vsub.f32 2.0, %v4808
      %v4937 = vsub.f32 2.0, %v4809
      %v4938 = vsub.f32 2.0, %v4810
      %v4939 = vsub.f32 2.0, %v4811
      %v4940 = vsub.f32 2.0, %v4812
      %v4941 = vsub.f32 2.0, %v4813
      %v4942 = vsub.f32 2.0, %v4814
      %v4943 = vsub.f32 2.0, %v4815
      %v4944 = vsub.f32 2.0, %v4816
      %v4945 = vsub.f32 2.0, %v4817
      %v4946 = vsub.f32 2.0, %v4818
      %v4947 = vsub.f32 2.0, %v4819
      %v4948 = vsub.f32 2.0, %v4820
      %v4949 = vsub.f32 2.0, %v4821
      %v4950 = vsub.f32 2.0, %v4822
      %v4951 = vsub.f32 2.0, %v4823
      %v4952 = vsub.f32 2.0, %v4824
      %v4953 = vsub.f32 2.0, %v4825
      %v4954 = vsub.f32 2.0, %v4826
      %v4955 = vsub.f32 2.0, %v4827
      %v4956 = vsub.f32 2.0, %v4828
      %v4957 = vsub.f32 2.0, %v4829
      %v4958 = vsub.f32 2.0, %v4830
      %v4959 = vsub.f32 2.0, %v4831
      %v4960 = vsub.f32 2.0, %v4832
      %v4961 = vsub.f32 2.0, %v4833
      %v4962 = vsub.f32 2.0, %v4834
      %v4963 = vsub.f32 2.0, %v4835
      %v4964 = vsub.f32 2.0, %v4836
      %v4965 = vsub.f32 2.0, %v4837
      %v4966 = vsub.f32 2.0, %v4838
      %v4967 = vsub.f32 2.0, %v4839
      %v4968 = vsub.f32 2.0, %v4840
      %v4969 = vsub.f32 2.0, %v4841
      %v4970 = vsub.f32 2.0, %v4842
      %v4971 = vsub.f32 2.0, %v4843
      %v4972 = vsub.f32 2.0, %v4844
      %v4973 = vsub.f32 2.0, %v4845
      %v4974 = vsub.f32 2.0, %v4846
      %v4975 = vsub.f32 2.0, %v4847
      %v4976 = vsub.f32 2.0, %v4848
      %v4977 = vsub.f32 2.0, %v4849
      %v4978 = vsub.f32 2.0, %v4850
      %v4979 = vsub.f32 2.0, %v4851
      %v4980 = vsub.f32 2.0, %v4852
      %v4981 = vsub.f32 2.0, %v4853
      %v4982 = vsub.f32 2.0, %v4854
      %v4983 = vsub.f32 2.0, %v4855
      %v4984 = vsub.f32 2.0, %v4856
      %v4985 = vsub.f32 2.0, %v4857
      %v4986 = vsub.f32 2.0, %v4858
      %v4987 = vsub.f32 2.0, %v4859
      %v4988 = vsub.f32 2.0, %v4860
      %v4989 = vsub.f32 2.0, %v4861
      %v4990 = vsub.f32 2.0, %v4862
      %v4991 = vsub.f32 2.0, %v4863
      %v4992 = vsub.f32 2.0, %v4864
      %v4993 = vsub.f32 2.0, %v4865
      %v4994 = vsub.f32 2.0, %v4866
      %v4995 = vsub.f32 2.0, %v4867
      %v4996 = vsub.f32 2.0, %v4868
      %v4997 = vsub.f32 2.0, %v4869
      %v4998 = vsub.f32 2.0, %v4870
      %v4999 = vsub.f32 2.0, %v4871
      %v5000 = vsub.f32 2.0, %v4872
      %v5001 = vsub.f32 2.0, %v4873
      %v5002 = vsub.f32 2.0, %v4874
      %v5003 = vsub.f32 2.0, %v4875
      %v5004 = vsub.f32 2.0, %v4876
      %v5005 = vsub.f32 2.0, %v4877
      %v5006 = vsub.f32 2.0, %v4878
      %v5007 = vsub.f32 2.0, %v4879
      %v5008 = vsub.f32 2.0, %v4880
      %v5009 = vmul.f32 %v4625, %v4881
      %v5010 = vmul.f32 %v4626, %v4882
      %v5011 = vmul.f32 %v4627, %v4883
      %v5012 = vmul.f32 %v4628, %v4884
      %v5013 = vmul.f32 %v4629, %v4885
      %v5014 = vmul.f32 %v4630, %v4886
      %v5015 = vmul.f32 %v4631, %v4887
      %v5016 = vmul.f32 %v4632, %v4888
      %v5017 = vmul.f32 %v4633, %v4889
      %v5018 = vmul.f32 %v4634, %v4890
      %v5019 = vmul.f32 %v4635, %v4891
      %v5020 = vmul.f32 %v4636, %v4892
      %v5021 = vmul.f32 %v4637, %v4893
      %v5022 = vmul.f32 %v4638, %v4894
      %v5023 = vmul.f32 %v4639, %v4895
      %v5024 = vmul.f32 %v4640, %v4896
      %v5025 = vmul.f32 %v4641, %v4897
      %v5026 = vmul.f32 %v4642, %v4898
      %v5027 = vmul.f32 %v4643, %v4899
      %v5028 = vmul.f32 %v4644, %v4900
      %v5029 = vmul.f32 %v4645, %v4901
      %v5030 = vmul.f32 %v4646, %v4902
      %v5031 = vmul.f32 %v4647, %v4903
      %v5032 = vmul.f32 %v4648, %v4904
      %v5033 = vmul.f32 %v4649, %v4905
      %v5034 = vmul.f32 %v4650, %v4906
      %v5035 = vmul.f32 %v4651, %v4907
      %v5036 = vmul.f32 %v4652, %v4908
      %v5037 = vmul.f32 %v4653, %v4909
      %v5038 = vmul.f32 %v4654, %v4910
      %v5039 = vmul.f32 %v4655, %v4911
      %v5040 = vmul.f32 %v4656, %v4912
      %v5041 = vmul.f32 %v4657, %v4913
      %v5042 = vmul.f32 %v4658, %v4914
      %v5043 = vmul.f32 %v4659, %v4915
      %v5044 = vmul.f32 %v4660, %v4916
      %v5045 = vmul.f32 %v4661, %v4917
      %v5046 = vmul.f32 %v4662, %v4918
      %v5047 = vmul.f32 %v4663, %v4919
      %v5048 = vmul.f32 %v4664, %v4920
      %v5049 = vmul.f32 %v4665, %v4921
      %v5050 = vmul.f32 %v4666, %v4922
      %v5051 = vmul.f32 %v4667, %v4923
      %v5052 = vmul.f32 %v4668, %v4924
      %v5053 = vmul.f32 %v4669, %v4925
      %v5054 = vmul.f32 %v4670, %v4926
      %v5055 = vmul.f32 %v4671, %v4927
      %v5056 = vmul.f32 %v4672, %v4928
      %v5057 = vmul.f32 %v4673, %v4929
      %v5058 = vmul.f32 %v4674, %v4930
      %v5059 = vmul.f32 %v4675, %v4931
      %v5060 = vmul.f32 %v4676, %v4932
      %v5061 = vmul.f32 %v4677, %v4933
      %v5062 = vmul.f32 %v4678, %v4934
      %v5063 = vmul.f32 %v4679, %v4935
      %v5064 = vmul.f32 %v4680, %v4936
      %v5065 = vmul.f32 %v4681, %v4937
      %v5066 = vmul.f32 %v4682, %v4938
      %v5067 = vmul.f32 %v4683, %v4939
      %v5068 = vmul.f32 %v4684, %v4940
      %v5069 = vmul.f32 %v4685, %v4941
      %v5070 = vmul.f32 %v4686, %v4942
      %v5071 = vmul.f32 %v4687, %v4943
      %v5072 = vmul.f32 %v4688, %v4944
      %v5073 = vmul.f32 %v4689, %v4945
      %v5074 = vmul.f32 %v4690, %v4946
      %v5075 = vmul.f32 %v4691, %v4947
      %v5076 = vmul.f32 %v4692, %v4948
      %v5077 = vmul.f32 %v4693, %v4949
      %v5078 = vmul.f32 %v4694, %v4950
      %v5079 = vmul.f32 %v4695, %v4951
      %v5080 = vmul.f32 %v4696, %v4952
      %v5081 = vmul.f32 %v4697, %v4953
      %v5082 = vmul.f32 %v4698, %v4954
      %v5083 = vmul.f32 %v4699, %v4955
      %v5084 = vmul.f32 %v4700, %v4956
      %v5085 = vmul.f32 %v4701, %v4957
      %v5086 = vmul.f32 %v4702, %v4958
      %v5087 = vmul.f32 %v4703, %v4959
      %v5088 = vmul.f32 %v4704, %v4960
      %v5089 = vmul.f32 %v4705, %v4961
      %v5090 = vmul.f32 %v4706, %v4962
      %v5091 = vmul.f32 %v4707, %v4963
      %v5092 = vmul.f32 %v4708, %v4964
      %v5093 = vmul.f32 %v4709, %v4965
      %v5094 = vmul.f32 %v4710, %v4966
      %v5095 = vmul.f32 %v4711, %v4967
      %v5096 = vmul.f32 %v4712, %v4968
      %v5097 = vmul.f32 %v4713, %v4969
      %v5098 = vmul.f32 %v4714, %v4970
      %v5099 = vmul.f32 %v4715, %v4971
      %v5100 = vmul.f32 %v4716, %v4972
      %v5101 = vmul.f32 %v4717, %v4973
      %v5102 = vmul.f32 %v4718, %v4974
      %v5103 = vmul.f32 %v4719, %v4975
      %v5104 = vmul.f32 %v4720, %v4976
      %v5105 = vmul.f32 %v4721, %v4977
      %v5106 = vmul.f32 %v4722, %v4978
      %v5107 = vmul.f32 %v4723, %v4979
      %v5108 = vmul.f32 %v4724, %v4980
      %v5109 = vmul.f32 %v4725, %v4981
      %v5110 = vmul.f32 %v4726, %v4982
      %v5111 = vmul.f32 %v4727, %v4983
      %v5112 = vmul.f32 %v4728, %v4984
      %v5113 = vmul.f32 %v4729, %v4985
      %v5114 = vmul.f32 %v4730, %v4986
      %v5115 = vmul.f32 %v4731, %v4987
      %v5116 = vmul.f32 %v4732, %v4988
      %v5117 = vmul.f32 %v4733, %v4989
      %v5118 = vmul.f32 %v4734, %v4990
      %v5119 = vmul.f32 %v4735, %v4991
      %v5120 = vmul.f32 %v4736, %v4992
      %v5121 = vmul.f32 %v4737, %v4993
      %v5122 = vmul.f32 %v4738, %v4994
      %v5123 = vmul.f32 %v4739, %v4995
      %v5124 = vmul.f32 %v4740, %v4996
      %v5125 = vmul.f32 %v4741, %v4997
      %v5126 = vmul.f32 %v4742, %v4998
      %v5127 = vmul.f32 %v4743, %v4999
      %v5128 = vmul.f32 %v4744, %v5000
      %v5129 = vmul.f32 %v4745, %v5001
      %v5130 = vmul.f32 %v4746, %v5002
      %v5131 = vmul.f32 %v4747, %v5003
      %v5132 = vmul.f32 %v4748, %v5004
      %v5133 = vmul.f32 %v4749, %v5005
      %v5134 = vmul.f32 %v4750, %v5006
      %v5135 = vmul.f32 %v4751, %v5007
      %v5136 = vmul.f32 %v4752, %v5008
      %v5137 = vmul.f32 %v3986, %v5009
      %v5138 = vmul.f32 %v3988, %v5010
      %v5139 = vmul.f32 %v3990, %v5011
      %v5140 = vmul.f32 %v3992, %v5012
      %v5141 = vmul.f32 %v3994, %v5013
      %v5142 = vmul.f32 %v3996, %v5014
      %v5143 = vmul.f32 %v3998, %v5015
      %v5144 = vmul.f32 %v4000, %v5016
      %v5145 = vmul.f32 %v4002, %v5017
      %v5146 = vmul.f32 %v4004, %v5018
      %v5147 = vmul.f32 %v4006, %v5019
      %v5148 = vmul.f32 %v4008, %v5020
      %v5149 = vmul.f32 %v4010, %v5021
      %v5150 = vmul.f32 %v4012, %v5022
      %v5151 = vmul.f32 %v4014, %v5023
      %v5152 = vmul.f32 %v4016, %v5024
      %v5153 = vmul.f32 %v4018, %v5025
      %v5154 = vmul.f32 %v4020, %v5026
      %v5155 = vmul.f32 %v4022, %v5027
      %v5156 = vmul.f32 %v4024, %v5028
      %v5157 = vmul.f32 %v4026, %v5029
      %v5158 = vmul.f32 %v4028, %v5030
      %v5159 = vmul.f32 %v4030, %v5031
      %v5160 = vmul.f32 %v4032, %v5032
      %v5161 = vmul.f32 %v4034, %v5033
      %v5162 = vmul.f32 %v4036, %v5034
      %v5163 = vmul.f32 %v4038, %v5035
      %v5164 = vmul.f32 %v4040, %v5036
      %v5165 = vmul.f32 %v4042, %v5037
      %v5166 = vmul.f32 %v4044, %v5038
      %v5167 = vmul.f32 %v4046, %v5039
      %v5168 = vmul.f32 %v4048, %v5040
      %v5169 = vmul.f32 %v4050, %v5041
      %v5170 = vmul.f32 %v4052, %v5042
      %v5171 = vmul.f32 %v4054, %v5043
      %v5172 = vmul.f32 %v4056, %v5044
      %v5173 = vmul.f32 %v4058, %v5045
      %v5174 = vmul.f32 %v4060, %v5046
      %v5175 = vmul.f32 %v4062, %v5047
      %v5176 = vmul.f32 %v4064, %v5048
      %v5177 = vmul.f32 %v4066, %v5049
      %v5178 = vmul.f32 %v4068, %v5050
      %v5179 = vmul.f32 %v4070, %v5051
      %v5180 = vmul.f32 %v4072, %v5052
      %v5181 = vmul.f32 %v4074, %v5053
      %v5182 = vmul.f32 %v4076, %v5054
      %v5183 = vmul.f32 %v4078, %v5055
      %v5184 = vmul.f32 %v4080, %v5056
      %v5185 = vmul.f32 %v4082, %v5057
      %v5186 = vmul.f32 %v4084, %v5058
      %v5187 = vmul.f32 %v4086, %v5059
      %v5188 = vmul.f32 %v4088, %v5060
      %v5189 = vmul.f32 %v4090, %v5061
      %v5190 = vmul.f32 %v4092, %v5062
      %v5191 = vmul.f32 %v4094, %v5063
      %v5192 = vmul.f32 %v4096, %v5064
      %v5193 = vmul.f32 %v4098, %v5065
      %v5194 = vmul.f32 %v4100, %v5066
      %v5195 = vmul.f32 %v4102, %v5067
      %v5196 = vmul.f32 %v4104, %v5068
      %v5197 = vmul.f32 %v4106, %v5069
      %v5198 = vmul.f32 %v4108, %v5070
      %v5199 = vmul.f32 %v4110, %v5071
      %v5200 = vmul.f32 %v4112, %v5072
      %v5201 = vmul.f32 %v4114, %v5073
      %v5202 = vmul.f32 %v4116, %v5074
      %v5203 = vmul.f32 %v4118, %v5075
      %v5204 = vmul.f32 %v4120, %v5076
      %v5205 = vmul.f32 %v4122, %v5077
      %v5206 = vmul.f32 %v4124, %v5078
      %v5207 = vmul.f32 %v4126, %v5079
      %v5208 = vmul.f32 %v4128, %v5080
      %v5209 = vmul.f32 %v4130, %v5081
      %v5210 = vmul.f32 %v4132, %v5082
      %v5211 = vmul.f32 %v4134, %v5083
      %v5212 = vmul.f32 %v4136, %v5084
      %v5213 = vmul.f32 %v4138, %v5085
      %v5214 = vmul.f32 %v4140, %v5086
      %v5215 = vmul.f32 %v4142, %v5087
      %v5216 = vmul.f32 %v4144, %v5088
      %v5217 = vmul.f32 %v4146, %v5089
      %v5218 = vmul.f32 %v4148, %v5090
      %v5219 = vmul.f32 %v4150, %v5091
      %v5220 = vmul.f32 %v4152, %v5092
      %v5221 = vmul.f32 %v4154, %v5093
      %v5222 = vmul.f32 %v4156, %v5094
      %v5223 = vmul.f32 %v4158, %v5095
      %v5224 = vmul.f32 %v4160, %v5096
      %v5225 = vmul.f32 %v4162, %v5097
      %v5226 = vmul.f32 %v4164, %v5098
      %v5227 = vmul.f32 %v4166, %v5099
      %v5228 = vmul.f32 %v4168, %v5100
      %v5229 = vmul.f32 %v4170, %v5101
      %v5230 = vmul.f32 %v4172, %v5102
      %v5231 = vmul.f32 %v4174, %v5103
      %v5232 = vmul.f32 %v4176, %v5104
      %v5233 = vmul.f32 %v4178, %v5105
      %v5234 = vmul.f32 %v4180, %v5106
      %v5235 = vmul.f32 %v4182, %v5107
      %v5236 = vmul.f32 %v4184, %v5108
      %v5237 = vmul.f32 %v4186, %v5109
      %v5238 = vmul.f32 %v4188, %v5110
      %v5239 = vmul.f32 %v4190, %v5111
      %v5240 = vmul.f32 %v4192, %v5112
      %v5241 = vmul.f32 %v4194, %v5113
      %v5242 = vmul.f32 %v4196, %v5114
      %v5243 = vmul.f32 %v4198, %v5115
      %v5244 = vmul.f32 %v4200, %v5116
      %v5245 = vmul.f32 %v4202, %v5117
      %v5246 = vmul.f32 %v4204, %v5118
      %v5247 = vmul.f32 %v4206, %v5119
      %v5248 = vmul.f32 %v4208, %v5120
      %v5249 = vmul.f32 %v4210, %v5121
      %v5250 = vmul.f32 %v4212, %v5122
      %v5251 = vmul.f32 %v4214, %v5123
      %v5252 = vmul.f32 %v4216, %v5124
      %v5253 = vmul.f32 %v4218, %v5125
      %v5254 = vmul.f32 %v4220, %v5126
      %v5255 = vmul.f32 %v4222, %v5127
      %v5256 = vmul.f32 %v4224, %v5128
      %v5257 = vmul.f32 %v4226, %v5129
      %v5258 = vmul.f32 %v4228, %v5130
      %v5259 = vmul.f32 %v4230, %v5131
      %v5260 = vmul.f32 %v4232, %v5132
      %v5261 = vmul.f32 %v4234, %v5133
      %v5262 = vmul.f32 %v4236, %v5134
      %v5263 = vmul.f32 %v4238, %v5135
      %v5264 = vmul.f32 %v4240, %v5136
      %v5265 = vpack.c.bf16 %v5137, %v5137
      %v5266 = vpack.c.bf16 %v5138, %v5138
      %v5267 = vpack.c.bf16 %v5139, %v5139
      %v5268 = vpack.c.bf16 %v5140, %v5140
      %v5269 = vpack.c.bf16 %v5141, %v5141
      %v5270 = vpack.c.bf16 %v5142, %v5142
      %v5271 = vpack.c.bf16 %v5143, %v5143
      %v5272 = vpack.c.bf16 %v5144, %v5144
      %v5273 = vpack.c.bf16 %v5145, %v5145
      %v5274 = vpack.c.bf16 %v5146, %v5146
      %v5275 = vpack.c.bf16 %v5147, %v5147
      %v5276 = vpack.c.bf16 %v5148, %v5148
      %v5277 = vpack.c.bf16 %v5149, %v5149
      %v5278 = vpack.c.bf16 %v5150, %v5150
      %v5279 = vpack.c.bf16 %v5151, %v5151
      %v5280 = vpack.c.bf16 %v5152, %v5152
      %v5281 = vpack.c.bf16 %v5153, %v5153
      %v5282 = vpack.c.bf16 %v5154, %v5154
      %v5283 = vpack.c.bf16 %v5155, %v5155
      %v5284 = vpack.c.bf16 %v5156, %v5156
      %v5285 = vpack.c.bf16 %v5157, %v5157
      %v5286 = vpack.c.bf16 %v5158, %v5158
      %v5287 = vpack.c.bf16 %v5159, %v5159
      %v5288 = vpack.c.bf16 %v5160, %v5160
      %v5289 = vpack.c.bf16 %v5161, %v5161
      %v5290 = vpack.c.bf16 %v5162, %v5162
      %v5291 = vpack.c.bf16 %v5163, %v5163
      %v5292 = vpack.c.bf16 %v5164, %v5164
      %v5293 = vpack.c.bf16 %v5165, %v5165
      %v5294 = vpack.c.bf16 %v5166, %v5166
      %v5295 = vpack.c.bf16 %v5167, %v5167
      %v5296 = vpack.c.bf16 %v5168, %v5168
      %v5297 = vpack.c.bf16 %v5169, %v5169
      %v5298 = vpack.c.bf16 %v5170, %v5170
      %v5299 = vpack.c.bf16 %v5171, %v5171
      %v5300 = vpack.c.bf16 %v5172, %v5172
      %v5301 = vpack.c.bf16 %v5173, %v5173
      %v5302 = vpack.c.bf16 %v5174, %v5174
      %v5303 = vpack.c.bf16 %v5175, %v5175
      %v5304 = vpack.c.bf16 %v5176, %v5176
      %v5305 = vpack.c.bf16 %v5177, %v5177
      %v5306 = vpack.c.bf16 %v5178, %v5178
      %v5307 = vpack.c.bf16 %v5179, %v5179
      %v5308 = vpack.c.bf16 %v5180, %v5180
      %v5309 = vpack.c.bf16 %v5181, %v5181
      %v5310 = vpack.c.bf16 %v5182, %v5182
      %v5311 = vpack.c.bf16 %v5183, %v5183
      %v5312 = vpack.c.bf16 %v5184, %v5184
      %v5313 = vpack.c.bf16 %v5185, %v5185
      %v5314 = vpack.c.bf16 %v5186, %v5186
      %v5315 = vpack.c.bf16 %v5187, %v5187
      %v5316 = vpack.c.bf16 %v5188, %v5188
      %v5317 = vpack.c.bf16 %v5189, %v5189
      %v5318 = vpack.c.bf16 %v5190, %v5190
      %v5319 = vpack.c.bf16 %v5191, %v5191
      %v5320 = vpack.c.bf16 %v5192, %v5192
      %v5321 = vpack.c.bf16 %v5193, %v5193
      %v5322 = vpack.c.bf16 %v5194, %v5194
      %v5323 = vpack.c.bf16 %v5195, %v5195
      %v5324 = vpack.c.bf16 %v5196, %v5196
      %v5325 = vpack.c.bf16 %v5197, %v5197
      %v5326 = vpack.c.bf16 %v5198, %v5198
      %v5327 = vpack.c.bf16 %v5199, %v5199
      %v5328 = vpack.c.bf16 %v5200, %v5200
      %v5329 = vpack.c.bf16 %v5201, %v5201
      %v5330 = vpack.c.bf16 %v5202, %v5202
      %v5331 = vpack.c.bf16 %v5203, %v5203
      %v5332 = vpack.c.bf16 %v5204, %v5204
      %v5333 = vpack.c.bf16 %v5205, %v5205
      %v5334 = vpack.c.bf16 %v5206, %v5206
      %v5335 = vpack.c.bf16 %v5207, %v5207
      %v5336 = vpack.c.bf16 %v5208, %v5208
      %v5337 = vpack.c.bf16 %v5209, %v5209
      %v5338 = vpack.c.bf16 %v5210, %v5210
      %v5339 = vpack.c.bf16 %v5211, %v5211
      %v5340 = vpack.c.bf16 %v5212, %v5212
      %v5341 = vpack.c.bf16 %v5213, %v5213
      %v5342 = vpack.c.bf16 %v5214, %v5214
      %v5343 = vpack.c.bf16 %v5215, %v5215
      %v5344 = vpack.c.bf16 %v5216, %v5216
      %v5345 = vpack.c.bf16 %v5217, %v5217
      %v5346 = vpack.c.bf16 %v5218, %v5218
      %v5347 = vpack.c.bf16 %v5219, %v5219
      %v5348 = vpack.c.bf16 %v5220, %v5220
      %v5349 = vpack.c.bf16 %v5221, %v5221
      %v5350 = vpack.c.bf16 %v5222, %v5222
      %v5351 = vpack.c.bf16 %v5223, %v5223
      %v5352 = vpack.c.bf16 %v5224, %v5224
      %v5353 = vpack.c.bf16 %v5225, %v5225
      %v5354 = vpack.c.bf16 %v5226, %v5226
      %v5355 = vpack.c.bf16 %v5227, %v5227
      %v5356 = vpack.c.bf16 %v5228, %v5228
      %v5357 = vpack.c.bf16 %v5229, %v5229
      %v5358 = vpack.c.bf16 %v5230, %v5230
      %v5359 = vpack.c.bf16 %v5231, %v5231
      %v5360 = vpack.c.bf16 %v5232, %v5232
      %v5361 = vpack.c.bf16 %v5233, %v5233
      %v5362 = vpack.c.bf16 %v5234, %v5234
      %v5363 = vpack.c.bf16 %v5235, %v5235
      %v5364 = vpack.c.bf16 %v5236, %v5236
      %v5365 = vpack.c.bf16 %v5237, %v5237
      %v5366 = vpack.c.bf16 %v5238, %v5238
      %v5367 = vpack.c.bf16 %v5239, %v5239
      %v5368 = vpack.c.bf16 %v5240, %v5240
      %v5369 = vpack.c.bf16 %v5241, %v5241
      %v5370 = vpack.c.bf16 %v5242, %v5242
      %v5371 = vpack.c.bf16 %v5243, %v5243
      %v5372 = vpack.c.bf16 %v5244, %v5244
      %v5373 = vpack.c.bf16 %v5245, %v5245
      %v5374 = vpack.c.bf16 %v5246, %v5246
      %v5375 = vpack.c.bf16 %v5247, %v5247
      %v5376 = vpack.c.bf16 %v5248, %v5248
      %v5377 = vpack.c.bf16 %v5249, %v5249
      %v5378 = vpack.c.bf16 %v5250, %v5250
      %v5379 = vpack.c.bf16 %v5251, %v5251
      %v5380 = vpack.c.bf16 %v5252, %v5252
      %v5381 = vpack.c.bf16 %v5253, %v5253
      %v5382 = vpack.c.bf16 %v5254, %v5254
      %v5383 = vpack.c.bf16 %v5255, %v5255
      %v5384 = vpack.c.bf16 %v5256, %v5256
      %v5385 = vpack.c.bf16 %v5257, %v5257
      %v5386 = vpack.c.bf16 %v5258, %v5258
      %v5387 = vpack.c.bf16 %v5259, %v5259
      %v5388 = vpack.c.bf16 %v5260, %v5260
      %v5389 = vpack.c.bf16 %v5261, %v5261
      %v5390 = vpack.c.bf16 %v5262, %v5262
      %v5391 = vpack.c.bf16 %v5263, %v5263
      %v5392 = vpack.c.bf16 %v5264, %v5264
      %v5397 = vunpack.c.l.b16 %v5265
      %v5398 = vunpack.c.l.b16 %v5266
      %v5399 = vunpack.c.l.b16 %v5267
      %v5400 = vunpack.c.l.b16 %v5268
      %v5401 = vpack.c.b16 %v5398, %v5397
      %v5402 = vpack.c.b16 %v5400, %v5399
      %5403 = vrot.lane.b32.xlu0 %v2040, 64
      %v5404 = vpop.permute.xlu0 %5403
      %5405 = vrot.lane.b32.xlu0 %v2041, 64
      %v5406 = vpop.permute.xlu0 %5405
      %v5410 = vsel %vm509, %v5401, 0
      %v5413 = vsel %vm509, %v5402, 0
      %5415 = vmatpush.bf16.msra.mxu0 0
      %5416 = vmatpush.bf16.msra.mxu0 0
      %5417 = vmatpush.bf16.msra.mxu0 0
      %5418 = vmatpush.bf16.msra.mxu0 0
      %5419 = vmatpush.bf16.msra.mxu0 0
      %5420 = vmatpush.bf16.msra.mxu0 0
      %5421 = vmatpush.bf16.msra.mxu0 %v5406
      %5422 = vmatpush.bf16.msra.mxu0 %v5404
      %5423 = vmatmul.bf16.gmra.mxu0 %v5410
      %v5424 = vpop.f32.mrf.mxu0
      %v5425 = vadd.f32 0.0, %v5424
      %v5426 = vpop.f32.mrf.mxu0
      %v5427 = vadd.f32 0.0, %v5426
      %5428 = vmatmul.bf16.gmra.mxu0 %v5413
      %v5429 = vpop.f32.mrf.mxu0
      %v5430 = vadd.f32 0.0, %v5429
      %v5431 = vpop.f32.mrf.mxu0
      %v5432 = vadd.f32 0.0, %v5431
      %5433 = vdwg.mxu0
      %v5438 = vunpack.c.l.b16 %v5269
      %v5439 = vunpack.c.l.b16 %v5270
      %v5440 = vunpack.c.l.b16 %v5271
      %v5441 = vunpack.c.l.b16 %v5272
      %v5442 = vpack.c.b16 %v5439, %v5438
      %v5443 = vpack.c.b16 %v5441, %v5440
      %5444 = vrot.lane.b32.xlu0 %v2086, 64
      %v5445 = vpop.permute.xlu0 %5444
      %5446 = vrot.lane.b32.xlu0 %v2087, 64
      %v5447 = vpop.permute.xlu0 %5446
      %v5451 = vsel %vm509, %v5442, 0
      %v5454 = vsel %vm509, %v5443, 0
      %5456 = vmatpush.bf16.msra.mxu0 0
      %5457 = vmatpush.bf16.msra.mxu0 0
      %5458 = vmatpush.bf16.msra.mxu0 0
      %5459 = vmatpush.bf16.msra.mxu0 0
      %5460 = vmatpush.bf16.msra.mxu0 0
      %5461 = vmatpush.bf16.msra.mxu0 0
      %5462 = vmatpush.bf16.msra.mxu0 %v5447
      %5463 = vmatpush.bf16.msra.mxu0 %v5445
      %5464 = vmatmul.bf16.gmra.mxu0 %v5451
      %v5465 = vpop.f32.mrf.mxu0
      %v5466 = vadd.f32 0.0, %v5465
      %v5467 = vpop.f32.mrf.mxu0
      %v5468 = vadd.f32 0.0, %v5467
      %5469 = vmatmul.bf16.gmra.mxu0 %v5454
      %v5470 = vpop.f32.mrf.mxu0
      %v5471 = vadd.f32 0.0, %v5470
      %v5472 = vpop.f32.mrf.mxu0
      %v5473 = vadd.f32 0.0, %v5472
      %5474 = vdwg.mxu0
      %v5479 = vunpack.c.l.b16 %v5273
      %v5480 = vunpack.c.l.b16 %v5274
      %v5481 = vunpack.c.l.b16 %v5275
      %v5482 = vunpack.c.l.b16 %v5276
      %v5483 = vpack.c.b16 %v5480, %v5479
      %v5484 = vpack.c.b16 %v5482, %v5481
      %5485 = vrot.lane.b32.xlu0 %v2131, 64
      %v5486 = vpop.permute.xlu0 %5485
      %5487 = vrot.lane.b32.xlu0 %v2132, 64
      %v5488 = vpop.permute.xlu0 %5487
      %v5492 = vsel %vm509, %v5483, 0
      %v5495 = vsel %vm509, %v5484, 0
      %5497 = vmatpush.bf16.msra.mxu0 0
      %5498 = vmatpush.bf16.msra.mxu0 0
      %5499 = vmatpush.bf16.msra.mxu0 0
      %5500 = vmatpush.bf16.msra.mxu0 0
      %5501 = vmatpush.bf16.msra.mxu0 0
      %5502 = vmatpush.bf16.msra.mxu0 0
      %5503 = vmatpush.bf16.msra.mxu0 %v5488
      %5504 = vmatpush.bf16.msra.mxu0 %v5486
      %5505 = vmatmul.bf16.gmra.mxu0 %v5492
      %v5506 = vpop.f32.mrf.mxu0
      %v5507 = vadd.f32 0.0, %v5506
      %v5508 = vpop.f32.mrf.mxu0
      %v5509 = vadd.f32 0.0, %v5508
      %5510 = vmatmul.bf16.gmra.mxu0 %v5495
      %v5511 = vpop.f32.mrf.mxu0
      %v5512 = vadd.f32 0.0, %v5511
      %v5513 = vpop.f32.mrf.mxu0
      %v5514 = vadd.f32 0.0, %v5513
      %5515 = vdwg.mxu0
      %v5520 = vunpack.c.l.b16 %v5277
      %v5521 = vunpack.c.l.b16 %v5278
      %v5522 = vunpack.c.l.b16 %v5279
      %v5523 = vunpack.c.l.b16 %v5280
      %v5524 = vpack.c.b16 %v5521, %v5520
      %v5525 = vpack.c.b16 %v5523, %v5522
      %5526 = vrot.lane.b32.xlu0 %v2176, 64
      %v5527 = vpop.permute.xlu0 %5526
      %5528 = vrot.lane.b32.xlu0 %v2177, 64
      %v5529 = vpop.permute.xlu0 %5528
      %v5533 = vsel %vm509, %v5524, 0
      %v5536 = vsel %vm509, %v5525, 0
      %5538 = vmatpush.bf16.msra.mxu0 0
      %5539 = vmatpush.bf16.msra.mxu0 0
      %5540 = vmatpush.bf16.msra.mxu0 0
      %5541 = vmatpush.bf16.msra.mxu0 0
      %5542 = vmatpush.bf16.msra.mxu0 0
      %5543 = vmatpush.bf16.msra.mxu0 0
      %5544 = vmatpush.bf16.msra.mxu0 %v5529
      %5545 = vmatpush.bf16.msra.mxu0 %v5527
      %5546 = vmatmul.bf16.gmra.mxu0 %v5533
      %v5547 = vpop.f32.mrf.mxu0
      %v5548 = vadd.f32 0.0, %v5547
      %v5549 = vpop.f32.mrf.mxu0
      %v5550 = vadd.f32 0.0, %v5549
      %5551 = vmatmul.bf16.gmra.mxu0 %v5536
      %v5552 = vpop.f32.mrf.mxu0
      %v5553 = vadd.f32 0.0, %v5552
      %v5554 = vpop.f32.mrf.mxu0
      %v5555 = vadd.f32 0.0, %v5554
      %5556 = vdwg.mxu0
      %v5561 = vunpack.c.l.b16 %v5281
      %v5562 = vunpack.c.l.b16 %v5282
      %v5563 = vunpack.c.l.b16 %v5283
      %v5564 = vunpack.c.l.b16 %v5284
      %v5565 = vpack.c.b16 %v5562, %v5561
      %v5566 = vpack.c.b16 %v5564, %v5563
      %5567 = vrot.lane.b32.xlu0 %v2221, 64
      %v5568 = vpop.permute.xlu0 %5567
      %5569 = vrot.lane.b32.xlu0 %v2222, 64
      %v5570 = vpop.permute.xlu0 %5569
      %v5574 = vsel %vm509, %v5565, 0
      %v5577 = vsel %vm509, %v5566, 0
      %5579 = vmatpush.bf16.msra.mxu0 0
      %5580 = vmatpush.bf16.msra.mxu0 0
      %5581 = vmatpush.bf16.msra.mxu0 0
      %5582 = vmatpush.bf16.msra.mxu0 0
      %5583 = vmatpush.bf16.msra.mxu0 0
      %5584 = vmatpush.bf16.msra.mxu0 0
      %5585 = vmatpush.bf16.msra.mxu0 %v5570
      %5586 = vmatpush.bf16.msra.mxu0 %v5568
      %5587 = vmatmul.bf16.gmra.mxu0 %v5574
      %v5588 = vpop.f32.mrf.mxu0
      %v5589 = vadd.f32 0.0, %v5588
      %v5590 = vpop.f32.mrf.mxu0
      %v5591 = vadd.f32 0.0, %v5590
      %5592 = vmatmul.bf16.gmra.mxu0 %v5577
      %v5593 = vpop.f32.mrf.mxu0
      %v5594 = vadd.f32 0.0, %v5593
      %v5595 = vpop.f32.mrf.mxu0
      %v5596 = vadd.f32 0.0, %v5595
      %5597 = vdwg.mxu0
      %v5602 = vunpack.c.l.b16 %v5285
      %v5603 = vunpack.c.l.b16 %v5286
      %v5604 = vunpack.c.l.b16 %v5287
      %v5605 = vunpack.c.l.b16 %v5288
      %v5606 = vpack.c.b16 %v5603, %v5602
      %v5607 = vpack.c.b16 %v5605, %v5604
      %5608 = vrot.lane.b32.xlu0 %v2266, 64
      %v5609 = vpop.permute.xlu0 %5608
      %5610 = vrot.lane.b32.xlu0 %v2267, 64
      %v5611 = vpop.permute.xlu0 %5610
      %v5615 = vsel %vm509, %v5606, 0
      %v5618 = vsel %vm509, %v5607, 0
      %5620 = vmatpush.bf16.msra.mxu0 0
      %5621 = vmatpush.bf16.msra.mxu0 0
      %5622 = vmatpush.bf16.msra.mxu0 0
      %5623 = vmatpush.bf16.msra.mxu0 0
      %5624 = vmatpush.bf16.msra.mxu0 0
      %5625 = vmatpush.bf16.msra.mxu0 0
      %5626 = vmatpush.bf16.msra.mxu0 %v5611
      %5627 = vmatpush.bf16.msra.mxu0 %v5609
      %5628 = vmatmul.bf16.gmra.mxu0 %v5615
      %v5629 = vpop.f32.mrf.mxu0
      %v5630 = vadd.f32 0.0, %v5629
      %v5631 = vpop.f32.mrf.mxu0
      %v5632 = vadd.f32 0.0, %v5631
      %5633 = vmatmul.bf16.gmra.mxu0 %v5618
      %v5634 = vpop.f32.mrf.mxu0
      %v5635 = vadd.f32 0.0, %v5634
      %v5636 = vpop.f32.mrf.mxu0
      %v5637 = vadd.f32 0.0, %v5636
      %5638 = vdwg.mxu0
      %v5643 = vunpack.c.l.b16 %v5289
      %v5644 = vunpack.c.l.b16 %v5290
      %v5645 = vunpack.c.l.b16 %v5291
      %v5646 = vunpack.c.l.b16 %v5292
      %v5647 = vpack.c.b16 %v5644, %v5643
      %v5648 = vpack.c.b16 %v5646, %v5645
      %5649 = vrot.lane.b32.xlu0 %v2311, 64
      %v5650 = vpop.permute.xlu0 %5649
      %5651 = vrot.lane.b32.xlu0 %v2312, 64
      %v5652 = vpop.permute.xlu0 %5651
      %v5656 = vsel %vm509, %v5647, 0
      %v5659 = vsel %vm509, %v5648, 0
      %5661 = vmatpush.bf16.msra.mxu0 0
      %5662 = vmatpush.bf16.msra.mxu0 0
      %5663 = vmatpush.bf16.msra.mxu0 0
      %5664 = vmatpush.bf16.msra.mxu0 0
      %5665 = vmatpush.bf16.msra.mxu0 0
      %5666 = vmatpush.bf16.msra.mxu0 0
      %5667 = vmatpush.bf16.msra.mxu0 %v5652
      %5668 = vmatpush.bf16.msra.mxu0 %v5650
      %5669 = vmatmul.bf16.gmra.mxu0 %v5656
      %v5670 = vpop.f32.mrf.mxu0
      %v5671 = vadd.f32 0.0, %v5670
      %v5672 = vpop.f32.mrf.mxu0
      %v5673 = vadd.f32 0.0, %v5672
      %5674 = vmatmul.bf16.gmra.mxu0 %v5659
      %v5675 = vpop.f32.mrf.mxu0
      %v5676 = vadd.f32 0.0, %v5675
      %v5677 = vpop.f32.mrf.mxu0
      %v5678 = vadd.f32 0.0, %v5677
      %5679 = vdwg.mxu0
      %v5684 = vunpack.c.l.b16 %v5293
      %v5685 = vunpack.c.l.b16 %v5294
      %v5686 = vunpack.c.l.b16 %v5295
      %v5687 = vunpack.c.l.b16 %v5296
      %v5688 = vpack.c.b16 %v5685, %v5684
      %v5689 = vpack.c.b16 %v5687, %v5686
      %5690 = vrot.lane.b32.xlu0 %v2356, 64
      %v5691 = vpop.permute.xlu0 %5690
      %5692 = vrot.lane.b32.xlu0 %v2357, 64
      %v5693 = vpop.permute.xlu0 %5692
      %v5697 = vsel %vm509, %v5688, 0
      %v5700 = vsel %vm509, %v5689, 0
      %5702 = vmatpush.bf16.msra.mxu0 0
      %5703 = vmatpush.bf16.msra.mxu0 0
      %5704 = vmatpush.bf16.msra.mxu0 0
      %5705 = vmatpush.bf16.msra.mxu0 0
      %5706 = vmatpush.bf16.msra.mxu0 0
      %5707 = vmatpush.bf16.msra.mxu0 0
      %5708 = vmatpush.bf16.msra.mxu0 %v5693
      %5709 = vmatpush.bf16.msra.mxu0 %v5691
      %5710 = vmatmul.bf16.gmra.mxu0 %v5697
      %v5711 = vpop.f32.mrf.mxu0
      %v5712 = vadd.f32 0.0, %v5711
      %v5713 = vpop.f32.mrf.mxu0
      %v5714 = vadd.f32 0.0, %v5713
      %5715 = vmatmul.bf16.gmra.mxu0 %v5700
      %v5716 = vpop.f32.mrf.mxu0
      %v5717 = vadd.f32 0.0, %v5716
      %v5718 = vpop.f32.mrf.mxu0
      %v5719 = vadd.f32 0.0, %v5718
      %5720 = vdwg.mxu0
      %v5725 = vunpack.c.l.b16 %v5297
      %v5726 = vunpack.c.l.b16 %v5298
      %v5727 = vunpack.c.l.b16 %v5299
      %v5728 = vunpack.c.l.b16 %v5300
      %v5729 = vpack.c.b16 %v5726, %v5725
      %v5730 = vpack.c.b16 %v5728, %v5727
      %5731 = vrot.lane.b32.xlu0 %v2401, 64
      %v5732 = vpop.permute.xlu0 %5731
      %5733 = vrot.lane.b32.xlu0 %v2402, 64
      %v5734 = vpop.permute.xlu0 %5733
      %v5738 = vsel %vm509, %v5729, 0
      %v5741 = vsel %vm509, %v5730, 0
      %5743 = vmatpush.bf16.msra.mxu0 0
      %5744 = vmatpush.bf16.msra.mxu0 0
      %5745 = vmatpush.bf16.msra.mxu0 0
      %5746 = vmatpush.bf16.msra.mxu0 0
      %5747 = vmatpush.bf16.msra.mxu0 0
      %5748 = vmatpush.bf16.msra.mxu0 0
      %5749 = vmatpush.bf16.msra.mxu0 %v5734
      %5750 = vmatpush.bf16.msra.mxu0 %v5732
      %5751 = vmatmul.bf16.gmra.mxu0 %v5738
      %v5752 = vpop.f32.mrf.mxu0
      %v5753 = vadd.f32 0.0, %v5752
      %v5754 = vpop.f32.mrf.mxu0
      %v5755 = vadd.f32 0.0, %v5754
      %5756 = vmatmul.bf16.gmra.mxu0 %v5741
      %v5757 = vpop.f32.mrf.mxu0
      %v5758 = vadd.f32 0.0, %v5757
      %v5759 = vpop.f32.mrf.mxu0
      %v5760 = vadd.f32 0.0, %v5759
      %5761 = vdwg.mxu0
      %v5766 = vunpack.c.l.b16 %v5301
      %v5767 = vunpack.c.l.b16 %v5302
      %v5768 = vunpack.c.l.b16 %v5303
      %v5769 = vunpack.c.l.b16 %v5304
      %v5770 = vpack.c.b16 %v5767, %v5766
      %v5771 = vpack.c.b16 %v5769, %v5768
      %5772 = vrot.lane.b32.xlu0 %v2446, 64
      %v5773 = vpop.permute.xlu0 %5772
      %5774 = vrot.lane.b32.xlu0 %v2447, 64
      %v5775 = vpop.permute.xlu0 %5774
      %v5779 = vsel %vm509, %v5770, 0
      %v5782 = vsel %vm509, %v5771, 0
      %5784 = vmatpush.bf16.msra.mxu0 0
      %5785 = vmatpush.bf16.msra.mxu0 0
      %5786 = vmatpush.bf16.msra.mxu0 0
      %5787 = vmatpush.bf16.msra.mxu0 0
      %5788 = vmatpush.bf16.msra.mxu0 0
      %5789 = vmatpush.bf16.msra.mxu0 0
      %5790 = vmatpush.bf16.msra.mxu0 %v5775
      %5791 = vmatpush.bf16.msra.mxu0 %v5773
      %5792 = vmatmul.bf16.gmra.mxu0 %v5779
      %v5793 = vpop.f32.mrf.mxu0
      %v5794 = vadd.f32 0.0, %v5793
      %v5795 = vpop.f32.mrf.mxu0
      %v5796 = vadd.f32 0.0, %v5795
      %5797 = vmatmul.bf16.gmra.mxu0 %v5782
      %v5798 = vpop.f32.mrf.mxu0
      %v5799 = vadd.f32 0.0, %v5798
      %v5800 = vpop.f32.mrf.mxu0
      %v5801 = vadd.f32 0.0, %v5800
      %5802 = vdwg.mxu0
      %v5807 = vunpack.c.l.b16 %v5305
      %v5808 = vunpack.c.l.b16 %v5306
      %v5809 = vunpack.c.l.b16 %v5307
      %v5810 = vunpack.c.l.b16 %v5308
      %v5811 = vpack.c.b16 %v5808, %v5807
      %v5812 = vpack.c.b16 %v5810, %v5809
      %5813 = vrot.lane.b32.xlu0 %v2491, 64
      %v5814 = vpop.permute.xlu0 %5813
      %5815 = vrot.lane.b32.xlu0 %v2492, 64
      %v5816 = vpop.permute.xlu0 %5815
      %v5820 = vsel %vm509, %v5811, 0
      %v5823 = vsel %vm509, %v5812, 0
      %5825 = vmatpush.bf16.msra.mxu0 0
      %5826 = vmatpush.bf16.msra.mxu0 0
      %5827 = vmatpush.bf16.msra.mxu0 0
      %5828 = vmatpush.bf16.msra.mxu0 0
      %5829 = vmatpush.bf16.msra.mxu0 0
      %5830 = vmatpush.bf16.msra.mxu0 0
      %5831 = vmatpush.bf16.msra.mxu0 %v5816
      %5832 = vmatpush.bf16.msra.mxu0 %v5814
      %5833 = vmatmul.bf16.gmra.mxu0 %v5820
      %v5834 = vpop.f32.mrf.mxu0
      %v5835 = vadd.f32 0.0, %v5834
      %v5836 = vpop.f32.mrf.mxu0
      %v5837 = vadd.f32 0.0, %v5836
      %5838 = vmatmul.bf16.gmra.mxu0 %v5823
      %v5839 = vpop.f32.mrf.mxu0
      %v5840 = vadd.f32 0.0, %v5839
      %v5841 = vpop.f32.mrf.mxu0
      %v5842 = vadd.f32 0.0, %v5841
      %5843 = vdwg.mxu0
      %v5848 = vunpack.c.l.b16 %v5309
      %v5849 = vunpack.c.l.b16 %v5310
      %v5850 = vunpack.c.l.b16 %v5311
      %v5851 = vunpack.c.l.b16 %v5312
      %v5852 = vpack.c.b16 %v5849, %v5848
      %v5853 = vpack.c.b16 %v5851, %v5850
      %5854 = vrot.lane.b32.xlu0 %v2536, 64
      %v5855 = vpop.permute.xlu0 %5854
      %5856 = vrot.lane.b32.xlu0 %v2537, 64
      %v5857 = vpop.permute.xlu0 %5856
      %v5861 = vsel %vm509, %v5852, 0
      %v5864 = vsel %vm509, %v5853, 0
      %5866 = vmatpush.bf16.msra.mxu0 0
      %5867 = vmatpush.bf16.msra.mxu0 0
      %5868 = vmatpush.bf16.msra.mxu0 0
      %5869 = vmatpush.bf16.msra.mxu0 0
      %5870 = vmatpush.bf16.msra.mxu0 0
      %5871 = vmatpush.bf16.msra.mxu0 0
      %5872 = vmatpush.bf16.msra.mxu0 %v5857
      %5873 = vmatpush.bf16.msra.mxu0 %v5855
      %5874 = vmatmul.bf16.gmra.mxu0 %v5861
      %v5875 = vpop.f32.mrf.mxu0
      %v5876 = vadd.f32 0.0, %v5875
      %v5877 = vpop.f32.mrf.mxu0
      %v5878 = vadd.f32 0.0, %v5877
      %5879 = vmatmul.bf16.gmra.mxu0 %v5864
      %v5880 = vpop.f32.mrf.mxu0
      %v5881 = vadd.f32 0.0, %v5880
      %v5882 = vpop.f32.mrf.mxu0
      %v5883 = vadd.f32 0.0, %v5882
      %5884 = vdwg.mxu0
      %v5889 = vunpack.c.l.b16 %v5313
      %v5890 = vunpack.c.l.b16 %v5314
      %v5891 = vunpack.c.l.b16 %v5315
      %v5892 = vunpack.c.l.b16 %v5316
      %v5893 = vpack.c.b16 %v5890, %v5889
      %v5894 = vpack.c.b16 %v5892, %v5891
      %5895 = vrot.lane.b32.xlu0 %v2581, 64
      %v5896 = vpop.permute.xlu0 %5895
      %5897 = vrot.lane.b32.xlu0 %v2582, 64
      %v5898 = vpop.permute.xlu0 %5897
      %v5902 = vsel %vm509, %v5893, 0
      %v5905 = vsel %vm509, %v5894, 0
      %5907 = vmatpush.bf16.msra.mxu0 0
      %5908 = vmatpush.bf16.msra.mxu0 0
      %5909 = vmatpush.bf16.msra.mxu0 0
      %5910 = vmatpush.bf16.msra.mxu0 0
      %5911 = vmatpush.bf16.msra.mxu0 0
      %5912 = vmatpush.bf16.msra.mxu0 0
      %5913 = vmatpush.bf16.msra.mxu0 %v5898
      %5914 = vmatpush.bf16.msra.mxu0 %v5896
      %5915 = vmatmul.bf16.gmra.mxu0 %v5902
      %v5916 = vpop.f32.mrf.mxu0
      %v5917 = vadd.f32 0.0, %v5916
      %v5918 = vpop.f32.mrf.mxu0
      %v5919 = vadd.f32 0.0, %v5918
      %5920 = vmatmul.bf16.gmra.mxu0 %v5905
      %v5921 = vpop.f32.mrf.mxu0
      %v5922 = vadd.f32 0.0, %v5921
      %v5923 = vpop.f32.mrf.mxu0
      %v5924 = vadd.f32 0.0, %v5923
      %5925 = vdwg.mxu0
      %v5930 = vunpack.c.l.b16 %v5317
      %v5931 = vunpack.c.l.b16 %v5318
      %v5932 = vunpack.c.l.b16 %v5319
      %v5933 = vunpack.c.l.b16 %v5320
      %v5934 = vpack.c.b16 %v5931, %v5930
      %v5935 = vpack.c.b16 %v5933, %v5932
      %5936 = vrot.lane.b32.xlu0 %v2626, 64
      %v5937 = vpop.permute.xlu0 %5936
      %5938 = vrot.lane.b32.xlu0 %v2627, 64
      %v5939 = vpop.permute.xlu0 %5938
      %v5943 = vsel %vm509, %v5934, 0
      %v5946 = vsel %vm509, %v5935, 0
      %5948 = vmatpush.bf16.msra.mxu0 0
      %5949 = vmatpush.bf16.msra.mxu0 0
      %5950 = vmatpush.bf16.msra.mxu0 0
      %5951 = vmatpush.bf16.msra.mxu0 0
      %5952 = vmatpush.bf16.msra.mxu0 0
      %5953 = vmatpush.bf16.msra.mxu0 0
      %5954 = vmatpush.bf16.msra.mxu0 %v5939
      %5955 = vmatpush.bf16.msra.mxu0 %v5937
      %5956 = vmatmul.bf16.gmra.mxu0 %v5943
      %v5957 = vpop.f32.mrf.mxu0
      %v5958 = vadd.f32 0.0, %v5957
      %v5959 = vpop.f32.mrf.mxu0
      %v5960 = vadd.f32 0.0, %v5959
      %5961 = vmatmul.bf16.gmra.mxu0 %v5946
      %v5962 = vpop.f32.mrf.mxu0
      %v5963 = vadd.f32 0.0, %v5962
      %v5964 = vpop.f32.mrf.mxu0
      %v5965 = vadd.f32 0.0, %v5964
      %5966 = vdwg.mxu0
      %v5971 = vunpack.c.l.b16 %v5321
      %v5972 = vunpack.c.l.b16 %v5322
      %v5973 = vunpack.c.l.b16 %v5323
      %v5974 = vunpack.c.l.b16 %v5324
      %v5975 = vpack.c.b16 %v5972, %v5971
      %v5976 = vpack.c.b16 %v5974, %v5973
      %5977 = vrot.lane.b32.xlu0 %v2671, 64
      %v5978 = vpop.permute.xlu0 %5977
      %5979 = vrot.lane.b32.xlu0 %v2672, 64
      %v5980 = vpop.permute.xlu0 %5979
      %v5984 = vsel %vm509, %v5975, 0
      %v5987 = vsel %vm509, %v5976, 0
      %5989 = vmatpush.bf16.msra.mxu0 0
      %5990 = vmatpush.bf16.msra.mxu0 0
      %5991 = vmatpush.bf16.msra.mxu0 0
      %5992 = vmatpush.bf16.msra.mxu0 0
      %5993 = vmatpush.bf16.msra.mxu0 0
      %5994 = vmatpush.bf16.msra.mxu0 0
      %5995 = vmatpush.bf16.msra.mxu0 %v5980
      %5996 = vmatpush.bf16.msra.mxu0 %v5978
      %5997 = vmatmul.bf16.gmra.mxu0 %v5984
      %v5998 = vpop.f32.mrf.mxu0
      %v5999 = vadd.f32 0.0, %v5998
      %v6000 = vpop.f32.mrf.mxu0
      %v6001 = vadd.f32 0.0, %v6000
      %6002 = vmatmul.bf16.gmra.mxu0 %v5987
      %v6003 = vpop.f32.mrf.mxu0
      %v6004 = vadd.f32 0.0, %v6003
      %v6005 = vpop.f32.mrf.mxu0
      %v6006 = vadd.f32 0.0, %v6005
      %6007 = vdwg.mxu0
      %v6012 = vunpack.c.l.b16 %v5325
      %v6013 = vunpack.c.l.b16 %v5326
      %v6014 = vunpack.c.l.b16 %v5327
      %v6015 = vunpack.c.l.b16 %v5328
      %v6016 = vpack.c.b16 %v6013, %v6012
      %v6017 = vpack.c.b16 %v6015, %v6014
      %6018 = vrot.lane.b32.xlu0 %v2716, 64
      %v6019 = vpop.permute.xlu0 %6018
      %6020 = vrot.lane.b32.xlu0 %v2717, 64
      %v6021 = vpop.permute.xlu0 %6020
      %v6025 = vsel %vm509, %v6016, 0
      %v6028 = vsel %vm509, %v6017, 0
      %6030 = vmatpush.bf16.msra.mxu0 0
      %6031 = vmatpush.bf16.msra.mxu0 0
      %6032 = vmatpush.bf16.msra.mxu0 0
      %6033 = vmatpush.bf16.msra.mxu0 0
      %6034 = vmatpush.bf16.msra.mxu0 0
      %6035 = vmatpush.bf16.msra.mxu0 0
      %6036 = vmatpush.bf16.msra.mxu0 %v6021
      %6037 = vmatpush.bf16.msra.mxu0 %v6019
      %6038 = vmatmul.bf16.gmra.mxu0 %v6025
      %v6039 = vpop.f32.mrf.mxu0
      %v6040 = vadd.f32 0.0, %v6039
      %v6041 = vpop.f32.mrf.mxu0
      %v6042 = vadd.f32 0.0, %v6041
      %6043 = vmatmul.bf16.gmra.mxu0 %v6028
      %v6044 = vpop.f32.mrf.mxu0
      %v6045 = vadd.f32 0.0, %v6044
      %v6046 = vpop.f32.mrf.mxu0
      %v6047 = vadd.f32 0.0, %v6046
      %6048 = vdwg.mxu0
      %v6053 = vunpack.c.l.b16 %v5329
      %v6054 = vunpack.c.l.b16 %v5330
      %v6055 = vunpack.c.l.b16 %v5331
      %v6056 = vunpack.c.l.b16 %v5332
      %v6057 = vpack.c.b16 %v6054, %v6053
      %v6058 = vpack.c.b16 %v6056, %v6055
      %6059 = vrot.lane.b32.xlu0 %v2761, 64
      %v6060 = vpop.permute.xlu0 %6059
      %6061 = vrot.lane.b32.xlu0 %v2762, 64
      %v6062 = vpop.permute.xlu0 %6061
      %v6066 = vsel %vm509, %v6057, 0
      %v6069 = vsel %vm509, %v6058, 0
      %6071 = vmatpush.bf16.msra.mxu0 0
      %6072 = vmatpush.bf16.msra.mxu0 0
      %6073 = vmatpush.bf16.msra.mxu0 0
      %6074 = vmatpush.bf16.msra.mxu0 0
      %6075 = vmatpush.bf16.msra.mxu0 0
      %6076 = vmatpush.bf16.msra.mxu0 0
      %6077 = vmatpush.bf16.msra.mxu0 %v6062
      %6078 = vmatpush.bf16.msra.mxu0 %v6060
      %6079 = vmatmul.bf16.gmra.mxu0 %v6066
      %v6080 = vpop.f32.mrf.mxu0
      %v6081 = vadd.f32 0.0, %v6080
      %v6082 = vpop.f32.mrf.mxu0
      %v6083 = vadd.f32 0.0, %v6082
      %6084 = vmatmul.bf16.gmra.mxu0 %v6069
      %v6085 = vpop.f32.mrf.mxu0
      %v6086 = vadd.f32 0.0, %v6085
      %v6087 = vpop.f32.mrf.mxu0
      %v6088 = vadd.f32 0.0, %v6087
      %6089 = vdwg.mxu0
      %v6094 = vunpack.c.l.b16 %v5333
      %v6095 = vunpack.c.l.b16 %v5334
      %v6096 = vunpack.c.l.b16 %v5335
      %v6097 = vunpack.c.l.b16 %v5336
      %v6098 = vpack.c.b16 %v6095, %v6094
      %v6099 = vpack.c.b16 %v6097, %v6096
      %6100 = vrot.lane.b32.xlu0 %v2806, 64
      %v6101 = vpop.permute.xlu0 %6100
      %6102 = vrot.lane.b32.xlu0 %v2807, 64
      %v6103 = vpop.permute.xlu0 %6102
      %v6107 = vsel %vm509, %v6098, 0
      %v6110 = vsel %vm509, %v6099, 0
      %6112 = vmatpush.bf16.msra.mxu0 0
      %6113 = vmatpush.bf16.msra.mxu0 0
      %6114 = vmatpush.bf16.msra.mxu0 0
      %6115 = vmatpush.bf16.msra.mxu0 0
      %6116 = vmatpush.bf16.msra.mxu0 0
      %6117 = vmatpush.bf16.msra.mxu0 0
      %6118 = vmatpush.bf16.msra.mxu0 %v6103
      %6119 = vmatpush.bf16.msra.mxu0 %v6101
      %6120 = vmatmul.bf16.gmra.mxu0 %v6107
      %v6121 = vpop.f32.mrf.mxu0
      %v6122 = vadd.f32 0.0, %v6121
      %v6123 = vpop.f32.mrf.mxu0
      %v6124 = vadd.f32 0.0, %v6123
      %6125 = vmatmul.bf16.gmra.mxu0 %v6110
      %v6126 = vpop.f32.mrf.mxu0
      %v6127 = vadd.f32 0.0, %v6126
      %v6128 = vpop.f32.mrf.mxu0
      %v6129 = vadd.f32 0.0, %v6128
      %6130 = vdwg.mxu0
      %v6135 = vunpack.c.l.b16 %v5337
      %v6136 = vunpack.c.l.b16 %v5338
      %v6137 = vunpack.c.l.b16 %v5339
      %v6138 = vunpack.c.l.b16 %v5340
      %v6139 = vpack.c.b16 %v6136, %v6135
      %v6140 = vpack.c.b16 %v6138, %v6137
      %6141 = vrot.lane.b32.xlu0 %v2851, 64
      %v6142 = vpop.permute.xlu0 %6141
      %6143 = vrot.lane.b32.xlu0 %v2852, 64
      %v6144 = vpop.permute.xlu0 %6143
      %v6148 = vsel %vm509, %v6139, 0
      %v6151 = vsel %vm509, %v6140, 0
      %6153 = vmatpush.bf16.msra.mxu0 0
      %6154 = vmatpush.bf16.msra.mxu0 0
      %6155 = vmatpush.bf16.msra.mxu0 0
      %6156 = vmatpush.bf16.msra.mxu0 0
      %6157 = vmatpush.bf16.msra.mxu0 0
      %6158 = vmatpush.bf16.msra.mxu0 0
      %6159 = vmatpush.bf16.msra.mxu0 %v6144
      %6160 = vmatpush.bf16.msra.mxu0 %v6142
      %6161 = vmatmul.bf16.gmra.mxu0 %v6148
      %v6162 = vpop.f32.mrf.mxu0
      %v6163 = vadd.f32 0.0, %v6162
      %v6164 = vpop.f32.mrf.mxu0
      %v6165 = vadd.f32 0.0, %v6164
      %6166 = vmatmul.bf16.gmra.mxu0 %v6151
      %v6167 = vpop.f32.mrf.mxu0
      %v6168 = vadd.f32 0.0, %v6167
      %v6169 = vpop.f32.mrf.mxu0
      %v6170 = vadd.f32 0.0, %v6169
      %6171 = vdwg.mxu0
      %v6176 = vunpack.c.l.b16 %v5341
      %v6177 = vunpack.c.l.b16 %v5342
      %v6178 = vunpack.c.l.b16 %v5343
      %v6179 = vunpack.c.l.b16 %v5344
      %v6180 = vpack.c.b16 %v6177, %v6176
      %v6181 = vpack.c.b16 %v6179, %v6178
      %6182 = vrot.lane.b32.xlu0 %v2896, 64
      %v6183 = vpop.permute.xlu0 %6182
      %6184 = vrot.lane.b32.xlu0 %v2897, 64
      %v6185 = vpop.permute.xlu0 %6184
      %v6189 = vsel %vm509, %v6180, 0
      %v6192 = vsel %vm509, %v6181, 0
      %6194 = vmatpush.bf16.msra.mxu0 0
      %6195 = vmatpush.bf16.msra.mxu0 0
      %6196 = vmatpush.bf16.msra.mxu0 0
      %6197 = vmatpush.bf16.msra.mxu0 0
      %6198 = vmatpush.bf16.msra.mxu0 0
      %6199 = vmatpush.bf16.msra.mxu0 0
      %6200 = vmatpush.bf16.msra.mxu0 %v6185
      %6201 = vmatpush.bf16.msra.mxu0 %v6183
      %6202 = vmatmul.bf16.gmra.mxu0 %v6189
      %v6203 = vpop.f32.mrf.mxu0
      %v6204 = vadd.f32 0.0, %v6203
      %v6205 = vpop.f32.mrf.mxu0
      %v6206 = vadd.f32 0.0, %v6205
      %6207 = vmatmul.bf16.gmra.mxu0 %v6192
      %v6208 = vpop.f32.mrf.mxu0
      %v6209 = vadd.f32 0.0, %v6208
      %v6210 = vpop.f32.mrf.mxu0
      %v6211 = vadd.f32 0.0, %v6210
      %6212 = vdwg.mxu0
      %v6217 = vunpack.c.l.b16 %v5345
      %v6218 = vunpack.c.l.b16 %v5346
      %v6219 = vunpack.c.l.b16 %v5347
      %v6220 = vunpack.c.l.b16 %v5348
      %v6221 = vpack.c.b16 %v6218, %v6217
      %v6222 = vpack.c.b16 %v6220, %v6219
      %6223 = vrot.lane.b32.xlu0 %v2941, 64
      %v6224 = vpop.permute.xlu0 %6223
      %6225 = vrot.lane.b32.xlu0 %v2942, 64
      %v6226 = vpop.permute.xlu0 %6225
      %v6230 = vsel %vm509, %v6221, 0
      %v6233 = vsel %vm509, %v6222, 0
      %6235 = vmatpush.bf16.msra.mxu0 0
      %6236 = vmatpush.bf16.msra.mxu0 0
      %6237 = vmatpush.bf16.msra.mxu0 0
      %6238 = vmatpush.bf16.msra.mxu0 0
      %6239 = vmatpush.bf16.msra.mxu0 0
      %6240 = vmatpush.bf16.msra.mxu0 0
      %6241 = vmatpush.bf16.msra.mxu0 %v6226
      %6242 = vmatpush.bf16.msra.mxu0 %v6224
      %6243 = vmatmul.bf16.gmra.mxu0 %v6230
      %v6244 = vpop.f32.mrf.mxu0
      %v6245 = vadd.f32 0.0, %v6244
      %v6246 = vpop.f32.mrf.mxu0
      %v6247 = vadd.f32 0.0, %v6246
      %6248 = vmatmul.bf16.gmra.mxu0 %v6233
      %v6249 = vpop.f32.mrf.mxu0
      %v6250 = vadd.f32 0.0, %v6249
      %v6251 = vpop.f32.mrf.mxu0
      %v6252 = vadd.f32 0.0, %v6251
      %6253 = vdwg.mxu0
      %v6258 = vunpack.c.l.b16 %v5349
      %v6259 = vunpack.c.l.b16 %v5350
      %v6260 = vunpack.c.l.b16 %v5351
      %v6261 = vunpack.c.l.b16 %v5352
      %v6262 = vpack.c.b16 %v6259, %v6258
      %v6263 = vpack.c.b16 %v6261, %v6260
      %6264 = vrot.lane.b32.xlu0 %v2986, 64
      %v6265 = vpop.permute.xlu0 %6264
      %6266 = vrot.lane.b32.xlu0 %v2987, 64
      %v6267 = vpop.permute.xlu0 %6266
      %v6271 = vsel %vm509, %v6262, 0
      %v6274 = vsel %vm509, %v6263, 0
      %6276 = vmatpush.bf16.msra.mxu0 0
      %6277 = vmatpush.bf16.msra.mxu0 0
      %6278 = vmatpush.bf16.msra.mxu0 0
      %6279 = vmatpush.bf16.msra.mxu0 0
      %6280 = vmatpush.bf16.msra.mxu0 0
      %6281 = vmatpush.bf16.msra.mxu0 0
      %6282 = vmatpush.bf16.msra.mxu0 %v6267
      %6283 = vmatpush.bf16.msra.mxu0 %v6265
      %6284 = vmatmul.bf16.gmra.mxu0 %v6271
      %v6285 = vpop.f32.mrf.mxu0
      %v6286 = vadd.f32 0.0, %v6285
      %v6287 = vpop.f32.mrf.mxu0
      %v6288 = vadd.f32 0.0, %v6287
      %6289 = vmatmul.bf16.gmra.mxu0 %v6274
      %v6290 = vpop.f32.mrf.mxu0
      %v6291 = vadd.f32 0.0, %v6290
      %v6292 = vpop.f32.mrf.mxu0
      %v6293 = vadd.f32 0.0, %v6292
      %6294 = vdwg.mxu0
      %v6299 = vunpack.c.l.b16 %v5353
      %v6300 = vunpack.c.l.b16 %v5354
      %v6301 = vunpack.c.l.b16 %v5355
      %v6302 = vunpack.c.l.b16 %v5356
      %v6303 = vpack.c.b16 %v6300, %v6299
      %v6304 = vpack.c.b16 %v6302, %v6301
      %6305 = vrot.lane.b32.xlu0 %v3031, 64
      %v6306 = vpop.permute.xlu0 %6305
      %6307 = vrot.lane.b32.xlu0 %v3032, 64
      %v6308 = vpop.permute.xlu0 %6307
      %v6312 = vsel %vm509, %v6303, 0
      %v6315 = vsel %vm509, %v6304, 0
      %6317 = vmatpush.bf16.msra.mxu0 0
      %6318 = vmatpush.bf16.msra.mxu0 0
      %6319 = vmatpush.bf16.msra.mxu0 0
      %6320 = vmatpush.bf16.msra.mxu0 0
      %6321 = vmatpush.bf16.msra.mxu0 0
      %6322 = vmatpush.bf16.msra.mxu0 0
      %6323 = vmatpush.bf16.msra.mxu0 %v6308
      %6324 = vmatpush.bf16.msra.mxu0 %v6306
      %6325 = vmatmul.bf16.gmra.mxu0 %v6312
      %v6326 = vpop.f32.mrf.mxu0
      %v6327 = vadd.f32 0.0, %v6326
      %v6328 = vpop.f32.mrf.mxu0
      %v6329 = vadd.f32 0.0, %v6328
      %6330 = vmatmul.bf16.gmra.mxu0 %v6315
      %v6331 = vpop.f32.mrf.mxu0
      %v6332 = vadd.f32 0.0, %v6331
      %v6333 = vpop.f32.mrf.mxu0
      %v6334 = vadd.f32 0.0, %v6333
      %6335 = vdwg.mxu0
      %v6340 = vunpack.c.l.b16 %v5357
      %v6341 = vunpack.c.l.b16 %v5358
      %v6342 = vunpack.c.l.b16 %v5359
      %v6343 = vunpack.c.l.b16 %v5360
      %v6344 = vpack.c.b16 %v6341, %v6340
      %v6345 = vpack.c.b16 %v6343, %v6342
      %6346 = vrot.lane.b32.xlu0 %v3076, 64
      %v6347 = vpop.permute.xlu0 %6346
      %6348 = vrot.lane.b32.xlu0 %v3077, 64
      %v6349 = vpop.permute.xlu0 %6348
      %v6353 = vsel %vm509, %v6344, 0
      %v6356 = vsel %vm509, %v6345, 0
      %6358 = vmatpush.bf16.msra.mxu0 0
      %6359 = vmatpush.bf16.msra.mxu0 0
      %6360 = vmatpush.bf16.msra.mxu0 0
      %6361 = vmatpush.bf16.msra.mxu0 0
      %6362 = vmatpush.bf16.msra.mxu0 0
      %6363 = vmatpush.bf16.msra.mxu0 0
      %6364 = vmatpush.bf16.msra.mxu0 %v6349
      %6365 = vmatpush.bf16.msra.mxu0 %v6347
      %6366 = vmatmul.bf16.gmra.mxu0 %v6353
      %v6367 = vpop.f32.mrf.mxu0
      %v6368 = vadd.f32 0.0, %v6367
      %v6369 = vpop.f32.mrf.mxu0
      %v6370 = vadd.f32 0.0, %v6369
      %6371 = vmatmul.bf16.gmra.mxu0 %v6356
      %v6372 = vpop.f32.mrf.mxu0
      %v6373 = vadd.f32 0.0, %v6372
      %v6374 = vpop.f32.mrf.mxu0
      %v6375 = vadd.f32 0.0, %v6374
      %6376 = vdwg.mxu0
      %v6381 = vunpack.c.l.b16 %v5361
      %v6382 = vunpack.c.l.b16 %v5362
      %v6383 = vunpack.c.l.b16 %v5363
      %v6384 = vunpack.c.l.b16 %v5364
      %v6385 = vpack.c.b16 %v6382, %v6381
      %v6386 = vpack.c.b16 %v6384, %v6383
      %6387 = vrot.lane.b32.xlu0 %v3121, 64
      %v6388 = vpop.permute.xlu0 %6387
      %6389 = vrot.lane.b32.xlu0 %v3122, 64
      %v6390 = vpop.permute.xlu0 %6389
      %v6394 = vsel %vm509, %v6385, 0
      %v6397 = vsel %vm509, %v6386, 0
      %6399 = vmatpush.bf16.msra.mxu0 0
      %6400 = vmatpush.bf16.msra.mxu0 0
      %6401 = vmatpush.bf16.msra.mxu0 0
      %6402 = vmatpush.bf16.msra.mxu0 0
      %6403 = vmatpush.bf16.msra.mxu0 0
      %6404 = vmatpush.bf16.msra.mxu0 0
      %6405 = vmatpush.bf16.msra.mxu0 %v6390
      %6406 = vmatpush.bf16.msra.mxu0 %v6388
      %6407 = vmatmul.bf16.gmra.mxu0 %v6394
      %v6408 = vpop.f32.mrf.mxu0
      %v6409 = vadd.f32 0.0, %v6408
      %v6410 = vpop.f32.mrf.mxu0
      %v6411 = vadd.f32 0.0, %v6410
      %6412 = vmatmul.bf16.gmra.mxu0 %v6397
      %v6413 = vpop.f32.mrf.mxu0
      %v6414 = vadd.f32 0.0, %v6413
      %v6415 = vpop.f32.mrf.mxu0
      %v6416 = vadd.f32 0.0, %v6415
      %6417 = vdwg.mxu0
      %v6422 = vunpack.c.l.b16 %v5365
      %v6423 = vunpack.c.l.b16 %v5366
      %v6424 = vunpack.c.l.b16 %v5367
      %v6425 = vunpack.c.l.b16 %v5368
      %v6426 = vpack.c.b16 %v6423, %v6422
      %v6427 = vpack.c.b16 %v6425, %v6424
      %6428 = vrot.lane.b32.xlu0 %v3166, 64
      %v6429 = vpop.permute.xlu0 %6428
      %6430 = vrot.lane.b32.xlu0 %v3167, 64
      %v6431 = vpop.permute.xlu0 %6430
      %v6435 = vsel %vm509, %v6426, 0
      %v6438 = vsel %vm509, %v6427, 0
      %6440 = vmatpush.bf16.msra.mxu0 0
      %6441 = vmatpush.bf16.msra.mxu0 0
      %6442 = vmatpush.bf16.msra.mxu0 0
      %6443 = vmatpush.bf16.msra.mxu0 0
      %6444 = vmatpush.bf16.msra.mxu0 0
      %6445 = vmatpush.bf16.msra.mxu0 0
      %6446 = vmatpush.bf16.msra.mxu0 %v6431
      %6447 = vmatpush.bf16.msra.mxu0 %v6429
      %6448 = vmatmul.bf16.gmra.mxu0 %v6435
      %v6449 = vpop.f32.mrf.mxu0
      %v6450 = vadd.f32 0.0, %v6449
      %v6451 = vpop.f32.mrf.mxu0
      %v6452 = vadd.f32 0.0, %v6451
      %6453 = vmatmul.bf16.gmra.mxu0 %v6438
      %v6454 = vpop.f32.mrf.mxu0
      %v6455 = vadd.f32 0.0, %v6454
      %v6456 = vpop.f32.mrf.mxu0
      %v6457 = vadd.f32 0.0, %v6456
      %6458 = vdwg.mxu0
      %v6463 = vunpack.c.l.b16 %v5369
      %v6464 = vunpack.c.l.b16 %v5370
      %v6465 = vunpack.c.l.b16 %v5371
      %v6466 = vunpack.c.l.b16 %v5372
      %v6467 = vpack.c.b16 %v6464, %v6463
      %v6468 = vpack.c.b16 %v6466, %v6465
      %6469 = vrot.lane.b32.xlu0 %v3211, 64
      %v6470 = vpop.permute.xlu0 %6469
      %6471 = vrot.lane.b32.xlu0 %v3212, 64
      %v6472 = vpop.permute.xlu0 %6471
      %v6476 = vsel %vm509, %v6467, 0
      %v6479 = vsel %vm509, %v6468, 0
      %6481 = vmatpush.bf16.msra.mxu0 0
      %6482 = vmatpush.bf16.msra.mxu0 0
      %6483 = vmatpush.bf16.msra.mxu0 0
      %6484 = vmatpush.bf16.msra.mxu0 0
      %6485 = vmatpush.bf16.msra.mxu0 0
      %6486 = vmatpush.bf16.msra.mxu0 0
      %6487 = vmatpush.bf16.msra.mxu0 %v6472
      %6488 = vmatpush.bf16.msra.mxu0 %v6470
      %6489 = vmatmul.bf16.gmra.mxu0 %v6476
      %v6490 = vpop.f32.mrf.mxu0
      %v6491 = vadd.f32 0.0, %v6490
      %v6492 = vpop.f32.mrf.mxu0
      %v6493 = vadd.f32 0.0, %v6492
      %6494 = vmatmul.bf16.gmra.mxu0 %v6479
      %v6495 = vpop.f32.mrf.mxu0
      %v6496 = vadd.f32 0.0, %v6495
      %v6497 = vpop.f32.mrf.mxu0
      %v6498 = vadd.f32 0.0, %v6497
      %6499 = vdwg.mxu0
      %v6504 = vunpack.c.l.b16 %v5373
      %v6505 = vunpack.c.l.b16 %v5374
      %v6506 = vunpack.c.l.b16 %v5375
      %v6507 = vunpack.c.l.b16 %v5376
      %v6508 = vpack.c.b16 %v6505, %v6504
      %v6509 = vpack.c.b16 %v6507, %v6506
      %6510 = vrot.lane.b32.xlu0 %v3256, 64
      %v6511 = vpop.permute.xlu0 %6510
      %6512 = vrot.lane.b32.xlu0 %v3257, 64
      %v6513 = vpop.permute.xlu0 %6512
      %v6517 = vsel %vm509, %v6508, 0
      %v6520 = vsel %vm509, %v6509, 0
      %6522 = vmatpush.bf16.msra.mxu0 0
      %6523 = vmatpush.bf16.msra.mxu0 0
      %6524 = vmatpush.bf16.msra.mxu0 0
      %6525 = vmatpush.bf16.msra.mxu0 0
      %6526 = vmatpush.bf16.msra.mxu0 0
      %6527 = vmatpush.bf16.msra.mxu0 0
      %6528 = vmatpush.bf16.msra.mxu0 %v6513
      %6529 = vmatpush.bf16.msra.mxu0 %v6511
      %6530 = vmatmul.bf16.gmra.mxu0 %v6517
      %v6531 = vpop.f32.mrf.mxu0
      %v6532 = vadd.f32 0.0, %v6531
      %v6533 = vpop.f32.mrf.mxu0
      %v6534 = vadd.f32 0.0, %v6533
      %6535 = vmatmul.bf16.gmra.mxu0 %v6520
      %v6536 = vpop.f32.mrf.mxu0
      %v6537 = vadd.f32 0.0, %v6536
      %v6538 = vpop.f32.mrf.mxu0
      %v6539 = vadd.f32 0.0, %v6538
      %6540 = vdwg.mxu0
      %v6545 = vunpack.c.l.b16 %v5377
      %v6546 = vunpack.c.l.b16 %v5378
      %v6547 = vunpack.c.l.b16 %v5379
      %v6548 = vunpack.c.l.b16 %v5380
      %v6549 = vpack.c.b16 %v6546, %v6545
      %v6550 = vpack.c.b16 %v6548, %v6547
      %6551 = vrot.lane.b32.xlu0 %v3301, 64
      %v6552 = vpop.permute.xlu0 %6551
      %6553 = vrot.lane.b32.xlu0 %v3302, 64
      %v6554 = vpop.permute.xlu0 %6553
      %v6558 = vsel %vm509, %v6549, 0
      %v6561 = vsel %vm509, %v6550, 0
      %6563 = vmatpush.bf16.msra.mxu0 0
      %6564 = vmatpush.bf16.msra.mxu0 0
      %6565 = vmatpush.bf16.msra.mxu0 0
      %6566 = vmatpush.bf16.msra.mxu0 0
      %6567 = vmatpush.bf16.msra.mxu0 0
      %6568 = vmatpush.bf16.msra.mxu0 0
      %6569 = vmatpush.bf16.msra.mxu0 %v6554
      %6570 = vmatpush.bf16.msra.mxu0 %v6552
      %6571 = vmatmul.bf16.gmra.mxu0 %v6558
      %v6572 = vpop.f32.mrf.mxu0
      %v6573 = vadd.f32 0.0, %v6572
      %v6574 = vpop.f32.mrf.mxu0
      %v6575 = vadd.f32 0.0, %v6574
      %6576 = vmatmul.bf16.gmra.mxu0 %v6561
      %v6577 = vpop.f32.mrf.mxu0
      %v6578 = vadd.f32 0.0, %v6577
      %v6579 = vpop.f32.mrf.mxu0
      %v6580 = vadd.f32 0.0, %v6579
      %6581 = vdwg.mxu0
      %v6586 = vunpack.c.l.b16 %v5381
      %v6587 = vunpack.c.l.b16 %v5382
      %v6588 = vunpack.c.l.b16 %v5383
      %v6589 = vunpack.c.l.b16 %v5384
      %v6590 = vpack.c.b16 %v6587, %v6586
      %v6591 = vpack.c.b16 %v6589, %v6588
      %6592 = vrot.lane.b32.xlu0 %v3346, 64
      %v6593 = vpop.permute.xlu0 %6592
      %6594 = vrot.lane.b32.xlu0 %v3347, 64
      %v6595 = vpop.permute.xlu0 %6594
      %v6599 = vsel %vm509, %v6590, 0
      %v6602 = vsel %vm509, %v6591, 0
      %6604 = vmatpush.bf16.msra.mxu0 0
      %6605 = vmatpush.bf16.msra.mxu0 0
      %6606 = vmatpush.bf16.msra.mxu0 0
      %6607 = vmatpush.bf16.msra.mxu0 0
      %6608 = vmatpush.bf16.msra.mxu0 0
      %6609 = vmatpush.bf16.msra.mxu0 0
      %6610 = vmatpush.bf16.msra.mxu0 %v6595
      %6611 = vmatpush.bf16.msra.mxu0 %v6593
      %6612 = vmatmul.bf16.gmra.mxu0 %v6599
      %v6613 = vpop.f32.mrf.mxu0
      %v6614 = vadd.f32 0.0, %v6613
      %v6615 = vpop.f32.mrf.mxu0
      %v6616 = vadd.f32 0.0, %v6615
      %6617 = vmatmul.bf16.gmra.mxu0 %v6602
      %v6618 = vpop.f32.mrf.mxu0
      %v6619 = vadd.f32 0.0, %v6618
      %v6620 = vpop.f32.mrf.mxu0
      %v6621 = vadd.f32 0.0, %v6620
      %6622 = vdwg.mxu0
      %v6627 = vunpack.c.l.b16 %v5385
      %v6628 = vunpack.c.l.b16 %v5386
      %v6629 = vunpack.c.l.b16 %v5387
      %v6630 = vunpack.c.l.b16 %v5388
      %v6631 = vpack.c.b16 %v6628, %v6627
      %v6632 = vpack.c.b16 %v6630, %v6629
      %6633 = vrot.lane.b32.xlu0 %v3391, 64
      %v6634 = vpop.permute.xlu0 %6633
      %6635 = vrot.lane.b32.xlu0 %v3392, 64
      %v6636 = vpop.permute.xlu0 %6635
      %v6640 = vsel %vm509, %v6631, 0
      %v6643 = vsel %vm509, %v6632, 0
      %6645 = vmatpush.bf16.msra.mxu0 0
      %6646 = vmatpush.bf16.msra.mxu0 0
      %6647 = vmatpush.bf16.msra.mxu0 0
      %6648 = vmatpush.bf16.msra.mxu0 0
      %6649 = vmatpush.bf16.msra.mxu0 0
      %6650 = vmatpush.bf16.msra.mxu0 0
      %6651 = vmatpush.bf16.msra.mxu0 %v6636
      %6652 = vmatpush.bf16.msra.mxu0 %v6634
      %6653 = vmatmul.bf16.gmra.mxu0 %v6640
      %v6654 = vpop.f32.mrf.mxu0
      %v6655 = vadd.f32 0.0, %v6654
      %v6656 = vpop.f32.mrf.mxu0
      %v6657 = vadd.f32 0.0, %v6656
      %6658 = vmatmul.bf16.gmra.mxu0 %v6643
      %v6659 = vpop.f32.mrf.mxu0
      %v6660 = vadd.f32 0.0, %v6659
      %v6661 = vpop.f32.mrf.mxu0
      %v6662 = vadd.f32 0.0, %v6661
      %6663 = vdwg.mxu0
      %v6668 = vunpack.c.l.b16 %v5389
      %v6669 = vunpack.c.l.b16 %v5390
      %v6670 = vunpack.c.l.b16 %v5391
      %v6671 = vunpack.c.l.b16 %v5392
      %v6672 = vpack.c.b16 %v6669, %v6668
      %v6673 = vpack.c.b16 %v6671, %v6670
      %6674 = vrot.lane.b32.xlu0 %v3436, 64
      %v6675 = vpop.permute.xlu0 %6674
      %6676 = vrot.lane.b32.xlu0 %v3437, 64
      %v6677 = vpop.permute.xlu0 %6676
      %v6681 = vsel %vm509, %v6672, 0
      %v6684 = vsel %vm509, %v6673, 0
      %6686 = vmatpush.bf16.msra.mxu0 0
      %6687 = vmatpush.bf16.msra.mxu0 0
      %6688 = vmatpush.bf16.msra.mxu0 0
      %6689 = vmatpush.bf16.msra.mxu0 0
      %6690 = vmatpush.bf16.msra.mxu0 0
      %6691 = vmatpush.bf16.msra.mxu0 0
      %6692 = vmatpush.bf16.msra.mxu0 %v6677
      %6693 = vmatpush.bf16.msra.mxu0 %v6675
      %6694 = vmatmul.bf16.gmra.mxu0 %v6681
      %v6695 = vpop.f32.mrf.mxu0
      %v6696 = vadd.f32 0.0, %v6695
      %v6697 = vpop.f32.mrf.mxu0
      %v6698 = vadd.f32 0.0, %v6697
      %6699 = vmatmul.bf16.gmra.mxu0 %v6684
      %v6700 = vpop.f32.mrf.mxu0
      %v6701 = vadd.f32 0.0, %v6700
      %v6702 = vpop.f32.mrf.mxu0
      %v6703 = vadd.f32 0.0, %v6702
      %6704 = vdwg.mxu0
      %6737 = vrot.lane.b32.xlu0 %v5753, 8
      %v6738 = vpop.permute.xlu0 %6737
      %6739 = vrot.lane.b32.xlu0 %v5755, 8
      %v6740 = vpop.permute.xlu0 %6739
      %6741 = vrot.lane.b32.xlu0 %v5758, 8
      %v6742 = vpop.permute.xlu0 %6741
      %6743 = vrot.lane.b32.xlu0 %v5760, 8
      %v6744 = vpop.permute.xlu0 %6743
      %6745 = vrot.lane.b32.xlu0 %v5794, 8
      %v6746 = vpop.permute.xlu0 %6745
      %6747 = vrot.lane.b32.xlu0 %v5796, 8
      %v6748 = vpop.permute.xlu0 %6747
      %6749 = vrot.lane.b32.xlu0 %v5799, 8
      %v6750 = vpop.permute.xlu0 %6749
      %6751 = vrot.lane.b32.xlu0 %v5801, 8
      %v6752 = vpop.permute.xlu0 %6751
      %6753 = vrot.lane.b32.xlu0 %v5835, 8
      %v6754 = vpop.permute.xlu0 %6753
      %6755 = vrot.lane.b32.xlu0 %v5837, 8
      %v6756 = vpop.permute.xlu0 %6755
      %6757 = vrot.lane.b32.xlu0 %v5840, 8
      %v6758 = vpop.permute.xlu0 %6757
      %6759 = vrot.lane.b32.xlu0 %v5842, 8
      %v6760 = vpop.permute.xlu0 %6759
      %6761 = vrot.lane.b32.xlu0 %v5876, 8
      %v6762 = vpop.permute.xlu0 %6761
      %6763 = vrot.lane.b32.xlu0 %v5878, 8
      %v6764 = vpop.permute.xlu0 %6763
      %6765 = vrot.lane.b32.xlu0 %v5881, 8
      %v6766 = vpop.permute.xlu0 %6765
      %6767 = vrot.lane.b32.xlu0 %v5883, 8
      %v6768 = vpop.permute.xlu0 %6767
      %6769 = vrot.lane.b32.xlu0 %v5917, 8
      %v6770 = vpop.permute.xlu0 %6769
      %6771 = vrot.lane.b32.xlu0 %v5919, 8
      %v6772 = vpop.permute.xlu0 %6771
      %6773 = vrot.lane.b32.xlu0 %v5922, 8
      %v6774 = vpop.permute.xlu0 %6773
      %6775 = vrot.lane.b32.xlu0 %v5924, 8
      %v6776 = vpop.permute.xlu0 %6775
      %6777 = vrot.lane.b32.xlu0 %v5958, 8
      %v6778 = vpop.permute.xlu0 %6777
      %6779 = vrot.lane.b32.xlu0 %v5960, 8
      %v6780 = vpop.permute.xlu0 %6779
      %6781 = vrot.lane.b32.xlu0 %v5963, 8
      %v6782 = vpop.permute.xlu0 %6781
      %6783 = vrot.lane.b32.xlu0 %v5965, 8
      %v6784 = vpop.permute.xlu0 %6783
      %6785 = vrot.lane.b32.xlu0 %v5999, 8
      %v6786 = vpop.permute.xlu0 %6785
      %6787 = vrot.lane.b32.xlu0 %v6001, 8
      %v6788 = vpop.permute.xlu0 %6787
      %6789 = vrot.lane.b32.xlu0 %v6004, 8
      %v6790 = vpop.permute.xlu0 %6789
      %6791 = vrot.lane.b32.xlu0 %v6006, 8
      %v6792 = vpop.permute.xlu0 %6791
      %6793 = vrot.lane.b32.xlu0 %v6040, 8
      %v6794 = vpop.permute.xlu0 %6793
      %6795 = vrot.lane.b32.xlu0 %v6042, 8
      %v6796 = vpop.permute.xlu0 %6795
      %6797 = vrot.lane.b32.xlu0 %v6045, 8
      %v6798 = vpop.permute.xlu0 %6797
      %6799 = vrot.lane.b32.xlu0 %v6047, 8
      %v6800 = vpop.permute.xlu0 %6799
      %6865 = vrot.lane.b32.xlu0 %v6081, 16
      %v6866 = vpop.permute.xlu0 %6865
      %6867 = vrot.lane.b32.xlu0 %v6083, 16
      %v6868 = vpop.permute.xlu0 %6867
      %6869 = vrot.lane.b32.xlu0 %v6086, 16
      %v6870 = vpop.permute.xlu0 %6869
      %6871 = vrot.lane.b32.xlu0 %v6088, 16
      %v6872 = vpop.permute.xlu0 %6871
      %6873 = vrot.lane.b32.xlu0 %v6122, 16
      %v6874 = vpop.permute.xlu0 %6873
      %6875 = vrot.lane.b32.xlu0 %v6124, 16
      %v6876 = vpop.permute.xlu0 %6875
      %6877 = vrot.lane.b32.xlu0 %v6127, 16
      %v6878 = vpop.permute.xlu0 %6877
      %6879 = vrot.lane.b32.xlu0 %v6129, 16
      %v6880 = vpop.permute.xlu0 %6879
      %6881 = vrot.lane.b32.xlu0 %v6163, 16
      %v6882 = vpop.permute.xlu0 %6881
      %6883 = vrot.lane.b32.xlu0 %v6165, 16
      %v6884 = vpop.permute.xlu0 %6883
      %6885 = vrot.lane.b32.xlu0 %v6168, 16
      %v6886 = vpop.permute.xlu0 %6885
      %6887 = vrot.lane.b32.xlu0 %v6170, 16
      %v6888 = vpop.permute.xlu0 %6887
      %6889 = vrot.lane.b32.xlu0 %v6204, 16
      %v6890 = vpop.permute.xlu0 %6889
      %6891 = vrot.lane.b32.xlu0 %v6206, 16
      %v6892 = vpop.permute.xlu0 %6891
      %6893 = vrot.lane.b32.xlu0 %v6209, 16
      %v6894 = vpop.permute.xlu0 %6893
      %6895 = vrot.lane.b32.xlu0 %v6211, 16
      %v6896 = vpop.permute.xlu0 %6895
      %6897 = vrot.lane.b32.xlu0 %v6245, 16
      %v6898 = vpop.permute.xlu0 %6897
      %6899 = vrot.lane.b32.xlu0 %v6247, 16
      %v6900 = vpop.permute.xlu0 %6899
      %6901 = vrot.lane.b32.xlu0 %v6250, 16
      %v6902 = vpop.permute.xlu0 %6901
      %6903 = vrot.lane.b32.xlu0 %v6252, 16
      %v6904 = vpop.permute.xlu0 %6903
      %6905 = vrot.lane.b32.xlu0 %v6286, 16
      %v6906 = vpop.permute.xlu0 %6905
      %6907 = vrot.lane.b32.xlu0 %v6288, 16
      %v6908 = vpop.permute.xlu0 %6907
      %6909 = vrot.lane.b32.xlu0 %v6291, 16
      %v6910 = vpop.permute.xlu0 %6909
      %6911 = vrot.lane.b32.xlu0 %v6293, 16
      %v6912 = vpop.permute.xlu0 %6911
      %6913 = vrot.lane.b32.xlu0 %v6327, 16
      %v6914 = vpop.permute.xlu0 %6913
      %6915 = vrot.lane.b32.xlu0 %v6329, 16
      %v6916 = vpop.permute.xlu0 %6915
      %6917 = vrot.lane.b32.xlu0 %v6332, 16
      %v6918 = vpop.permute.xlu0 %6917
      %6919 = vrot.lane.b32.xlu0 %v6334, 16
      %v6920 = vpop.permute.xlu0 %6919
      %6921 = vrot.lane.b32.xlu0 %v6368, 16
      %v6922 = vpop.permute.xlu0 %6921
      %6923 = vrot.lane.b32.xlu0 %v6370, 16
      %v6924 = vpop.permute.xlu0 %6923
      %6925 = vrot.lane.b32.xlu0 %v6373, 16
      %v6926 = vpop.permute.xlu0 %6925
      %6927 = vrot.lane.b32.xlu0 %v6375, 16
      %v6928 = vpop.permute.xlu0 %6927
      %6993 = vrot.lane.b32.xlu0 %v6409, 24
      %v6994 = vpop.permute.xlu0 %6993
      %6995 = vrot.lane.b32.xlu0 %v6411, 24
      %v6996 = vpop.permute.xlu0 %6995
      %6997 = vrot.lane.b32.xlu0 %v6414, 24
      %v6998 = vpop.permute.xlu0 %6997
      %6999 = vrot.lane.b32.xlu0 %v6416, 24
      %v7000 = vpop.permute.xlu0 %6999
      %7001 = vrot.lane.b32.xlu0 %v6450, 24
      %v7002 = vpop.permute.xlu0 %7001
      %7003 = vrot.lane.b32.xlu0 %v6452, 24
      %v7004 = vpop.permute.xlu0 %7003
      %7005 = vrot.lane.b32.xlu0 %v6455, 24
      %v7006 = vpop.permute.xlu0 %7005
      %7007 = vrot.lane.b32.xlu0 %v6457, 24
      %v7008 = vpop.permute.xlu0 %7007
      %7009 = vrot.lane.b32.xlu0 %v6491, 24
      %v7010 = vpop.permute.xlu0 %7009
      %7011 = vrot.lane.b32.xlu0 %v6493, 24
      %v7012 = vpop.permute.xlu0 %7011
      %7013 = vrot.lane.b32.xlu0 %v6496, 24
      %v7014 = vpop.permute.xlu0 %7013
      %7015 = vrot.lane.b32.xlu0 %v6498, 24
      %v7016 = vpop.permute.xlu0 %7015
      %7017 = vrot.lane.b32.xlu0 %v6532, 24
      %v7018 = vpop.permute.xlu0 %7017
      %7019 = vrot.lane.b32.xlu0 %v6534, 24
      %v7020 = vpop.permute.xlu0 %7019
      %7021 = vrot.lane.b32.xlu0 %v6537, 24
      %v7022 = vpop.permute.xlu0 %7021
      %7023 = vrot.lane.b32.xlu0 %v6539, 24
      %v7024 = vpop.permute.xlu0 %7023
      %7025 = vrot.lane.b32.xlu0 %v6573, 24
      %v7026 = vpop.permute.xlu0 %7025
      %7027 = vrot.lane.b32.xlu0 %v6575, 24
      %v7028 = vpop.permute.xlu0 %7027
      %7029 = vrot.lane.b32.xlu0 %v6578, 24
      %v7030 = vpop.permute.xlu0 %7029
      %7031 = vrot.lane.b32.xlu0 %v6580, 24
      %v7032 = vpop.permute.xlu0 %7031
      %7033 = vrot.lane.b32.xlu0 %v6614, 24
      %v7034 = vpop.permute.xlu0 %7033
      %7035 = vrot.lane.b32.xlu0 %v6616, 24
      %v7036 = vpop.permute.xlu0 %7035
      %7037 = vrot.lane.b32.xlu0 %v6619, 24
      %v7038 = vpop.permute.xlu0 %7037
      %7039 = vrot.lane.b32.xlu0 %v6621, 24
      %v7040 = vpop.permute.xlu0 %7039
      %7041 = vrot.lane.b32.xlu0 %v6655, 24
      %v7042 = vpop.permute.xlu0 %7041
      %7043 = vrot.lane.b32.xlu0 %v6657, 24
      %v7044 = vpop.permute.xlu0 %7043
      %7045 = vrot.lane.b32.xlu0 %v6660, 24
      %v7046 = vpop.permute.xlu0 %7045
      %7047 = vrot.lane.b32.xlu0 %v6662, 24
      %v7048 = vpop.permute.xlu0 %7047
      %7049 = vrot.lane.b32.xlu0 %v6696, 24
      %v7050 = vpop.permute.xlu0 %7049
      %7051 = vrot.lane.b32.xlu0 %v6698, 24
      %v7052 = vpop.permute.xlu0 %7051
      %7053 = vrot.lane.b32.xlu0 %v6701, 24
      %v7054 = vpop.permute.xlu0 %7053
      %7055 = vrot.lane.b32.xlu0 %v6703, 24
      %v7056 = vpop.permute.xlu0 %7055
      %v7089 = vsel %vm2046, %v5425, %v6738
      %v7090 = vsel %vm2046, %v5427, %v6740
      %v7091 = vsel %vm2046, %v5430, %v6742
      %v7092 = vsel %vm2046, %v5432, %v6744
      %v7093 = vsel %vm2046, %v5466, %v6746
      %v7094 = vsel %vm2046, %v5468, %v6748
      %v7095 = vsel %vm2046, %v5471, %v6750
      %v7096 = vsel %vm2046, %v5473, %v6752
      %v7097 = vsel %vm2046, %v5507, %v6754
      %v7098 = vsel %vm2046, %v5509, %v6756
      %v7099 = vsel %vm2046, %v5512, %v6758
      %v7100 = vsel %vm2046, %v5514, %v6760
      %v7101 = vsel %vm2046, %v5548, %v6762
      %v7102 = vsel %vm2046, %v5550, %v6764
      %v7103 = vsel %vm2046, %v5553, %v6766
      %v7104 = vsel %vm2046, %v5555, %v6768
      %v7105 = vsel %vm2046, %v5589, %v6770
      %v7106 = vsel %vm2046, %v5591, %v6772
      %v7107 = vsel %vm2046, %v5594, %v6774
      %v7108 = vsel %vm2046, %v5596, %v6776
      %v7109 = vsel %vm2046, %v5630, %v6778
      %v7110 = vsel %vm2046, %v5632, %v6780
      %v7111 = vsel %vm2046, %v5635, %v6782
      %v7112 = vsel %vm2046, %v5637, %v6784
      %v7113 = vsel %vm2046, %v5671, %v6786
      %v7114 = vsel %vm2046, %v5673, %v6788
      %v7115 = vsel %vm2046, %v5676, %v6790
      %v7116 = vsel %vm2046, %v5678, %v6792
      %v7117 = vsel %vm2046, %v5712, %v6794
      %v7118 = vsel %vm2046, %v5714, %v6796
      %v7119 = vsel %vm2046, %v5717, %v6798
      %v7120 = vsel %vm2046, %v5719, %v6800
      %vm7121 = vcmask 130048
      %v7122 = vsel %vm7121, %v7089, %v6866
      %v7123 = vsel %vm7121, %v7090, %v6868
      %v7124 = vsel %vm7121, %v7091, %v6870
      %v7125 = vsel %vm7121, %v7092, %v6872
      %v7126 = vsel %vm7121, %v7093, %v6874
      %v7127 = vsel %vm7121, %v7094, %v6876
      %v7128 = vsel %vm7121, %v7095, %v6878
      %v7129 = vsel %vm7121, %v7096, %v6880
      %v7130 = vsel %vm7121, %v7097, %v6882
      %v7131 = vsel %vm7121, %v7098, %v6884
      %v7132 = vsel %vm7121, %v7099, %v6886
      %v7133 = vsel %vm7121, %v7100, %v6888
      %v7134 = vsel %vm7121, %v7101, %v6890
      %v7135 = vsel %vm7121, %v7102, %v6892
      %v7136 = vsel %vm7121, %v7103, %v6894
      %v7137 = vsel %vm7121, %v7104, %v6896
      %v7138 = vsel %vm7121, %v7105, %v6898
      %v7139 = vsel %vm7121, %v7106, %v6900
      %v7140 = vsel %vm7121, %v7107, %v6902
      %v7141 = vsel %vm7121, %v7108, %v6904
      %v7142 = vsel %vm7121, %v7109, %v6906
      %v7143 = vsel %vm7121, %v7110, %v6908
      %v7144 = vsel %vm7121, %v7111, %v6910
      %v7145 = vsel %vm7121, %v7112, %v6912
      %v7146 = vsel %vm7121, %v7113, %v6914
      %v7147 = vsel %vm7121, %v7114, %v6916
      %v7148 = vsel %vm7121, %v7115, %v6918
      %v7149 = vsel %vm7121, %v7116, %v6920
      %v7150 = vsel %vm7121, %v7117, %v6922
      %v7151 = vsel %vm7121, %v7118, %v6924
      %v7152 = vsel %vm7121, %v7119, %v6926
      %v7153 = vsel %vm7121, %v7120, %v6928
      %vm7154 = vcmask 195584
      %v7155 = vsel %vm7154, %v7122, %v6994
      %v7156 = vsel %vm7154, %v7123, %v6996
      %v7157 = vsel %vm7154, %v7124, %v6998
      %v7158 = vsel %vm7154, %v7125, %v7000
      %v7159 = vsel %vm7154, %v7126, %v7002
      %v7160 = vsel %vm7154, %v7127, %v7004
      %v7161 = vsel %vm7154, %v7128, %v7006
      %v7162 = vsel %vm7154, %v7129, %v7008
      %v7163 = vsel %vm7154, %v7130, %v7010
      %v7164 = vsel %vm7154, %v7131, %v7012
      %v7165 = vsel %vm7154, %v7132, %v7014
      %v7166 = vsel %vm7154, %v7133, %v7016
      %v7167 = vsel %vm7154, %v7134, %v7018
      %v7168 = vsel %vm7154, %v7135, %v7020
      %v7169 = vsel %vm7154, %v7136, %v7022
      %v7170 = vsel %vm7154, %v7137, %v7024
      %v7171 = vsel %vm7154, %v7138, %v7026
      %v7172 = vsel %vm7154, %v7139, %v7028
      %v7173 = vsel %vm7154, %v7140, %v7030
      %v7174 = vsel %vm7154, %v7141, %v7032
      %v7175 = vsel %vm7154, %v7142, %v7034
      %v7176 = vsel %vm7154, %v7143, %v7036
      %v7177 = vsel %vm7154, %v7144, %v7038
      %v7178 = vsel %vm7154, %v7145, %v7040
      %v7179 = vsel %vm7154, %v7146, %v7042
      %v7180 = vsel %vm7154, %v7147, %v7044
      %v7181 = vsel %vm7154, %v7148, %v7046
      %v7182 = vsel %vm7154, %v7149, %v7048
      %v7183 = vsel %vm7154, %v7150, %v7050
      %v7184 = vsel %vm7154, %v7151, %v7052
      %v7185 = vsel %vm7154, %v7152, %v7054
      %v7186 = vsel %vm7154, %v7153, %v7056
      %v7187 = vpack.c.bf16 %v7156, %v7155
      %v7188 = vpack.c.bf16 %v7158, %v7157
      %v7189 = vpack.c.bf16 %v7160, %v7159
      %v7190 = vpack.c.bf16 %v7162, %v7161
      %v7191 = vpack.c.bf16 %v7164, %v7163
      %v7192 = vpack.c.bf16 %v7166, %v7165
      %v7193 = vpack.c.bf16 %v7168, %v7167
      %v7194 = vpack.c.bf16 %v7170, %v7169
      %v7195 = vpack.c.bf16 %v7172, %v7171
      %v7196 = vpack.c.bf16 %v7174, %v7173
      %v7197 = vpack.c.bf16 %v7176, %v7175
      %v7198 = vpack.c.bf16 %v7178, %v7177
      %v7199 = vpack.c.bf16 %v7180, %v7179
      %v7200 = vpack.c.bf16 %v7182, %v7181
      %v7201 = vpack.c.bf16 %v7184, %v7183
      %v7202 = vpack.c.bf16 %v7186, %v7185
      %v7203 = vld [vmem:[%s6] sm:$0xff]
      %v7204 = vld [vmem:[%s6 + $0x8] sm:$0xff]
      %v7205 = vld [vmem:[%s6 + $0x10] sm:$0xff]
      %v7206 = vld [vmem:[%s6 + $0x18] sm:$0xff]
      %v7207 = vpack.c.bf16 %v7204, %v7203
      %v7208 = vpack.c.bf16 %v7206, %v7205
      %v7209 = vld [vmem:[%s7] sm:$0x1]
      %v7211 = vperm.slane %v7209, 0
      %v7214 = vsel %vm509, %v7187, 0
      %v7217 = vsel %vm509, %v7188, 0
      %v7220 = vsel %vm509, %v7189, 0
      %v7223 = vsel %vm509, %v7190, 0
      %v7226 = vsel %vm509, %v7191, 0
      %v7229 = vsel %vm509, %v7192, 0
      %v7232 = vsel %vm509, %v7193, 0
      %v7235 = vsel %vm509, %v7194, 0
      %v7238 = vsel %vm509, %v7195, 0
      %v7241 = vsel %vm509, %v7196, 0
      %v7244 = vsel %vm509, %v7197, 0
      %v7247 = vsel %vm509, %v7198, 0
      %v7250 = vsel %vm509, %v7199, 0
      %v7253 = vsel %vm509, %v7200, 0
      %v7256 = vsel %vm509, %v7201, 0
      %v7259 = vsel %vm509, %v7202, 0
      %7261 = vmatpush.bf16.msra.mxu0 0
      %7262 = vmatpush.bf16.msra.mxu0 0
      %7263 = vmatpush.bf16.msra.mxu0 0
      %7264 = vmatpush.bf16.msra.mxu0 0
      %7265 = vmatpush.bf16.msra.mxu0 0
      %7266 = vmatpush.bf16.msra.mxu0 0
      %7267 = vmatpush.bf16.msra.mxu0 %v7208
      %7268 = vmatpush.bf16.msra.mxu0 %v7207
      %7269 = vmatmul.bf16.gmra.mxu0 %v7214
      %v7270 = vpop.f32.mrf.mxu0
      %v7271 = vadd.f32 %v7211, %v7270
      %v7272 = vpop.f32.mrf.mxu0
      %v7273 = vadd.f32 %v7211, %v7272
      %7274 = vmatmul.bf16.gmra.mxu0 %v7217
      %v7275 = vpop.f32.mrf.mxu0
      %v7276 = vadd.f32 %v7211, %v7275
      %v7277 = vpop.f32.mrf.mxu0
      %v7278 = vadd.f32 %v7211, %v7277
      %7279 = vmatmul.bf16.gmra.mxu0 %v7220
      %v7280 = vpop.f32.mrf.mxu0
      %v7281 = vadd.f32 %v7211, %v7280
      %v7282 = vpop.f32.mrf.mxu0
      %v7283 = vadd.f32 %v7211, %v7282
      %7284 = vmatmul.bf16.gmra.mxu0 %v7223
      %v7285 = vpop.f32.mrf.mxu0
      %v7286 = vadd.f32 %v7211, %v7285
      %v7287 = vpop.f32.mrf.mxu0
      %v7288 = vadd.f32 %v7211, %v7287
      %7289 = vmatmul.bf16.gmra.mxu0 %v7226
      %v7290 = vpop.f32.mrf.mxu0
      %v7291 = vadd.f32 %v7211, %v7290
      %v7292 = vpop.f32.mrf.mxu0
      %v7293 = vadd.f32 %v7211, %v7292
      %7294 = vmatmul.bf16.gmra.mxu0 %v7229
      %v7295 = vpop.f32.mrf.mxu0
      %v7296 = vadd.f32 %v7211, %v7295
      %v7297 = vpop.f32.mrf.mxu0
      %v7298 = vadd.f32 %v7211, %v7297
      %7299 = vmatmul.bf16.gmra.mxu0 %v7232
      %v7300 = vpop.f32.mrf.mxu0
      %v7301 = vadd.f32 %v7211, %v7300
      %v7302 = vpop.f32.mrf.mxu0
      %v7303 = vadd.f32 %v7211, %v7302
      %7304 = vmatmul.bf16.gmra.mxu0 %v7235
      %v7305 = vpop.f32.mrf.mxu0
      %v7306 = vadd.f32 %v7211, %v7305
      %v7307 = vpop.f32.mrf.mxu0
      %v7308 = vadd.f32 %v7211, %v7307
      %7309 = vmatmul.bf16.gmra.mxu0 %v7238
      %v7310 = vpop.f32.mrf.mxu0
      %v7311 = vadd.f32 %v7211, %v7310
      %v7312 = vpop.f32.mrf.mxu0
      %v7313 = vadd.f32 %v7211, %v7312
      %7314 = vmatmul.bf16.gmra.mxu0 %v7241
      %v7315 = vpop.f32.mrf.mxu0
      %v7316 = vadd.f32 %v7211, %v7315
      %v7317 = vpop.f32.mrf.mxu0
      %v7318 = vadd.f32 %v7211, %v7317
      %7319 = vmatmul.bf16.gmra.mxu0 %v7244
      %v7320 = vpop.f32.mrf.mxu0
      %v7321 = vadd.f32 %v7211, %v7320
      %v7322 = vpop.f32.mrf.mxu0
      %v7323 = vadd.f32 %v7211, %v7322
      %7324 = vmatmul.bf16.gmra.mxu0 %v7247
      %v7325 = vpop.f32.mrf.mxu0
      %v7326 = vadd.f32 %v7211, %v7325
      %v7327 = vpop.f32.mrf.mxu0
      %v7328 = vadd.f32 %v7211, %v7327
      %7329 = vmatmul.bf16.gmra.mxu0 %v7250
      %v7330 = vpop.f32.mrf.mxu0
      %v7331 = vadd.f32 %v7211, %v7330
      %v7332 = vpop.f32.mrf.mxu0
      %v7333 = vadd.f32 %v7211, %v7332
      %7334 = vmatmul.bf16.gmra.mxu0 %v7253
      %v7335 = vpop.f32.mrf.mxu0
      %v7336 = vadd.f32 %v7211, %v7335
      %v7337 = vpop.f32.mrf.mxu0
      %v7338 = vadd.f32 %v7211, %v7337
      %7339 = vmatmul.bf16.gmra.mxu0 %v7256
      %v7340 = vpop.f32.mrf.mxu0
      %v7341 = vadd.f32 %v7211, %v7340
      %v7342 = vpop.f32.mrf.mxu0
      %v7343 = vadd.f32 %v7211, %v7342
      %7344 = vmatmul.bf16.gmra.mxu0 %v7259
      %v7345 = vpop.f32.mrf.mxu0
      %v7346 = vadd.f32 %v7211, %v7345
      %v7347 = vpop.f32.mrf.mxu0
      %v7348 = vadd.f32 %v7211, %v7347
      %7349 = vdwg.mxu0
      %v7350 = vadd.f32 %v477, %v7271
      %v7351 = vadd.f32 %v478, %v7273
      %v7352 = vadd.f32 %v479, %v7276
      %v7353 = vadd.f32 %v480, %v7278
      %v7354 = vadd.f32 %v481, %v7281
      %v7355 = vadd.f32 %v482, %v7283
      %v7356 = vadd.f32 %v483, %v7286
      %v7357 = vadd.f32 %v484, %v7288
      %v7358 = vadd.f32 %v485, %v7291
      %v7359 = vadd.f32 %v486, %v7293
      %v7360 = vadd.f32 %v487, %v7296
      %v7361 = vadd.f32 %v488, %v7298
      %v7362 = vadd.f32 %v489, %v7301
      %v7363 = vadd.f32 %v490, %v7303
      %v7364 = vadd.f32 %v491, %v7306
      %v7365 = vadd.f32 %v492, %v7308
      %v7366 = vadd.f32 %v493, %v7311
      %v7367 = vadd.f32 %v494, %v7313
      %v7368 = vadd.f32 %v495, %v7316
      %v7369 = vadd.f32 %v496, %v7318
      %v7370 = vadd.f32 %v497, %v7321
      %v7371 = vadd.f32 %v498, %v7323
      %v7372 = vadd.f32 %v499, %v7326
      %v7373 = vadd.f32 %v500, %v7328
      %v7374 = vadd.f32 %v501, %v7331
      %v7375 = vadd.f32 %v502, %v7333
      %v7376 = vadd.f32 %v503, %v7336
      %v7377 = vadd.f32 %v504, %v7338
      %v7378 = vadd.f32 %v505, %v7341
      %v7379 = vadd.f32 %v506, %v7343
      %v7380 = vadd.f32 %v507, %v7346
      %v7381 = vadd.f32 %v508, %v7348
      %v7382 = vsel %vm509, %v7350, 0.0
      %7383 = vadd.xlane.f32.xlu0 %v7382
      %v7384 = vpop.xlane.xlu0 %7383
      %v7385 = vsel %vm509, %v7351, 0.0
      %7386 = vadd.xlane.f32.xlu0 %v7385
      %v7387 = vpop.xlane.xlu0 %7386
      %v7388 = vsel %vm509, %v7352, 0.0
      %7389 = vadd.xlane.f32.xlu0 %v7388
      %v7390 = vpop.xlane.xlu0 %7389
      %v7391 = vsel %vm509, %v7353, 0.0
      %7392 = vadd.xlane.f32.xlu0 %v7391
      %v7393 = vpop.xlane.xlu0 %7392
      %v7394 = vsel %vm509, %v7354, 0.0
      %7395 = vadd.xlane.f32.xlu0 %v7394
      %v7396 = vpop.xlane.xlu0 %7395
      %v7397 = vsel %vm509, %v7355, 0.0
      %7398 = vadd.xlane.f32.xlu0 %v7397
      %v7399 = vpop.xlane.xlu0 %7398
      %v7400 = vsel %vm509, %v7356, 0.0
      %7401 = vadd.xlane.f32.xlu0 %v7400
      %v7402 = vpop.xlane.xlu0 %7401
      %v7403 = vsel %vm509, %v7357, 0.0
      %7404 = vadd.xlane.f32.xlu0 %v7403
      %v7405 = vpop.xlane.xlu0 %7404
      %v7406 = vsel %vm509, %v7358, 0.0
      %7407 = vadd.xlane.f32.xlu0 %v7406
      %v7408 = vpop.xlane.xlu0 %7407
      %v7409 = vsel %vm509, %v7359, 0.0
      %7410 = vadd.xlane.f32.xlu0 %v7409
      %v7411 = vpop.xlane.xlu0 %7410
      %v7412 = vsel %vm509, %v7360, 0.0
      %7413 = vadd.xlane.f32.xlu0 %v7412
      %v7414 = vpop.xlane.xlu0 %7413
      %v7415 = vsel %vm509, %v7361, 0.0
      %7416 = vadd.xlane.f32.xlu0 %v7415
      %v7417 = vpop.xlane.xlu0 %7416
      %v7418 = vsel %vm509, %v7362, 0.0
      %7419 = vadd.xlane.f32.xlu0 %v7418
      %v7420 = vpop.xlane.xlu0 %7419
      %v7421 = vsel %vm509, %v7363, 0.0
      %7422 = vadd.xlane.f32.xlu0 %v7421
      %v7423 = vpop.xlane.xlu0 %7422
      %v7424 = vsel %vm509, %v7364, 0.0
      %7425 = vadd.xlane.f32.xlu0 %v7424
      %v7426 = vpop.xlane.xlu0 %7425
      %v7427 = vsel %vm509, %v7365, 0.0
      %7428 = vadd.xlane.f32.xlu0 %v7427
      %v7429 = vpop.xlane.xlu0 %7428
      %v7430 = vsel %vm509, %v7366, 0.0
      %7431 = vadd.xlane.f32.xlu0 %v7430
      %v7432 = vpop.xlane.xlu0 %7431
      %v7433 = vsel %vm509, %v7367, 0.0
      %7434 = vadd.xlane.f32.xlu0 %v7433
      %v7435 = vpop.xlane.xlu0 %7434
      %v7436 = vsel %vm509, %v7368, 0.0
      %7437 = vadd.xlane.f32.xlu0 %v7436
      %v7438 = vpop.xlane.xlu0 %7437
      %v7439 = vsel %vm509, %v7369, 0.0
      %7440 = vadd.xlane.f32.xlu0 %v7439
      %v7441 = vpop.xlane.xlu0 %7440
      %v7442 = vsel %vm509, %v7370, 0.0
      %7443 = vadd.xlane.f32.xlu0 %v7442
      %v7444 = vpop.xlane.xlu0 %7443
      %v7445 = vsel %vm509, %v7371, 0.0
      %7446 = vadd.xlane.f32.xlu0 %v7445
      %v7447 = vpop.xlane.xlu0 %7446
      %v7448 = vsel %vm509, %v7372, 0.0
      %7449 = vadd.xlane.f32.xlu0 %v7448
      %v7450 = vpop.xlane.xlu0 %7449
      %v7451 = vsel %vm509, %v7373, 0.0
      %7452 = vadd.xlane.f32.xlu0 %v7451
      %v7453 = vpop.xlane.xlu0 %7452
      %v7454 = vsel %vm509, %v7374, 0.0
      %7455 = vadd.xlane.f32.xlu0 %v7454
      %v7456 = vpop.xlane.xlu0 %7455
      %v7457 = vsel %vm509, %v7375, 0.0
      %7458 = vadd.xlane.f32.xlu0 %v7457
      %v7459 = vpop.xlane.xlu0 %7458
      %v7460 = vsel %vm509, %v7376, 0.0
      %7461 = vadd.xlane.f32.xlu0 %v7460
      %v7462 = vpop.xlane.xlu0 %7461
      %v7463 = vsel %vm509, %v7377, 0.0
      %7464 = vadd.xlane.f32.xlu0 %v7463
      %v7465 = vpop.xlane.xlu0 %7464
      %v7466 = vsel %vm509, %v7378, 0.0
      %7467 = vadd.xlane.f32.xlu0 %v7466
      %v7468 = vpop.xlane.xlu0 %7467
      %v7469 = vsel %vm509, %v7379, 0.0
      %7470 = vadd.xlane.f32.xlu0 %v7469
      %v7471 = vpop.xlane.xlu0 %7470
      %v7472 = vsel %vm509, %v7380, 0.0
      %7473 = vadd.xlane.f32.xlu0 %v7472
      %v7474 = vpop.xlane.xlu0 %7473
      %v7475 = vsel %vm509, %v7381, 0.0
      %7476 = vadd.xlane.f32.xlu0 %v7475
      %v7477 = vpop.xlane.xlu0 %7476
      %v7478 = vmul.f32 %v7384, %v612
      %v7479 = vmul.f32 %v7387, %v612
      %v7480 = vmul.f32 %v7390, %v612
      %v7481 = vmul.f32 %v7393, %v612
      %v7482 = vmul.f32 %v7396, %v612
      %v7483 = vmul.f32 %v7399, %v612
      %v7484 = vmul.f32 %v7402, %v612
      %v7485 = vmul.f32 %v7405, %v612
      %v7486 = vmul.f32 %v7408, %v612
      %v7487 = vmul.f32 %v7411, %v612
      %v7488 = vmul.f32 %v7414, %v612
      %v7489 = vmul.f32 %v7417, %v612
      %v7490 = vmul.f32 %v7420, %v612
      %v7491 = vmul.f32 %v7423, %v612
      %v7492 = vmul.f32 %v7426, %v612
      %v7493 = vmul.f32 %v7429, %v612
      %v7494 = vmul.f32 %v7432, %v612
      %v7495 = vmul.f32 %v7435, %v612
      %v7496 = vmul.f32 %v7438, %v612
      %v7497 = vmul.f32 %v7441, %v612
      %v7498 = vmul.f32 %v7444, %v612
      %v7499 = vmul.f32 %v7447, %v612
      %v7500 = vmul.f32 %v7450, %v612
      %v7501 = vmul.f32 %v7453, %v612
      %v7502 = vmul.f32 %v7456, %v612
      %v7503 = vmul.f32 %v7459, %v612
      %v7504 = vmul.f32 %v7462, %v612
      %v7505 = vmul.f32 %v7465, %v612
      %v7506 = vmul.f32 %v7468, %v612
      %v7507 = vmul.f32 %v7471, %v612
      %v7508 = vmul.f32 %v7474, %v612
      %v7509 = vmul.f32 %v7477, %v612
      %v7510 = vsub.f32 %v7350, %v7478
      %v7511 = vsub.f32 %v7351, %v7479
      %v7512 = vsub.f32 %v7352, %v7480
      %v7513 = vsub.f32 %v7353, %v7481
      %v7514 = vsub.f32 %v7354, %v7482
      %v7515 = vsub.f32 %v7355, %v7483
      %v7516 = vsub.f32 %v7356, %v7484
      %v7517 = vsub.f32 %v7357, %v7485
      %v7518 = vsub.f32 %v7358, %v7486
      %v7519 = vsub.f32 %v7359, %v7487
      %v7520 = vsub.f32 %v7360, %v7488
      %v7521 = vsub.f32 %v7361, %v7489
      %v7522 = vsub.f32 %v7362, %v7490
      %v7523 = vsub.f32 %v7363, %v7491
      %v7524 = vsub.f32 %v7364, %v7492
      %v7525 = vsub.f32 %v7365, %v7493
      %v7526 = vsub.f32 %v7366, %v7494
      %v7527 = vsub.f32 %v7367, %v7495
      %v7528 = vsub.f32 %v7368, %v7496
      %v7529 = vsub.f32 %v7369, %v7497
      %v7530 = vsub.f32 %v7370, %v7498
      %v7531 = vsub.f32 %v7371, %v7499
      %v7532 = vsub.f32 %v7372, %v7500
      %v7533 = vsub.f32 %v7373, %v7501
      %v7534 = vsub.f32 %v7374, %v7502
      %v7535 = vsub.f32 %v7375, %v7503
      %v7536 = vsub.f32 %v7376, %v7504
      %v7537 = vsub.f32 %v7377, %v7505
      %v7538 = vsub.f32 %v7378, %v7506
      %v7539 = vsub.f32 %v7379, %v7507
      %v7540 = vsub.f32 %v7380, %v7508
      %v7541 = vsub.f32 %v7381, %v7509
      %v7542 = vmul.f32 %v7510, %v7510
      %v7543 = vmul.f32 %v7511, %v7511
      %v7544 = vmul.f32 %v7512, %v7512
      %v7545 = vmul.f32 %v7513, %v7513
      %v7546 = vmul.f32 %v7514, %v7514
      %v7547 = vmul.f32 %v7515, %v7515
      %v7548 = vmul.f32 %v7516, %v7516
      %v7549 = vmul.f32 %v7517, %v7517
      %v7550 = vmul.f32 %v7518, %v7518
      %v7551 = vmul.f32 %v7519, %v7519
      %v7552 = vmul.f32 %v7520, %v7520
      %v7553 = vmul.f32 %v7521, %v7521
      %v7554 = vmul.f32 %v7522, %v7522
      %v7555 = vmul.f32 %v7523, %v7523
      %v7556 = vmul.f32 %v7524, %v7524
      %v7557 = vmul.f32 %v7525, %v7525
      %v7558 = vmul.f32 %v7526, %v7526
      %v7559 = vmul.f32 %v7527, %v7527
      %v7560 = vmul.f32 %v7528, %v7528
      %v7561 = vmul.f32 %v7529, %v7529
      %v7562 = vmul.f32 %v7530, %v7530
      %v7563 = vmul.f32 %v7531, %v7531
      %v7564 = vmul.f32 %v7532, %v7532
      %v7565 = vmul.f32 %v7533, %v7533
      %v7566 = vmul.f32 %v7534, %v7534
      %v7567 = vmul.f32 %v7535, %v7535
      %v7568 = vmul.f32 %v7536, %v7536
      %v7569 = vmul.f32 %v7537, %v7537
      %v7570 = vmul.f32 %v7538, %v7538
      %v7571 = vmul.f32 %v7539, %v7539
      %v7572 = vmul.f32 %v7540, %v7540
      %v7573 = vmul.f32 %v7541, %v7541
      %v7574 = vsel %vm509, %v7542, 0.0
      %7575 = vadd.xlane.f32.xlu0 %v7574
      %v7576 = vpop.xlane.xlu0 %7575
      %v7577 = vsel %vm509, %v7543, 0.0
      %7578 = vadd.xlane.f32.xlu0 %v7577
      %v7579 = vpop.xlane.xlu0 %7578
      %v7580 = vsel %vm509, %v7544, 0.0
      %7581 = vadd.xlane.f32.xlu0 %v7580
      %v7582 = vpop.xlane.xlu0 %7581
      %v7583 = vsel %vm509, %v7545, 0.0
      %7584 = vadd.xlane.f32.xlu0 %v7583
      %v7585 = vpop.xlane.xlu0 %7584
      %v7586 = vsel %vm509, %v7546, 0.0
      %7587 = vadd.xlane.f32.xlu0 %v7586
      %v7588 = vpop.xlane.xlu0 %7587
      %v7589 = vsel %vm509, %v7547, 0.0
      %7590 = vadd.xlane.f32.xlu0 %v7589
      %v7591 = vpop.xlane.xlu0 %7590
      %v7592 = vsel %vm509, %v7548, 0.0
      %7593 = vadd.xlane.f32.xlu0 %v7592
      %v7594 = vpop.xlane.xlu0 %7593
      %v7595 = vsel %vm509, %v7549, 0.0
      %7596 = vadd.xlane.f32.xlu0 %v7595
      %v7597 = vpop.xlane.xlu0 %7596
      %v7598 = vsel %vm509, %v7550, 0.0
      %7599 = vadd.xlane.f32.xlu0 %v7598
      %v7600 = vpop.xlane.xlu0 %7599
      %v7601 = vsel %vm509, %v7551, 0.0
      %7602 = vadd.xlane.f32.xlu0 %v7601
      %v7603 = vpop.xlane.xlu0 %7602
      %v7604 = vsel %vm509, %v7552, 0.0
      %7605 = vadd.xlane.f32.xlu0 %v7604
      %v7606 = vpop.xlane.xlu0 %7605
      %v7607 = vsel %vm509, %v7553, 0.0
      %7608 = vadd.xlane.f32.xlu0 %v7607
      %v7609 = vpop.xlane.xlu0 %7608
      %v7610 = vsel %vm509, %v7554, 0.0
      %7611 = vadd.xlane.f32.xlu0 %v7610
      %v7612 = vpop.xlane.xlu0 %7611
      %v7613 = vsel %vm509, %v7555, 0.0
      %7614 = vadd.xlane.f32.xlu0 %v7613
      %v7615 = vpop.xlane.xlu0 %7614
      %v7616 = vsel %vm509, %v7556, 0.0
      %7617 = vadd.xlane.f32.xlu0 %v7616
      %v7618 = vpop.xlane.xlu0 %7617
      %v7619 = vsel %vm509, %v7557, 0.0
      %7620 = vadd.xlane.f32.xlu0 %v7619
      %v7621 = vpop.xlane.xlu0 %7620
      %v7622 = vsel %vm509, %v7558, 0.0
      %7623 = vadd.xlane.f32.xlu0 %v7622
      %v7624 = vpop.xlane.xlu0 %7623
      %v7625 = vsel %vm509, %v7559, 0.0
      %7626 = vadd.xlane.f32.xlu0 %v7625
      %v7627 = vpop.xlane.xlu0 %7626
      %v7628 = vsel %vm509, %v7560, 0.0
      %7629 = vadd.xlane.f32.xlu0 %v7628
      %v7630 = vpop.xlane.xlu0 %7629
      %v7631 = vsel %vm509, %v7561, 0.0
      %7632 = vadd.xlane.f32.xlu0 %v7631
      %v7633 = vpop.xlane.xlu0 %7632
      %v7634 = vsel %vm509, %v7562, 0.0
      %7635 = vadd.xlane.f32.xlu0 %v7634
      %v7636 = vpop.xlane.xlu0 %7635
      %v7637 = vsel %vm509, %v7563, 0.0
      %7638 = vadd.xlane.f32.xlu0 %v7637
      %v7639 = vpop.xlane.xlu0 %7638
      %v7640 = vsel %vm509, %v7564, 0.0
      %7641 = vadd.xlane.f32.xlu0 %v7640
      %v7642 = vpop.xlane.xlu0 %7641
      %v7643 = vsel %vm509, %v7565, 0.0
      %7644 = vadd.xlane.f32.xlu0 %v7643
      %v7645 = vpop.xlane.xlu0 %7644
      %v7646 = vsel %vm509, %v7566, 0.0
      %7647 = vadd.xlane.f32.xlu0 %v7646
      %v7648 = vpop.xlane.xlu0 %7647
      %v7649 = vsel %vm509, %v7567, 0.0
      %7650 = vadd.xlane.f32.xlu0 %v7649
      %v7651 = vpop.xlane.xlu0 %7650
      %v7652 = vsel %vm509, %v7568, 0.0
      %7653 = vadd.xlane.f32.xlu0 %v7652
      %v7654 = vpop.xlane.xlu0 %7653
      %v7655 = vsel %vm509, %v7569, 0.0
      %7656 = vadd.xlane.f32.xlu0 %v7655
      %v7657 = vpop.xlane.xlu0 %7656
      %v7658 = vsel %vm509, %v7570, 0.0
      %7659 = vadd.xlane.f32.xlu0 %v7658
      %v7660 = vpop.xlane.xlu0 %7659
      %v7661 = vsel %vm509, %v7571, 0.0
      %7662 = vadd.xlane.f32.xlu0 %v7661
      %v7663 = vpop.xlane.xlu0 %7662
      %v7664 = vsel %vm509, %v7572, 0.0
      %7665 = vadd.xlane.f32.xlu0 %v7664
      %v7666 = vpop.xlane.xlu0 %7665
      %v7667 = vsel %vm509, %v7573, 0.0
      %7668 = vadd.xlane.f32.xlu0 %v7667
      %v7669 = vpop.xlane.xlu0 %7668
      %v7670 = vmul.f32 %v7576, %v612
      %v7671 = vmul.f32 %v7579, %v612
      %v7672 = vmul.f32 %v7582, %v612
      %v7673 = vmul.f32 %v7585, %v612
      %v7674 = vmul.f32 %v7588, %v612
      %v7675 = vmul.f32 %v7591, %v612
      %v7676 = vmul.f32 %v7594, %v612
      %v7677 = vmul.f32 %v7597, %v612
      %v7678 = vmul.f32 %v7600, %v612
      %v7679 = vmul.f32 %v7603, %v612
      %v7680 = vmul.f32 %v7606, %v612
      %v7681 = vmul.f32 %v7609, %v612
      %v7682 = vmul.f32 %v7612, %v612
      %v7683 = vmul.f32 %v7615, %v612
      %v7684 = vmul.f32 %v7618, %v612
      %v7685 = vmul.f32 %v7621, %v612
      %v7686 = vmul.f32 %v7624, %v612
      %v7687 = vmul.f32 %v7627, %v612
      %v7688 = vmul.f32 %v7630, %v612
      %v7689 = vmul.f32 %v7633, %v612
      %v7690 = vmul.f32 %v7636, %v612
      %v7691 = vmul.f32 %v7639, %v612
      %v7692 = vmul.f32 %v7642, %v612
      %v7693 = vmul.f32 %v7645, %v612
      %v7694 = vmul.f32 %v7648, %v612
      %v7695 = vmul.f32 %v7651, %v612
      %v7696 = vmul.f32 %v7654, %v612
      %v7697 = vmul.f32 %v7657, %v612
      %v7698 = vmul.f32 %v7660, %v612
      %v7699 = vmul.f32 %v7663, %v612
      %v7700 = vmul.f32 %v7666, %v612
      %v7701 = vmul.f32 %v7669, %v612
      %v7702 = vadd.f32 %v7670, 1e-05
      %v7703 = vadd.f32 %v7671, 1e-05
      %v7704 = vadd.f32 %v7672, 1e-05
      %v7705 = vadd.f32 %v7673, 1e-05
      %v7706 = vadd.f32 %v7674, 1e-05
      %v7707 = vadd.f32 %v7675, 1e-05
      %v7708 = vadd.f32 %v7676, 1e-05
      %v7709 = vadd.f32 %v7677, 1e-05
      %v7710 = vadd.f32 %v7678, 1e-05
      %v7711 = vadd.f32 %v7679, 1e-05
      %v7712 = vadd.f32 %v7680, 1e-05
      %v7713 = vadd.f32 %v7681, 1e-05
      %v7714 = vadd.f32 %v7682, 1e-05
      %v7715 = vadd.f32 %v7683, 1e-05
      %v7716 = vadd.f32 %v7684, 1e-05
      %v7717 = vadd.f32 %v7685, 1e-05
      %v7718 = vadd.f32 %v7686, 1e-05
      %v7719 = vadd.f32 %v7687, 1e-05
      %v7720 = vadd.f32 %v7688, 1e-05
      %v7721 = vadd.f32 %v7689, 1e-05
      %v7722 = vadd.f32 %v7690, 1e-05
      %v7723 = vadd.f32 %v7691, 1e-05
      %v7724 = vadd.f32 %v7692, 1e-05
      %v7725 = vadd.f32 %v7693, 1e-05
      %v7726 = vadd.f32 %v7694, 1e-05
      %v7727 = vadd.f32 %v7695, 1e-05
      %v7728 = vadd.f32 %v7696, 1e-05
      %v7729 = vadd.f32 %v7697, 1e-05
      %v7730 = vadd.f32 %v7698, 1e-05
      %v7731 = vadd.f32 %v7699, 1e-05
      %v7732 = vadd.f32 %v7700, 1e-05
      %v7733 = vadd.f32 %v7701, 1e-05
      %v7734 = vrsqrt.pop %v7702
      %v7735 = vmul.f32 %v7734, %v7702
      %v7736 = vmul.f32 %v7735, %v7734
      %v7737 = vmul.f32 0.5, %v7736
      %v7738 = vsub.f32 1.5, %v7737
      %v7739 = vmul.f32 %v7734, %v7738
      %vm7740 = vweird.f32 %v7702
      %vm7741 = vweird.f32 %v7734
      %vm7742 = vmor %vm7740, %vm7741
      %v7743 = vsel %vm7742, %v7734, %v7739
      %v7744 = vrsqrt.pop %v7703
      %v7745 = vmul.f32 %v7744, %v7703
      %v7746 = vmul.f32 %v7745, %v7744
      %v7747 = vmul.f32 0.5, %v7746
      %v7748 = vsub.f32 1.5, %v7747
      %v7749 = vmul.f32 %v7744, %v7748
      %vm7750 = vweird.f32 %v7703
      %vm7751 = vweird.f32 %v7744
      %vm7752 = vmor %vm7750, %vm7751
      %v7753 = vsel %vm7752, %v7744, %v7749
      %v7754 = vrsqrt.pop %v7704
      %v7755 = vmul.f32 %v7754, %v7704
      %v7756 = vmul.f32 %v7755, %v7754
      %v7757 = vmul.f32 0.5, %v7756
      %v7758 = vsub.f32 1.5, %v7757
      %v7759 = vmul.f32 %v7754, %v7758
      %vm7760 = vweird.f32 %v7704
      %vm7761 = vweird.f32 %v7754
      %vm7762 = vmor %vm7760, %vm7761
      %v7763 = vsel %vm7762, %v7754, %v7759
      %v7764 = vrsqrt.pop %v7705
      %v7765 = vmul.f32 %v7764, %v7705
      %v7766 = vmul.f32 %v7765, %v7764
      %v7767 = vmul.f32 0.5, %v7766
      %v7768 = vsub.f32 1.5, %v7767
      %v7769 = vmul.f32 %v7764, %v7768
      %vm7770 = vweird.f32 %v7705
      %vm7771 = vweird.f32 %v7764
      %vm7772 = vmor %vm7770, %vm7771
      %v7773 = vsel %vm7772, %v7764, %v7769
      %v7774 = vrsqrt.pop %v7706
      %v7775 = vmul.f32 %v7774, %v7706
      %v7776 = vmul.f32 %v7775, %v7774
      %v7777 = vmul.f32 0.5, %v7776
      %v7778 = vsub.f32 1.5, %v7777
      %v7779 = vmul.f32 %v7774, %v7778
      %vm7780 = vweird.f32 %v7706
      %vm7781 = vweird.f32 %v7774
      %vm7782 = vmor %vm7780, %vm7781
      %v7783 = vsel %vm7782, %v7774, %v7779
      %v7784 = vrsqrt.pop %v7707
      %v7785 = vmul.f32 %v7784, %v7707
      %v7786 = vmul.f32 %v7785, %v7784
      %v7787 = vmul.f32 0.5, %v7786
      %v7788 = vsub.f32 1.5, %v7787
      %v7789 = vmul.f32 %v7784, %v7788
      %vm7790 = vweird.f32 %v7707
      %vm7791 = vweird.f32 %v7784
      %vm7792 = vmor %vm7790, %vm7791
      %v7793 = vsel %vm7792, %v7784, %v7789
      %v7794 = vrsqrt.pop %v7708
      %v7795 = vmul.f32 %v7794, %v7708
      %v7796 = vmul.f32 %v7795, %v7794
      %v7797 = vmul.f32 0.5, %v7796
      %v7798 = vsub.f32 1.5, %v7797
      %v7799 = vmul.f32 %v7794, %v7798
      %vm7800 = vweird.f32 %v7708
      %vm7801 = vweird.f32 %v7794
      %vm7802 = vmor %vm7800, %vm7801
      %v7803 = vsel %vm7802, %v7794, %v7799
      %v7804 = vrsqrt.pop %v7709
      %v7805 = vmul.f32 %v7804, %v7709
      %v7806 = vmul.f32 %v7805, %v7804
      %v7807 = vmul.f32 0.5, %v7806
      %v7808 = vsub.f32 1.5, %v7807
      %v7809 = vmul.f32 %v7804, %v7808
      %vm7810 = vweird.f32 %v7709
      %vm7811 = vweird.f32 %v7804
      %vm7812 = vmor %vm7810, %vm7811
      %v7813 = vsel %vm7812, %v7804, %v7809
      %v7814 = vrsqrt.pop %v7710
      %v7815 = vmul.f32 %v7814, %v7710
      %v7816 = vmul.f32 %v7815, %v7814
      %v7817 = vmul.f32 0.5, %v7816
      %v7818 = vsub.f32 1.5, %v7817
      %v7819 = vmul.f32 %v7814, %v7818
      %vm7820 = vweird.f32 %v7710
      %vm7821 = vweird.f32 %v7814
      %vm7822 = vmor %vm7820, %vm7821
      %v7823 = vsel %vm7822, %v7814, %v7819
      %v7824 = vrsqrt.pop %v7711
      %v7825 = vmul.f32 %v7824, %v7711
      %v7826 = vmul.f32 %v7825, %v7824
      %v7827 = vmul.f32 0.5, %v7826
      %v7828 = vsub.f32 1.5, %v7827
      %v7829 = vmul.f32 %v7824, %v7828
      %vm7830 = vweird.f32 %v7711
      %vm7831 = vweird.f32 %v7824
      %vm7832 = vmor %vm7830, %vm7831
      %v7833 = vsel %vm7832, %v7824, %v7829
      %v7834 = vrsqrt.pop %v7712
      %v7835 = vmul.f32 %v7834, %v7712
      %v7836 = vmul.f32 %v7835, %v7834
      %v7837 = vmul.f32 0.5, %v7836
      %v7838 = vsub.f32 1.5, %v7837
      %v7839 = vmul.f32 %v7834, %v7838
      %vm7840 = vweird.f32 %v7712
      %vm7841 = vweird.f32 %v7834
      %vm7842 = vmor %vm7840, %vm7841
      %v7843 = vsel %vm7842, %v7834, %v7839
      %v7844 = vrsqrt.pop %v7713
      %v7845 = vmul.f32 %v7844, %v7713
      %v7846 = vmul.f32 %v7845, %v7844
      %v7847 = vmul.f32 0.5, %v7846
      %v7848 = vsub.f32 1.5, %v7847
      %v7849 = vmul.f32 %v7844, %v7848
      %vm7850 = vweird.f32 %v7713
      %vm7851 = vweird.f32 %v7844
      %vm7852 = vmor %vm7850, %vm7851
      %v7853 = vsel %vm7852, %v7844, %v7849
      %v7854 = vrsqrt.pop %v7714
      %v7855 = vmul.f32 %v7854, %v7714
      %v7856 = vmul.f32 %v7855, %v7854
      %v7857 = vmul.f32 0.5, %v7856
      %v7858 = vsub.f32 1.5, %v7857
      %v7859 = vmul.f32 %v7854, %v7858
      %vm7860 = vweird.f32 %v7714
      %vm7861 = vweird.f32 %v7854
      %vm7862 = vmor %vm7860, %vm7861
      %v7863 = vsel %vm7862, %v7854, %v7859
      %v7864 = vrsqrt.pop %v7715
      %v7865 = vmul.f32 %v7864, %v7715
      %v7866 = vmul.f32 %v7865, %v7864
      %v7867 = vmul.f32 0.5, %v7866
      %v7868 = vsub.f32 1.5, %v7867
      %v7869 = vmul.f32 %v7864, %v7868
      %vm7870 = vweird.f32 %v7715
      %vm7871 = vweird.f32 %v7864
      %vm7872 = vmor %vm7870, %vm7871
      %v7873 = vsel %vm7872, %v7864, %v7869
      %v7874 = vrsqrt.pop %v7716
      %v7875 = vmul.f32 %v7874, %v7716
      %v7876 = vmul.f32 %v7875, %v7874
      %v7877 = vmul.f32 0.5, %v7876
      %v7878 = vsub.f32 1.5, %v7877
      %v7879 = vmul.f32 %v7874, %v7878
      %vm7880 = vweird.f32 %v7716
      %vm7881 = vweird.f32 %v7874
      %vm7882 = vmor %vm7880, %vm7881
      %v7883 = vsel %vm7882, %v7874, %v7879
      %v7884 = vrsqrt.pop %v7717
      %v7885 = vmul.f32 %v7884, %v7717
      %v7886 = vmul.f32 %v7885, %v7884
      %v7887 = vmul.f32 0.5, %v7886
      %v7888 = vsub.f32 1.5, %v7887
      %v7889 = vmul.f32 %v7884, %v7888
      %vm7890 = vweird.f32 %v7717
      %vm7891 = vweird.f32 %v7884
      %vm7892 = vmor %vm7890, %vm7891
      %v7893 = vsel %vm7892, %v7884, %v7889
      %v7894 = vrsqrt.pop %v7718
      %v7895 = vmul.f32 %v7894, %v7718
      %v7896 = vmul.f32 %v7895, %v7894
      %v7897 = vmul.f32 0.5, %v7896
      %v7898 = vsub.f32 1.5, %v7897
      %v7899 = vmul.f32 %v7894, %v7898
      %vm7900 = vweird.f32 %v7718
      %vm7901 = vweird.f32 %v7894
      %vm7902 = vmor %vm7900, %vm7901
      %v7903 = vsel %vm7902, %v7894, %v7899
      %v7904 = vrsqrt.pop %v7719
      %v7905 = vmul.f32 %v7904, %v7719
      %v7906 = vmul.f32 %v7905, %v7904
      %v7907 = vmul.f32 0.5, %v7906
      %v7908 = vsub.f32 1.5, %v7907
      %v7909 = vmul.f32 %v7904, %v7908
      %vm7910 = vweird.f32 %v7719
      %vm7911 = vweird.f32 %v7904
      %vm7912 = vmor %vm7910, %vm7911
      %v7913 = vsel %vm7912, %v7904, %v7909
      %v7914 = vrsqrt.pop %v7720
      %v7915 = vmul.f32 %v7914, %v7720
      %v7916 = vmul.f32 %v7915, %v7914
      %v7917 = vmul.f32 0.5, %v7916
      %v7918 = vsub.f32 1.5, %v7917
      %v7919 = vmul.f32 %v7914, %v7918
      %vm7920 = vweird.f32 %v7720
      %vm7921 = vweird.f32 %v7914
      %vm7922 = vmor %vm7920, %vm7921
      %v7923 = vsel %vm7922, %v7914, %v7919
      %v7924 = vrsqrt.pop %v7721
      %v7925 = vmul.f32 %v7924, %v7721
      %v7926 = vmul.f32 %v7925, %v7924
      %v7927 = vmul.f32 0.5, %v7926
      %v7928 = vsub.f32 1.5, %v7927
      %v7929 = vmul.f32 %v7924, %v7928
      %vm7930 = vweird.f32 %v7721
      %vm7931 = vweird.f32 %v7924
      %vm7932 = vmor %vm7930, %vm7931
      %v7933 = vsel %vm7932, %v7924, %v7929
      %v7934 = vrsqrt.pop %v7722
      %v7935 = vmul.f32 %v7934, %v7722
      %v7936 = vmul.f32 %v7935, %v7934
      %v7937 = vmul.f32 0.5, %v7936
      %v7938 = vsub.f32 1.5, %v7937
      %v7939 = vmul.f32 %v7934, %v7938
      %vm7940 = vweird.f32 %v7722
      %vm7941 = vweird.f32 %v7934
      %vm7942 = vmor %vm7940, %vm7941
      %v7943 = vsel %vm7942, %v7934, %v7939
      %v7944 = vrsqrt.pop %v7723
      %v7945 = vmul.f32 %v7944, %v7723
      %v7946 = vmul.f32 %v7945, %v7944
      %v7947 = vmul.f32 0.5, %v7946
      %v7948 = vsub.f32 1.5, %v7947
      %v7949 = vmul.f32 %v7944, %v7948
      %vm7950 = vweird.f32 %v7723
      %vm7951 = vweird.f32 %v7944
      %vm7952 = vmor %vm7950, %vm7951
      %v7953 = vsel %vm7952, %v7944, %v7949
      %v7954 = vrsqrt.pop %v7724
      %v7955 = vmul.f32 %v7954, %v7724
      %v7956 = vmul.f32 %v7955, %v7954
      %v7957 = vmul.f32 0.5, %v7956
      %v7958 = vsub.f32 1.5, %v7957
      %v7959 = vmul.f32 %v7954, %v7958
      %vm7960 = vweird.f32 %v7724
      %vm7961 = vweird.f32 %v7954
      %vm7962 = vmor %vm7960, %vm7961
      %v7963 = vsel %vm7962, %v7954, %v7959
      %v7964 = vrsqrt.pop %v7725
      %v7965 = vmul.f32 %v7964, %v7725
      %v7966 = vmul.f32 %v7965, %v7964
      %v7967 = vmul.f32 0.5, %v7966
      %v7968 = vsub.f32 1.5, %v7967
      %v7969 = vmul.f32 %v7964, %v7968
      %vm7970 = vweird.f32 %v7725
      %vm7971 = vweird.f32 %v7964
      %vm7972 = vmor %vm7970, %vm7971
      %v7973 = vsel %vm7972, %v7964, %v7969
      %v7974 = vrsqrt.pop %v7726
      %v7975 = vmul.f32 %v7974, %v7726
      %v7976 = vmul.f32 %v7975, %v7974
      %v7977 = vmul.f32 0.5, %v7976
      %v7978 = vsub.f32 1.5, %v7977
      %v7979 = vmul.f32 %v7974, %v7978
      %vm7980 = vweird.f32 %v7726
      %vm7981 = vweird.f32 %v7974
      %vm7982 = vmor %vm7980, %vm7981
      %v7983 = vsel %vm7982, %v7974, %v7979
      %v7984 = vrsqrt.pop %v7727
      %v7985 = vmul.f32 %v7984, %v7727
      %v7986 = vmul.f32 %v7985, %v7984
      %v7987 = vmul.f32 0.5, %v7986
      %v7988 = vsub.f32 1.5, %v7987
      %v7989 = vmul.f32 %v7984, %v7988
      %vm7990 = vweird.f32 %v7727
      %vm7991 = vweird.f32 %v7984
      %vm7992 = vmor %vm7990, %vm7991
      %v7993 = vsel %vm7992, %v7984, %v7989
      %v7994 = vrsqrt.pop %v7728
      %v7995 = vmul.f32 %v7994, %v7728
      %v7996 = vmul.f32 %v7995, %v7994
      %v7997 = vmul.f32 0.5, %v7996
      %v7998 = vsub.f32 1.5, %v7997
      %v7999 = vmul.f32 %v7994, %v7998
      %vm8000 = vweird.f32 %v7728
      %vm8001 = vweird.f32 %v7994
      %vm8002 = vmor %vm8000, %vm8001
      %v8003 = vsel %vm8002, %v7994, %v7999
      %v8004 = vrsqrt.pop %v7729
      %v8005 = vmul.f32 %v8004, %v7729
      %v8006 = vmul.f32 %v8005, %v8004
      %v8007 = vmul.f32 0.5, %v8006
      %v8008 = vsub.f32 1.5, %v8007
      %v8009 = vmul.f32 %v8004, %v8008
      %vm8010 = vweird.f32 %v7729
      %vm8011 = vweird.f32 %v8004
      %vm8012 = vmor %vm8010, %vm8011
      %v8013 = vsel %vm8012, %v8004, %v8009
      %v8014 = vrsqrt.pop %v7730
      %v8015 = vmul.f32 %v8014, %v7730
      %v8016 = vmul.f32 %v8015, %v8014
      %v8017 = vmul.f32 0.5, %v8016
      %v8018 = vsub.f32 1.5, %v8017
      %v8019 = vmul.f32 %v8014, %v8018
      %vm8020 = vweird.f32 %v7730
      %vm8021 = vweird.f32 %v8014
      %vm8022 = vmor %vm8020, %vm8021
      %v8023 = vsel %vm8022, %v8014, %v8019
      %v8024 = vrsqrt.pop %v7731
      %v8025 = vmul.f32 %v8024, %v7731
      %v8026 = vmul.f32 %v8025, %v8024
      %v8027 = vmul.f32 0.5, %v8026
      %v8028 = vsub.f32 1.5, %v8027
      %v8029 = vmul.f32 %v8024, %v8028
      %vm8030 = vweird.f32 %v7731
      %vm8031 = vweird.f32 %v8024
      %vm8032 = vmor %vm8030, %vm8031
      %v8033 = vsel %vm8032, %v8024, %v8029
      %v8034 = vrsqrt.pop %v7732
      %v8035 = vmul.f32 %v8034, %v7732
      %v8036 = vmul.f32 %v8035, %v8034
      %v8037 = vmul.f32 0.5, %v8036
      %v8038 = vsub.f32 1.5, %v8037
      %v8039 = vmul.f32 %v8034, %v8038
      %vm8040 = vweird.f32 %v7732
      %vm8041 = vweird.f32 %v8034
      %vm8042 = vmor %vm8040, %vm8041
      %v8043 = vsel %vm8042, %v8034, %v8039
      %v8044 = vrsqrt.pop %v7733
      %v8045 = vmul.f32 %v8044, %v7733
      %v8046 = vmul.f32 %v8045, %v8044
      %v8047 = vmul.f32 0.5, %v8046
      %v8048 = vsub.f32 1.5, %v8047
      %v8049 = vmul.f32 %v8044, %v8048
      %vm8050 = vweird.f32 %v7733
      %vm8051 = vweird.f32 %v8044
      %vm8052 = vmor %vm8050, %vm8051
      %v8053 = vsel %vm8052, %v8044, %v8049
      %v8054 = vmul.f32 %v7510, %v7743
      %v8055 = vmul.f32 %v7511, %v7753
      %v8056 = vmul.f32 %v7512, %v7763
      %v8057 = vmul.f32 %v7513, %v7773
      %v8058 = vmul.f32 %v7514, %v7783
      %v8059 = vmul.f32 %v7515, %v7793
      %v8060 = vmul.f32 %v7516, %v7803
      %v8061 = vmul.f32 %v7517, %v7813
      %v8062 = vmul.f32 %v7518, %v7823
      %v8063 = vmul.f32 %v7519, %v7833
      %v8064 = vmul.f32 %v7520, %v7843
      %v8065 = vmul.f32 %v7521, %v7853
      %v8066 = vmul.f32 %v7522, %v7863
      %v8067 = vmul.f32 %v7523, %v7873
      %v8068 = vmul.f32 %v7524, %v7883
      %v8069 = vmul.f32 %v7525, %v7893
      %v8070 = vmul.f32 %v7526, %v7903
      %v8071 = vmul.f32 %v7527, %v7913
      %v8072 = vmul.f32 %v7528, %v7923
      %v8073 = vmul.f32 %v7529, %v7933
      %v8074 = vmul.f32 %v7530, %v7943
      %v8075 = vmul.f32 %v7531, %v7953
      %v8076 = vmul.f32 %v7532, %v7963
      %v8077 = vmul.f32 %v7533, %v7973
      %v8078 = vmul.f32 %v7534, %v7983
      %v8079 = vmul.f32 %v7535, %v7993
      %v8080 = vmul.f32 %v7536, %v8003
      %v8081 = vmul.f32 %v7537, %v8013
      %v8082 = vmul.f32 %v7538, %v8023
      %v8083 = vmul.f32 %v7539, %v8033
      %v8084 = vmul.f32 %v7540, %v8043
      %v8085 = vmul.f32 %v7541, %v8053
      %v8086 = vld [vmem:[%s8] sm:$0x1]
      %v8088 = vperm.slane %v8086, 0
      %v8090 = vmul.f32 %v8054, %v8088
      %v8091 = vmul.f32 %v8055, %v8088
      %v8092 = vmul.f32 %v8056, %v8088
      %v8093 = vmul.f32 %v8057, %v8088
      %v8094 = vmul.f32 %v8058, %v8088
      %v8095 = vmul.f32 %v8059, %v8088
      %v8096 = vmul.f32 %v8060, %v8088
      %v8097 = vmul.f32 %v8061, %v8088
      %v8098 = vmul.f32 %v8062, %v8088
      %v8099 = vmul.f32 %v8063, %v8088
      %v8100 = vmul.f32 %v8064, %v8088
      %v8101 = vmul.f32 %v8065, %v8088
      %v8102 = vmul.f32 %v8066, %v8088
      %v8103 = vmul.f32 %v8067, %v8088
      %v8104 = vmul.f32 %v8068, %v8088
      %v8105 = vmul.f32 %v8069, %v8088
      %v8106 = vmul.f32 %v8070, %v8088
      %v8107 = vmul.f32 %v8071, %v8088
      %v8108 = vmul.f32 %v8072, %v8088
      %v8109 = vmul.f32 %v8073, %v8088
      %v8110 = vmul.f32 %v8074, %v8088
      %v8111 = vmul.f32 %v8075, %v8088
      %v8112 = vmul.f32 %v8076, %v8088
      %v8113 = vmul.f32 %v8077, %v8088
      %v8114 = vmul.f32 %v8078, %v8088
      %v8115 = vmul.f32 %v8079, %v8088
      %v8116 = vmul.f32 %v8080, %v8088
      %v8117 = vmul.f32 %v8081, %v8088
      %v8118 = vmul.f32 %v8082, %v8088
      %v8119 = vmul.f32 %v8083, %v8088
      %v8120 = vmul.f32 %v8084, %v8088
      %v8121 = vmul.f32 %v8085, %v8088
      %v8122 = vld [vmem:[%s9] sm:$0x1]
      %v8124 = vperm.slane %v8122, 0
      %v8126 = vadd.f32 %v8090, %v8124
      %v8127 = vadd.f32 %v8091, %v8124
      %v8128 = vadd.f32 %v8092, %v8124
      %v8129 = vadd.f32 %v8093, %v8124
      %v8130 = vadd.f32 %v8094, %v8124
      %v8131 = vadd.f32 %v8095, %v8124
      %v8132 = vadd.f32 %v8096, %v8124
      %v8133 = vadd.f32 %v8097, %v8124
      %v8134 = vadd.f32 %v8098, %v8124
      %v8135 = vadd.f32 %v8099, %v8124
      %v8136 = vadd.f32 %v8100, %v8124
      %v8137 = vadd.f32 %v8101, %v8124
      %v8138 = vadd.f32 %v8102, %v8124
      %v8139 = vadd.f32 %v8103, %v8124
      %v8140 = vadd.f32 %v8104, %v8124
      %v8141 = vadd.f32 %v8105, %v8124
      %v8142 = vadd.f32 %v8106, %v8124
      %v8143 = vadd.f32 %v8107, %v8124
      %v8144 = vadd.f32 %v8108, %v8124
      %v8145 = vadd.f32 %v8109, %v8124
      %v8146 = vadd.f32 %v8110, %v8124
      %v8147 = vadd.f32 %v8111, %v8124
      %v8148 = vadd.f32 %v8112, %v8124
      %v8149 = vadd.f32 %v8113, %v8124
      %v8150 = vadd.f32 %v8114, %v8124
      %v8151 = vadd.f32 %v8115, %v8124
      %v8152 = vadd.f32 %v8116, %v8124
      %v8153 = vadd.f32 %v8117, %v8124
      %v8154 = vadd.f32 %v8118, %v8124
      %v8155 = vadd.f32 %v8119, %v8124
      %v8156 = vadd.f32 %v8120, %v8124
      %v8157 = vadd.f32 %v8121, %v8124
      %v8158 = vpack.c.bf16 %v8127, %v8126
      %v8159 = vpack.c.bf16 %v8129, %v8128
      %v8160 = vpack.c.bf16 %v8131, %v8130
      %v8161 = vpack.c.bf16 %v8133, %v8132
      %v8162 = vpack.c.bf16 %v8135, %v8134
      %v8163 = vpack.c.bf16 %v8137, %v8136
      %v8164 = vpack.c.bf16 %v8139, %v8138
      %v8165 = vpack.c.bf16 %v8141, %v8140
      %v8166 = vpack.c.bf16 %v8143, %v8142
      %v8167 = vpack.c.bf16 %v8145, %v8144
      %v8168 = vpack.c.bf16 %v8147, %v8146
      %v8169 = vpack.c.bf16 %v8149, %v8148
      %v8170 = vpack.c.bf16 %v8151, %v8150
      %v8171 = vpack.c.bf16 %v8153, %v8152
      %v8172 = vpack.c.bf16 %v8155, %v8154
      %v8173 = vpack.c.bf16 %v8157, %v8156
      %v8174 = vld [vmem:[%s10] sm:$0xff]
      %v8175 = vld [vmem:[%s10 + $0x8] sm:$0xff]
      %v8176 = vld [vmem:[%s10 + $0x10] sm:$0xff]
      %v8177 = vld [vmem:[%s10 + $0x18] sm:$0xff]
      %v8178 = vpack.c.bf16 %v8175, %v8174
      %v8179 = vpack.c.bf16 %v8177, %v8176
      %v8180 = vld [vmem:[%s11] sm:$0x1]
      %v8182 = vperm.slane %v8180, 0
      %v8185 = vsel %vm509, %v8158, 0
      %v8188 = vsel %vm509, %v8159, 0
      %v8191 = vsel %vm509, %v8160, 0
      %v8194 = vsel %vm509, %v8161, 0
      %v8197 = vsel %vm509, %v8162, 0
      %v8200 = vsel %vm509, %v8163, 0
      %v8203 = vsel %vm509, %v8164, 0
      %v8206 = vsel %vm509, %v8165, 0
      %v8209 = vsel %vm509, %v8166, 0
      %v8212 = vsel %vm509, %v8167, 0
      %v8215 = vsel %vm509, %v8168, 0
      %v8218 = vsel %vm509, %v8169, 0
      %v8221 = vsel %vm509, %v8170, 0
      %v8224 = vsel %vm509, %v8171, 0
      %v8227 = vsel %vm509, %v8172, 0
      %v8230 = vsel %vm509, %v8173, 0
      %8232 = vmatpush.bf16.msra.mxu0 0
      %8233 = vmatpush.bf16.msra.mxu0 0
      %8234 = vmatpush.bf16.msra.mxu0 0
      %8235 = vmatpush.bf16.msra.mxu0 0
      %8236 = vmatpush.bf16.msra.mxu0 0
      %8237 = vmatpush.bf16.msra.mxu0 0
      %8238 = vmatpush.bf16.msra.mxu0 %v8179
      %8239 = vmatpush.bf16.msra.mxu0 %v8178
      %8240 = vmatmul.bf16.gmra.mxu0 %v8185
      %v8241 = vpop.f32.mrf.mxu0
      %v8242 = vadd.f32 %v8182, %v8241
      %v8243 = vpop.f32.mrf.mxu0
      %v8244 = vadd.f32 %v8182, %v8243
      %8245 = vmatmul.bf16.gmra.mxu0 %v8188
      %v8246 = vpop.f32.mrf.mxu0
      %v8247 = vadd.f32 %v8182, %v8246
      %v8248 = vpop.f32.mrf.mxu0
      %v8249 = vadd.f32 %v8182, %v8248
      %8250 = vmatmul.bf16.gmra.mxu0 %v8191
      %v8251 = vpop.f32.mrf.mxu0
      %v8252 = vadd.f32 %v8182, %v8251
      %v8253 = vpop.f32.mrf.mxu0
      %v8254 = vadd.f32 %v8182, %v8253
      %8255 = vmatmul.bf16.gmra.mxu0 %v8194
      %v8256 = vpop.f32.mrf.mxu0
      %v8257 = vadd.f32 %v8182, %v8256
      %v8258 = vpop.f32.mrf.mxu0
      %v8259 = vadd.f32 %v8182, %v8258
      %8260 = vmatmul.bf16.gmra.mxu0 %v8197
      %v8261 = vpop.f32.mrf.mxu0
      %v8262 = vadd.f32 %v8182, %v8261
      %v8263 = vpop.f32.mrf.mxu0
      %v8264 = vadd.f32 %v8182, %v8263
      %8265 = vmatmul.bf16.gmra.mxu0 %v8200
      %v8266 = vpop.f32.mrf.mxu0
      %v8267 = vadd.f32 %v8182, %v8266
      %v8268 = vpop.f32.mrf.mxu0
      %v8269 = vadd.f32 %v8182, %v8268
      %8270 = vmatmul.bf16.gmra.mxu0 %v8203
      %v8271 = vpop.f32.mrf.mxu0
      %v8272 = vadd.f32 %v8182, %v8271
      %v8273 = vpop.f32.mrf.mxu0
      %v8274 = vadd.f32 %v8182, %v8273
      %8275 = vmatmul.bf16.gmra.mxu0 %v8206
      %v8276 = vpop.f32.mrf.mxu0
      %v8277 = vadd.f32 %v8182, %v8276
      %v8278 = vpop.f32.mrf.mxu0
      %v8279 = vadd.f32 %v8182, %v8278
      %8280 = vmatmul.bf16.gmra.mxu0 %v8209
      %v8281 = vpop.f32.mrf.mxu0
      %v8282 = vadd.f32 %v8182, %v8281
      %v8283 = vpop.f32.mrf.mxu0
      %v8284 = vadd.f32 %v8182, %v8283
      %8285 = vmatmul.bf16.gmra.mxu0 %v8212
      %v8286 = vpop.f32.mrf.mxu0
      %v8287 = vadd.f32 %v8182, %v8286
      %v8288 = vpop.f32.mrf.mxu0
      %v8289 = vadd.f32 %v8182, %v8288
      %8290 = vmatmul.bf16.gmra.mxu0 %v8215
      %v8291 = vpop.f32.mrf.mxu0
      %v8292 = vadd.f32 %v8182, %v8291
      %v8293 = vpop.f32.mrf.mxu0
      %v8294 = vadd.f32 %v8182, %v8293
      %8295 = vmatmul.bf16.gmra.mxu0 %v8218
      %v8296 = vpop.f32.mrf.mxu0
      %v8297 = vadd.f32 %v8182, %v8296
      %v8298 = vpop.f32.mrf.mxu0
      %v8299 = vadd.f32 %v8182, %v8298
      %8300 = vmatmul.bf16.gmra.mxu0 %v8221
      %v8301 = vpop.f32.mrf.mxu0
      %v8302 = vadd.f32 %v8182, %v8301
      %v8303 = vpop.f32.mrf.mxu0
      %v8304 = vadd.f32 %v8182, %v8303
      %8305 = vmatmul.bf16.gmra.mxu0 %v8224
      %v8306 = vpop.f32.mrf.mxu0
      %v8307 = vadd.f32 %v8182, %v8306
      %v8308 = vpop.f32.mrf.mxu0
      %v8309 = vadd.f32 %v8182, %v8308
      %8310 = vmatmul.bf16.gmra.mxu0 %v8227
      %v8311 = vpop.f32.mrf.mxu0
      %v8312 = vadd.f32 %v8182, %v8311
      %v8313 = vpop.f32.mrf.mxu0
      %v8314 = vadd.f32 %v8182, %v8313
      %8315 = vmatmul.bf16.gmra.mxu0 %v8230
      %v8316 = vpop.f32.mrf.mxu0
      %v8317 = vadd.f32 %v8182, %v8316
      %v8318 = vpop.f32.mrf.mxu0
      %v8319 = vadd.f32 %v8182, %v8318
      %8320 = vdwg.mxu0
      %v8321 = vmul.f32 %v8242, 0.5
      %v8322 = vmul.f32 %v8244, 0.5
      %v8323 = vmul.f32 %v8247, 0.5
      %v8324 = vmul.f32 %v8249, 0.5
      %v8325 = vmul.f32 %v8252, 0.5
      %v8326 = vmul.f32 %v8254, 0.5
      %v8327 = vmul.f32 %v8257, 0.5
      %v8328 = vmul.f32 %v8259, 0.5
      %v8329 = vmul.f32 %v8262, 0.5
      %v8330 = vmul.f32 %v8264, 0.5
      %v8331 = vmul.f32 %v8267, 0.5
      %v8332 = vmul.f32 %v8269, 0.5
      %v8333 = vmul.f32 %v8272, 0.5
      %v8334 = vmul.f32 %v8274, 0.5
      %v8335 = vmul.f32 %v8277, 0.5
      %v8336 = vmul.f32 %v8279, 0.5
      %v8337 = vmul.f32 %v8282, 0.5
      %v8338 = vmul.f32 %v8284, 0.5
      %v8339 = vmul.f32 %v8287, 0.5
      %v8340 = vmul.f32 %v8289, 0.5
      %v8341 = vmul.f32 %v8292, 0.5
      %v8342 = vmul.f32 %v8294, 0.5
      %v8343 = vmul.f32 %v8297, 0.5
      %v8344 = vmul.f32 %v8299, 0.5
      %v8345 = vmul.f32 %v8302, 0.5
      %v8346 = vmul.f32 %v8304, 0.5
      %v8347 = vmul.f32 %v8307, 0.5
      %v8348 = vmul.f32 %v8309, 0.5
      %v8349 = vmul.f32 %v8312, 0.5
      %v8350 = vmul.f32 %v8314, 0.5
      %v8351 = vmul.f32 %v8317, 0.5
      %v8352 = vmul.f32 %v8319, 0.5
      %v8353 = vrcp.pop 1.4142135
      %v8354 = vmul.f32 1.4142135, %v8353
      %v8355 = vsub.f32 1.0, %v8354
      %v8356 = vmul.f32 %v8353, %v8355
      %v8357 = vadd.f32 %v8353, %v8356
      %vm8358 = vweird.f32 %v8353
      %v8359 = vsel %vm8358, %v8353, %v8357
      %v8360 = vmul.f32 %v8242, %v8359
      %v8361 = vmul.f32 %v8244, %v8359
      %v8362 = vmul.f32 %v8247, %v8359
      %v8363 = vmul.f32 %v8249, %v8359
      %v8364 = vmul.f32 %v8252, %v8359
      %v8365 = vmul.f32 %v8254, %v8359
      %v8366 = vmul.f32 %v8257, %v8359
      %v8367 = vmul.f32 %v8259, %v8359
      %v8368 = vmul.f32 %v8262, %v8359
      %v8369 = vmul.f32 %v8264, %v8359
      %v8370 = vmul.f32 %v8267, %v8359
      %v8371 = vmul.f32 %v8269, %v8359
      %v8372 = vmul.f32 %v8272, %v8359
      %v8373 = vmul.f32 %v8274, %v8359
      %v8374 = vmul.f32 %v8277, %v8359
      %v8375 = vmul.f32 %v8279, %v8359
      %v8376 = vmul.f32 %v8282, %v8359
      %v8377 = vmul.f32 %v8284, %v8359
      %v8378 = vmul.f32 %v8287, %v8359
      %v8379 = vmul.f32 %v8289, %v8359
      %v8380 = vmul.f32 %v8292, %v8359
      %v8381 = vmul.f32 %v8294, %v8359
      %v8382 = vmul.f32 %v8297, %v8359
      %v8383 = vmul.f32 %v8299, %v8359
      %v8384 = vmul.f32 %v8302, %v8359
      %v8385 = vmul.f32 %v8304, %v8359
      %v8386 = vmul.f32 %v8307, %v8359
      %v8387 = vmul.f32 %v8309, %v8359
      %v8388 = vmul.f32 %v8312, %v8359
      %v8389 = vmul.f32 %v8314, %v8359
      %v8390 = vmul.f32 %v8317, %v8359
      %v8391 = vmul.f32 %v8319, %v8359
      %v8392 = vmul.f32 %v8360, %v8360
      %v8393 = vmin.f32 16.0, %v8392
      %v8394 = vmul.f32 %v8393, 2.1237322e-06
      %v8395 = vadd.f32 %v8394, 0.00028619796
      %v8396 = vmul.f32 %v8393, %v8395
      %v8397 = vadd.f32 %v8396, 0.0036580483
      %v8398 = vmul.f32 %v8393, %v8397
      %v8399 = vadd.f32 %v8398, 0.05243302
      %v8400 = vmul.f32 %v8393, %v8399
      %v8401 = vadd.f32 %v8400, 0.18741608
      %v8402 = vmul.f32 %v8393, %v8401
      %v8403 = vadd.f32 %v8402, 1.1283791
      %v8404 = vmul.f32 %v8360, %v8403
      %v8405 = vmul.f32 %v8393, 3.8918573e-05
      %v8406 = vadd.f32 %v8405, 0.001143296
      %v8407 = vmul.f32 %v8393, %v8406
      %v8408 = vadd.f32 %v8407, 0.014752088
      %v8409 = vmul.f32 %v8393, %v8408
      %v8410 = vadd.f32 %v8409, 0.112945676
      %v8411 = vmul.f32 %v8393, %v8410
      %v8412 = vadd.f32 %v8411, 0.4994258
      %v8413 = vmul.f32 %v8393, %v8412
      %v8414 = vadd.f32 %v8413, 1.0
      %v8415 = vrcp.pop %v8414
      %v8416 = vmul.f32 %v8414, %v8415
      %v8417 = vsub.f32 1.0, %v8416
      %v8418 = vmul.f32 %v8415, %v8417
      %v8419 = vadd.f32 %v8415, %v8418
      %vm8420 = vweird.f32 %v8414
      %vm8421 = vweird.f32 %v8415
      %vm8422 = vmor %vm8420, %vm8421
      %v8423 = vsel %vm8422, %v8415, %v8419
      %v8424 = vand.u32 2147483647, %v8414
      %vm8425 = vcmp.eq.f32.partialorder %v8424, 8.507059e+37
      %v8426 = vand.u32 %v8414, 2147483648
      %v8427 = vor.u32 1.1754944e-38, %v8426
      %v8428 = vsel %vm8425, %v8427, %v8423
      %v8429 = vmul.f32 %v8404, %v8428
      %v8430 = vmin.f32 %v8429, 1.0
      %v8431 = vmax.f32 %v8430, -1.0
      %v8432 = vmul.f32 %v8361, %v8361
      %v8433 = vmin.f32 16.0, %v8432
      %v8434 = vmul.f32 %v8433, 2.1237322e-06
      %v8435 = vadd.f32 %v8434, 0.00028619796
      %v8436 = vmul.f32 %v8433, %v8435
      %v8437 = vadd.f32 %v8436, 0.0036580483
      %v8438 = vmul.f32 %v8433, %v8437
      %v8439 = vadd.f32 %v8438, 0.05243302
      %v8440 = vmul.f32 %v8433, %v8439
      %v8441 = vadd.f32 %v8440, 0.18741608
      %v8442 = vmul.f32 %v8433, %v8441
      %v8443 = vadd.f32 %v8442, 1.1283791
      %v8444 = vmul.f32 %v8361, %v8443
      %v8445 = vmul.f32 %v8433, 3.8918573e-05
      %v8446 = vadd.f32 %v8445, 0.001143296
      %v8447 = vmul.f32 %v8433, %v8446
      %v8448 = vadd.f32 %v8447, 0.014752088
      %v8449 = vmul.f32 %v8433, %v8448
      %v8450 = vadd.f32 %v8449, 0.112945676
      %v8451 = vmul.f32 %v8433, %v8450
      %v8452 = vadd.f32 %v8451, 0.4994258
      %v8453 = vmul.f32 %v8433, %v8452
      %v8454 = vadd.f32 %v8453, 1.0
      %v8455 = vrcp.pop %v8454
      %v8456 = vmul.f32 %v8454, %v8455
      %v8457 = vsub.f32 1.0, %v8456
      %v8458 = vmul.f32 %v8455, %v8457
      %v8459 = vadd.f32 %v8455, %v8458
      %vm8460 = vweird.f32 %v8454
      %vm8461 = vweird.f32 %v8455
      %vm8462 = vmor %vm8460, %vm8461
      %v8463 = vsel %vm8462, %v8455, %v8459
      %v8464 = vand.u32 2147483647, %v8454
      %vm8465 = vcmp.eq.f32.partialorder %v8464, 8.507059e+37
      %v8466 = vand.u32 %v8454, 2147483648
      %v8467 = vor.u32 1.1754944e-38, %v8466
      %v8468 = vsel %vm8465, %v8467, %v8463
      %v8469 = vmul.f32 %v8444, %v8468
      %v8470 = vmin.f32 %v8469, 1.0
      %v8471 = vmax.f32 %v8470, -1.0
      %v8472 = vmul.f32 %v8362, %v8362
      %v8473 = vmin.f32 16.0, %v8472
      %v8474 = vmul.f32 %v8473, 2.1237322e-06
      %v8475 = vadd.f32 %v8474, 0.00028619796
      %v8476 = vmul.f32 %v8473, %v8475
      %v8477 = vadd.f32 %v8476, 0.0036580483
      %v8478 = vmul.f32 %v8473, %v8477
      %v8479 = vadd.f32 %v8478, 0.05243302
      %v8480 = vmul.f32 %v8473, %v8479
      %v8481 = vadd.f32 %v8480, 0.18741608
      %v8482 = vmul.f32 %v8473, %v8481
      %v8483 = vadd.f32 %v8482, 1.1283791
      %v8484 = vmul.f32 %v8362, %v8483
      %v8485 = vmul.f32 %v8473, 3.8918573e-05
      %v8486 = vadd.f32 %v8485, 0.001143296
      %v8487 = vmul.f32 %v8473, %v8486
      %v8488 = vadd.f32 %v8487, 0.014752088
      %v8489 = vmul.f32 %v8473, %v8488
      %v8490 = vadd.f32 %v8489, 0.112945676
      %v8491 = vmul.f32 %v8473, %v8490
      %v8492 = vadd.f32 %v8491, 0.4994258
      %v8493 = vmul.f32 %v8473, %v8492
      %v8494 = vadd.f32 %v8493, 1.0
      %v8495 = vrcp.pop %v8494
      %v8496 = vmul.f32 %v8494, %v8495
      %v8497 = vsub.f32 1.0, %v8496
      %v8498 = vmul.f32 %v8495, %v8497
      %v8499 = vadd.f32 %v8495, %v8498
      %vm8500 = vweird.f32 %v8494
      %vm8501 = vweird.f32 %v8495
      %vm8502 = vmor %vm8500, %vm8501
      %v8503 = vsel %vm8502, %v8495, %v8499
      %v8504 = vand.u32 2147483647, %v8494
      %vm8505 = vcmp.eq.f32.partialorder %v8504, 8.507059e+37
      %v8506 = vand.u32 %v8494, 2147483648
      %v8507 = vor.u32 1.1754944e-38, %v8506
      %v8508 = vsel %vm8505, %v8507, %v8503
      %v8509 = vmul.f32 %v8484, %v8508
      %v8510 = vmin.f32 %v8509, 1.0
      %v8511 = vmax.f32 %v8510, -1.0
      %v8512 = vmul.f32 %v8363, %v8363
      %v8513 = vmin.f32 16.0, %v8512
      %v8514 = vmul.f32 %v8513, 2.1237322e-06
      %v8515 = vadd.f32 %v8514, 0.00028619796
      %v8516 = vmul.f32 %v8513, %v8515
      %v8517 = vadd.f32 %v8516, 0.0036580483
      %v8518 = vmul.f32 %v8513, %v8517
      %v8519 = vadd.f32 %v8518, 0.05243302
      %v8520 = vmul.f32 %v8513, %v8519
      %v8521 = vadd.f32 %v8520, 0.18741608
      %v8522 = vmul.f32 %v8513, %v8521
      %v8523 = vadd.f32 %v8522, 1.1283791
      %v8524 = vmul.f32 %v8363, %v8523
      %v8525 = vmul.f32 %v8513, 3.8918573e-05
      %v8526 = vadd.f32 %v8525, 0.001143296
      %v8527 = vmul.f32 %v8513, %v8526
      %v8528 = vadd.f32 %v8527, 0.014752088
      %v8529 = vmul.f32 %v8513, %v8528
      %v8530 = vadd.f32 %v8529, 0.112945676
      %v8531 = vmul.f32 %v8513, %v8530
      %v8532 = vadd.f32 %v8531, 0.4994258
      %v8533 = vmul.f32 %v8513, %v8532
      %v8534 = vadd.f32 %v8533, 1.0
      %v8535 = vrcp.pop %v8534
      %v8536 = vmul.f32 %v8534, %v8535
      %v8537 = vsub.f32 1.0, %v8536
      %v8538 = vmul.f32 %v8535, %v8537
      %v8539 = vadd.f32 %v8535, %v8538
      %vm8540 = vweird.f32 %v8534
      %vm8541 = vweird.f32 %v8535
      %vm8542 = vmor %vm8540, %vm8541
      %v8543 = vsel %vm8542, %v8535, %v8539
      %v8544 = vand.u32 2147483647, %v8534
      %vm8545 = vcmp.eq.f32.partialorder %v8544, 8.507059e+37
      %v8546 = vand.u32 %v8534, 2147483648
      %v8547 = vor.u32 1.1754944e-38, %v8546
      %v8548 = vsel %vm8545, %v8547, %v8543
      %v8549 = vmul.f32 %v8524, %v8548
      %v8550 = vmin.f32 %v8549, 1.0
      %v8551 = vmax.f32 %v8550, -1.0
      %v8552 = vmul.f32 %v8364, %v8364
      %v8553 = vmin.f32 16.0, %v8552
      %v8554 = vmul.f32 %v8553, 2.1237322e-06
      %v8555 = vadd.f32 %v8554, 0.00028619796
      %v8556 = vmul.f32 %v8553, %v8555
      %v8557 = vadd.f32 %v8556, 0.0036580483
      %v8558 = vmul.f32 %v8553, %v8557
      %v8559 = vadd.f32 %v8558, 0.05243302
      %v8560 = vmul.f32 %v8553, %v8559
      %v8561 = vadd.f32 %v8560, 0.18741608
      %v8562 = vmul.f32 %v8553, %v8561
      %v8563 = vadd.f32 %v8562, 1.1283791
      %v8564 = vmul.f32 %v8364, %v8563
      %v8565 = vmul.f32 %v8553, 3.8918573e-05
      %v8566 = vadd.f32 %v8565, 0.001143296
      %v8567 = vmul.f32 %v8553, %v8566
      %v8568 = vadd.f32 %v8567, 0.014752088
      %v8569 = vmul.f32 %v8553, %v8568
      %v8570 = vadd.f32 %v8569, 0.112945676
      %v8571 = vmul.f32 %v8553, %v8570
      %v8572 = vadd.f32 %v8571, 0.4994258
      %v8573 = vmul.f32 %v8553, %v8572
      %v8574 = vadd.f32 %v8573, 1.0
      %v8575 = vrcp.pop %v8574
      %v8576 = vmul.f32 %v8574, %v8575
      %v8577 = vsub.f32 1.0, %v8576
      %v8578 = vmul.f32 %v8575, %v8577
      %v8579 = vadd.f32 %v8575, %v8578
      %vm8580 = vweird.f32 %v8574
      %vm8581 = vweird.f32 %v8575
      %vm8582 = vmor %vm8580, %vm8581
      %v8583 = vsel %vm8582, %v8575, %v8579
      %v8584 = vand.u32 2147483647, %v8574
      %vm8585 = vcmp.eq.f32.partialorder %v8584, 8.507059e+37
      %v8586 = vand.u32 %v8574, 2147483648
      %v8587 = vor.u32 1.1754944e-38, %v8586
      %v8588 = vsel %vm8585, %v8587, %v8583
      %v8589 = vmul.f32 %v8564, %v8588
      %v8590 = vmin.f32 %v8589, 1.0
      %v8591 = vmax.f32 %v8590, -1.0
      %v8592 = vmul.f32 %v8365, %v8365
      %v8593 = vmin.f32 16.0, %v8592
      %v8594 = vmul.f32 %v8593, 2.1237322e-06
      %v8595 = vadd.f32 %v8594, 0.00028619796
      %v8596 = vmul.f32 %v8593, %v8595
      %v8597 = vadd.f32 %v8596, 0.0036580483
      %v8598 = vmul.f32 %v8593, %v8597
      %v8599 = vadd.f32 %v8598, 0.05243302
      %v8600 = vmul.f32 %v8593, %v8599
      %v8601 = vadd.f32 %v8600, 0.18741608
      %v8602 = vmul.f32 %v8593, %v8601
      %v8603 = vadd.f32 %v8602, 1.1283791
      %v8604 = vmul.f32 %v8365, %v8603
      %v8605 = vmul.f32 %v8593, 3.8918573e-05
      %v8606 = vadd.f32 %v8605, 0.001143296
      %v8607 = vmul.f32 %v8593, %v8606
      %v8608 = vadd.f32 %v8607, 0.014752088
      %v8609 = vmul.f32 %v8593, %v8608
      %v8610 = vadd.f32 %v8609, 0.112945676
      %v8611 = vmul.f32 %v8593, %v8610
      %v8612 = vadd.f32 %v8611, 0.4994258
      %v8613 = vmul.f32 %v8593, %v8612
      %v8614 = vadd.f32 %v8613, 1.0
      %v8615 = vrcp.pop %v8614
      %v8616 = vmul.f32 %v8614, %v8615
      %v8617 = vsub.f32 1.0, %v8616
      %v8618 = vmul.f32 %v8615, %v8617
      %v8619 = vadd.f32 %v8615, %v8618
      %vm8620 = vweird.f32 %v8614
      %vm8621 = vweird.f32 %v8615
      %vm8622 = vmor %vm8620, %vm8621
      %v8623 = vsel %vm8622, %v8615, %v8619
      %v8624 = vand.u32 2147483647, %v8614
      %vm8625 = vcmp.eq.f32.partialorder %v8624, 8.507059e+37
      %v8626 = vand.u32 %v8614, 2147483648
      %v8627 = vor.u32 1.1754944e-38, %v8626
      %v8628 = vsel %vm8625, %v8627, %v8623
      %v8629 = vmul.f32 %v8604, %v8628
      %v8630 = vmin.f32 %v8629, 1.0
      %v8631 = vmax.f32 %v8630, -1.0
      %v8632 = vmul.f32 %v8366, %v8366
      %v8633 = vmin.f32 16.0, %v8632
      %v8634 = vmul.f32 %v8633, 2.1237322e-06
      %v8635 = vadd.f32 %v8634, 0.00028619796
      %v8636 = vmul.f32 %v8633, %v8635
      %v8637 = vadd.f32 %v8636, 0.0036580483
      %v8638 = vmul.f32 %v8633, %v8637
      %v8639 = vadd.f32 %v8638, 0.05243302
      %v8640 = vmul.f32 %v8633, %v8639
      %v8641 = vadd.f32 %v8640, 0.18741608
      %v8642 = vmul.f32 %v8633, %v8641
      %v8643 = vadd.f32 %v8642, 1.1283791
      %v8644 = vmul.f32 %v8366, %v8643
      %v8645 = vmul.f32 %v8633, 3.8918573e-05
      %v8646 = vadd.f32 %v8645, 0.001143296
      %v8647 = vmul.f32 %v8633, %v8646
      %v8648 = vadd.f32 %v8647, 0.014752088
      %v8649 = vmul.f32 %v8633, %v8648
      %v8650 = vadd.f32 %v8649, 0.112945676
      %v8651 = vmul.f32 %v8633, %v8650
      %v8652 = vadd.f32 %v8651, 0.4994258
      %v8653 = vmul.f32 %v8633, %v8652
      %v8654 = vadd.f32 %v8653, 1.0
      %v8655 = vrcp.pop %v8654
      %v8656 = vmul.f32 %v8654, %v8655
      %v8657 = vsub.f32 1.0, %v8656
      %v8658 = vmul.f32 %v8655, %v8657
      %v8659 = vadd.f32 %v8655, %v8658
      %vm8660 = vweird.f32 %v8654
      %vm8661 = vweird.f32 %v8655
      %vm8662 = vmor %vm8660, %vm8661
      %v8663 = vsel %vm8662, %v8655, %v8659
      %v8664 = vand.u32 2147483647, %v8654
      %vm8665 = vcmp.eq.f32.partialorder %v8664, 8.507059e+37
      %v8666 = vand.u32 %v8654, 2147483648
      %v8667 = vor.u32 1.1754944e-38, %v8666
      %v8668 = vsel %vm8665, %v8667, %v8663
      %v8669 = vmul.f32 %v8644, %v8668
      %v8670 = vmin.f32 %v8669, 1.0
      %v8671 = vmax.f32 %v8670, -1.0
      %v8672 = vmul.f32 %v8367, %v8367
      %v8673 = vmin.f32 16.0, %v8672
      %v8674 = vmul.f32 %v8673, 2.1237322e-06
      %v8675 = vadd.f32 %v8674, 0.00028619796
      %v8676 = vmul.f32 %v8673, %v8675
      %v8677 = vadd.f32 %v8676, 0.0036580483
      %v8678 = vmul.f32 %v8673, %v8677
      %v8679 = vadd.f32 %v8678, 0.05243302
      %v8680 = vmul.f32 %v8673, %v8679
      %v8681 = vadd.f32 %v8680, 0.18741608
      %v8682 = vmul.f32 %v8673, %v8681
      %v8683 = vadd.f32 %v8682, 1.1283791
      %v8684 = vmul.f32 %v8367, %v8683
      %v8685 = vmul.f32 %v8673, 3.8918573e-05
      %v8686 = vadd.f32 %v8685, 0.001143296
      %v8687 = vmul.f32 %v8673, %v8686
      %v8688 = vadd.f32 %v8687, 0.014752088
      %v8689 = vmul.f32 %v8673, %v8688
      %v8690 = vadd.f32 %v8689, 0.112945676
      %v8691 = vmul.f32 %v8673, %v8690
      %v8692 = vadd.f32 %v8691, 0.4994258
      %v8693 = vmul.f32 %v8673, %v8692
      %v8694 = vadd.f32 %v8693, 1.0
      %v8695 = vrcp.pop %v8694
      %v8696 = vmul.f32 %v8694, %v8695
      %v8697 = vsub.f32 1.0, %v8696
      %v8698 = vmul.f32 %v8695, %v8697
      %v8699 = vadd.f32 %v8695, %v8698
      %vm8700 = vweird.f32 %v8694
      %vm8701 = vweird.f32 %v8695
      %vm8702 = vmor %vm8700, %vm8701
      %v8703 = vsel %vm8702, %v8695, %v8699
      %v8704 = vand.u32 2147483647, %v8694
      %vm8705 = vcmp.eq.f32.partialorder %v8704, 8.507059e+37
      %v8706 = vand.u32 %v8694, 2147483648
      %v8707 = vor.u32 1.1754944e-38, %v8706
      %v8708 = vsel %vm8705, %v8707, %v8703
      %v8709 = vmul.f32 %v8684, %v8708
      %v8710 = vmin.f32 %v8709, 1.0
      %v8711 = vmax.f32 %v8710, -1.0
      %v8712 = vmul.f32 %v8368, %v8368
      %v8713 = vmin.f32 16.0, %v8712
      %v8714 = vmul.f32 %v8713, 2.1237322e-06
      %v8715 = vadd.f32 %v8714, 0.00028619796
      %v8716 = vmul.f32 %v8713, %v8715
      %v8717 = vadd.f32 %v8716, 0.0036580483
      %v8718 = vmul.f32 %v8713, %v8717
      %v8719 = vadd.f32 %v8718, 0.05243302
      %v8720 = vmul.f32 %v8713, %v8719
      %v8721 = vadd.f32 %v8720, 0.18741608
      %v8722 = vmul.f32 %v8713, %v8721
      %v8723 = vadd.f32 %v8722, 1.1283791
      %v8724 = vmul.f32 %v8368, %v8723
      %v8725 = vmul.f32 %v8713, 3.8918573e-05
      %v8726 = vadd.f32 %v8725, 0.001143296
      %v8727 = vmul.f32 %v8713, %v8726
      %v8728 = vadd.f32 %v8727, 0.014752088
      %v8729 = vmul.f32 %v8713, %v8728
      %v8730 = vadd.f32 %v8729, 0.112945676
      %v8731 = vmul.f32 %v8713, %v8730
      %v8732 = vadd.f32 %v8731, 0.4994258
      %v8733 = vmul.f32 %v8713, %v8732
      %v8734 = vadd.f32 %v8733, 1.0
      %v8735 = vrcp.pop %v8734
      %v8736 = vmul.f32 %v8734, %v8735
      %v8737 = vsub.f32 1.0, %v8736
      %v8738 = vmul.f32 %v8735, %v8737
      %v8739 = vadd.f32 %v8735, %v8738
      %vm8740 = vweird.f32 %v8734
      %vm8741 = vweird.f32 %v8735
      %vm8742 = vmor %vm8740, %vm8741
      %v8743 = vsel %vm8742, %v8735, %v8739
      %v8744 = vand.u32 2147483647, %v8734
      %vm8745 = vcmp.eq.f32.partialorder %v8744, 8.507059e+37
      %v8746 = vand.u32 %v8734, 2147483648
      %v8747 = vor.u32 1.1754944e-38, %v8746
      %v8748 = vsel %vm8745, %v8747, %v8743
      %v8749 = vmul.f32 %v8724, %v8748
      %v8750 = vmin.f32 %v8749, 1.0
      %v8751 = vmax.f32 %v8750, -1.0
      %v8752 = vmul.f32 %v8369, %v8369
      %v8753 = vmin.f32 16.0, %v8752
      %v8754 = vmul.f32 %v8753, 2.1237322e-06
      %v8755 = vadd.f32 %v8754, 0.00028619796
      %v8756 = vmul.f32 %v8753, %v8755
      %v8757 = vadd.f32 %v8756, 0.0036580483
      %v8758 = vmul.f32 %v8753, %v8757
      %v8759 = vadd.f32 %v8758, 0.05243302
      %v8760 = vmul.f32 %v8753, %v8759
      %v8761 = vadd.f32 %v8760, 0.18741608
      %v8762 = vmul.f32 %v8753, %v8761
      %v8763 = vadd.f32 %v8762, 1.1283791
      %v8764 = vmul.f32 %v8369, %v8763
      %v8765 = vmul.f32 %v8753, 3.8918573e-05
      %v8766 = vadd.f32 %v8765, 0.001143296
      %v8767 = vmul.f32 %v8753, %v8766
      %v8768 = vadd.f32 %v8767, 0.014752088
      %v8769 = vmul.f32 %v8753, %v8768
      %v8770 = vadd.f32 %v8769, 0.112945676
      %v8771 = vmul.f32 %v8753, %v8770
      %v8772 = vadd.f32 %v8771, 0.4994258
      %v8773 = vmul.f32 %v8753, %v8772
      %v8774 = vadd.f32 %v8773, 1.0
      %v8775 = vrcp.pop %v8774
      %v8776 = vmul.f32 %v8774, %v8775
      %v8777 = vsub.f32 1.0, %v8776
      %v8778 = vmul.f32 %v8775, %v8777
      %v8779 = vadd.f32 %v8775, %v8778
      %vm8780 = vweird.f32 %v8774
      %vm8781 = vweird.f32 %v8775
      %vm8782 = vmor %vm8780, %vm8781
      %v8783 = vsel %vm8782, %v8775, %v8779
      %v8784 = vand.u32 2147483647, %v8774
      %vm8785 = vcmp.eq.f32.partialorder %v8784, 8.507059e+37
      %v8786 = vand.u32 %v8774, 2147483648
      %v8787 = vor.u32 1.1754944e-38, %v8786
      %v8788 = vsel %vm8785, %v8787, %v8783
      %v8789 = vmul.f32 %v8764, %v8788
      %v8790 = vmin.f32 %v8789, 1.0
      %v8791 = vmax.f32 %v8790, -1.0
      %v8792 = vmul.f32 %v8370, %v8370
      %v8793 = vmin.f32 16.0, %v8792
      %v8794 = vmul.f32 %v8793, 2.1237322e-06
      %v8795 = vadd.f32 %v8794, 0.00028619796
      %v8796 = vmul.f32 %v8793, %v8795
      %v8797 = vadd.f32 %v8796, 0.0036580483
      %v8798 = vmul.f32 %v8793, %v8797
      %v8799 = vadd.f32 %v8798, 0.05243302
      %v8800 = vmul.f32 %v8793, %v8799
      %v8801 = vadd.f32 %v8800, 0.18741608
      %v8802 = vmul.f32 %v8793, %v8801
      %v8803 = vadd.f32 %v8802, 1.1283791
      %v8804 = vmul.f32 %v8370, %v8803
      %v8805 = vmul.f32 %v8793, 3.8918573e-05
      %v8806 = vadd.f32 %v8805, 0.001143296
      %v8807 = vmul.f32 %v8793, %v8806
      %v8808 = vadd.f32 %v8807, 0.014752088
      %v8809 = vmul.f32 %v8793, %v8808
      %v8810 = vadd.f32 %v8809, 0.112945676
      %v8811 = vmul.f32 %v8793, %v8810
      %v8812 = vadd.f32 %v8811, 0.4994258
      %v8813 = vmul.f32 %v8793, %v8812
      %v8814 = vadd.f32 %v8813, 1.0
      %v8815 = vrcp.pop %v8814
      %v8816 = vmul.f32 %v8814, %v8815
      %v8817 = vsub.f32 1.0, %v8816
      %v8818 = vmul.f32 %v8815, %v8817
      %v8819 = vadd.f32 %v8815, %v8818
      %vm8820 = vweird.f32 %v8814
      %vm8821 = vweird.f32 %v8815
      %vm8822 = vmor %vm8820, %vm8821
      %v8823 = vsel %vm8822, %v8815, %v8819
      %v8824 = vand.u32 2147483647, %v8814
      %vm8825 = vcmp.eq.f32.partialorder %v8824, 8.507059e+37
      %v8826 = vand.u32 %v8814, 2147483648
      %v8827 = vor.u32 1.1754944e-38, %v8826
      %v8828 = vsel %vm8825, %v8827, %v8823
      %v8829 = vmul.f32 %v8804, %v8828
      %v8830 = vmin.f32 %v8829, 1.0
      %v8831 = vmax.f32 %v8830, -1.0
      %v8832 = vmul.f32 %v8371, %v8371
      %v8833 = vmin.f32 16.0, %v8832
      %v8834 = vmul.f32 %v8833, 2.1237322e-06
      %v8835 = vadd.f32 %v8834, 0.00028619796
      %v8836 = vmul.f32 %v8833, %v8835
      %v8837 = vadd.f32 %v8836, 0.0036580483
      %v8838 = vmul.f32 %v8833, %v8837
      %v8839 = vadd.f32 %v8838, 0.05243302
      %v8840 = vmul.f32 %v8833, %v8839
      %v8841 = vadd.f32 %v8840, 0.18741608
      %v8842 = vmul.f32 %v8833, %v8841
      %v8843 = vadd.f32 %v8842, 1.1283791
      %v8844 = vmul.f32 %v8371, %v8843
      %v8845 = vmul.f32 %v8833, 3.8918573e-05
      %v8846 = vadd.f32 %v8845, 0.001143296
      %v8847 = vmul.f32 %v8833, %v8846
      %v8848 = vadd.f32 %v8847, 0.014752088
      %v8849 = vmul.f32 %v8833, %v8848
      %v8850 = vadd.f32 %v8849, 0.112945676
      %v8851 = vmul.f32 %v8833, %v8850
      %v8852 = vadd.f32 %v8851, 0.4994258
      %v8853 = vmul.f32 %v8833, %v8852
      %v8854 = vadd.f32 %v8853, 1.0
      %v8855 = vrcp.pop %v8854
      %v8856 = vmul.f32 %v8854, %v8855
      %v8857 = vsub.f32 1.0, %v8856
      %v8858 = vmul.f32 %v8855, %v8857
      %v8859 = vadd.f32 %v8855, %v8858
      %vm8860 = vweird.f32 %v8854
      %vm8861 = vweird.f32 %v8855
      %vm8862 = vmor %vm8860, %vm8861
      %v8863 = vsel %vm8862, %v8855, %v8859
      %v8864 = vand.u32 2147483647, %v8854
      %vm8865 = vcmp.eq.f32.partialorder %v8864, 8.507059e+37
      %v8866 = vand.u32 %v8854, 2147483648
      %v8867 = vor.u32 1.1754944e-38, %v8866
      %v8868 = vsel %vm8865, %v8867, %v8863
      %v8869 = vmul.f32 %v8844, %v8868
      %v8870 = vmin.f32 %v8869, 1.0
      %v8871 = vmax.f32 %v8870, -1.0
      %v8872 = vmul.f32 %v8372, %v8372
      %v8873 = vmin.f32 16.0, %v8872
      %v8874 = vmul.f32 %v8873, 2.1237322e-06
      %v8875 = vadd.f32 %v8874, 0.00028619796
      %v8876 = vmul.f32 %v8873, %v8875
      %v8877 = vadd.f32 %v8876, 0.0036580483
      %v8878 = vmul.f32 %v8873, %v8877
      %v8879 = vadd.f32 %v8878, 0.05243302
      %v8880 = vmul.f32 %v8873, %v8879
      %v8881 = vadd.f32 %v8880, 0.18741608
      %v8882 = vmul.f32 %v8873, %v8881
      %v8883 = vadd.f32 %v8882, 1.1283791
      %v8884 = vmul.f32 %v8372, %v8883
      %v8885 = vmul.f32 %v8873, 3.8918573e-05
      %v8886 = vadd.f32 %v8885, 0.001143296
      %v8887 = vmul.f32 %v8873, %v8886
      %v8888 = vadd.f32 %v8887, 0.014752088
      %v8889 = vmul.f32 %v8873, %v8888
      %v8890 = vadd.f32 %v8889, 0.112945676
      %v8891 = vmul.f32 %v8873, %v8890
      %v8892 = vadd.f32 %v8891, 0.4994258
      %v8893 = vmul.f32 %v8873, %v8892
      %v8894 = vadd.f32 %v8893, 1.0
      %v8895 = vrcp.pop %v8894
      %v8896 = vmul.f32 %v8894, %v8895
      %v8897 = vsub.f32 1.0, %v8896
      %v8898 = vmul.f32 %v8895, %v8897
      %v8899 = vadd.f32 %v8895, %v8898
      %vm8900 = vweird.f32 %v8894
      %vm8901 = vweird.f32 %v8895
      %vm8902 = vmor %vm8900, %vm8901
      %v8903 = vsel %vm8902, %v8895, %v8899
      %v8904 = vand.u32 2147483647, %v8894
      %vm8905 = vcmp.eq.f32.partialorder %v8904, 8.507059e+37
      %v8906 = vand.u32 %v8894, 2147483648
      %v8907 = vor.u32 1.1754944e-38, %v8906
      %v8908 = vsel %vm8905, %v8907, %v8903
      %v8909 = vmul.f32 %v8884, %v8908
      %v8910 = vmin.f32 %v8909, 1.0
      %v8911 = vmax.f32 %v8910, -1.0
      %v8912 = vmul.f32 %v8373, %v8373
      %v8913 = vmin.f32 16.0, %v8912
      %v8914 = vmul.f32 %v8913, 2.1237322e-06
      %v8915 = vadd.f32 %v8914, 0.00028619796
      %v8916 = vmul.f32 %v8913, %v8915
      %v8917 = vadd.f32 %v8916, 0.0036580483
      %v8918 = vmul.f32 %v8913, %v8917
      %v8919 = vadd.f32 %v8918, 0.05243302
      %v8920 = vmul.f32 %v8913, %v8919
      %v8921 = vadd.f32 %v8920, 0.18741608
      %v8922 = vmul.f32 %v8913, %v8921
      %v8923 = vadd.f32 %v8922, 1.1283791
      %v8924 = vmul.f32 %v8373, %v8923
      %v8925 = vmul.f32 %v8913, 3.8918573e-05
      %v8926 = vadd.f32 %v8925, 0.001143296
      %v8927 = vmul.f32 %v8913, %v8926
      %v8928 = vadd.f32 %v8927, 0.014752088
      %v8929 = vmul.f32 %v8913, %v8928
      %v8930 = vadd.f32 %v8929, 0.112945676
      %v8931 = vmul.f32 %v8913, %v8930
      %v8932 = vadd.f32 %v8931, 0.4994258
      %v8933 = vmul.f32 %v8913, %v8932
      %v8934 = vadd.f32 %v8933, 1.0
      %v8935 = vrcp.pop %v8934
      %v8936 = vmul.f32 %v8934, %v8935
      %v8937 = vsub.f32 1.0, %v8936
      %v8938 = vmul.f32 %v8935, %v8937
      %v8939 = vadd.f32 %v8935, %v8938
      %vm8940 = vweird.f32 %v8934
      %vm8941 = vweird.f32 %v8935
      %vm8942 = vmor %vm8940, %vm8941
      %v8943 = vsel %vm8942, %v8935, %v8939
      %v8944 = vand.u32 2147483647, %v8934
      %vm8945 = vcmp.eq.f32.partialorder %v8944, 8.507059e+37
      %v8946 = vand.u32 %v8934, 2147483648
      %v8947 = vor.u32 1.1754944e-38, %v8946
      %v8948 = vsel %vm8945, %v8947, %v8943
      %v8949 = vmul.f32 %v8924, %v8948
      %v8950 = vmin.f32 %v8949, 1.0
      %v8951 = vmax.f32 %v8950, -1.0
      %v8952 = vmul.f32 %v8374, %v8374
      %v8953 = vmin.f32 16.0, %v8952
      %v8954 = vmul.f32 %v8953, 2.1237322e-06
      %v8955 = vadd.f32 %v8954, 0.00028619796
      %v8956 = vmul.f32 %v8953, %v8955
      %v8957 = vadd.f32 %v8956, 0.0036580483
      %v8958 = vmul.f32 %v8953, %v8957
      %v8959 = vadd.f32 %v8958, 0.05243302
      %v8960 = vmul.f32 %v8953, %v8959
      %v8961 = vadd.f32 %v8960, 0.18741608
      %v8962 = vmul.f32 %v8953, %v8961
      %v8963 = vadd.f32 %v8962, 1.1283791
      %v8964 = vmul.f32 %v8374, %v8963
      %v8965 = vmul.f32 %v8953, 3.8918573e-05
      %v8966 = vadd.f32 %v8965, 0.001143296
      %v8967 = vmul.f32 %v8953, %v8966
      %v8968 = vadd.f32 %v8967, 0.014752088
      %v8969 = vmul.f32 %v8953, %v8968
      %v8970 = vadd.f32 %v8969, 0.112945676
      %v8971 = vmul.f32 %v8953, %v8970
      %v8972 = vadd.f32 %v8971, 0.4994258
      %v8973 = vmul.f32 %v8953, %v8972
      %v8974 = vadd.f32 %v8973, 1.0
      %v8975 = vrcp.pop %v8974
      %v8976 = vmul.f32 %v8974, %v8975
      %v8977 = vsub.f32 1.0, %v8976
      %v8978 = vmul.f32 %v8975, %v8977
      %v8979 = vadd.f32 %v8975, %v8978
      %vm8980 = vweird.f32 %v8974
      %vm8981 = vweird.f32 %v8975
      %vm8982 = vmor %vm8980, %vm8981
      %v8983 = vsel %vm8982, %v8975, %v8979
      %v8984 = vand.u32 2147483647, %v8974
      %vm8985 = vcmp.eq.f32.partialorder %v8984, 8.507059e+37
      %v8986 = vand.u32 %v8974, 2147483648
      %v8987 = vor.u32 1.1754944e-38, %v8986
      %v8988 = vsel %vm8985, %v8987, %v8983
      %v8989 = vmul.f32 %v8964, %v8988
      %v8990 = vmin.f32 %v8989, 1.0
      %v8991 = vmax.f32 %v8990, -1.0
      %v8992 = vmul.f32 %v8375, %v8375
      %v8993 = vmin.f32 16.0, %v8992
      %v8994 = vmul.f32 %v8993, 2.1237322e-06
      %v8995 = vadd.f32 %v8994, 0.00028619796
      %v8996 = vmul.f32 %v8993, %v8995
      %v8997 = vadd.f32 %v8996, 0.0036580483
      %v8998 = vmul.f32 %v8993, %v8997
      %v8999 = vadd.f32 %v8998, 0.05243302
      %v9000 = vmul.f32 %v8993, %v8999
      %v9001 = vadd.f32 %v9000, 0.18741608
      %v9002 = vmul.f32 %v8993, %v9001
      %v9003 = vadd.f32 %v9002, 1.1283791
      %v9004 = vmul.f32 %v8375, %v9003
      %v9005 = vmul.f32 %v8993, 3.8918573e-05
      %v9006 = vadd.f32 %v9005, 0.001143296
      %v9007 = vmul.f32 %v8993, %v9006
      %v9008 = vadd.f32 %v9007, 0.014752088
      %v9009 = vmul.f32 %v8993, %v9008
      %v9010 = vadd.f32 %v9009, 0.112945676
      %v9011 = vmul.f32 %v8993, %v9010
      %v9012 = vadd.f32 %v9011, 0.4994258
      %v9013 = vmul.f32 %v8993, %v9012
      %v9014 = vadd.f32 %v9013, 1.0
      %v9015 = vrcp.pop %v9014
      %v9016 = vmul.f32 %v9014, %v9015
      %v9017 = vsub.f32 1.0, %v9016
      %v9018 = vmul.f32 %v9015, %v9017
      %v9019 = vadd.f32 %v9015, %v9018
      %vm9020 = vweird.f32 %v9014
      %vm9021 = vweird.f32 %v9015
      %vm9022 = vmor %vm9020, %vm9021
      %v9023 = vsel %vm9022, %v9015, %v9019
      %v9024 = vand.u32 2147483647, %v9014
      %vm9025 = vcmp.eq.f32.partialorder %v9024, 8.507059e+37
      %v9026 = vand.u32 %v9014, 2147483648
      %v9027 = vor.u32 1.1754944e-38, %v9026
      %v9028 = vsel %vm9025, %v9027, %v9023
      %v9029 = vmul.f32 %v9004, %v9028
      %v9030 = vmin.f32 %v9029, 1.0
      %v9031 = vmax.f32 %v9030, -1.0
      %v9032 = vmul.f32 %v8376, %v8376
      %v9033 = vmin.f32 16.0, %v9032
      %v9034 = vmul.f32 %v9033, 2.1237322e-06
      %v9035 = vadd.f32 %v9034, 0.00028619796
      %v9036 = vmul.f32 %v9033, %v9035
      %v9037 = vadd.f32 %v9036, 0.0036580483
      %v9038 = vmul.f32 %v9033, %v9037
      %v9039 = vadd.f32 %v9038, 0.05243302
      %v9040 = vmul.f32 %v9033, %v9039
      %v9041 = vadd.f32 %v9040, 0.18741608
      %v9042 = vmul.f32 %v9033, %v9041
      %v9043 = vadd.f32 %v9042, 1.1283791
      %v9044 = vmul.f32 %v8376, %v9043
      %v9045 = vmul.f32 %v9033, 3.8918573e-05
      %v9046 = vadd.f32 %v9045, 0.001143296
      %v9047 = vmul.f32 %v9033, %v9046
      %v9048 = vadd.f32 %v9047, 0.014752088
      %v9049 = vmul.f32 %v9033, %v9048
      %v9050 = vadd.f32 %v9049, 0.112945676
      %v9051 = vmul.f32 %v9033, %v9050
      %v9052 = vadd.f32 %v9051, 0.4994258
      %v9053 = vmul.f32 %v9033, %v9052
      %v9054 = vadd.f32 %v9053, 1.0
      %v9055 = vrcp.pop %v9054
      %v9056 = vmul.f32 %v9054, %v9055
      %v9057 = vsub.f32 1.0, %v9056
      %v9058 = vmul.f32 %v9055, %v9057
      %v9059 = vadd.f32 %v9055, %v9058
      %vm9060 = vweird.f32 %v9054
      %vm9061 = vweird.f32 %v9055
      %vm9062 = vmor %vm9060, %vm9061
      %v9063 = vsel %vm9062, %v9055, %v9059
      %v9064 = vand.u32 2147483647, %v9054
      %vm9065 = vcmp.eq.f32.partialorder %v9064, 8.507059e+37
      %v9066 = vand.u32 %v9054, 2147483648
      %v9067 = vor.u32 1.1754944e-38, %v9066
      %v9068 = vsel %vm9065, %v9067, %v9063
      %v9069 = vmul.f32 %v9044, %v9068
      %v9070 = vmin.f32 %v9069, 1.0
      %v9071 = vmax.f32 %v9070, -1.0
      %v9072 = vmul.f32 %v8377, %v8377
      %v9073 = vmin.f32 16.0, %v9072
      %v9074 = vmul.f32 %v9073, 2.1237322e-06
      %v9075 = vadd.f32 %v9074, 0.00028619796
      %v9076 = vmul.f32 %v9073, %v9075
      %v9077 = vadd.f32 %v9076, 0.0036580483
      %v9078 = vmul.f32 %v9073, %v9077
      %v9079 = vadd.f32 %v9078, 0.05243302
      %v9080 = vmul.f32 %v9073, %v9079
      %v9081 = vadd.f32 %v9080, 0.18741608
      %v9082 = vmul.f32 %v9073, %v9081
      %v9083 = vadd.f32 %v9082, 1.1283791
      %v9084 = vmul.f32 %v8377, %v9083
      %v9085 = vmul.f32 %v9073, 3.8918573e-05
      %v9086 = vadd.f32 %v9085, 0.001143296
      %v9087 = vmul.f32 %v9073, %v9086
      %v9088 = vadd.f32 %v9087, 0.014752088
      %v9089 = vmul.f32 %v9073, %v9088
      %v9090 = vadd.f32 %v9089, 0.112945676
      %v9091 = vmul.f32 %v9073, %v9090
      %v9092 = vadd.f32 %v9091, 0.4994258
      %v9093 = vmul.f32 %v9073, %v9092
      %v9094 = vadd.f32 %v9093, 1.0
      %v9095 = vrcp.pop %v9094
      %v9096 = vmul.f32 %v9094, %v9095
      %v9097 = vsub.f32 1.0, %v9096
      %v9098 = vmul.f32 %v9095, %v9097
      %v9099 = vadd.f32 %v9095, %v9098
      %vm9100 = vweird.f32 %v9094
      %vm9101 = vweird.f32 %v9095
      %vm9102 = vmor %vm9100, %vm9101
      %v9103 = vsel %vm9102, %v9095, %v9099
      %v9104 = vand.u32 2147483647, %v9094
      %vm9105 = vcmp.eq.f32.partialorder %v9104, 8.507059e+37
      %v9106 = vand.u32 %v9094, 2147483648
      %v9107 = vor.u32 1.1754944e-38, %v9106
      %v9108 = vsel %vm9105, %v9107, %v9103
      %v9109 = vmul.f32 %v9084, %v9108
      %v9110 = vmin.f32 %v9109, 1.0
      %v9111 = vmax.f32 %v9110, -1.0
      %v9112 = vmul.f32 %v8378, %v8378
      %v9113 = vmin.f32 16.0, %v9112
      %v9114 = vmul.f32 %v9113, 2.1237322e-06
      %v9115 = vadd.f32 %v9114, 0.00028619796
      %v9116 = vmul.f32 %v9113, %v9115
      %v9117 = vadd.f32 %v9116, 0.0036580483
      %v9118 = vmul.f32 %v9113, %v9117
      %v9119 = vadd.f32 %v9118, 0.05243302
      %v9120 = vmul.f32 %v9113, %v9119
      %v9121 = vadd.f32 %v9120, 0.18741608
      %v9122 = vmul.f32 %v9113, %v9121
      %v9123 = vadd.f32 %v9122, 1.1283791
      %v9124 = vmul.f32 %v8378, %v9123
      %v9125 = vmul.f32 %v9113, 3.8918573e-05
      %v9126 = vadd.f32 %v9125, 0.001143296
      %v9127 = vmul.f32 %v9113, %v9126
      %v9128 = vadd.f32 %v9127, 0.014752088
      %v9129 = vmul.f32 %v9113, %v9128
      %v9130 = vadd.f32 %v9129, 0.112945676
      %v9131 = vmul.f32 %v9113, %v9130
      %v9132 = vadd.f32 %v9131, 0.4994258
      %v9133 = vmul.f32 %v9113, %v9132
      %v9134 = vadd.f32 %v9133, 1.0
      %v9135 = vrcp.pop %v9134
      %v9136 = vmul.f32 %v9134, %v9135
      %v9137 = vsub.f32 1.0, %v9136
      %v9138 = vmul.f32 %v9135, %v9137
      %v9139 = vadd.f32 %v9135, %v9138
      %vm9140 = vweird.f32 %v9134
      %vm9141 = vweird.f32 %v9135
      %vm9142 = vmor %vm9140, %vm9141
      %v9143 = vsel %vm9142, %v9135, %v9139
      %v9144 = vand.u32 2147483647, %v9134
      %vm9145 = vcmp.eq.f32.partialorder %v9144, 8.507059e+37
      %v9146 = vand.u32 %v9134, 2147483648
      %v9147 = vor.u32 1.1754944e-38, %v9146
      %v9148 = vsel %vm9145, %v9147, %v9143
      %v9149 = vmul.f32 %v9124, %v9148
      %v9150 = vmin.f32 %v9149, 1.0
      %v9151 = vmax.f32 %v9150, -1.0
      %v9152 = vmul.f32 %v8379, %v8379
      %v9153 = vmin.f32 16.0, %v9152
      %v9154 = vmul.f32 %v9153, 2.1237322e-06
      %v9155 = vadd.f32 %v9154, 0.00028619796
      %v9156 = vmul.f32 %v9153, %v9155
      %v9157 = vadd.f32 %v9156, 0.0036580483
      %v9158 = vmul.f32 %v9153, %v9157
      %v9159 = vadd.f32 %v9158, 0.05243302
      %v9160 = vmul.f32 %v9153, %v9159
      %v9161 = vadd.f32 %v9160, 0.18741608
      %v9162 = vmul.f32 %v9153, %v9161
      %v9163 = vadd.f32 %v9162, 1.1283791
      %v9164 = vmul.f32 %v8379, %v9163
      %v9165 = vmul.f32 %v9153, 3.8918573e-05
      %v9166 = vadd.f32 %v9165, 0.001143296
      %v9167 = vmul.f32 %v9153, %v9166
      %v9168 = vadd.f32 %v9167, 0.014752088
      %v9169 = vmul.f32 %v9153, %v9168
      %v9170 = vadd.f32 %v9169, 0.112945676
      %v9171 = vmul.f32 %v9153, %v9170
      %v9172 = vadd.f32 %v9171, 0.4994258
      %v9173 = vmul.f32 %v9153, %v9172
      %v9174 = vadd.f32 %v9173, 1.0
      %v9175 = vrcp.pop %v9174
      %v9176 = vmul.f32 %v9174, %v9175
      %v9177 = vsub.f32 1.0, %v9176
      %v9178 = vmul.f32 %v9175, %v9177
      %v9179 = vadd.f32 %v9175, %v9178
      %vm9180 = vweird.f32 %v9174
      %vm9181 = vweird.f32 %v9175
      %vm9182 = vmor %vm9180, %vm9181
      %v9183 = vsel %vm9182, %v9175, %v9179
      %v9184 = vand.u32 2147483647, %v9174
      %vm9185 = vcmp.eq.f32.partialorder %v9184, 8.507059e+37
      %v9186 = vand.u32 %v9174, 2147483648
      %v9187 = vor.u32 1.1754944e-38, %v9186
      %v9188 = vsel %vm9185, %v9187, %v9183
      %v9189 = vmul.f32 %v9164, %v9188
      %v9190 = vmin.f32 %v9189, 1.0
      %v9191 = vmax.f32 %v9190, -1.0
      %v9192 = vmul.f32 %v8380, %v8380
      %v9193 = vmin.f32 16.0, %v9192
      %v9194 = vmul.f32 %v9193, 2.1237322e-06
      %v9195 = vadd.f32 %v9194, 0.00028619796
      %v9196 = vmul.f32 %v9193, %v9195
      %v9197 = vadd.f32 %v9196, 0.0036580483
      %v9198 = vmul.f32 %v9193, %v9197
      %v9199 = vadd.f32 %v9198, 0.05243302
      %v9200 = vmul.f32 %v9193, %v9199
      %v9201 = vadd.f32 %v9200, 0.18741608
      %v9202 = vmul.f32 %v9193, %v9201
      %v9203 = vadd.f32 %v9202, 1.1283791
      %v9204 = vmul.f32 %v8380, %v9203
      %v9205 = vmul.f32 %v9193, 3.8918573e-05
      %v9206 = vadd.f32 %v9205, 0.001143296
      %v9207 = vmul.f32 %v9193, %v9206
      %v9208 = vadd.f32 %v9207, 0.014752088
      %v9209 = vmul.f32 %v9193, %v9208
      %v9210 = vadd.f32 %v9209, 0.112945676
      %v9211 = vmul.f32 %v9193, %v9210
      %v9212 = vadd.f32 %v9211, 0.4994258
      %v9213 = vmul.f32 %v9193, %v9212
      %v9214 = vadd.f32 %v9213, 1.0
      %v9215 = vrcp.pop %v9214
      %v9216 = vmul.f32 %v9214, %v9215
      %v9217 = vsub.f32 1.0, %v9216
      %v9218 = vmul.f32 %v9215, %v9217
      %v9219 = vadd.f32 %v9215, %v9218
      %vm9220 = vweird.f32 %v9214
      %vm9221 = vweird.f32 %v9215
      %vm9222 = vmor %vm9220, %vm9221
      %v9223 = vsel %vm9222, %v9215, %v9219
      %v9224 = vand.u32 2147483647, %v9214
      %vm9225 = vcmp.eq.f32.partialorder %v9224, 8.507059e+37
      %v9226 = vand.u32 %v9214, 2147483648
      %v9227 = vor.u32 1.1754944e-38, %v9226
      %v9228 = vsel %vm9225, %v9227, %v9223
      %v9229 = vmul.f32 %v9204, %v9228
      %v9230 = vmin.f32 %v9229, 1.0
      %v9231 = vmax.f32 %v9230, -1.0
      %v9232 = vmul.f32 %v8381, %v8381
      %v9233 = vmin.f32 16.0, %v9232
      %v9234 = vmul.f32 %v9233, 2.1237322e-06
      %v9235 = vadd.f32 %v9234, 0.00028619796
      %v9236 = vmul.f32 %v9233, %v9235
      %v9237 = vadd.f32 %v9236, 0.0036580483
      %v9238 = vmul.f32 %v9233, %v9237
      %v9239 = vadd.f32 %v9238, 0.05243302
      %v9240 = vmul.f32 %v9233, %v9239
      %v9241 = vadd.f32 %v9240, 0.18741608
      %v9242 = vmul.f32 %v9233, %v9241
      %v9243 = vadd.f32 %v9242, 1.1283791
      %v9244 = vmul.f32 %v8381, %v9243
      %v9245 = vmul.f32 %v9233, 3.8918573e-05
      %v9246 = vadd.f32 %v9245, 0.001143296
      %v9247 = vmul.f32 %v9233, %v9246
      %v9248 = vadd.f32 %v9247, 0.014752088
      %v9249 = vmul.f32 %v9233, %v9248
      %v9250 = vadd.f32 %v9249, 0.112945676
      %v9251 = vmul.f32 %v9233, %v9250
      %v9252 = vadd.f32 %v9251, 0.4994258
      %v9253 = vmul.f32 %v9233, %v9252
      %v9254 = vadd.f32 %v9253, 1.0
      %v9255 = vrcp.pop %v9254
      %v9256 = vmul.f32 %v9254, %v9255
      %v9257 = vsub.f32 1.0, %v9256
      %v9258 = vmul.f32 %v9255, %v9257
      %v9259 = vadd.f32 %v9255, %v9258
      %vm9260 = vweird.f32 %v9254
      %vm9261 = vweird.f32 %v9255
      %vm9262 = vmor %vm9260, %vm9261
      %v9263 = vsel %vm9262, %v9255, %v9259
      %v9264 = vand.u32 2147483647, %v9254
      %vm9265 = vcmp.eq.f32.partialorder %v9264, 8.507059e+37
      %v9266 = vand.u32 %v9254, 2147483648
      %v9267 = vor.u32 1.1754944e-38, %v9266
      %v9268 = vsel %vm9265, %v9267, %v9263
      %v9269 = vmul.f32 %v9244, %v9268
      %v9270 = vmin.f32 %v9269, 1.0
      %v9271 = vmax.f32 %v9270, -1.0
      %v9272 = vmul.f32 %v8382, %v8382
      %v9273 = vmin.f32 16.0, %v9272
      %v9274 = vmul.f32 %v9273, 2.1237322e-06
      %v9275 = vadd.f32 %v9274, 0.00028619796
      %v9276 = vmul.f32 %v9273, %v9275
      %v9277 = vadd.f32 %v9276, 0.0036580483
      %v9278 = vmul.f32 %v9273, %v9277
      %v9279 = vadd.f32 %v9278, 0.05243302
      %v9280 = vmul.f32 %v9273, %v9279
      %v9281 = vadd.f32 %v9280, 0.18741608
      %v9282 = vmul.f32 %v9273, %v9281
      %v9283 = vadd.f32 %v9282, 1.1283791
      %v9284 = vmul.f32 %v8382, %v9283
      %v9285 = vmul.f32 %v9273, 3.8918573e-05
      %v9286 = vadd.f32 %v9285, 0.001143296
      %v9287 = vmul.f32 %v9273, %v9286
      %v9288 = vadd.f32 %v9287, 0.014752088
      %v9289 = vmul.f32 %v9273, %v9288
      %v9290 = vadd.f32 %v9289, 0.112945676
      %v9291 = vmul.f32 %v9273, %v9290
      %v9292 = vadd.f32 %v9291, 0.4994258
      %v9293 = vmul.f32 %v9273, %v9292
      %v9294 = vadd.f32 %v9293, 1.0
      %v9295 = vrcp.pop %v9294
      %v9296 = vmul.f32 %v9294, %v9295
      %v9297 = vsub.f32 1.0, %v9296
      %v9298 = vmul.f32 %v9295, %v9297
      %v9299 = vadd.f32 %v9295, %v9298
      %vm9300 = vweird.f32 %v9294
      %vm9301 = vweird.f32 %v9295
      %vm9302 = vmor %vm9300, %vm9301
      %v9303 = vsel %vm9302, %v9295, %v9299
      %v9304 = vand.u32 2147483647, %v9294
      %vm9305 = vcmp.eq.f32.partialorder %v9304, 8.507059e+37
      %v9306 = vand.u32 %v9294, 2147483648
      %v9307 = vor.u32 1.1754944e-38, %v9306
      %v9308 = vsel %vm9305, %v9307, %v9303
      %v9309 = vmul.f32 %v9284, %v9308
      %v9310 = vmin.f32 %v9309, 1.0
      %v9311 = vmax.f32 %v9310, -1.0
      %v9312 = vmul.f32 %v8383, %v8383
      %v9313 = vmin.f32 16.0, %v9312
      %v9314 = vmul.f32 %v9313, 2.1237322e-06
      %v9315 = vadd.f32 %v9314, 0.00028619796
      %v9316 = vmul.f32 %v9313, %v9315
      %v9317 = vadd.f32 %v9316, 0.0036580483
      %v9318 = vmul.f32 %v9313, %v9317
      %v9319 = vadd.f32 %v9318, 0.05243302
      %v9320 = vmul.f32 %v9313, %v9319
      %v9321 = vadd.f32 %v9320, 0.18741608
      %v9322 = vmul.f32 %v9313, %v9321
      %v9323 = vadd.f32 %v9322, 1.1283791
      %v9324 = vmul.f32 %v8383, %v9323
      %v9325 = vmul.f32 %v9313, 3.8918573e-05
      %v9326 = vadd.f32 %v9325, 0.001143296
      %v9327 = vmul.f32 %v9313, %v9326
      %v9328 = vadd.f32 %v9327, 0.014752088
      %v9329 = vmul.f32 %v9313, %v9328
      %v9330 = vadd.f32 %v9329, 0.112945676
      %v9331 = vmul.f32 %v9313, %v9330
      %v9332 = vadd.f32 %v9331, 0.4994258
      %v9333 = vmul.f32 %v9313, %v9332
      %v9334 = vadd.f32 %v9333, 1.0
      %v9335 = vrcp.pop %v9334
      %v9336 = vmul.f32 %v9334, %v9335
      %v9337 = vsub.f32 1.0, %v9336
      %v9338 = vmul.f32 %v9335, %v9337
      %v9339 = vadd.f32 %v9335, %v9338
      %vm9340 = vweird.f32 %v9334
      %vm9341 = vweird.f32 %v9335
      %vm9342 = vmor %vm9340, %vm9341
      %v9343 = vsel %vm9342, %v9335, %v9339
      %v9344 = vand.u32 2147483647, %v9334
      %vm9345 = vcmp.eq.f32.partialorder %v9344, 8.507059e+37
      %v9346 = vand.u32 %v9334, 2147483648
      %v9347 = vor.u32 1.1754944e-38, %v9346
      %v9348 = vsel %vm9345, %v9347, %v9343
      %v9349 = vmul.f32 %v9324, %v9348
      %v9350 = vmin.f32 %v9349, 1.0
      %v9351 = vmax.f32 %v9350, -1.0
      %v9352 = vmul.f32 %v8384, %v8384
      %v9353 = vmin.f32 16.0, %v9352
      %v9354 = vmul.f32 %v9353, 2.1237322e-06
      %v9355 = vadd.f32 %v9354, 0.00028619796
      %v9356 = vmul.f32 %v9353, %v9355
      %v9357 = vadd.f32 %v9356, 0.0036580483
      %v9358 = vmul.f32 %v9353, %v9357
      %v9359 = vadd.f32 %v9358, 0.05243302
      %v9360 = vmul.f32 %v9353, %v9359
      %v9361 = vadd.f32 %v9360, 0.18741608
      %v9362 = vmul.f32 %v9353, %v9361
      %v9363 = vadd.f32 %v9362, 1.1283791
      %v9364 = vmul.f32 %v8384, %v9363
      %v9365 = vmul.f32 %v9353, 3.8918573e-05
      %v9366 = vadd.f32 %v9365, 0.001143296
      %v9367 = vmul.f32 %v9353, %v9366
      %v9368 = vadd.f32 %v9367, 0.014752088
      %v9369 = vmul.f32 %v9353, %v9368
      %v9370 = vadd.f32 %v9369, 0.112945676
      %v9371 = vmul.f32 %v9353, %v9370
      %v9372 = vadd.f32 %v9371, 0.4994258
      %v9373 = vmul.f32 %v9353, %v9372
      %v9374 = vadd.f32 %v9373, 1.0
      %v9375 = vrcp.pop %v9374
      %v9376 = vmul.f32 %v9374, %v9375
      %v9377 = vsub.f32 1.0, %v9376
      %v9378 = vmul.f32 %v9375, %v9377
      %v9379 = vadd.f32 %v9375, %v9378
      %vm9380 = vweird.f32 %v9374
      %vm9381 = vweird.f32 %v9375
      %vm9382 = vmor %vm9380, %vm9381
      %v9383 = vsel %vm9382, %v9375, %v9379
      %v9384 = vand.u32 2147483647, %v9374
      %vm9385 = vcmp.eq.f32.partialorder %v9384, 8.507059e+37
      %v9386 = vand.u32 %v9374, 2147483648
      %v9387 = vor.u32 1.1754944e-38, %v9386
      %v9388 = vsel %vm9385, %v9387, %v9383
      %v9389 = vmul.f32 %v9364, %v9388
      %v9390 = vmin.f32 %v9389, 1.0
      %v9391 = vmax.f32 %v9390, -1.0
      %v9392 = vmul.f32 %v8385, %v8385
      %v9393 = vmin.f32 16.0, %v9392
      %v9394 = vmul.f32 %v9393, 2.1237322e-06
      %v9395 = vadd.f32 %v9394, 0.00028619796
      %v9396 = vmul.f32 %v9393, %v9395
      %v9397 = vadd.f32 %v9396, 0.0036580483
      %v9398 = vmul.f32 %v9393, %v9397
      %v9399 = vadd.f32 %v9398, 0.05243302
      %v9400 = vmul.f32 %v9393, %v9399
      %v9401 = vadd.f32 %v9400, 0.18741608
      %v9402 = vmul.f32 %v9393, %v9401
      %v9403 = vadd.f32 %v9402, 1.1283791
      %v9404 = vmul.f32 %v8385, %v9403
      %v9405 = vmul.f32 %v9393, 3.8918573e-05
      %v9406 = vadd.f32 %v9405, 0.001143296
      %v9407 = vmul.f32 %v9393, %v9406
      %v9408 = vadd.f32 %v9407, 0.014752088
      %v9409 = vmul.f32 %v9393, %v9408
      %v9410 = vadd.f32 %v9409, 0.112945676
      %v9411 = vmul.f32 %v9393, %v9410
      %v9412 = vadd.f32 %v9411, 0.4994258
      %v9413 = vmul.f32 %v9393, %v9412
      %v9414 = vadd.f32 %v9413, 1.0
      %v9415 = vrcp.pop %v9414
      %v9416 = vmul.f32 %v9414, %v9415
      %v9417 = vsub.f32 1.0, %v9416
      %v9418 = vmul.f32 %v9415, %v9417
      %v9419 = vadd.f32 %v9415, %v9418
      %vm9420 = vweird.f32 %v9414
      %vm9421 = vweird.f32 %v9415
      %vm9422 = vmor %vm9420, %vm9421
      %v9423 = vsel %vm9422, %v9415, %v9419
      %v9424 = vand.u32 2147483647, %v9414
      %vm9425 = vcmp.eq.f32.partialorder %v9424, 8.507059e+37
      %v9426 = vand.u32 %v9414, 2147483648
      %v9427 = vor.u32 1.1754944e-38, %v9426
      %v9428 = vsel %vm9425, %v9427, %v9423
      %v9429 = vmul.f32 %v9404, %v9428
      %v9430 = vmin.f32 %v9429, 1.0
      %v9431 = vmax.f32 %v9430, -1.0
      %v9432 = vmul.f32 %v8386, %v8386
      %v9433 = vmin.f32 16.0, %v9432
      %v9434 = vmul.f32 %v9433, 2.1237322e-06
      %v9435 = vadd.f32 %v9434, 0.00028619796
      %v9436 = vmul.f32 %v9433, %v9435
      %v9437 = vadd.f32 %v9436, 0.0036580483
      %v9438 = vmul.f32 %v9433, %v9437
      %v9439 = vadd.f32 %v9438, 0.05243302
      %v9440 = vmul.f32 %v9433, %v9439
      %v9441 = vadd.f32 %v9440, 0.18741608
      %v9442 = vmul.f32 %v9433, %v9441
      %v9443 = vadd.f32 %v9442, 1.1283791
      %v9444 = vmul.f32 %v8386, %v9443
      %v9445 = vmul.f32 %v9433, 3.8918573e-05
      %v9446 = vadd.f32 %v9445, 0.001143296
      %v9447 = vmul.f32 %v9433, %v9446
      %v9448 = vadd.f32 %v9447, 0.014752088
      %v9449 = vmul.f32 %v9433, %v9448
      %v9450 = vadd.f32 %v9449, 0.112945676
      %v9451 = vmul.f32 %v9433, %v9450
      %v9452 = vadd.f32 %v9451, 0.4994258
      %v9453 = vmul.f32 %v9433, %v9452
      %v9454 = vadd.f32 %v9453, 1.0
      %v9455 = vrcp.pop %v9454
      %v9456 = vmul.f32 %v9454, %v9455
      %v9457 = vsub.f32 1.0, %v9456
      %v9458 = vmul.f32 %v9455, %v9457
      %v9459 = vadd.f32 %v9455, %v9458
      %vm9460 = vweird.f32 %v9454
      %vm9461 = vweird.f32 %v9455
      %vm9462 = vmor %vm9460, %vm9461
      %v9463 = vsel %vm9462, %v9455, %v9459
      %v9464 = vand.u32 2147483647, %v9454
      %vm9465 = vcmp.eq.f32.partialorder %v9464, 8.507059e+37
      %v9466 = vand.u32 %v9454, 2147483648
      %v9467 = vor.u32 1.1754944e-38, %v9466
      %v9468 = vsel %vm9465, %v9467, %v9463
      %v9469 = vmul.f32 %v9444, %v9468
      %v9470 = vmin.f32 %v9469, 1.0
      %v9471 = vmax.f32 %v9470, -1.0
      %v9472 = vmul.f32 %v8387, %v8387
      %v9473 = vmin.f32 16.0, %v9472
      %v9474 = vmul.f32 %v9473, 2.1237322e-06
      %v9475 = vadd.f32 %v9474, 0.00028619796
      %v9476 = vmul.f32 %v9473, %v9475
      %v9477 = vadd.f32 %v9476, 0.0036580483
      %v9478 = vmul.f32 %v9473, %v9477
      %v9479 = vadd.f32 %v9478, 0.05243302
      %v9480 = vmul.f32 %v9473, %v9479
      %v9481 = vadd.f32 %v9480, 0.18741608
      %v9482 = vmul.f32 %v9473, %v9481
      %v9483 = vadd.f32 %v9482, 1.1283791
      %v9484 = vmul.f32 %v8387, %v9483
      %v9485 = vmul.f32 %v9473, 3.8918573e-05
      %v9486 = vadd.f32 %v9485, 0.001143296
      %v9487 = vmul.f32 %v9473, %v9486
      %v9488 = vadd.f32 %v9487, 0.014752088
      %v9489 = vmul.f32 %v9473, %v9488
      %v9490 = vadd.f32 %v9489, 0.112945676
      %v9491 = vmul.f32 %v9473, %v9490
      %v9492 = vadd.f32 %v9491, 0.4994258
      %v9493 = vmul.f32 %v9473, %v9492
      %v9494 = vadd.f32 %v9493, 1.0
      %v9495 = vrcp.pop %v9494
      %v9496 = vmul.f32 %v9494, %v9495
      %v9497 = vsub.f32 1.0, %v9496
      %v9498 = vmul.f32 %v9495, %v9497
      %v9499 = vadd.f32 %v9495, %v9498
      %vm9500 = vweird.f32 %v9494
      %vm9501 = vweird.f32 %v9495
      %vm9502 = vmor %vm9500, %vm9501
      %v9503 = vsel %vm9502, %v9495, %v9499
      %v9504 = vand.u32 2147483647, %v9494
      %vm9505 = vcmp.eq.f32.partialorder %v9504, 8.507059e+37
      %v9506 = vand.u32 %v9494, 2147483648
      %v9507 = vor.u32 1.1754944e-38, %v9506
      %v9508 = vsel %vm9505, %v9507, %v9503
      %v9509 = vmul.f32 %v9484, %v9508
      %v9510 = vmin.f32 %v9509, 1.0
      %v9511 = vmax.f32 %v9510, -1.0
      %v9512 = vmul.f32 %v8388, %v8388
      %v9513 = vmin.f32 16.0, %v9512
      %v9514 = vmul.f32 %v9513, 2.1237322e-06
      %v9515 = vadd.f32 %v9514, 0.00028619796
      %v9516 = vmul.f32 %v9513, %v9515
      %v9517 = vadd.f32 %v9516, 0.0036580483
      %v9518 = vmul.f32 %v9513, %v9517
      %v9519 = vadd.f32 %v9518, 0.05243302
      %v9520 = vmul.f32 %v9513, %v9519
      %v9521 = vadd.f32 %v9520, 0.18741608
      %v9522 = vmul.f32 %v9513, %v9521
      %v9523 = vadd.f32 %v9522, 1.1283791
      %v9524 = vmul.f32 %v8388, %v9523
      %v9525 = vmul.f32 %v9513, 3.8918573e-05
      %v9526 = vadd.f32 %v9525, 0.001143296
      %v9527 = vmul.f32 %v9513, %v9526
      %v9528 = vadd.f32 %v9527, 0.014752088
      %v9529 = vmul.f32 %v9513, %v9528
      %v9530 = vadd.f32 %v9529, 0.112945676
      %v9531 = vmul.f32 %v9513, %v9530
      %v9532 = vadd.f32 %v9531, 0.4994258
      %v9533 = vmul.f32 %v9513, %v9532
      %v9534 = vadd.f32 %v9533, 1.0
      %v9535 = vrcp.pop %v9534
      %v9536 = vmul.f32 %v9534, %v9535
      %v9537 = vsub.f32 1.0, %v9536
      %v9538 = vmul.f32 %v9535, %v9537
      %v9539 = vadd.f32 %v9535, %v9538
      %vm9540 = vweird.f32 %v9534
      %vm9541 = vweird.f32 %v9535
      %vm9542 = vmor %vm9540, %vm9541
      %v9543 = vsel %vm9542, %v9535, %v9539
      %v9544 = vand.u32 2147483647, %v9534
      %vm9545 = vcmp.eq.f32.partialorder %v9544, 8.507059e+37
      %v9546 = vand.u32 %v9534, 2147483648
      %v9547 = vor.u32 1.1754944e-38, %v9546
      %v9548 = vsel %vm9545, %v9547, %v9543
      %v9549 = vmul.f32 %v9524, %v9548
      %v9550 = vmin.f32 %v9549, 1.0
      %v9551 = vmax.f32 %v9550, -1.0
      %v9552 = vmul.f32 %v8389, %v8389
      %v9553 = vmin.f32 16.0, %v9552
      %v9554 = vmul.f32 %v9553, 2.1237322e-06
      %v9555 = vadd.f32 %v9554, 0.00028619796
      %v9556 = vmul.f32 %v9553, %v9555
      %v9557 = vadd.f32 %v9556, 0.0036580483
      %v9558 = vmul.f32 %v9553, %v9557
      %v9559 = vadd.f32 %v9558, 0.05243302
      %v9560 = vmul.f32 %v9553, %v9559
      %v9561 = vadd.f32 %v9560, 0.18741608
      %v9562 = vmul.f32 %v9553, %v9561
      %v9563 = vadd.f32 %v9562, 1.1283791
      %v9564 = vmul.f32 %v8389, %v9563
      %v9565 = vmul.f32 %v9553, 3.8918573e-05
      %v9566 = vadd.f32 %v9565, 0.001143296
      %v9567 = vmul.f32 %v9553, %v9566
      %v9568 = vadd.f32 %v9567, 0.014752088
      %v9569 = vmul.f32 %v9553, %v9568
      %v9570 = vadd.f32 %v9569, 0.112945676
      %v9571 = vmul.f32 %v9553, %v9570
      %v9572 = vadd.f32 %v9571, 0.4994258
      %v9573 = vmul.f32 %v9553, %v9572
      %v9574 = vadd.f32 %v9573, 1.0
      %v9575 = vrcp.pop %v9574
      %v9576 = vmul.f32 %v9574, %v9575
      %v9577 = vsub.f32 1.0, %v9576
      %v9578 = vmul.f32 %v9575, %v9577
      %v9579 = vadd.f32 %v9575, %v9578
      %vm9580 = vweird.f32 %v9574
      %vm9581 = vweird.f32 %v9575
      %vm9582 = vmor %vm9580, %vm9581
      %v9583 = vsel %vm9582, %v9575, %v9579
      %v9584 = vand.u32 2147483647, %v9574
      %vm9585 = vcmp.eq.f32.partialorder %v9584, 8.507059e+37
      %v9586 = vand.u32 %v9574, 2147483648
      %v9587 = vor.u32 1.1754944e-38, %v9586
      %v9588 = vsel %vm9585, %v9587, %v9583
      %v9589 = vmul.f32 %v9564, %v9588
      %v9590 = vmin.f32 %v9589, 1.0
      %v9591 = vmax.f32 %v9590, -1.0
      %v9592 = vmul.f32 %v8390, %v8390
      %v9593 = vmin.f32 16.0, %v9592
      %v9594 = vmul.f32 %v9593, 2.1237322e-06
      %v9595 = vadd.f32 %v9594, 0.00028619796
      %v9596 = vmul.f32 %v9593, %v9595
      %v9597 = vadd.f32 %v9596, 0.0036580483
      %v9598 = vmul.f32 %v9593, %v9597
      %v9599 = vadd.f32 %v9598, 0.05243302
      %v9600 = vmul.f32 %v9593, %v9599
      %v9601 = vadd.f32 %v9600, 0.18741608
      %v9602 = vmul.f32 %v9593, %v9601
      %v9603 = vadd.f32 %v9602, 1.1283791
      %v9604 = vmul.f32 %v8390, %v9603
      %v9605 = vmul.f32 %v9593, 3.8918573e-05
      %v9606 = vadd.f32 %v9605, 0.001143296
      %v9607 = vmul.f32 %v9593, %v9606
      %v9608 = vadd.f32 %v9607, 0.014752088
      %v9609 = vmul.f32 %v9593, %v9608
      %v9610 = vadd.f32 %v9609, 0.112945676
      %v9611 = vmul.f32 %v9593, %v9610
      %v9612 = vadd.f32 %v9611, 0.4994258
      %v9613 = vmul.f32 %v9593, %v9612
      %v9614 = vadd.f32 %v9613, 1.0
      %v9615 = vrcp.pop %v9614
      %v9616 = vmul.f32 %v9614, %v9615
      %v9617 = vsub.f32 1.0, %v9616
      %v9618 = vmul.f32 %v9615, %v9617
      %v9619 = vadd.f32 %v9615, %v9618
      %vm9620 = vweird.f32 %v9614
      %vm9621 = vweird.f32 %v9615
      %vm9622 = vmor %vm9620, %vm9621
      %v9623 = vsel %vm9622, %v9615, %v9619
      %v9624 = vand.u32 2147483647, %v9614
      %vm9625 = vcmp.eq.f32.partialorder %v9624, 8.507059e+37
      %v9626 = vand.u32 %v9614, 2147483648
      %v9627 = vor.u32 1.1754944e-38, %v9626
      %v9628 = vsel %vm9625, %v9627, %v9623
      %v9629 = vmul.f32 %v9604, %v9628
      %v9630 = vmin.f32 %v9629, 1.0
      %v9631 = vmax.f32 %v9630, -1.0
      %v9632 = vmul.f32 %v8391, %v8391
      %v9633 = vmin.f32 16.0, %v9632
      %v9634 = vmul.f32 %v9633, 2.1237322e-06
      %v9635 = vadd.f32 %v9634, 0.00028619796
      %v9636 = vmul.f32 %v9633, %v9635
      %v9637 = vadd.f32 %v9636, 0.0036580483
      %v9638 = vmul.f32 %v9633, %v9637
      %v9639 = vadd.f32 %v9638, 0.05243302
      %v9640 = vmul.f32 %v9633, %v9639
      %v9641 = vadd.f32 %v9640, 0.18741608
      %v9642 = vmul.f32 %v9633, %v9641
      %v9643 = vadd.f32 %v9642, 1.1283791
      %v9644 = vmul.f32 %v8391, %v9643
      %v9645 = vmul.f32 %v9633, 3.8918573e-05
      %v9646 = vadd.f32 %v9645, 0.001143296
      %v9647 = vmul.f32 %v9633, %v9646
      %v9648 = vadd.f32 %v9647, 0.014752088
      %v9649 = vmul.f32 %v9633, %v9648
      %v9650 = vadd.f32 %v9649, 0.112945676
      %v9651 = vmul.f32 %v9633, %v9650
      %v9652 = vadd.f32 %v9651, 0.4994258
      %v9653 = vmul.f32 %v9633, %v9652
      %v9654 = vadd.f32 %v9653, 1.0
      %v9655 = vrcp.pop %v9654
      %v9656 = vmul.f32 %v9654, %v9655
      %v9657 = vsub.f32 1.0, %v9656
      %v9658 = vmul.f32 %v9655, %v9657
      %v9659 = vadd.f32 %v9655, %v9658
      %vm9660 = vweird.f32 %v9654
      %vm9661 = vweird.f32 %v9655
      %vm9662 = vmor %vm9660, %vm9661
      %v9663 = vsel %vm9662, %v9655, %v9659
      %v9664 = vand.u32 2147483647, %v9654
      %vm9665 = vcmp.eq.f32.partialorder %v9664, 8.507059e+37
      %v9666 = vand.u32 %v9654, 2147483648
      %v9667 = vor.u32 1.1754944e-38, %v9666
      %v9668 = vsel %vm9665, %v9667, %v9663
      %v9669 = vmul.f32 %v9644, %v9668
      %v9670 = vmin.f32 %v9669, 1.0
      %v9671 = vmax.f32 %v9670, -1.0
      %v9672 = vadd.f32 %v8431, 1.0
      %v9673 = vadd.f32 %v8471, 1.0
      %v9674 = vadd.f32 %v8511, 1.0
      %v9675 = vadd.f32 %v8551, 1.0
      %v9676 = vadd.f32 %v8591, 1.0
      %v9677 = vadd.f32 %v8631, 1.0
      %v9678 = vadd.f32 %v8671, 1.0
      %v9679 = vadd.f32 %v8711, 1.0
      %v9680 = vadd.f32 %v8751, 1.0
      %v9681 = vadd.f32 %v8791, 1.0
      %v9682 = vadd.f32 %v8831, 1.0
      %v9683 = vadd.f32 %v8871, 1.0
      %v9684 = vadd.f32 %v8911, 1.0
      %v9685 = vadd.f32 %v8951, 1.0
      %v9686 = vadd.f32 %v8991, 1.0
      %v9687 = vadd.f32 %v9031, 1.0
      %v9688 = vadd.f32 %v9071, 1.0
      %v9689 = vadd.f32 %v9111, 1.0
      %v9690 = vadd.f32 %v9151, 1.0
      %v9691 = vadd.f32 %v9191, 1.0
      %v9692 = vadd.f32 %v9231, 1.0
      %v9693 = vadd.f32 %v9271, 1.0
      %v9694 = vadd.f32 %v9311, 1.0
      %v9695 = vadd.f32 %v9351, 1.0
      %v9696 = vadd.f32 %v9391, 1.0
      %v9697 = vadd.f32 %v9431, 1.0
      %v9698 = vadd.f32 %v9471, 1.0
      %v9699 = vadd.f32 %v9511, 1.0
      %v9700 = vadd.f32 %v9551, 1.0
      %v9701 = vadd.f32 %v9591, 1.0
      %v9702 = vadd.f32 %v9631, 1.0
      %v9703 = vadd.f32 %v9671, 1.0
      %v9704 = vmul.f32 %v8321, %v9672
      %v9705 = vmul.f32 %v8322, %v9673
      %v9706 = vmul.f32 %v8323, %v9674
      %v9707 = vmul.f32 %v8324, %v9675
      %v9708 = vmul.f32 %v8325, %v9676
      %v9709 = vmul.f32 %v8326, %v9677
      %v9710 = vmul.f32 %v8327, %v9678
      %v9711 = vmul.f32 %v8328, %v9679
      %v9712 = vmul.f32 %v8329, %v9680
      %v9713 = vmul.f32 %v8330, %v9681
      %v9714 = vmul.f32 %v8331, %v9682
      %v9715 = vmul.f32 %v8332, %v9683
      %v9716 = vmul.f32 %v8333, %v9684
      %v9717 = vmul.f32 %v8334, %v9685
      %v9718 = vmul.f32 %v8335, %v9686
      %v9719 = vmul.f32 %v8336, %v9687
      %v9720 = vmul.f32 %v8337, %v9688
      %v9721 = vmul.f32 %v8338, %v9689
      %v9722 = vmul.f32 %v8339, %v9690
      %v9723 = vmul.f32 %v8340, %v9691
      %v9724 = vmul.f32 %v8341, %v9692
      %v9725 = vmul.f32 %v8342, %v9693
      %v9726 = vmul.f32 %v8343, %v9694
      %v9727 = vmul.f32 %v8344, %v9695
      %v9728 = vmul.f32 %v8345, %v9696
      %v9729 = vmul.f32 %v8346, %v9697
      %v9730 = vmul.f32 %v8347, %v9698
      %v9731 = vmul.f32 %v8348, %v9699
      %v9732 = vmul.f32 %v8349, %v9700
      %v9733 = vmul.f32 %v8350, %v9701
      %v9734 = vmul.f32 %v8351, %v9702
      %v9735 = vmul.f32 %v8352, %v9703
      %v9736 = vpack.c.bf16 %v9705, %v9704
      %v9737 = vpack.c.bf16 %v9707, %v9706
      %v9738 = vpack.c.bf16 %v9709, %v9708
      %v9739 = vpack.c.bf16 %v9711, %v9710
      %v9740 = vpack.c.bf16 %v9713, %v9712
      %v9741 = vpack.c.bf16 %v9715, %v9714
      %v9742 = vpack.c.bf16 %v9717, %v9716
      %v9743 = vpack.c.bf16 %v9719, %v9718
      %v9744 = vpack.c.bf16 %v9721, %v9720
      %v9745 = vpack.c.bf16 %v9723, %v9722
      %v9746 = vpack.c.bf16 %v9725, %v9724
      %v9747 = vpack.c.bf16 %v9727, %v9726
      %v9748 = vpack.c.bf16 %v9729, %v9728
      %v9749 = vpack.c.bf16 %v9731, %v9730
      %v9750 = vpack.c.bf16 %v9733, %v9732
      %v9751 = vpack.c.bf16 %v9735, %v9734
      %v9752 = vld [vmem:[%s12] sm:$0xff]
      %v9753 = vld [vmem:[%s12 + $0x8] sm:$0xff]
      %v9754 = vld [vmem:[%s12 + $0x10] sm:$0xff]
      %v9755 = vld [vmem:[%s12 + $0x18] sm:$0xff]
      %v9756 = vld [vmem:[%s12 + $0x20] sm:$0xff]
      %v9757 = vld [vmem:[%s12 + $0x28] sm:$0xff]
      %v9758 = vld [vmem:[%s12 + $0x30] sm:$0xff]
      %v9759 = vld [vmem:[%s12 + $0x38] sm:$0xff]
      %v9760 = vld [vmem:[%s12 + $0x40] sm:$0xff]
      %v9761 = vld [vmem:[%s12 + $0x48] sm:$0xff]
      %v9762 = vld [vmem:[%s12 + $0x50] sm:$0xff]
      %v9763 = vld [vmem:[%s12 + $0x58] sm:$0xff]
      %v9764 = vld [vmem:[%s12 + $0x60] sm:$0xff]
      %v9765 = vld [vmem:[%s12 + $0x68] sm:$0xff]
      %v9766 = vld [vmem:[%s12 + $0x70] sm:$0xff]
      %v9767 = vld [vmem:[%s12 + $0x78] sm:$0xff]
      %v9768 = vpack.c.bf16 %v9753, %v9752
      %v9769 = vpack.c.bf16 %v9755, %v9754
      %v9770 = vpack.c.bf16 %v9757, %v9756
      %v9771 = vpack.c.bf16 %v9759, %v9758
      %v9772 = vpack.c.bf16 %v9761, %v9760
      %v9773 = vpack.c.bf16 %v9763, %v9762
      %v9774 = vpack.c.bf16 %v9765, %v9764
      %v9775 = vpack.c.bf16 %v9767, %v9766
      %v9776 = vld [vmem:[%s13] sm:$0x1]
      %v9778 = vperm.slane %v9776, 0
      %9780 = vmatpush.bf16.msra.mxu0 %v9775
      %9781 = vmatpush.bf16.msra.mxu0 %v9774
      %9782 = vmatpush.bf16.msra.mxu0 %v9773
      %9783 = vmatpush.bf16.msra.mxu0 %v9772
      %9784 = vmatpush.bf16.msra.mxu0 %v9771
      %9785 = vmatpush.bf16.msra.mxu0 %v9770
      %9786 = vmatpush.bf16.msra.mxu0 %v9769
      %9787 = vmatpush.bf16.msra.mxu0 %v9768
      %9788 = vmatmul.bf16.gmra.mxu0 %v9736
      %v9789 = vpop.f32.mrf.mxu0
      %v9790 = vadd.f32 %v9778, %v9789
      %v9791 = vpop.f32.mrf.mxu0
      %v9792 = vadd.f32 %v9778, %v9791
      %9793 = vmatmul.bf16.gmra.mxu0 %v9737
      %v9794 = vpop.f32.mrf.mxu0
      %v9795 = vadd.f32 %v9778, %v9794
      %v9796 = vpop.f32.mrf.mxu0
      %v9797 = vadd.f32 %v9778, %v9796
      %9798 = vmatmul.bf16.gmra.mxu0 %v9738
      %v9799 = vpop.f32.mrf.mxu0
      %v9800 = vadd.f32 %v9778, %v9799
      %v9801 = vpop.f32.mrf.mxu0
      %v9802 = vadd.f32 %v9778, %v9801
      %9803 = vmatmul.bf16.gmra.mxu0 %v9739
      %v9804 = vpop.f32.mrf.mxu0
      %v9805 = vadd.f32 %v9778, %v9804
      %v9806 = vpop.f32.mrf.mxu0
      %v9807 = vadd.f32 %v9778, %v9806
      %9808 = vmatmul.bf16.gmra.mxu0 %v9740
      %v9809 = vpop.f32.mrf.mxu0
      %v9810 = vadd.f32 %v9778, %v9809
      %v9811 = vpop.f32.mrf.mxu0
      %v9812 = vadd.f32 %v9778, %v9811
      %9813 = vmatmul.bf16.gmra.mxu0 %v9741
      %v9814 = vpop.f32.mrf.mxu0
      %v9815 = vadd.f32 %v9778, %v9814
      %v9816 = vpop.f32.mrf.mxu0
      %v9817 = vadd.f32 %v9778, %v9816
      %9818 = vmatmul.bf16.gmra.mxu0 %v9742
      %v9819 = vpop.f32.mrf.mxu0
      %v9820 = vadd.f32 %v9778, %v9819
      %v9821 = vpop.f32.mrf.mxu0
      %v9822 = vadd.f32 %v9778, %v9821
      %9823 = vmatmul.bf16.gmra.mxu0 %v9743
      %v9824 = vpop.f32.mrf.mxu0
      %v9825 = vadd.f32 %v9778, %v9824
      %v9826 = vpop.f32.mrf.mxu0
      %v9827 = vadd.f32 %v9778, %v9826
      %9828 = vmatmul.bf16.gmra.mxu0 %v9744
      %v9829 = vpop.f32.mrf.mxu0
      %v9830 = vadd.f32 %v9778, %v9829
      %v9831 = vpop.f32.mrf.mxu0
      %v9832 = vadd.f32 %v9778, %v9831
      %9833 = vmatmul.bf16.gmra.mxu0 %v9745
      %v9834 = vpop.f32.mrf.mxu0
      %v9835 = vadd.f32 %v9778, %v9834
      %v9836 = vpop.f32.mrf.mxu0
      %v9837 = vadd.f32 %v9778, %v9836
      %9838 = vmatmul.bf16.gmra.mxu0 %v9746
      %v9839 = vpop.f32.mrf.mxu0
      %v9840 = vadd.f32 %v9778, %v9839
      %v9841 = vpop.f32.mrf.mxu0
      %v9842 = vadd.f32 %v9778, %v9841
      %9843 = vmatmul.bf16.gmra.mxu0 %v9747
      %v9844 = vpop.f32.mrf.mxu0
      %v9845 = vadd.f32 %v9778, %v9844
      %v9846 = vpop.f32.mrf.mxu0
      %v9847 = vadd.f32 %v9778, %v9846
      %9848 = vmatmul.bf16.gmra.mxu0 %v9748
      %v9849 = vpop.f32.mrf.mxu0
      %v9850 = vadd.f32 %v9778, %v9849
      %v9851 = vpop.f32.mrf.mxu0
      %v9852 = vadd.f32 %v9778, %v9851
      %9853 = vmatmul.bf16.gmra.mxu0 %v9749
      %v9854 = vpop.f32.mrf.mxu0
      %v9855 = vadd.f32 %v9778, %v9854
      %v9856 = vpop.f32.mrf.mxu0
      %v9857 = vadd.f32 %v9778, %v9856
      %9858 = vmatmul.bf16.gmra.mxu0 %v9750
      %v9859 = vpop.f32.mrf.mxu0
      %v9860 = vadd.f32 %v9778, %v9859
      %v9861 = vpop.f32.mrf.mxu0
      %v9862 = vadd.f32 %v9778, %v9861
      %9863 = vmatmul.bf16.gmra.mxu0 %v9751
      %v9864 = vpop.f32.mrf.mxu0
      %v9865 = vadd.f32 %v9778, %v9864
      %v9866 = vpop.f32.mrf.mxu0
      %v9867 = vadd.f32 %v9778, %v9866
      %9868 = vdwg.mxu0
      %v9869 = vadd.f32 %v7350, %v9790
      %v9870 = vadd.f32 %v7351, %v9792
      %v9871 = vadd.f32 %v7352, %v9795
      %v9872 = vadd.f32 %v7353, %v9797
      %v9873 = vadd.f32 %v7354, %v9800
      %v9874 = vadd.f32 %v7355, %v9802
      %v9875 = vadd.f32 %v7356, %v9805
      %v9876 = vadd.f32 %v7357, %v9807
      %v9877 = vadd.f32 %v7358, %v9810
      %v9878 = vadd.f32 %v7359, %v9812
      %v9879 = vadd.f32 %v7360, %v9815
      %v9880 = vadd.f32 %v7361, %v9817
      %v9881 = vadd.f32 %v7362, %v9820
      %v9882 = vadd.f32 %v7363, %v9822
      %v9883 = vadd.f32 %v7364, %v9825
      %v9884 = vadd.f32 %v7365, %v9827
      %v9885 = vadd.f32 %v7366, %v9830
      %v9886 = vadd.f32 %v7367, %v9832
      %v9887 = vadd.f32 %v7368, %v9835
      %v9888 = vadd.f32 %v7369, %v9837
      %v9889 = vadd.f32 %v7370, %v9840
      %v9890 = vadd.f32 %v7371, %v9842
      %v9891 = vadd.f32 %v7372, %v9845
      %v9892 = vadd.f32 %v7373, %v9847
      %v9893 = vadd.f32 %v7374, %v9850
      %v9894 = vadd.f32 %v7375, %v9852
      %v9895 = vadd.f32 %v7376, %v9855
      %v9896 = vadd.f32 %v7377, %v9857
      %v9897 = vadd.f32 %v7378, %v9860
      %v9898 = vadd.f32 %v7379, %v9862
      %v9899 = vadd.f32 %v7380, %v9865
      %v9900 = vadd.f32 %v7381, %v9867
      %9901 = vst.msk [vmem:[%s474] sm:$0xff] %vm509, %v9869
      %9902 = vst.msk [vmem:[%s474 + $0x8] sm:$0xff] %vm509, %v9870
      %9903 = vst.msk [vmem:[%s474 + $0x10] sm:$0xff] %vm509, %v9871
      %9904 = vst.msk [vmem:[%s474 + $0x18] sm:$0xff] %vm509, %v9872
      %9905 = vst.msk [vmem:[%s474 + $0x20] sm:$0xff] %vm509, %v9873
      %9906 = vst.msk [vmem:[%s474 + $0x28] sm:$0xff] %vm509, %v9874
      %9907 = vst.msk [vmem:[%s474 + $0x30] sm:$0xff] %vm509, %v9875
      %9908 = vst.msk [vmem:[%s474 + $0x38] sm:$0xff] %vm509, %v9876
      %9909 = vst.msk [vmem:[%s474 + $0x40] sm:$0xff] %vm509, %v9877
      %9910 = vst.msk [vmem:[%s474 + $0x48] sm:$0xff] %vm509, %v9878
      %9911 = vst.msk [vmem:[%s474 + $0x50] sm:$0xff] %vm509, %v9879
      %9912 = vst.msk [vmem:[%s474 + $0x58] sm:$0xff] %vm509, %v9880
      %9913 = vst.msk [vmem:[%s474 + $0x60] sm:$0xff] %vm509, %v9881
      %9914 = vst.msk [vmem:[%s474 + $0x68] sm:$0xff] %vm509, %v9882
      %9915 = vst.msk [vmem:[%s474 + $0x70] sm:$0xff] %vm509, %v9883
      %9916 = vst.msk [vmem:[%s474 + $0x78] sm:$0xff] %vm509, %v9884
      %9917 = vst.msk [vmem:[%s474 + $0x80] sm:$0xff] %vm509, %v9885
      %9918 = vst.msk [vmem:[%s474 + $0x88] sm:$0xff] %vm509, %v9886
      %9919 = vst.msk [vmem:[%s474 + $0x90] sm:$0xff] %vm509, %v9887
      %9920 = vst.msk [vmem:[%s474 + $0x98] sm:$0xff] %vm509, %v9888
      %9921 = vst.msk [vmem:[%s474 + $0xa0] sm:$0xff] %vm509, %v9889
      %9922 = vst.msk [vmem:[%s474 + $0xa8] sm:$0xff] %vm509, %v9890
      %9923 = vst.msk [vmem:[%s474 + $0xb0] sm:$0xff] %vm509, %v9891
      %9924 = vst.msk [vmem:[%s474 + $0xb8] sm:$0xff] %vm509, %v9892
      %9925 = vst.msk [vmem:[%s474 + $0xc0] sm:$0xff] %vm509, %v9893
      %9926 = vst.msk [vmem:[%s474 + $0xc8] sm:$0xff] %vm509, %v9894
      %9927 = vst.msk [vmem:[%s474 + $0xd0] sm:$0xff] %vm509, %v9895
      %9928 = vst.msk [vmem:[%s474 + $0xd8] sm:$0xff] %vm509, %v9896
      %9929 = vst.msk [vmem:[%s474 + $0xe0] sm:$0xff] %vm509, %v9897
      %9930 = vst.msk [vmem:[%s474 + $0xe8] sm:$0xff] %vm509, %v9898
      %9931 = vst.msk [vmem:[%s474 + $0xf0] sm:$0xff] %vm509, %v9899
      %9932 = vst.msk [vmem:[%s474 + $0xf8] sm:$0xff] %vm509, %v9900
      %s9933 = smul.u32 8, %s25
      %p9934 = scmp.lt.s32.totalorder %s9933, 15
      %s9935 = scalar_select %p9934, %s9933, 15
      %s9936 = smul.addr %s9935, 4
      %s9937 = smul.addr %s9936, 8
      %s9938 = scalar_lea.vmem %s14, %s9937
      // Predicated region
      $region77: #{_lambda_.1} parent=75 // pred_check
        %p9939 = pneg %p342
      $region78: #{_lambda_.1} parent=75 // pred_check_branch
        %9941 = sbr.rel (%p9939) target = $region80
      $region79: #{_lambda_.1} parent=75 // pred_region
        %s9942 = smul.u32 8, %s25
      $region80: #{_lambda_.1} parent=75 // pred_fallthru
        _
    $region76: #{_lambda_.1} parent=5 // pred_fallthru
      _
    %p9943 = scmp.le.s32.totalorder 2, %s20
    // Predicated region
    $region81: #{_lambda_.1} parent=5 // pred_check
      %p9944 = pneg %p9943
    $region82: #{_lambda_.1} parent=5 // pred_check_branch
      %9946 = sbr.rel (%p9944) target = $region84
    $region83: #{_lambda_.1} parent=5 // pred_region
      %s9947 = ssub.s32 %s20, 2
      // Predicated region
      $region85: #{_lambda_.1} parent=83 // pred_check
        %p9948 = pneg %p348
      $region86: #{_lambda_.1} parent=83 // pred_check_branch
        %9950 = sbr.rel (%p9948) target = $region88
      $region87: #{_lambda_.1} parent=83 // pred_region
        %s9951 = smul.u32 8, %s26
        %p9952 = scmp.lt.s32.totalorder %s9951, 15
        %s9953 = scalar_select %p9952, %s9951, 15
        %s9954 = smul.addr %s9953, 4
        %s9955 = smul.addr %s9954, 8
        %s9956 = scalar_lea.vmem %s14, %s9955
      $region88: #{_lambda_.1} parent=83 // pred_fallthru
        _
    $region84: #{_lambda_.1} parent=5 // pred_fallthru
      _
  $region6: #{_lambda_.1} parent=0 // loop_footer
    %s24 = sadd.s32 1, %s20
  $region7: #{_lambda_.1} parent=0 // loop_footer_branch
    %19 = sbr.rel target = $region3
  $region8: #{_lambda_.1} parent=0 // loop_exit
    _

</llo_original>
